<compile_context>
chip_gen: v6e
topology: v6e:2x2x1
jax: 0.10.0
libtpu: 0.0.40
codegen_flags: <defaults>
</compile_context>

<pallas_src>
import functools
import math

import jax
import jax.numpy as jnp
from jax.experimental import pallas as pl
from jax.experimental.pallas import tpu as pltpu

# small synthetic configuration (reference hard-codes 768; parameterized here)
HIDDEN = 128
NHEAD = 8
HEAD_DIM = HIDDEN // NHEAD
INTERMEDIATE = 256   # BertConfig.intermediate_size (small synthetic)
FFN_DIM = 256        # TransformerEncoderLayer.dim_feedforward (small synthetic)
BATCH = 2
SEQ = 8


# ------------------------------ fused layer kernel ------------------------------

def _fused_layer_kernel(x_ref, bias_ref, wqkv_ref, bqkv_ref, wo_ref, bo_ref,
                        ln1_g_ref, ln1_b_ref, w1_ref, b1_ref, w2_ref, b2_ref,
                        ln2_g_ref, ln2_b_ref, o_ref,
                        *, nhead, scale, ln_eps, activation):
    """One full post-norm transformer layer for a single batch element.

    x_ref:    (1, S, H)  activations (f32)
    bias_ref: (1, 1, S)  additive attention bias per key position (f32)
    weights:  bf16 matmul weights, f32 biases / LN params.
    """
    x = x_ref[0].astype(jnp.float32)               # (S, H)
    bias = bias_ref[0].astype(jnp.float32)         # (1, S) -> broadcast over queries
    H = x.shape[-1]
    Dh = H // nhead

    def layernorm(y, g_ref, b_ref):
        mean = jnp.mean(y, axis=-1, keepdims=True)
        c = y - mean
        var = jnp.mean(c * c, axis=-1, keepdims=True)
        return c * jax.lax.rsqrt(var + ln_eps) * g_ref[...] + b_ref[...]

    # ---- fused QKV projection (bf16 MXU, f32 accumulate) ----
    qkv = jnp.dot(x.astype(jnp.bfloat16), wqkv_ref[...],
                  preferred_element_type=jnp.float32) + bqkv_ref[...]
    q = qkv[:, 0 * H:1 * H]
    k = qkv[:, 1 * H:2 * H]
    v = qkv[:, 2 * H:3 * H]

    # ---- attention: all heads in-register (statically unrolled) ----
    ctx_parts = []
    for h in range(nhead):
        qh = q[:, h * Dh:(h + 1) * Dh]
        kh = k[:, h * Dh:(h + 1) * Dh]
        vh = v[:, h * Dh:(h + 1) * Dh]
        s = jax.lax.dot_general(qh, kh, (((1,), (1,)), ((), ())),
                                preferred_element_type=jnp.float32) * scale + bias
        m = jnp.max(s, axis=-1, keepdims=True)
        e = jnp.exp(s - m)
        inv = pl.reciprocal(jnp.sum(e, axis=-1, keepdims=True), approx=True)
        p = e * inv
        ctx_parts.append(jnp.dot(p, vh, preferred_element_type=jnp.float32))
    ctx = jnp.concatenate(ctx_parts, axis=-1)      # (S, H)

    # ---- output projection + add & LN1 ----
    attn = jnp.dot(ctx.astype(jnp.bfloat16), wo_ref[...],
                   preferred_element_type=jnp.float32) + bo_ref[...]
    x1 = layernorm(attn + x, ln1_g_ref, ln1_b_ref)

    # ---- feed-forward + add & LN2 ----
    h1 = jnp.dot(x1.astype(jnp.bfloat16), w1_ref[...],
                 preferred_element_type=jnp.float32) + b1_ref[...]
    if activation == "gelu":
        # exact (erf) GELU, matching HF Bert default hidden_act="gelu"
        h1 = 0.5 * h1 * (1.0 + jax.lax.erf(h1 * (1.0 / math.sqrt(2.0))))
    else:  # relu (nn.TransformerEncoderLayer default)
        h1 = jnp.maximum(h1, 0.0)
    h2 = jnp.dot(h1.astype(jnp.bfloat16), w2_ref[...],
                 preferred_element_type=jnp.float32) + b2_ref[...]
    x2 = layernorm(h2 + x1, ln2_g_ref, ln2_b_ref)

    o_ref[0] = x2.astype(o_ref.dtype)


def fused_transformer_layer(p, x, bias, *, activation, ln_eps, nhead):
    """x: (B, S, H) f32; bias: (B, 1, S) additive key bias. Returns (B, S, H)."""
    B, S, H = x.shape
    F = p["w1"].shape[1]
    scale = 1.0 / math.sqrt(H // nhead)

    def full(shape):
        return pl.BlockSpec(shape, lambda b, _n=len(shape): (0,) * _n)

    kernel = functools.partial(_fused_layer_kernel, nhead=nhead, scale=scale,
                               ln_eps=ln_eps, activation=activation)
    return pl.pallas_call(
        kernel,
        out_shape=jax.ShapeDtypeStruct((B, S, H), x.dtype),
        grid=(B,),
        in_specs=[
            pl.BlockSpec((1, S, H), lambda b: (b, 0, 0)),   # x (lane-dense, H=128)
            pl.BlockSpec((1, 1, S), lambda b: (b, 0, 0)),   # additive attention bias
            full((H, 3 * H)),                               # wqkv (bf16)
            full((1, 3 * H)),                               # bqkv
            full((H, H)),                                   # wo (bf16)
            full((1, H)),                                   # bo
            full((1, H)), full((1, H)),                     # ln1 gamma/beta
            full((H, F)),                                   # w1 (bf16)
            full((1, F)),                                   # b1
            full((F, H)),                                   # w2 (bf16)
            full((1, H)),                                   # b2
            full((1, H)), full((1, H)),                     # ln2 gamma/beta
        ],
        out_specs=pl.BlockSpec((1, S, H), lambda b: (b, 0, 0)),
        compiler_params=pltpu.CompilerParams(
            dimension_semantics=("parallel",)),             # v7x: one batch per TC
    )(x, bias, p["wqkv"], p["bqkv"], p["wo"], p["bo"],
      p["ln1_g"], p["ln1_b"], p["w1"], p["b1"], p["w2"], p["b2"],
      p["ln2_g"], p["ln2_b"])


# --------------------------- CrossEncoderLayer forward --------------------------

@jax.jit
def _text_forward(packed, last_hidden_state, extended_attention_mask, attention_mask):
    B, S, H = last_hidden_state.shape

    # 1) HF BertLayer with additive extended_attention_mask
    bert_bias = extended_attention_mask.reshape(B, 1, S).astype(jnp.float32)
    hidden = fused_transformer_layer(packed["bert"], last_hidden_state, bert_bias,
                                     activation="gelu", ln_eps=1e-12, nhead=NHEAD)

    # 2) build padded features + pad mask entirely on device (jit-friendly).
    #    Static pad length S+1 >= max(text_sizes)+1; extra identical zero pad rows
    #    do not change the attention result for the rows scattered back.
    text_sizes = jnp.sum(attention_mask, axis=1).astype(jnp.int32)        # (B,)
    S_pad = S + 1
    padded = jnp.concatenate(
        [hidden, jnp.zeros((B, S_pad - S, H), hidden.dtype)], axis=1)      # (B, S+1, H)

    positions = jax.lax.broadcasted_iota(jnp.int32, (B, S_pad), 1)
    valid = positions < text_sizes[:, None]      # pad_array > 0  (True for real tokens)
    # reference passes pad_array>0 verbatim as src_key_padding_mask, i.e. *valid*
    # tokens are masked OUT of the keys (True => ignore). Reproduced here; use a
    # large finite negative instead of -inf to keep softmax NaN-free.
    trans_bias = jnp.where(valid, -1e9, 0.0).astype(jnp.float32).reshape(B, 1, S_pad)

    # 3) torch.nn.TransformerEncoderLayer (batch_first, post-norm, ReLU, eval)
    trans_out = fused_transformer_layer(packed["trans"], padded, trans_bias,
                                        activation="relu", ln_eps=1e-5, nhead=NHEAD)

    # 4) scatter back: last_hidden_state[b, :text_size] = trans_out[b, :text_size]
    write = jax.lax.broadcasted_iota(jnp.int32, (B, S), 1) < text_sizes[:, None]
    return jnp.where(write[..., None], trans_out[:, :S, :], hidden)


def cross_encoder_forward(packed, new_text_batch, new_grover_batch, input_type="text"):
    if input_type != "text":
        # TODO(synk): 'mol'/'both' require the external grover GTransEncoder.
        raise NotImplementedError("only input_type='text' is implemented")
    last_hidden_state, extended_attention_mask, attention_mask = new_text_batch
    hidden = _text_forward(packed, last_hidden_state, extended_attention_mask,
                           attention_mask)
    return ((hidden, extended_attention_mask, attention_mask), new_grover_batch)


# ------------------------------- parameter init ---------------------------------

def init_params(key):
    ks = iter(jax.random.split(key, 16))

    def w(shape):
        return (0.02 * jax.random.normal(next(ks), shape, jnp.float32)
                ).astype(jnp.bfloat16)                      # matmul weights in bf16

    zeros = lambda s: jnp.zeros(s, jnp.float32)
    ones = lambda s: jnp.ones(s, jnp.float32)

    def layer(ffn_dim):
        return dict(
            wqkv=w((HIDDEN, 3 * HIDDEN)), bqkv=zeros((1, 3 * HIDDEN)),
            wo=w((HIDDEN, HIDDEN)), bo=zeros((1, HIDDEN)),
            ln1_g=ones((1, HIDDEN)), ln1_b=zeros((1, HIDDEN)),
            w1=w((HIDDEN, ffn_dim)), b1=zeros((1, ffn_dim)),
            w2=w((ffn_dim, HIDDEN)), b2=zeros((1, HIDDEN)),
            ln2_g=ones((1, HIDDEN)), ln2_b=zeros((1, HIDDEN)),
        )

    return dict(bert=layer(INTERMEDIATE), trans=layer(FFN_DIM))


# ------------------------------------ main ---------------------------------------

if __name__ == "__main__":
    key = jax.random.PRNGKey(0)
    kp, kx, ka, kb = jax.random.split(key, 4)
    params = init_params(kp)

    # text batch
    last_hidden_state = jax.random.normal(kx, (BATCH, SEQ, HIDDEN), jnp.float32)
    attention_mask = jnp.ones((BATCH, SEQ), jnp.int32)
    extended_attention_mask = ((1.0 - attention_mask.astype(jnp.float32)) * -10000.0
                               ).reshape(BATCH, 1, 1, SEQ)
    new_text_batch = (last_hidden_state, extended_attention_mask, attention_mask)

    # synthetic grover batch (passed through unchanged on the 'text' path)
    n_atoms, n_bonds = 6, 10
    f_atoms = jax.random.normal(ka, (1 + n_atoms, HIDDEN), jnp.float32)
    f_bonds = jax.random.normal(kb, (1 + n_bonds, HIDDEN), jnp.float32)
    a2b = jnp.zeros((1 + n_atoms, 4), jnp.int32)
    b2a = jnp.zeros((1 + n_bonds,), jnp.int32)
    b2revb = jnp.zeros((1 + n_bonds,), jnp.int32)
    a_scope = [(1, 3), (4, 3)]
    b_scope = [(1, 5), (6, 5)]
    a2a = jnp.zeros((1 + n_atoms, 4), jnp.int32)
    new_grover_batch = (f_atoms, f_bonds, a2b, b2a, b2revb, a_scope, b_scope, a2a)

    (out_hidden, out_ext_mask, out_mask), _ = cross_encoder_forward(
        params, new_text_batch, new_grover_batch, input_type="text")
    jax.block_until_ready(out_hidden)
    assert out_hidden.shape == (BATCH, SEQ, HIDDEN)
    assert bool(jnp.all(jnp.isfinite(out_hidden)))
    print("KERNEL_OK")
</pallas_src>

<mosaic_0001>
module attributes {stable_mosaic.version = 11 : i64} {
  func.func @_fused_layer_kernel(%arg0: i32, %arg1: memref<1x8x128xf32, #tpu.memory_space<vmem>>, %arg2: memref<1x1x8xf32, #tpu.memory_space<vmem>>, %arg3: memref<128x384xbf16, #tpu.memory_space<vmem>>, %arg4: memref<1x384xf32, #tpu.memory_space<vmem>>, %arg5: memref<128x128xbf16, #tpu.memory_space<vmem>>, %arg6: memref<1x128xf32, #tpu.memory_space<vmem>>, %arg7: memref<1x128xf32, #tpu.memory_space<vmem>>, %arg8: memref<1x128xf32, #tpu.memory_space<vmem>>, %arg9: memref<128x256xbf16, #tpu.memory_space<vmem>>, %arg10: memref<1x256xf32, #tpu.memory_space<vmem>>, %arg11: memref<256x128xbf16, #tpu.memory_space<vmem>>, %arg12: memref<1x128xf32, #tpu.memory_space<vmem>>, %arg13: memref<1x128xf32, #tpu.memory_space<vmem>>, %arg14: memref<1x128xf32, #tpu.memory_space<vmem>>, %arg15: memref<1x8x128xf32, #tpu.memory_space<vmem>>) attributes {dimension_semantics = [#tpu.dimension_semantics<parallel>], iteration_bounds = array<i64: 2>, scalar_prefetch = 0 : i64, scratch_operands = 0 : i64, tpu.core_type = #tpu.core_type<tc>, window_params = [{transform_indices = @transform_0, window_bounds = array<i64: 1, 8, 128>}, {transform_indices = @transform_1, window_bounds = array<i64: 1, 1, 8>}, {pipeline_mode = #tpu.pipeline_mode<synchronous>, transform_indices = @transform_2, window_bounds = array<i64: 128, 384>}, {pipeline_mode = #tpu.pipeline_mode<synchronous>, transform_indices = @transform_3, window_bounds = array<i64: 1, 384>}, {pipeline_mode = #tpu.pipeline_mode<synchronous>, transform_indices = @transform_4, window_bounds = array<i64: 128, 128>}, {pipeline_mode = #tpu.pipeline_mode<synchronous>, transform_indices = @transform_5, window_bounds = array<i64: 1, 128>}, {pipeline_mode = #tpu.pipeline_mode<synchronous>, transform_indices = @transform_6, window_bounds = array<i64: 1, 128>}, {pipeline_mode = #tpu.pipeline_mode<synchronous>, transform_indices = @transform_7, window_bounds = array<i64: 1, 128>}, {pipeline_mode = #tpu.pipeline_mode<synchronous>, transform_indices = @transform_8, window_bounds = array<i64: 128, 256>}, {pipeline_mode = #tpu.pipeline_mode<synchronous>, transform_indices = @transform_9, window_bounds = array<i64: 1, 256>}, {pipeline_mode = #tpu.pipeline_mode<synchronous>, transform_indices = @transform_10, window_bounds = array<i64: 256, 128>}, {pipeline_mode = #tpu.pipeline_mode<synchronous>, transform_indices = @transform_11, window_bounds = array<i64: 1, 128>}, {pipeline_mode = #tpu.pipeline_mode<synchronous>, transform_indices = @transform_12, window_bounds = array<i64: 1, 128>}, {pipeline_mode = #tpu.pipeline_mode<synchronous>, transform_indices = @transform_13, window_bounds = array<i64: 1, 128>}, {transform_indices = @transform_14, window_bounds = array<i64: 1, 8, 128>}]} {
    %c0 = arith.constant 0 : index
    %c0_0 = arith.constant 0 : index
    %c0_1 = arith.constant 0 : index
    %0 = vector.load %arg1[%c0, %c0_0, %c0_1] : memref<1x8x128xf32, #tpu.memory_space<vmem>>, vector<1x8x128xf32>
    %1 = vector.shape_cast %0 : vector<1x8x128xf32> to vector<8x128xf32>
    %c0_2 = arith.constant 0 : index
    %c0_3 = arith.constant 0 : index
    %c0_4 = arith.constant 0 : index
    %2 = vector.load %arg2[%c0_2, %c0_3, %c0_4] : memref<1x1x8xf32, #tpu.memory_space<vmem>>, vector<1x1x8xf32>
    %3 = vector.shape_cast %2 : vector<1x1x8xf32> to vector<1x8xf32>
    %4 = arith.truncf %1 : vector<8x128xf32> to vector<8x128xbf16>
    %c0_5 = arith.constant 0 : index
    %c0_6 = arith.constant 0 : index
    %5 = vector.load %arg3[%c0_5, %c0_6] : memref<128x384xbf16, #tpu.memory_space<vmem>>, vector<128x384xbf16>
    %cst = arith.constant dense<0.000000e+00> : vector<8x384xf32>
    %6 = tpu.matmul %4, %5, %cst {dimension_numbers = #tpu.dot_dimension_numbers<[1], [0], [0], [1], [0, 0, 1, 1], [], []>} : vector<8x128xbf16>, vector<128x384xbf16>, vector<8x384xf32> -> vector<8x384xf32>
    %c0_7 = arith.constant 0 : index
    %c0_8 = arith.constant 0 : index
    %7 = vector.load %arg4[%c0_7, %c0_8] : memref<1x384xf32, #tpu.memory_space<vmem>>, vector<1x384xf32>
    %8 = vector.broadcast %7 : vector<1x384xf32> to vector<8x384xf32>
    %9 = arith.addf %6, %8 : vector<8x384xf32>
    %10 = vector.extract_strided_slice %9 {offsets = [0, 0], sizes = [8, 128], strides = [1, 1]} : vector<8x384xf32> to vector<8x128xf32>
    %11 = vector.extract_strided_slice %9 {offsets = [0, 128], sizes = [8, 128], strides = [1, 1]} : vector<8x384xf32> to vector<8x128xf32>
    %12 = vector.extract_strided_slice %9 {offsets = [0, 256], sizes = [8, 128], strides = [1, 1]} : vector<8x384xf32> to vector<8x128xf32>
    %13 = vector.extract_strided_slice %10 {offsets = [0, 0], sizes = [8, 16], strides = [1, 1]} : vector<8x128xf32> to vector<8x16xf32>
    %14 = vector.extract_strided_slice %11 {offsets = [0, 0], sizes = [8, 16], strides = [1, 1]} : vector<8x128xf32> to vector<8x16xf32>
    %15 = vector.extract_strided_slice %12 {offsets = [0, 0], sizes = [8, 16], strides = [1, 1]} : vector<8x128xf32> to vector<8x16xf32>
    %cst_9 = arith.constant dense<0.000000e+00> : vector<8x8xf32>
    %16 = tpu.matmul %13, %14, %cst_9 {dimension_numbers = #tpu.dot_dimension_numbers<[1], [1], [0], [0], [0, 0, 1, 0], [], []>} : vector<8x16xf32>, vector<8x16xf32>, vector<8x8xf32> -> vector<8x8xf32>
    %cst_10 = arith.constant 2.500000e-01 : f32
    %17 = vector.broadcast %cst_10 : f32 to vector<8x8xf32>
    %18 = arith.mulf %16, %17 : vector<8x8xf32>
    %19 = vector.broadcast %3 : vector<1x8xf32> to vector<8x8xf32>
    %20 = arith.addf %18, %19 : vector<8x8xf32>
    %cst_11 = arith.constant dense<0xFF800000> : vector<8xf32>
    %21 = vector.multi_reduction <maximumf>, %20, %cst_11 [1] : vector<8x8xf32> to vector<8xf32>
    %22 = vector.shape_cast %21 : vector<8xf32> to vector<8x1xf32>
    %23 = vector.broadcast %22 : vector<8x1xf32> to vector<8x8xf32>
    %24 = arith.subf %20, %23 : vector<8x8xf32>
    %25 = math.exp %24 : vector<8x8xf32>
    %cst_12 = arith.constant dense<0.000000e+00> : vector<8xf32>
    %26 = vector.multi_reduction <add>, %25, %cst_12 [1] : vector<8x8xf32> to vector<8xf32>
    %27 = vector.shape_cast %26 : vector<8xf32> to vector<8x1xf32>
    %28 = tpu.reciprocal %27 {approx = true} : vector<8x1xf32> -> vector<8x1xf32>
    %29 = vector.broadcast %28 : vector<8x1xf32> to vector<8x8xf32>
    %30 = arith.mulf %25, %29 : vector<8x8xf32>
    %cst_13 = arith.constant dense<0.000000e+00> : vector<8x16xf32>
    %31 = tpu.matmul %30, %15, %cst_13 {dimension_numbers = #tpu.dot_dimension_numbers<[1], [0], [0], [1], [0, 0, 1, 1], [], []>} : vector<8x8xf32>, vector<8x16xf32>, vector<8x16xf32> -> vector<8x16xf32>
    %32 = vector.extract_strided_slice %10 {offsets = [0, 16], sizes = [8, 16], strides = [1, 1]} : vector<8x128xf32> to vector<8x16xf32>
    %33 = vector.extract_strided_slice %11 {offsets = [0, 16], sizes = [8, 16], strides = [1, 1]} : vector<8x128xf32> to vector<8x16xf32>
    %34 = vector.extract_strided_slice %12 {offsets = [0, 16], sizes = [8, 16], strides = [1, 1]} : vector<8x128xf32> to vector<8x16xf32>
    %cst_14 = arith.constant dense<0.000000e+00> : vector<8x8xf32>
    %35 = tpu.matmul %32, %33, %cst_14 {dimension_numbers = #tpu.dot_dimension_numbers<[1], [1], [0], [0], [0, 0, 1, 0], [], []>} : vector<8x16xf32>, vector<8x16xf32>, vector<8x8xf32> -> vector<8x8xf32>
    %cst_15 = arith.constant 2.500000e-01 : f32
    %36 = vector.broadcast %cst_15 : f32 to vector<8x8xf32>
    %37 = arith.mulf %35, %36 : vector<8x8xf32>
    %38 = vector.broadcast %3 : vector<1x8xf32> to vector<8x8xf32>
    %39 = arith.addf %37, %38 : vector<8x8xf32>
    %cst_16 = arith.constant dense<0xFF800000> : vector<8xf32>
    %40 = vector.multi_reduction <maximumf>, %39, %cst_16 [1] : vector<8x8xf32> to vector<8xf32>
    %41 = vector.shape_cast %40 : vector<8xf32> to vector<8x1xf32>
    %42 = vector.broadcast %41 : vector<8x1xf32> to vector<8x8xf32>
    %43 = arith.subf %39, %42 : vector<8x8xf32>
    %44 = math.exp %43 : vector<8x8xf32>
    %cst_17 = arith.constant dense<0.000000e+00> : vector<8xf32>
    %45 = vector.multi_reduction <add>, %44, %cst_17 [1] : vector<8x8xf32> to vector<8xf32>
    %46 = vector.shape_cast %45 : vector<8xf32> to vector<8x1xf32>
    %47 = tpu.reciprocal %46 {approx = true} : vector<8x1xf32> -> vector<8x1xf32>
    %48 = vector.broadcast %47 : vector<8x1xf32> to vector<8x8xf32>
    %49 = arith.mulf %44, %48 : vector<8x8xf32>
    %cst_18 = arith.constant dense<0.000000e+00> : vector<8x16xf32>
    %50 = tpu.matmul %49, %34, %cst_18 {dimension_numbers = #tpu.dot_dimension_numbers<[1], [0], [0], [1], [0, 0, 1, 1], [], []>} : vector<8x8xf32>, vector<8x16xf32>, vector<8x16xf32> -> vector<8x16xf32>
    %51 = vector.extract_strided_slice %10 {offsets = [0, 32], sizes = [8, 16], strides = [1, 1]} : vector<8x128xf32> to vector<8x16xf32>
    %52 = vector.extract_strided_slice %11 {offsets = [0, 32], sizes = [8, 16], strides = [1, 1]} : vector<8x128xf32> to vector<8x16xf32>
    %53 = vector.extract_strided_slice %12 {offsets = [0, 32], sizes = [8, 16], strides = [1, 1]} : vector<8x128xf32> to vector<8x16xf32>
    %cst_19 = arith.constant dense<0.000000e+00> : vector<8x8xf32>
    %54 = tpu.matmul %51, %52, %cst_19 {dimension_numbers = #tpu.dot_dimension_numbers<[1], [1], [0], [0], [0, 0, 1, 0], [], []>} : vector<8x16xf32>, vector<8x16xf32>, vector<8x8xf32> -> vector<8x8xf32>
    %cst_20 = arith.constant 2.500000e-01 : f32
    %55 = vector.broadcast %cst_20 : f32 to vector<8x8xf32>
    %56 = arith.mulf %54, %55 : vector<8x8xf32>
    %57 = vector.broadcast %3 : vector<1x8xf32> to vector<8x8xf32>
    %58 = arith.addf %56, %57 : vector<8x8xf32>
    %cst_21 = arith.constant dense<0xFF800000> : vector<8xf32>
    %59 = vector.multi_reduction <maximumf>, %58, %cst_21 [1] : vector<8x8xf32> to vector<8xf32>
    %60 = vector.shape_cast %59 : vector<8xf32> to vector<8x1xf32>
    %61 = vector.broadcast %60 : vector<8x1xf32> to vector<8x8xf32>
    %62 = arith.subf %58, %61 : vector<8x8xf32>
    %63 = math.exp %62 : vector<8x8xf32>
    %cst_22 = arith.constant dense<0.000000e+00> : vector<8xf32>
    %64 = vector.multi_reduction <add>, %63, %cst_22 [1] : vector<8x8xf32> to vector<8xf32>
    %65 = vector.shape_cast %64 : vector<8xf32> to vector<8x1xf32>
    %66 = tpu.reciprocal %65 {approx = true} : vector<8x1xf32> -> vector<8x1xf32>
    %67 = vector.broadcast %66 : vector<8x1xf32> to vector<8x8xf32>
    %68 = arith.mulf %63, %67 : vector<8x8xf32>
    %cst_23 = arith.constant dense<0.000000e+00> : vector<8x16xf32>
    %69 = tpu.matmul %68, %53, %cst_23 {dimension_numbers = #tpu.dot_dimension_numbers<[1], [0], [0], [1], [0, 0, 1, 1], [], []>} : vector<8x8xf32>, vector<8x16xf32>, vector<8x16xf32> -> vector<8x16xf32>
    %70 = vector.extract_strided_slice %10 {offsets = [0, 48], sizes = [8, 16], strides = [1, 1]} : vector<8x128xf32> to vector<8x16xf32>
    %71 = vector.extract_strided_slice %11 {offsets = [0, 48], sizes = [8, 16], strides = [1, 1]} : vector<8x128xf32> to vector<8x16xf32>
    %72 = vector.extract_strided_slice %12 {offsets = [0, 48], sizes = [8, 16], strides = [1, 1]} : vector<8x128xf32> to vector<8x16xf32>
    %cst_24 = arith.constant dense<0.000000e+00> : vector<8x8xf32>
    %73 = tpu.matmul %70, %71, %cst_24 {dimension_numbers = #tpu.dot_dimension_numbers<[1], [1], [0], [0], [0, 0, 1, 0], [], []>} : vector<8x16xf32>, vector<8x16xf32>, vector<8x8xf32> -> vector<8x8xf32>
    %cst_25 = arith.constant 2.500000e-01 : f32
    %74 = vector.broadcast %cst_25 : f32 to vector<8x8xf32>
    %75 = arith.mulf %73, %74 : vector<8x8xf32>
    %76 = vector.broadcast %3 : vector<1x8xf32> to vector<8x8xf32>
    %77 = arith.addf %75, %76 : vector<8x8xf32>
    %cst_26 = arith.constant dense<0xFF800000> : vector<8xf32>
    %78 = vector.multi_reduction <maximumf>, %77, %cst_26 [1] : vector<8x8xf32> to vector<8xf32>
    %79 = vector.shape_cast %78 : vector<8xf32> to vector<8x1xf32>
    %80 = vector.broadcast %79 : vector<8x1xf32> to vector<8x8xf32>
    %81 = arith.subf %77, %80 : vector<8x8xf32>
    %82 = math.exp %81 : vector<8x8xf32>
    %cst_27 = arith.constant dense<0.000000e+00> : vector<8xf32>
    %83 = vector.multi_reduction <add>, %82, %cst_27 [1] : vector<8x8xf32> to vector<8xf32>
    %84 = vector.shape_cast %83 : vector<8xf32> to vector<8x1xf32>
    %85 = tpu.reciprocal %84 {approx = true} : vector<8x1xf32> -> vector<8x1xf32>
    %86 = vector.broadcast %85 : vector<8x1xf32> to vector<8x8xf32>
    %87 = arith.mulf %82, %86 : vector<8x8xf32>
    %cst_28 = arith.constant dense<0.000000e+00> : vector<8x16xf32>
    %88 = tpu.matmul %87, %72, %cst_28 {dimension_numbers = #tpu.dot_dimension_numbers<[1], [0], [0], [1], [0, 0, 1, 1], [], []>} : vector<8x8xf32>, vector<8x16xf32>, vector<8x16xf32> -> vector<8x16xf32>
    %89 = vector.extract_strided_slice %10 {offsets = [0, 64], sizes = [8, 16], strides = [1, 1]} : vector<8x128xf32> to vector<8x16xf32>
    %90 = vector.extract_strided_slice %11 {offsets = [0, 64], sizes = [8, 16], strides = [1, 1]} : vector<8x128xf32> to vector<8x16xf32>
    %91 = vector.extract_strided_slice %12 {offsets = [0, 64], sizes = [8, 16], strides = [1, 1]} : vector<8x128xf32> to vector<8x16xf32>
    %cst_29 = arith.constant dense<0.000000e+00> : vector<8x8xf32>
    %92 = tpu.matmul %89, %90, %cst_29 {dimension_numbers = #tpu.dot_dimension_numbers<[1], [1], [0], [0], [0, 0, 1, 0], [], []>} : vector<8x16xf32>, vector<8x16xf32>, vector<8x8xf32> -> vector<8x8xf32>
    %cst_30 = arith.constant 2.500000e-01 : f32
    %93 = vector.broadcast %cst_30 : f32 to vector<8x8xf32>
    %94 = arith.mulf %92, %93 : vector<8x8xf32>
    %95 = vector.broadcast %3 : vector<1x8xf32> to vector<8x8xf32>
    %96 = arith.addf %94, %95 : vector<8x8xf32>
    %cst_31 = arith.constant dense<0xFF800000> : vector<8xf32>
    %97 = vector.multi_reduction <maximumf>, %96, %cst_31 [1] : vector<8x8xf32> to vector<8xf32>
    %98 = vector.shape_cast %97 : vector<8xf32> to vector<8x1xf32>
    %99 = vector.broadcast %98 : vector<8x1xf32> to vector<8x8xf32>
    %100 = arith.subf %96, %99 : vector<8x8xf32>
    %101 = math.exp %100 : vector<8x8xf32>
    %cst_32 = arith.constant dense<0.000000e+00> : vector<8xf32>
    %102 = vector.multi_reduction <add>, %101, %cst_32 [1] : vector<8x8xf32> to vector<8xf32>
    %103 = vector.shape_cast %102 : vector<8xf32> to vector<8x1xf32>
    %104 = tpu.reciprocal %103 {approx = true} : vector<8x1xf32> -> vector<8x1xf32>
    %105 = vector.broadcast %104 : vector<8x1xf32> to vector<8x8xf32>
    %106 = arith.mulf %101, %105 : vector<8x8xf32>
    %cst_33 = arith.constant dense<0.000000e+00> : vector<8x16xf32>
    %107 = tpu.matmul %106, %91, %cst_33 {dimension_numbers = #tpu.dot_dimension_numbers<[1], [0], [0], [1], [0, 0, 1, 1], [], []>} : vector<8x8xf32>, vector<8x16xf32>, vector<8x16xf32> -> vector<8x16xf32>
    %108 = vector.extract_strided_slice %10 {offsets = [0, 80], sizes = [8, 16], strides = [1, 1]} : vector<8x128xf32> to vector<8x16xf32>
    %109 = vector.extract_strided_slice %11 {offsets = [0, 80], sizes = [8, 16], strides = [1, 1]} : vector<8x128xf32> to vector<8x16xf32>
    %110 = vector.extract_strided_slice %12 {offsets = [0, 80], sizes = [8, 16], strides = [1, 1]} : vector<8x128xf32> to vector<8x16xf32>
    %cst_34 = arith.constant dense<0.000000e+00> : vector<8x8xf32>
    %111 = tpu.matmul %108, %109, %cst_34 {dimension_numbers = #tpu.dot_dimension_numbers<[1], [1], [0], [0], [0, 0, 1, 0], [], []>} : vector<8x16xf32>, vector<8x16xf32>, vector<8x8xf32> -> vector<8x8xf32>
    %cst_35 = arith.constant 2.500000e-01 : f32
    %112 = vector.broadcast %cst_35 : f32 to vector<8x8xf32>
    %113 = arith.mulf %111, %112 : vector<8x8xf32>
    %114 = vector.broadcast %3 : vector<1x8xf32> to vector<8x8xf32>
    %115 = arith.addf %113, %114 : vector<8x8xf32>
    %cst_36 = arith.constant dense<0xFF800000> : vector<8xf32>
    %116 = vector.multi_reduction <maximumf>, %115, %cst_36 [1] : vector<8x8xf32> to vector<8xf32>
    %117 = vector.shape_cast %116 : vector<8xf32> to vector<8x1xf32>
    %118 = vector.broadcast %117 : vector<8x1xf32> to vector<8x8xf32>
    %119 = arith.subf %115, %118 : vector<8x8xf32>
    %120 = math.exp %119 : vector<8x8xf32>
    %cst_37 = arith.constant dense<0.000000e+00> : vector<8xf32>
    %121 = vector.multi_reduction <add>, %120, %cst_37 [1] : vector<8x8xf32> to vector<8xf32>
    %122 = vector.shape_cast %121 : vector<8xf32> to vector<8x1xf32>
    %123 = tpu.reciprocal %122 {approx = true} : vector<8x1xf32> -> vector<8x1xf32>
    %124 = vector.broadcast %123 : vector<8x1xf32> to vector<8x8xf32>
    %125 = arith.mulf %120, %124 : vector<8x8xf32>
    %cst_38 = arith.constant dense<0.000000e+00> : vector<8x16xf32>
    %126 = tpu.matmul %125, %110, %cst_38 {dimension_numbers = #tpu.dot_dimension_numbers<[1], [0], [0], [1], [0, 0, 1, 1], [], []>} : vector<8x8xf32>, vector<8x16xf32>, vector<8x16xf32> -> vector<8x16xf32>
    %127 = vector.extract_strided_slice %10 {offsets = [0, 96], sizes = [8, 16], strides = [1, 1]} : vector<8x128xf32> to vector<8x16xf32>
    %128 = vector.extract_strided_slice %11 {offsets = [0, 96], sizes = [8, 16], strides = [1, 1]} : vector<8x128xf32> to vector<8x16xf32>
    %129 = vector.extract_strided_slice %12 {offsets = [0, 96], sizes = [8, 16], strides = [1, 1]} : vector<8x128xf32> to vector<8x16xf32>
    %cst_39 = arith.constant dense<0.000000e+00> : vector<8x8xf32>
    %130 = tpu.matmul %127, %128, %cst_39 {dimension_numbers = #tpu.dot_dimension_numbers<[1], [1], [0], [0], [0, 0, 1, 0], [], []>} : vector<8x16xf32>, vector<8x16xf32>, vector<8x8xf32> -> vector<8x8xf32>
    %cst_40 = arith.constant 2.500000e-01 : f32
    %131 = vector.broadcast %cst_40 : f32 to vector<8x8xf32>
    %132 = arith.mulf %130, %131 : vector<8x8xf32>
    %133 = vector.broadcast %3 : vector<1x8xf32> to vector<8x8xf32>
    %134 = arith.addf %132, %133 : vector<8x8xf32>
    %cst_41 = arith.constant dense<0xFF800000> : vector<8xf32>
    %135 = vector.multi_reduction <maximumf>, %134, %cst_41 [1] : vector<8x8xf32> to vector<8xf32>
    %136 = vector.shape_cast %135 : vector<8xf32> to vector<8x1xf32>
    %137 = vector.broadcast %136 : vector<8x1xf32> to vector<8x8xf32>
    %138 = arith.subf %134, %137 : vector<8x8xf32>
    %139 = math.exp %138 : vector<8x8xf32>
    %cst_42 = arith.constant dense<0.000000e+00> : vector<8xf32>
    %140 = vector.multi_reduction <add>, %139, %cst_42 [1] : vector<8x8xf32> to vector<8xf32>
    %141 = vector.shape_cast %140 : vector<8xf32> to vector<8x1xf32>
    %142 = tpu.reciprocal %141 {approx = true} : vector<8x1xf32> -> vector<8x1xf32>
    %143 = vector.broadcast %142 : vector<8x1xf32> to vector<8x8xf32>
    %144 = arith.mulf %139, %143 : vector<8x8xf32>
    %cst_43 = arith.constant dense<0.000000e+00> : vector<8x16xf32>
    %145 = tpu.matmul %144, %129, %cst_43 {dimension_numbers = #tpu.dot_dimension_numbers<[1], [0], [0], [1], [0, 0, 1, 1], [], []>} : vector<8x8xf32>, vector<8x16xf32>, vector<8x16xf32> -> vector<8x16xf32>
    %146 = vector.extract_strided_slice %10 {offsets = [0, 112], sizes = [8, 16], strides = [1, 1]} : vector<8x128xf32> to vector<8x16xf32>
    %147 = vector.extract_strided_slice %11 {offsets = [0, 112], sizes = [8, 16], strides = [1, 1]} : vector<8x128xf32> to vector<8x16xf32>
    %148 = vector.extract_strided_slice %12 {offsets = [0, 112], sizes = [8, 16], strides = [1, 1]} : vector<8x128xf32> to vector<8x16xf32>
    %cst_44 = arith.constant dense<0.000000e+00> : vector<8x8xf32>
    %149 = tpu.matmul %146, %147, %cst_44 {dimension_numbers = #tpu.dot_dimension_numbers<[1], [1], [0], [0], [0, 0, 1, 0], [], []>} : vector<8x16xf32>, vector<8x16xf32>, vector<8x8xf32> -> vector<8x8xf32>
    %cst_45 = arith.constant 2.500000e-01 : f32
    %150 = vector.broadcast %cst_45 : f32 to vector<8x8xf32>
    %151 = arith.mulf %149, %150 : vector<8x8xf32>
    %152 = vector.broadcast %3 : vector<1x8xf32> to vector<8x8xf32>
    %153 = arith.addf %151, %152 : vector<8x8xf32>
    %cst_46 = arith.constant dense<0xFF800000> : vector<8xf32>
    %154 = vector.multi_reduction <maximumf>, %153, %cst_46 [1] : vector<8x8xf32> to vector<8xf32>
    %155 = vector.shape_cast %154 : vector<8xf32> to vector<8x1xf32>
    %156 = vector.broadcast %155 : vector<8x1xf32> to vector<8x8xf32>
    %157 = arith.subf %153, %156 : vector<8x8xf32>
    %158 = math.exp %157 : vector<8x8xf32>
    %cst_47 = arith.constant dense<0.000000e+00> : vector<8xf32>
    %159 = vector.multi_reduction <add>, %158, %cst_47 [1] : vector<8x8xf32> to vector<8xf32>
    %160 = vector.shape_cast %159 : vector<8xf32> to vector<8x1xf32>
    %161 = tpu.reciprocal %160 {approx = true} : vector<8x1xf32> -> vector<8x1xf32>
    %162 = vector.broadcast %161 : vector<8x1xf32> to vector<8x8xf32>
    %163 = arith.mulf %158, %162 : vector<8x8xf32>
    %cst_48 = arith.constant dense<0.000000e+00> : vector<8x16xf32>
    %164 = tpu.matmul %163, %148, %cst_48 {dimension_numbers = #tpu.dot_dimension_numbers<[1], [0], [0], [1], [0, 0, 1, 1], [], []>} : vector<8x8xf32>, vector<8x16xf32>, vector<8x16xf32> -> vector<8x16xf32>
    %165 = tpu.concatenate %31, %50, %69, %88, %107, %126, %145, %164 in 1 : vector<8x16xf32>, vector<8x16xf32>, vector<8x16xf32>, vector<8x16xf32>, vector<8x16xf32>, vector<8x16xf32>, vector<8x16xf32>, vector<8x16xf32> -> vector<8x128xf32>
    %166 = arith.truncf %165 : vector<8x128xf32> to vector<8x128xbf16>
    %c0_49 = arith.constant 0 : index
    %c0_50 = arith.constant 0 : index
    %167 = vector.load %arg5[%c0_49, %c0_50] : memref<128x128xbf16, #tpu.memory_space<vmem>>, vector<128x128xbf16>
    %cst_51 = arith.constant dense<0.000000e+00> : vector<8x128xf32>
    %168 = tpu.matmul %166, %167, %cst_51 {dimension_numbers = #tpu.dot_dimension_numbers<[1], [0], [0], [1], [0, 0, 1, 1], [], []>} : vector<8x128xbf16>, vector<128x128xbf16>, vector<8x128xf32> -> vector<8x128xf32>
    %c0_52 = arith.constant 0 : index
    %c0_53 = arith.constant 0 : index
    %169 = vector.load %arg6[%c0_52, %c0_53] : memref<1x128xf32, #tpu.memory_space<vmem>>, vector<1x128xf32>
    %170 = vector.broadcast %169 : vector<1x128xf32> to vector<8x128xf32>
    %171 = arith.addf %168, %170 : vector<8x128xf32>
    %172 = arith.addf %171, %1 : vector<8x128xf32>
    %cst_54 = arith.constant dense<0.000000e+00> : vector<8xf32>
    %173 = vector.multi_reduction <add>, %172, %cst_54 [1] : vector<8x128xf32> to vector<8xf32>
    %174 = vector.shape_cast %173 : vector<8xf32> to vector<8x1xf32>
    %cst_55 = arith.constant 1.280000e+02 : f32
    %175 = vector.broadcast %cst_55 : f32 to vector<8x1xf32>
    %176 = arith.divf %174, %175 : vector<8x1xf32>
    %177 = vector.broadcast %176 : vector<8x1xf32> to vector<8x128xf32>
    %178 = arith.subf %172, %177 : vector<8x128xf32>
    %179 = arith.mulf %178, %178 : vector<8x128xf32>
    %cst_56 = arith.constant dense<0.000000e+00> : vector<8xf32>
    %180 = vector.multi_reduction <add>, %179, %cst_56 [1] : vector<8x128xf32> to vector<8xf32>
    %181 = vector.shape_cast %180 : vector<8xf32> to vector<8x1xf32>
    %cst_57 = arith.constant 1.280000e+02 : f32
    %182 = vector.broadcast %cst_57 : f32 to vector<8x1xf32>
    %183 = arith.divf %181, %182 : vector<8x1xf32>
    %cst_58 = arith.constant 9.99999996E-13 : f32
    %184 = vector.broadcast %cst_58 : f32 to vector<8x1xf32>
    %185 = arith.addf %183, %184 : vector<8x1xf32>
    %186 = math.rsqrt %185 : vector<8x1xf32>
    %187 = vector.broadcast %186 : vector<8x1xf32> to vector<8x128xf32>
    %188 = arith.mulf %178, %187 : vector<8x128xf32>
    %c0_59 = arith.constant 0 : index
    %c0_60 = arith.constant 0 : index
    %189 = vector.load %arg7[%c0_59, %c0_60] : memref<1x128xf32, #tpu.memory_space<vmem>>, vector<1x128xf32>
    %190 = vector.broadcast %189 : vector<1x128xf32> to vector<8x128xf32>
    %191 = arith.mulf %188, %190 : vector<8x128xf32>
    %c0_61 = arith.constant 0 : index
    %c0_62 = arith.constant 0 : index
    %192 = vector.load %arg8[%c0_61, %c0_62] : memref<1x128xf32, #tpu.memory_space<vmem>>, vector<1x128xf32>
    %193 = vector.broadcast %192 : vector<1x128xf32> to vector<8x128xf32>
    %194 = arith.addf %191, %193 : vector<8x128xf32>
    %195 = arith.truncf %194 : vector<8x128xf32> to vector<8x128xbf16>
    %c0_63 = arith.constant 0 : index
    %c0_64 = arith.constant 0 : index
    %196 = vector.load %arg9[%c0_63, %c0_64] : memref<128x256xbf16, #tpu.memory_space<vmem>>, vector<128x256xbf16>
    %cst_65 = arith.constant dense<0.000000e+00> : vector<8x256xf32>
    %197 = tpu.matmul %195, %196, %cst_65 {dimension_numbers = #tpu.dot_dimension_numbers<[1], [0], [0], [1], [0, 0, 1, 1], [], []>} : vector<8x128xbf16>, vector<128x256xbf16>, vector<8x256xf32> -> vector<8x256xf32>
    %c0_66 = arith.constant 0 : index
    %c0_67 = arith.constant 0 : index
    %198 = vector.load %arg10[%c0_66, %c0_67] : memref<1x256xf32, #tpu.memory_space<vmem>>, vector<1x256xf32>
    %199 = vector.broadcast %198 : vector<1x256xf32> to vector<8x256xf32>
    %200 = arith.addf %197, %199 : vector<8x256xf32>
    %cst_68 = arith.constant 5.000000e-01 : f32
    %201 = vector.broadcast %cst_68 : f32 to vector<8x256xf32>
    %202 = arith.mulf %201, %200 : vector<8x256xf32>
    %cst_69 = arith.constant 0.707106769 : f32
    %203 = vector.broadcast %cst_69 : f32 to vector<8x256xf32>
    %204 = arith.mulf %200, %203 : vector<8x256xf32>
    %205 = math.erf %204 : vector<8x256xf32>
    %cst_70 = arith.constant 1.000000e+00 : f32
    %206 = vector.broadcast %cst_70 : f32 to vector<8x256xf32>
    %207 = arith.addf %206, %205 : vector<8x256xf32>
    %208 = arith.mulf %202, %207 : vector<8x256xf32>
    %209 = arith.truncf %208 : vector<8x256xf32> to vector<8x256xbf16>
    %c0_71 = arith.constant 0 : index
    %c0_72 = arith.constant 0 : index
    %210 = vector.load %arg11[%c0_71, %c0_72] : memref<256x128xbf16, #tpu.memory_space<vmem>>, vector<256x128xbf16>
    %cst_73 = arith.constant dense<0.000000e+00> : vector<8x128xf32>
    %211 = tpu.matmul %209, %210, %cst_73 {dimension_numbers = #tpu.dot_dimension_numbers<[1], [0], [0], [1], [0, 0, 1, 1], [], []>} : vector<8x256xbf16>, vector<256x128xbf16>, vector<8x128xf32> -> vector<8x128xf32>
    %c0_74 = arith.constant 0 : index
    %c0_75 = arith.constant 0 : index
    %212 = vector.load %arg12[%c0_74, %c0_75] : memref<1x128xf32, #tpu.memory_space<vmem>>, vector<1x128xf32>
    %213 = vector.broadcast %212 : vector<1x128xf32> to vector<8x128xf32>
    %214 = arith.addf %211, %213 : vector<8x128xf32>
    %215 = arith.addf %214, %194 : vector<8x128xf32>
    %cst_76 = arith.constant dense<0.000000e+00> : vector<8xf32>
    %216 = vector.multi_reduction <add>, %215, %cst_76 [1] : vector<8x128xf32> to vector<8xf32>
    %217 = vector.shape_cast %216 : vector<8xf32> to vector<8x1xf32>
    %cst_77 = arith.constant 1.280000e+02 : f32
    %218 = vector.broadcast %cst_77 : f32 to vector<8x1xf32>
    %219 = arith.divf %217, %218 : vector<8x1xf32>
    %220 = vector.broadcast %219 : vector<8x1xf32> to vector<8x128xf32>
    %221 = arith.subf %215, %220 : vector<8x128xf32>
    %222 = arith.mulf %221, %221 : vector<8x128xf32>
    %cst_78 = arith.constant dense<0.000000e+00> : vector<8xf32>
    %223 = vector.multi_reduction <add>, %222, %cst_78 [1] : vector<8x128xf32> to vector<8xf32>
    %224 = vector.shape_cast %223 : vector<8xf32> to vector<8x1xf32>
    %cst_79 = arith.constant 1.280000e+02 : f32
    %225 = vector.broadcast %cst_79 : f32 to vector<8x1xf32>
    %226 = arith.divf %224, %225 : vector<8x1xf32>
    %cst_80 = arith.constant 9.99999996E-13 : f32
    %227 = vector.broadcast %cst_80 : f32 to vector<8x1xf32>
    %228 = arith.addf %226, %227 : vector<8x1xf32>
    %229 = math.rsqrt %228 : vector<8x1xf32>
    %230 = vector.broadcast %229 : vector<8x1xf32> to vector<8x128xf32>
    %231 = arith.mulf %221, %230 : vector<8x128xf32>
    %c0_81 = arith.constant 0 : index
    %c0_82 = arith.constant 0 : index
    %232 = vector.load %arg13[%c0_81, %c0_82] : memref<1x128xf32, #tpu.memory_space<vmem>>, vector<1x128xf32>
    %233 = vector.broadcast %232 : vector<1x128xf32> to vector<8x128xf32>
    %234 = arith.mulf %231, %233 : vector<8x128xf32>
    %c0_83 = arith.constant 0 : index
    %c0_84 = arith.constant 0 : index
    %235 = vector.load %arg14[%c0_83, %c0_84] : memref<1x128xf32, #tpu.memory_space<vmem>>, vector<1x128xf32>
    %236 = vector.broadcast %235 : vector<1x128xf32> to vector<8x128xf32>
    %237 = arith.addf %234, %236 : vector<8x128xf32>
    %c0_85 = arith.constant 0 : index
    %c0_86 = arith.constant 0 : index
    %c0_87 = arith.constant 0 : index
    %238 = vector.load %arg15[%c0_85, %c0_86, %c0_87] : memref<1x8x128xf32, #tpu.memory_space<vmem>>, vector<1x8x128xf32>
    %239 = vector.shape_cast %238 : vector<1x8x128xf32> to vector<8x128xf32>
    %240 = vector.shape_cast %237 : vector<8x128xf32> to vector<1x8x128xf32>
    tpu.vector_store %arg15[%c0_85, %c0_86, %c0_87], %240 {strides = array<i32>} : memref<1x8x128xf32, #tpu.memory_space<vmem>>, vector<1x8x128xf32>,
    return
  }
  func.func @transform_0(%arg0: i32) -> (i32, i32, i32) {
    %c0_i32 = arith.constant 0 : i32
    %c0_i32_0 = arith.constant 0 : i32
    %c0_i32_1 = arith.constant 0 : i32
    return %arg0, %c0_i32, %c0_i32_0 : i32, i32, i32
  }
  func.func @transform_1(%arg0: i32) -> (i32, i32, i32) {
    %c0_i32 = arith.constant 0 : i32
    %c0_i32_0 = arith.constant 0 : i32
    %c0_i32_1 = arith.constant 0 : i32
    return %arg0, %c0_i32, %c0_i32_0 : i32, i32, i32
  }
  func.func @transform_2(%arg0: i32) -> (i32, i32) {
    %c0_i32 = arith.constant 0 : i32
    %c0_i32_0 = arith.constant 0 : i32
    %c0_i32_1 = arith.constant 0 : i32
    return %c0_i32, %c0_i32_0 : i32, i32
  }
  func.func @transform_3(%arg0: i32) -> (i32, i32) {
    %c0_i32 = arith.constant 0 : i32
    %c0_i32_0 = arith.constant 0 : i32
    %c0_i32_1 = arith.constant 0 : i32
    return %c0_i32, %c0_i32_0 : i32, i32
  }
  func.func @transform_4(%arg0: i32) -> (i32, i32) {
    %c0_i32 = arith.constant 0 : i32
    %c0_i32_0 = arith.constant 0 : i32
    %c0_i32_1 = arith.constant 0 : i32
    return %c0_i32, %c0_i32_0 : i32, i32
  }
  func.func @transform_5(%arg0: i32) -> (i32, i32) {
    %c0_i32 = arith.constant 0 : i32
    %c0_i32_0 = arith.constant 0 : i32
    %c0_i32_1 = arith.constant 0 : i32
    return %c0_i32, %c0_i32_0 : i32, i32
  }
  func.func @transform_6(%arg0: i32) -> (i32, i32) {
    %c0_i32 = arith.constant 0 : i32
    %c0_i32_0 = arith.constant 0 : i32
    %c0_i32_1 = arith.constant 0 : i32
    return %c0_i32, %c0_i32_0 : i32, i32
  }
  func.func @transform_7(%arg0: i32) -> (i32, i32) {
    %c0_i32 = arith.constant 0 : i32
    %c0_i32_0 = arith.constant 0 : i32
    %c0_i32_1 = arith.constant 0 : i32
    return %c0_i32, %c0_i32_0 : i32, i32
  }
  func.func @transform_8(%arg0: i32) -> (i32, i32) {
    %c0_i32 = arith.constant 0 : i32
    %c0_i32_0 = arith.constant 0 : i32
    %c0_i32_1 = arith.constant 0 : i32
    return %c0_i32, %c0_i32_0 : i32, i32
  }
  func.func @transform_9(%arg0: i32) -> (i32, i32) {
    %c0_i32 = arith.constant 0 : i32
    %c0_i32_0 = arith.constant 0 : i32
    %c0_i32_1 = arith.constant 0 : i32
    return %c0_i32, %c0_i32_0 : i32, i32
  }
  func.func @transform_10(%arg0: i32) -> (i32, i32) {
    %c0_i32 = arith.constant 0 : i32
    %c0_i32_0 = arith.constant 0 : i32
    %c0_i32_1 = arith.constant 0 : i32
    return %c0_i32, %c0_i32_0 : i32, i32
  }
  func.func @transform_11(%arg0: i32) -> (i32, i32) {
    %c0_i32 = arith.constant 0 : i32
    %c0_i32_0 = arith.constant 0 : i32
    %c0_i32_1 = arith.constant 0 : i32
    return %c0_i32, %c0_i32_0 : i32, i32
  }
  func.func @transform_12(%arg0: i32) -> (i32, i32) {
    %c0_i32 = arith.constant 0 : i32
    %c0_i32_0 = arith.constant 0 : i32
    %c0_i32_1 = arith.constant 0 : i32
    return %c0_i32, %c0_i32_0 : i32, i32
  }
  func.func @transform_13(%arg0: i32) -> (i32, i32) {
    %c0_i32 = arith.constant 0 : i32
    %c0_i32_0 = arith.constant 0 : i32
    %c0_i32_1 = arith.constant 0 : i32
    return %c0_i32, %c0_i32_0 : i32, i32
  }
  func.func @transform_14(%arg0: i32) -> (i32, i32, i32) {
    %c0_i32 = arith.constant 0 : i32
    %c0_i32_0 = arith.constant 0 : i32
    %c0_i32_1 = arith.constant 0 : i32
    return %arg0, %c0_i32, %c0_i32_0 : i32, i32, i32
  }
}

module attributes {stable_mosaic.version = 11 : i64} {
  func.func @_fused_layer_kernel(%arg0: i32, %arg1: memref<1x9x128xf32, #tpu.memory_space<vmem>>, %arg2: memref<1x1x9xf32, #tpu.memory_space<vmem>>, %arg3: memref<128x384xbf16, #tpu.memory_space<vmem>>, %arg4: memref<1x384xf32, #tpu.memory_space<vmem>>, %arg5: memref<128x128xbf16, #tpu.memory_space<vmem>>, %arg6: memref<1x128xf32, #tpu.memory_space<vmem>>, %arg7: memref<1x128xf32, #tpu.memory_space<vmem>>, %arg8: memref<1x128xf32, #tpu.memory_space<vmem>>, %arg9: memref<128x256xbf16, #tpu.memory_space<vmem>>, %arg10: memref<1x256xf32, #tpu.memory_space<vmem>>, %arg11: memref<256x128xbf16, #tpu.memory_space<vmem>>, %arg12: memref<1x128xf32, #tpu.memory_space<vmem>>, %arg13: memref<1x128xf32, #tpu.memory_space<vmem>>, %arg14: memref<1x128xf32, #tpu.memory_space<vmem>>, %arg15: memref<1x9x128xf32, #tpu.memory_space<vmem>>) attributes {dimension_semantics = [#tpu.dimension_semantics<parallel>], iteration_bounds = array<i64: 2>, scalar_prefetch = 0 : i64, scratch_operands = 0 : i64, tpu.core_type = #tpu.core_type<tc>, window_params = [{transform_indices = @transform_0, window_bounds = array<i64: 1, 9, 128>}, {transform_indices = @transform_1, window_bounds = array<i64: 1, 1, 9>}, {pipeline_mode = #tpu.pipeline_mode<synchronous>, transform_indices = @transform_2, window_bounds = array<i64: 128, 384>}, {pipeline_mode = #tpu.pipeline_mode<synchronous>, transform_indices = @transform_3, window_bounds = array<i64: 1, 384>}, {pipeline_mode = #tpu.pipeline_mode<synchronous>, transform_indices = @transform_4, window_bounds = array<i64: 128, 128>}, {pipeline_mode = #tpu.pipeline_mode<synchronous>, transform_indices = @transform_5, window_bounds = array<i64: 1, 128>}, {pipeline_mode = #tpu.pipeline_mode<synchronous>, transform_indices = @transform_6, window_bounds = array<i64: 1, 128>}, {pipeline_mode = #tpu.pipeline_mode<synchronous>, transform_indices = @transform_7, window_bounds = array<i64: 1, 128>}, {pipeline_mode = #tpu.pipeline_mode<synchronous>, transform_indices = @transform_8, window_bounds = array<i64: 128, 256>}, {pipeline_mode = #tpu.pipeline_mode<synchronous>, transform_indices = @transform_9, window_bounds = array<i64: 1, 256>}, {pipeline_mode = #tpu.pipeline_mode<synchronous>, transform_indices = @transform_10, window_bounds = array<i64: 256, 128>}, {pipeline_mode = #tpu.pipeline_mode<synchronous>, transform_indices = @transform_11, window_bounds = array<i64: 1, 128>}, {pipeline_mode = #tpu.pipeline_mode<synchronous>, transform_indices = @transform_12, window_bounds = array<i64: 1, 128>}, {pipeline_mode = #tpu.pipeline_mode<synchronous>, transform_indices = @transform_13, window_bounds = array<i64: 1, 128>}, {transform_indices = @transform_14, window_bounds = array<i64: 1, 9, 128>}]} {
    %c0 = arith.constant 0 : index
    %c0_0 = arith.constant 0 : index
    %c0_1 = arith.constant 0 : index
    %0 = vector.load %arg1[%c0, %c0_0, %c0_1] : memref<1x9x128xf32, #tpu.memory_space<vmem>>, vector<1x9x128xf32>
    %1 = vector.shape_cast %0 : vector<1x9x128xf32> to vector<9x128xf32>
    %c0_2 = arith.constant 0 : index
    %c0_3 = arith.constant 0 : index
    %c0_4 = arith.constant 0 : index
    %2 = vector.load %arg2[%c0_2, %c0_3, %c0_4] : memref<1x1x9xf32, #tpu.memory_space<vmem>>, vector<1x1x9xf32>
    %3 = vector.shape_cast %2 : vector<1x1x9xf32> to vector<1x9xf32>
    %4 = arith.truncf %1 : vector<9x128xf32> to vector<9x128xbf16>
    %c0_5 = arith.constant 0 : index
    %c0_6 = arith.constant 0 : index
    %5 = vector.load %arg3[%c0_5, %c0_6] : memref<128x384xbf16, #tpu.memory_space<vmem>>, vector<128x384xbf16>
    %cst = arith.constant dense<0.000000e+00> : vector<9x384xf32>
    %6 = tpu.matmul %4, %5, %cst {dimension_numbers = #tpu.dot_dimension_numbers<[1], [0], [0], [1], [0, 0, 1, 1], [], []>} : vector<9x128xbf16>, vector<128x384xbf16>, vector<9x384xf32> -> vector<9x384xf32>
    %c0_7 = arith.constant 0 : index
    %c0_8 = arith.constant 0 : index
    %7 = vector.load %arg4[%c0_7, %c0_8] : memref<1x384xf32, #tpu.memory_space<vmem>>, vector<1x384xf32>
    %8 = vector.broadcast %7 : vector<1x384xf32> to vector<9x384xf32>
    %9 = arith.addf %6, %8 : vector<9x384xf32>
    %10 = vector.extract_strided_slice %9 {offsets = [0, 0], sizes = [9, 128], strides = [1, 1]} : vector<9x384xf32> to vector<9x128xf32>
    %11 = vector.extract_strided_slice %9 {offsets = [0, 128], sizes = [9, 128], strides = [1, 1]} : vector<9x384xf32> to vector<9x128xf32>
    %12 = vector.extract_strided_slice %9 {offsets = [0, 256], sizes = [9, 128], strides = [1, 1]} : vector<9x384xf32> to vector<9x128xf32>
    %13 = vector.extract_strided_slice %10 {offsets = [0, 0], sizes = [9, 16], strides = [1, 1]} : vector<9x128xf32> to vector<9x16xf32>
    %14 = vector.extract_strided_slice %11 {offsets = [0, 0], sizes = [9, 16], strides = [1, 1]} : vector<9x128xf32> to vector<9x16xf32>
    %15 = vector.extract_strided_slice %12 {offsets = [0, 0], sizes = [9, 16], strides = [1, 1]} : vector<9x128xf32> to vector<9x16xf32>
    %cst_9 = arith.constant dense<0.000000e+00> : vector<9x9xf32>
    %16 = tpu.matmul %13, %14, %cst_9 {dimension_numbers = #tpu.dot_dimension_numbers<[1], [1], [0], [0], [0, 0, 1, 0], [], []>} : vector<9x16xf32>, vector<9x16xf32>, vector<9x9xf32> -> vector<9x9xf32>
    %cst_10 = arith.constant 2.500000e-01 : f32
    %17 = vector.broadcast %cst_10 : f32 to vector<9x9xf32>
    %18 = arith.mulf %16, %17 : vector<9x9xf32>
    %19 = vector.broadcast %3 : vector<1x9xf32> to vector<9x9xf32>
    %20 = arith.addf %18, %19 : vector<9x9xf32>
    %cst_11 = arith.constant dense<0xFF800000> : vector<9xf32>
    %21 = vector.multi_reduction <maximumf>, %20, %cst_11 [1] : vector<9x9xf32> to vector<9xf32>
    %22 = vector.shape_cast %21 : vector<9xf32> to vector<9x1xf32>
    %23 = vector.broadcast %22 : vector<9x1xf32> to vector<9x9xf32>
    %24 = arith.subf %20, %23 : vector<9x9xf32>
    %25 = math.exp %24 : vector<9x9xf32>
    %cst_12 = arith.constant dense<0.000000e+00> : vector<9xf32>
    %26 = vector.multi_reduction <add>, %25, %cst_12 [1] : vector<9x9xf32> to vector<9xf32>
    %27 = vector.shape_cast %26 : vector<9xf32> to vector<9x1xf32>
    %28 = tpu.reciprocal %27 {approx = true} : vector<9x1xf32> -> vector<9x1xf32>
    %29 = vector.broadcast %28 : vector<9x1xf32> to vector<9x9xf32>
    %30 = arith.mulf %25, %29 : vector<9x9xf32>
    %cst_13 = arith.constant dense<0.000000e+00> : vector<9x16xf32>
    %31 = tpu.matmul %30, %15, %cst_13 {dimension_numbers = #tpu.dot_dimension_numbers<[1], [0], [0], [1], [0, 0, 1, 1], [], []>} : vector<9x9xf32>, vector<9x16xf32>, vector<9x16xf32> -> vector<9x16xf32>
    %32 = vector.extract_strided_slice %10 {offsets = [0, 16], sizes = [9, 16], strides = [1, 1]} : vector<9x128xf32> to vector<9x16xf32>
    %33 = vector.extract_strided_slice %11 {offsets = [0, 16], sizes = [9, 16], strides = [1, 1]} : vector<9x128xf32> to vector<9x16xf32>
    %34 = vector.extract_strided_slice %12 {offsets = [0, 16], sizes = [9, 16], strides = [1, 1]} : vector<9x128xf32> to vector<9x16xf32>
    %cst_14 = arith.constant dense<0.000000e+00> : vector<9x9xf32>
    %35 = tpu.matmul %32, %33, %cst_14 {dimension_numbers = #tpu.dot_dimension_numbers<[1], [1], [0], [0], [0, 0, 1, 0], [], []>} : vector<9x16xf32>, vector<9x16xf32>, vector<9x9xf32> -> vector<9x9xf32>
    %cst_15 = arith.constant 2.500000e-01 : f32
    %36 = vector.broadcast %cst_15 : f32 to vector<9x9xf32>
    %37 = arith.mulf %35, %36 : vector<9x9xf32>
    %38 = vector.broadcast %3 : vector<1x9xf32> to vector<9x9xf32>
    %39 = arith.addf %37, %38 : vector<9x9xf32>
    %cst_16 = arith.constant dense<0xFF800000> : vector<9xf32>
    %40 = vector.multi_reduction <maximumf>, %39, %cst_16 [1] : vector<9x9xf32> to vector<9xf32>
    %41 = vector.shape_cast %40 : vector<9xf32> to vector<9x1xf32>
    %42 = vector.broadcast %41 : vector<9x1xf32> to vector<9x9xf32>
    %43 = arith.subf %39, %42 : vector<9x9xf32>
    %44 = math.exp %43 : vector<9x9xf32>
    %cst_17 = arith.constant dense<0.000000e+00> : vector<9xf32>
    %45 = vector.multi_reduction <add>, %44, %cst_17 [1] : vector<9x9xf32> to vector<9xf32>
    %46 = vector.shape_cast %45 : vector<9xf32> to vector<9x1xf32>
    %47 = tpu.reciprocal %46 {approx = true} : vector<9x1xf32> -> vector<9x1xf32>
    %48 = vector.broadcast %47 : vector<9x1xf32> to vector<9x9xf32>
    %49 = arith.mulf %44, %48 : vector<9x9xf32>
    %cst_18 = arith.constant dense<0.000000e+00> : vector<9x16xf32>
    %50 = tpu.matmul %49, %34, %cst_18 {dimension_numbers = #tpu.dot_dimension_numbers<[1], [0], [0], [1], [0, 0, 1, 1], [], []>} : vector<9x9xf32>, vector<9x16xf32>, vector<9x16xf32> -> vector<9x16xf32>
    %51 = vector.extract_strided_slice %10 {offsets = [0, 32], sizes = [9, 16], strides = [1, 1]} : vector<9x128xf32> to vector<9x16xf32>
    %52 = vector.extract_strided_slice %11 {offsets = [0, 32], sizes = [9, 16], strides = [1, 1]} : vector<9x128xf32> to vector<9x16xf32>
    %53 = vector.extract_strided_slice %12 {offsets = [0, 32], sizes = [9, 16], strides = [1, 1]} : vector<9x128xf32> to vector<9x16xf32>
    %cst_19 = arith.constant dense<0.000000e+00> : vector<9x9xf32>
    %54 = tpu.matmul %51, %52, %cst_19 {dimension_numbers = #tpu.dot_dimension_numbers<[1], [1], [0], [0], [0, 0, 1, 0], [], []>} : vector<9x16xf32>, vector<9x16xf32>, vector<9x9xf32> -> vector<9x9xf32>
    %cst_20 = arith.constant 2.500000e-01 : f32
    %55 = vector.broadcast %cst_20 : f32 to vector<9x9xf32>
    %56 = arith.mulf %54, %55 : vector<9x9xf32>
    %57 = vector.broadcast %3 : vector<1x9xf32> to vector<9x9xf32>
    %58 = arith.addf %56, %57 : vector<9x9xf32>
    %cst_21 = arith.constant dense<0xFF800000> : vector<9xf32>
    %59 = vector.multi_reduction <maximumf>, %58, %cst_21 [1] : vector<9x9xf32> to vector<9xf32>
    %60 = vector.shape_cast %59 : vector<9xf32> to vector<9x1xf32>
    %61 = vector.broadcast %60 : vector<9x1xf32> to vector<9x9xf32>
    %62 = arith.subf %58, %61 : vector<9x9xf32>
    %63 = math.exp %62 : vector<9x9xf32>
    %cst_22 = arith.constant dense<0.000000e+00> : vector<9xf32>
    %64 = vector.multi_reduction <add>, %63, %cst_22 [1] : vector<9x9xf32> to vector<9xf32>
    %65 = vector.shape_cast %64 : vector<9xf32> to vector<9x1xf32>
    %66 = tpu.reciprocal %65 {approx = true} : vector<9x1xf32> -> vector<9x1xf32>
    %67 = vector.broadcast %66 : vector<9x1xf32> to vector<9x9xf32>
    %68 = arith.mulf %63, %67 : vector<9x9xf32>
    %cst_23 = arith.constant dense<0.000000e+00> : vector<9x16xf32>
    %69 = tpu.matmul %68, %53, %cst_23 {dimension_numbers = #tpu.dot_dimension_numbers<[1], [0], [0], [1], [0, 0, 1, 1], [], []>} : vector<9x9xf32>, vector<9x16xf32>, vector<9x16xf32> -> vector<9x16xf32>
    %70 = vector.extract_strided_slice %10 {offsets = [0, 48], sizes = [9, 16], strides = [1, 1]} : vector<9x128xf32> to vector<9x16xf32>
    %71 = vector.extract_strided_slice %11 {offsets = [0, 48], sizes = [9, 16], strides = [1, 1]} : vector<9x128xf32> to vector<9x16xf32>
    %72 = vector.extract_strided_slice %12 {offsets = [0, 48], sizes = [9, 16], strides = [1, 1]} : vector<9x128xf32> to vector<9x16xf32>
    %cst_24 = arith.constant dense<0.000000e+00> : vector<9x9xf32>
    %73 = tpu.matmul %70, %71, %cst_24 {dimension_numbers = #tpu.dot_dimension_numbers<[1], [1], [0], [0], [0, 0, 1, 0], [], []>} : vector<9x16xf32>, vector<9x16xf32>, vector<9x9xf32> -> vector<9x9xf32>
    %cst_25 = arith.constant 2.500000e-01 : f32
    %74 = vector.broadcast %cst_25 : f32 to vector<9x9xf32>
    %75 = arith.mulf %73, %74 : vector<9x9xf32>
    %76 = vector.broadcast %3 : vector<1x9xf32> to vector<9x9xf32>
    %77 = arith.addf %75, %76 : vector<9x9xf32>
    %cst_26 = arith.constant dense<0xFF800000> : vector<9xf32>
    %78 = vector.multi_reduction <maximumf>, %77, %cst_26 [1] : vector<9x9xf32> to vector<9xf32>
    %79 = vector.shape_cast %78 : vector<9xf32> to vector<9x1xf32>
    %80 = vector.broadcast %79 : vector<9x1xf32> to vector<9x9xf32>
    %81 = arith.subf %77, %80 : vector<9x9xf32>
    %82 = math.exp %81 : vector<9x9xf32>
    %cst_27 = arith.constant dense<0.000000e+00> : vector<9xf32>
    %83 = vector.multi_reduction <add>, %82, %cst_27 [1] : vector<9x9xf32> to vector<9xf32>
    %84 = vector.shape_cast %83 : vector<9xf32> to vector<9x1xf32>
    %85 = tpu.reciprocal %84 {approx = true} : vector<9x1xf32> -> vector<9x1xf32>
    %86 = vector.broadcast %85 : vector<9x1xf32> to vector<9x9xf32>
    %87 = arith.mulf %82, %86 : vector<9x9xf32>
    %cst_28 = arith.constant dense<0.000000e+00> : vector<9x16xf32>
    %88 = tpu.matmul %87, %72, %cst_28 {dimension_numbers = #tpu.dot_dimension_numbers<[1], [0], [0], [1], [0, 0, 1, 1], [], []>} : vector<9x9xf32>, vector<9x16xf32>, vector<9x16xf32> -> vector<9x16xf32>
    %89 = vector.extract_strided_slice %10 {offsets = [0, 64], sizes = [9, 16], strides = [1, 1]} : vector<9x128xf32> to vector<9x16xf32>
    %90 = vector.extract_strided_slice %11 {offsets = [0, 64], sizes = [9, 16], strides = [1, 1]} : vector<9x128xf32> to vector<9x16xf32>
    %91 = vector.extract_strided_slice %12 {offsets = [0, 64], sizes = [9, 16], strides = [1, 1]} : vector<9x128xf32> to vector<9x16xf32>
    %cst_29 = arith.constant dense<0.000000e+00> : vector<9x9xf32>
    %92 = tpu.matmul %89, %90, %cst_29 {dimension_numbers = #tpu.dot_dimension_numbers<[1], [1], [0], [0], [0, 0, 1, 0], [], []>} : vector<9x16xf32>, vector<9x16xf32>, vector<9x9xf32> -> vector<9x9xf32>
    %cst_30 = arith.constant 2.500000e-01 : f32
    %93 = vector.broadcast %cst_30 : f32 to vector<9x9xf32>
    %94 = arith.mulf %92, %93 : vector<9x9xf32>
    %95 = vector.broadcast %3 : vector<1x9xf32> to vector<9x9xf32>
    %96 = arith.addf %94, %95 : vector<9x9xf32>
    %cst_31 = arith.constant dense<0xFF800000> : vector<9xf32>
    %97 = vector.multi_reduction <maximumf>, %96, %cst_31 [1] : vector<9x9xf32> to vector<9xf32>
    %98 = vector.shape_cast %97 : vector<9xf32> to vector<9x1xf32>
    %99 = vector.broadcast %98 : vector<9x1xf32> to vector<9x9xf32>
    %100 = arith.subf %96, %99 : vector<9x9xf32>
    %101 = math.exp %100 : vector<9x9xf32>
    %cst_32 = arith.constant dense<0.000000e+00> : vector<9xf32>
    %102 = vector.multi_reduction <add>, %101, %cst_32 [1] : vector<9x9xf32> to vector<9xf32>
    %103 = vector.shape_cast %102 : vector<9xf32> to vector<9x1xf32>
    %104 = tpu.reciprocal %103 {approx = true} : vector<9x1xf32> -> vector<9x1xf32>
    %105 = vector.broadcast %104 : vector<9x1xf32> to vector<9x9xf32>
    %106 = arith.mulf %101, %105 : vector<9x9xf32>
    %cst_33 = arith.constant dense<0.000000e+00> : vector<9x16xf32>
    %107 = tpu.matmul %106, %91, %cst_33 {dimension_numbers = #tpu.dot_dimension_numbers<[1], [0], [0], [1], [0, 0, 1, 1], [], []>} : vector<9x9xf32>, vector<9x16xf32>, vector<9x16xf32> -> vector<9x16xf32>
    %108 = vector.extract_strided_slice %10 {offsets = [0, 80], sizes = [9, 16], strides = [1, 1]} : vector<9x128xf32> to vector<9x16xf32>
    %109 = vector.extract_strided_slice %11 {offsets = [0, 80], sizes = [9, 16], strides = [1, 1]} : vector<9x128xf32> to vector<9x16xf32>
    %110 = vector.extract_strided_slice %12 {offsets = [0, 80], sizes = [9, 16], strides = [1, 1]} : vector<9x128xf32> to vector<9x16xf32>
    %cst_34 = arith.constant dense<0.000000e+00> : vector<9x9xf32>
    %111 = tpu.matmul %108, %109, %cst_34 {dimension_numbers = #tpu.dot_dimension_numbers<[1], [1], [0], [0], [0, 0, 1, 0], [], []>} : vector<9x16xf32>, vector<9x16xf32>, vector<9x9xf32> -> vector<9x9xf32>
    %cst_35 = arith.constant 2.500000e-01 : f32
    %112 = vector.broadcast %cst_35 : f32 to vector<9x9xf32>
    %113 = arith.mulf %111, %112 : vector<9x9xf32>
    %114 = vector.broadcast %3 : vector<1x9xf32> to vector<9x9xf32>
    %115 = arith.addf %113, %114 : vector<9x9xf32>
    %cst_36 = arith.constant dense<0xFF800000> : vector<9xf32>
    %116 = vector.multi_reduction <maximumf>, %115, %cst_36 [1] : vector<9x9xf32> to vector<9xf32>
    %117 = vector.shape_cast %116 : vector<9xf32> to vector<9x1xf32>
    %118 = vector.broadcast %117 : vector<9x1xf32> to vector<9x9xf32>
    %119 = arith.subf %115, %118 : vector<9x9xf32>
    %120 = math.exp %119 : vector<9x9xf32>
    %cst_37 = arith.constant dense<0.000000e+00> : vector<9xf32>
    %121 = vector.multi_reduction <add>, %120, %cst_37 [1] : vector<9x9xf32> to vector<9xf32>
    %122 = vector.shape_cast %121 : vector<9xf32> to vector<9x1xf32>
    %123 = tpu.reciprocal %122 {approx = true} : vector<9x1xf32> -> vector<9x1xf32>
    %124 = vector.broadcast %123 : vector<9x1xf32> to vector<9x9xf32>
    %125 = arith.mulf %120, %124 : vector<9x9xf32>
    %cst_38 = arith.constant dense<0.000000e+00> : vector<9x16xf32>
    %126 = tpu.matmul %125, %110, %cst_38 {dimension_numbers = #tpu.dot_dimension_numbers<[1], [0], [0], [1], [0, 0, 1, 1], [], []>} : vector<9x9xf32>, vector<9x16xf32>, vector<9x16xf32> -> vector<9x16xf32>
    %127 = vector.extract_strided_slice %10 {offsets = [0, 96], sizes = [9, 16], strides = [1, 1]} : vector<9x128xf32> to vector<9x16xf32>
    %128 = vector.extract_strided_slice %11 {offsets = [0, 96], sizes = [9, 16], strides = [1, 1]} : vector<9x128xf32> to vector<9x16xf32>
    %129 = vector.extract_strided_slice %12 {offsets = [0, 96], sizes = [9, 16], strides = [1, 1]} : vector<9x128xf32> to vector<9x16xf32>
    %cst_39 = arith.constant dense<0.000000e+00> : vector<9x9xf32>
    %130 = tpu.matmul %127, %128, %cst_39 {dimension_numbers = #tpu.dot_dimension_numbers<[1], [1], [0], [0], [0, 0, 1, 0], [], []>} : vector<9x16xf32>, vector<9x16xf32>, vector<9x9xf32> -> vector<9x9xf32>
    %cst_40 = arith.constant 2.500000e-01 : f32
    %131 = vector.broadcast %cst_40 : f32 to vector<9x9xf32>
    %132 = arith.mulf %130, %131 : vector<9x9xf32>
    %133 = vector.broadcast %3 : vector<1x9xf32> to vector<9x9xf32>
    %134 = arith.addf %132, %133 : vector<9x9xf32>
    %cst_41 = arith.constant dense<0xFF800000> : vector<9xf32>
    %135 = vector.multi_reduction <maximumf>, %134, %cst_41 [1] : vector<9x9xf32> to vector<9xf32>
    %136 = vector.shape_cast %135 : vector<9xf32> to vector<9x1xf32>
    %137 = vector.broadcast %136 : vector<9x1xf32> to vector<9x9xf32>
    %138 = arith.subf %134, %137 : vector<9x9xf32>
    %139 = math.exp %138 : vector<9x9xf32>
    %cst_42 = arith.constant dense<0.000000e+00> : vector<9xf32>
    %140 = vector.multi_reduction <add>, %139, %cst_42 [1] : vector<9x9xf32> to vector<9xf32>
    %141 = vector.shape_cast %140 : vector<9xf32> to vector<9x1xf32>
    %142 = tpu.reciprocal %141 {approx = true} : vector<9x1xf32> -> vector<9x1xf32>
    %143 = vector.broadcast %142 : vector<9x1xf32> to vector<9x9xf32>
    %144 = arith.mulf %139, %143 : vector<9x9xf32>
    %cst_43 = arith.constant dense<0.000000e+00> : vector<9x16xf32>
    %145 = tpu.matmul %144, %129, %cst_43 {dimension_numbers = #tpu.dot_dimension_numbers<[1], [0], [0], [1], [0, 0, 1, 1], [], []>} : vector<9x9xf32>, vector<9x16xf32>, vector<9x16xf32> -> vector<9x16xf32>
    %146 = vector.extract_strided_slice %10 {offsets = [0, 112], sizes = [9, 16], strides = [1, 1]} : vector<9x128xf32> to vector<9x16xf32>
    %147 = vector.extract_strided_slice %11 {offsets = [0, 112], sizes = [9, 16], strides = [1, 1]} : vector<9x128xf32> to vector<9x16xf32>
    %148 = vector.extract_strided_slice %12 {offsets = [0, 112], sizes = [9, 16], strides = [1, 1]} : vector<9x128xf32> to vector<9x16xf32>
    %cst_44 = arith.constant dense<0.000000e+00> : vector<9x9xf32>
    %149 = tpu.matmul %146, %147, %cst_44 {dimension_numbers = #tpu.dot_dimension_numbers<[1], [1], [0], [0], [0, 0, 1, 0], [], []>} : vector<9x16xf32>, vector<9x16xf32>, vector<9x9xf32> -> vector<9x9xf32>
    %cst_45 = arith.constant 2.500000e-01 : f32
    %150 = vector.broadcast %cst_45 : f32 to vector<9x9xf32>
    %151 = arith.mulf %149, %150 : vector<9x9xf32>
    %152 = vector.broadcast %3 : vector<1x9xf32> to vector<9x9xf32>
    %153 = arith.addf %151, %152 : vector<9x9xf32>
    %cst_46 = arith.constant dense<0xFF800000> : vector<9xf32>
    %154 = vector.multi_reduction <maximumf>, %153, %cst_46 [1] : vector<9x9xf32> to vector<9xf32>
    %155 = vector.shape_cast %154 : vector<9xf32> to vector<9x1xf32>
    %156 = vector.broadcast %155 : vector<9x1xf32> to vector<9x9xf32>
    %157 = arith.subf %153, %156 : vector<9x9xf32>
    %158 = math.exp %157 : vector<9x9xf32>
    %cst_47 = arith.constant dense<0.000000e+00> : vector<9xf32>
    %159 = vector.multi_reduction <add>, %158, %cst_47 [1] : vector<9x9xf32> to vector<9xf32>
    %160 = vector.shape_cast %159 : vector<9xf32> to vector<9x1xf32>
    %161 = tpu.reciprocal %160 {approx = true} : vector<9x1xf32> -> vector<9x1xf32>
    %162 = vector.broadcast %161 : vector<9x1xf32> to vector<9x9xf32>
    %163 = arith.mulf %158, %162 : vector<9x9xf32>
    %cst_48 = arith.constant dense<0.000000e+00> : vector<9x16xf32>
    %164 = tpu.matmul %163, %148, %cst_48 {dimension_numbers = #tpu.dot_dimension_numbers<[1], [0], [0], [1], [0, 0, 1, 1], [], []>} : vector<9x9xf32>, vector<9x16xf32>, vector<9x16xf32> -> vector<9x16xf32>
    %165 = tpu.concatenate %31, %50, %69, %88, %107, %126, %145, %164 in 1 : vector<9x16xf32>, vector<9x16xf32>, vector<9x16xf32>, vector<9x16xf32>, vector<9x16xf32>, vector<9x16xf32>, vector<9x16xf32>, vector<9x16xf32> -> vector<9x128xf32>
    %166 = arith.truncf %165 : vector<9x128xf32> to vector<9x128xbf16>
    %c0_49 = arith.constant 0 : index
    %c0_50 = arith.constant 0 : index
    %167 = vector.load %arg5[%c0_49, %c0_50] : memref<128x128xbf16, #tpu.memory_space<vmem>>, vector<128x128xbf16>
    %cst_51 = arith.constant dense<0.000000e+00> : vector<9x128xf32>
    %168 = tpu.matmul %166, %167, %cst_51 {dimension_numbers = #tpu.dot_dimension_numbers<[1], [0], [0], [1], [0, 0, 1, 1], [], []>} : vector<9x128xbf16>, vector<128x128xbf16>, vector<9x128xf32> -> vector<9x128xf32>
    %c0_52 = arith.constant 0 : index
    %c0_53 = arith.constant 0 : index
    %169 = vector.load %arg6[%c0_52, %c0_53] : memref<1x128xf32, #tpu.memory_space<vmem>>, vector<1x128xf32>
    %170 = vector.broadcast %169 : vector<1x128xf32> to vector<9x128xf32>
    %171 = arith.addf %168, %170 : vector<9x128xf32>
    %172 = arith.addf %171, %1 : vector<9x128xf32>
    %cst_54 = arith.constant dense<0.000000e+00> : vector<9xf32>
    %173 = vector.multi_reduction <add>, %172, %cst_54 [1] : vector<9x128xf32> to vector<9xf32>
    %174 = vector.shape_cast %173 : vector<9xf32> to vector<9x1xf32>
    %cst_55 = arith.constant 1.280000e+02 : f32
    %175 = vector.broadcast %cst_55 : f32 to vector<9x1xf32>
    %176 = arith.divf %174, %175 : vector<9x1xf32>
    %177 = vector.broadcast %176 : vector<9x1xf32> to vector<9x128xf32>
    %178 = arith.subf %172, %177 : vector<9x128xf32>
    %179 = arith.mulf %178, %178 : vector<9x128xf32>
    %cst_56 = arith.constant dense<0.000000e+00> : vector<9xf32>
    %180 = vector.multi_reduction <add>, %179, %cst_56 [1] : vector<9x128xf32> to vector<9xf32>
    %181 = vector.shape_cast %180 : vector<9xf32> to vector<9x1xf32>
    %cst_57 = arith.constant 1.280000e+02 : f32
    %182 = vector.broadcast %cst_57 : f32 to vector<9x1xf32>
    %183 = arith.divf %181, %182 : vector<9x1xf32>
    %cst_58 = arith.constant 9.99999974E-6 : f32
    %184 = vector.broadcast %cst_58 : f32 to vector<9x1xf32>
    %185 = arith.addf %183, %184 : vector<9x1xf32>
    %186 = math.rsqrt %185 : vector<9x1xf32>
    %187 = vector.broadcast %186 : vector<9x1xf32> to vector<9x128xf32>
    %188 = arith.mulf %178, %187 : vector<9x128xf32>
    %c0_59 = arith.constant 0 : index
    %c0_60 = arith.constant 0 : index
    %189 = vector.load %arg7[%c0_59, %c0_60] : memref<1x128xf32, #tpu.memory_space<vmem>>, vector<1x128xf32>
    %190 = vector.broadcast %189 : vector<1x128xf32> to vector<9x128xf32>
    %191 = arith.mulf %188, %190 : vector<9x128xf32>
    %c0_61 = arith.constant 0 : index
    %c0_62 = arith.constant 0 : index
    %192 = vector.load %arg8[%c0_61, %c0_62] : memref<1x128xf32, #tpu.memory_space<vmem>>, vector<1x128xf32>
    %193 = vector.broadcast %192 : vector<1x128xf32> to vector<9x128xf32>
    %194 = arith.addf %191, %193 : vector<9x128xf32>
    %195 = arith.truncf %194 : vector<9x128xf32> to vector<9x128xbf16>
    %c0_63 = arith.constant 0 : index
    %c0_64 = arith.constant 0 : index
    %196 = vector.load %arg9[%c0_63, %c0_64] : memref<128x256xbf16, #tpu.memory_space<vmem>>, vector<128x256xbf16>
    %cst_65 = arith.constant dense<0.000000e+00> : vector<9x256xf32>
    %197 = tpu.matmul %195, %196, %cst_65 {dimension_numbers = #tpu.dot_dimension_numbers<[1], [0], [0], [1], [0, 0, 1, 1], [], []>} : vector<9x128xbf16>, vector<128x256xbf16>, vector<9x256xf32> -> vector<9x256xf32>
    %c0_66 = arith.constant 0 : index
    %c0_67 = arith.constant 0 : index
    %198 = vector.load %arg10[%c0_66, %c0_67] : memref<1x256xf32, #tpu.memory_space<vmem>>, vector<1x256xf32>
    %199 = vector.broadcast %198 : vector<1x256xf32> to vector<9x256xf32>
    %200 = arith.addf %197, %199 : vector<9x256xf32>
    %cst_68 = arith.constant 0.000000e+00 : f32
    %201 = vector.broadcast %cst_68 : f32 to vector<9x256xf32>
    %202 = arith.maximumf %200, %201 : vector<9x256xf32>
    %203 = arith.truncf %202 : vector<9x256xf32> to vector<9x256xbf16>
    %c0_69 = arith.constant 0 : index
    %c0_70 = arith.constant 0 : index
    %204 = vector.load %arg11[%c0_69, %c0_70] : memref<256x128xbf16, #tpu.memory_space<vmem>>, vector<256x128xbf16>
    %cst_71 = arith.constant dense<0.000000e+00> : vector<9x128xf32>
    %205 = tpu.matmul %203, %204, %cst_71 {dimension_numbers = #tpu.dot_dimension_numbers<[1], [0], [0], [1], [0, 0, 1, 1], [], []>} : vector<9x256xbf16>, vector<256x128xbf16>, vector<9x128xf32> -> vector<9x128xf32>
    %c0_72 = arith.constant 0 : index
    %c0_73 = arith.constant 0 : index
    %206 = vector.load %arg12[%c0_72, %c0_73] : memref<1x128xf32, #tpu.memory_space<vmem>>, vector<1x128xf32>
    %207 = vector.broadcast %206 : vector<1x128xf32> to vector<9x128xf32>
    %208 = arith.addf %205, %207 : vector<9x128xf32>
    %209 = arith.addf %208, %194 : vector<9x128xf32>
    %cst_74 = arith.constant dense<0.000000e+00> : vector<9xf32>
    %210 = vector.multi_reduction <add>, %209, %cst_74 [1] : vector<9x128xf32> to vector<9xf32>
    %211 = vector.shape_cast %210 : vector<9xf32> to vector<9x1xf32>
    %cst_75 = arith.constant 1.280000e+02 : f32
    %212 = vector.broadcast %cst_75 : f32 to vector<9x1xf32>
    %213 = arith.divf %211, %212 : vector<9x1xf32>
    %214 = vector.broadcast %213 : vector<9x1xf32> to vector<9x128xf32>
    %215 = arith.subf %209, %214 : vector<9x128xf32>
    %216 = arith.mulf %215, %215 : vector<9x128xf32>
    %cst_76 = arith.constant dense<0.000000e+00> : vector<9xf32>
    %217 = vector.multi_reduction <add>, %216, %cst_76 [1] : vector<9x128xf32> to vector<9xf32>
    %218 = vector.shape_cast %217 : vector<9xf32> to vector<9x1xf32>
    %cst_77 = arith.constant 1.280000e+02 : f32
    %219 = vector.broadcast %cst_77 : f32 to vector<9x1xf32>
    %220 = arith.divf %218, %219 : vector<9x1xf32>
    %cst_78 = arith.constant 9.99999974E-6 : f32
    %221 = vector.broadcast %cst_78 : f32 to vector<9x1xf32>
    %222 = arith.addf %220, %221 : vector<9x1xf32>
    %223 = math.rsqrt %222 : vector<9x1xf32>
    %224 = vector.broadcast %223 : vector<9x1xf32> to vector<9x128xf32>
    %225 = arith.mulf %215, %224 : vector<9x128xf32>
    %c0_79 = arith.constant 0 : index
    %c0_80 = arith.constant 0 : index
    %226 = vector.load %arg13[%c0_79, %c0_80] : memref<1x128xf32, #tpu.memory_space<vmem>>, vector<1x128xf32>
    %227 = vector.broadcast %226 : vector<1x128xf32> to vector<9x128xf32>
    %228 = arith.mulf %225, %227 : vector<9x128xf32>
    %c0_81 = arith.constant 0 : index
    %c0_82 = arith.constant 0 : index
    %229 = vector.load %arg14[%c0_81, %c0_82] : memref<1x128xf32, #tpu.memory_space<vmem>>, vector<1x128xf32>
    %230 = vector.broadcast %229 : vector<1x128xf32> to vector<9x128xf32>
    %231 = arith.addf %228, %230 : vector<9x128xf32>
    %c0_83 = arith.constant 0 : index
    %c0_84 = arith.constant 0 : index
    %c0_85 = arith.constant 0 : index
    %232 = vector.load %arg15[%c0_83, %c0_84, %c0_85] : memref<1x9x128xf32, #tpu.memory_space<vmem>>, vector<1x9x128xf32>
    %233 = vector.shape_cast %232 : vector<1x9x128xf32> to vector<9x128xf32>
    %234 = vector.shape_cast %231 : vector<9x128xf32> to vector<1x9x128xf32>
    tpu.vector_store %arg15[%c0_83, %c0_84, %c0_85], %234 {strides = array<i32>} : memref<1x9x128xf32, #tpu.memory_space<vmem>>, vector<1x9x128xf32>,
    return
  }
  func.func @transform_0(%arg0: i32) -> (i32, i32, i32) {
    %c0_i32 = arith.constant 0 : i32
    %c0_i32_0 = arith.constant 0 : i32
    %c0_i32_1 = arith.constant 0 : i32
    return %arg0, %c0_i32, %c0_i32_0 : i32, i32, i32
  }
  func.func @transform_1(%arg0: i32) -> (i32, i32, i32) {
    %c0_i32 = arith.constant 0 : i32
    %c0_i32_0 = arith.constant 0 : i32
    %c0_i32_1 = arith.constant 0 : i32
    return %arg0, %c0_i32, %c0_i32_0 : i32, i32, i32
  }
  func.func @transform_2(%arg0: i32) -> (i32, i32) {
    %c0_i32 = arith.constant 0 : i32
    %c0_i32_0 = arith.constant 0 : i32
    %c0_i32_1 = arith.constant 0 : i32
    return %c0_i32, %c0_i32_0 : i32, i32
  }
  func.func @transform_3(%arg0: i32) -> (i32, i32) {
    %c0_i32 = arith.constant 0 : i32
    %c0_i32_0 = arith.constant 0 : i32
    %c0_i32_1 = arith.constant 0 : i32
    return %c0_i32, %c0_i32_0 : i32, i32
  }
  func.func @transform_4(%arg0: i32) -> (i32, i32) {
    %c0_i32 = arith.constant 0 : i32
    %c0_i32_0 = arith.constant 0 : i32
    %c0_i32_1 = arith.constant 0 : i32
    return %c0_i32, %c0_i32_0 : i32, i32
  }
  func.func @transform_5(%arg0: i32) -> (i32, i32) {
    %c0_i32 = arith.constant 0 : i32
    %c0_i32_0 = arith.constant 0 : i32
    %c0_i32_1 = arith.constant 0 : i32
    return %c0_i32, %c0_i32_0 : i32, i32
  }
  func.func @transform_6(%arg0: i32) -> (i32, i32) {
    %c0_i32 = arith.constant 0 : i32
    %c0_i32_0 = arith.constant 0 : i32
    %c0_i32_1 = arith.constant 0 : i32
    return %c0_i32, %c0_i32_0 : i32, i32
  }
  func.func @transform_7(%arg0: i32) -> (i32, i32) {
    %c0_i32 = arith.constant 0 : i32
    %c0_i32_0 = arith.constant 0 : i32
    %c0_i32_1 = arith.constant 0 : i32
    return %c0_i32, %c0_i32_0 : i32, i32
  }
  func.func @transform_8(%arg0: i32) -> (i32, i32) {
    %c0_i32 = arith.constant 0 : i32
    %c0_i32_0 = arith.constant 0 : i32
    %c0_i32_1 = arith.constant 0 : i32
    return %c0_i32, %c0_i32_0 : i32, i32
  }
  func.func @transform_9(%arg0: i32) -> (i32, i32) {
    %c0_i32 = arith.constant 0 : i32
    %c0_i32_0 = arith.constant 0 : i32
    %c0_i32_1 = arith.constant 0 : i32
    return %c0_i32, %c0_i32_0 : i32, i32
  }
  func.func @transform_10(%arg0: i32) -> (i32, i32) {
    %c0_i32 = arith.constant 0 : i32
    %c0_i32_0 = arith.constant 0 : i32
    %c0_i32_1 = arith.constant 0 : i32
    return %c0_i32, %c0_i32_0 : i32, i32
  }
  func.func @transform_11(%arg0: i32) -> (i32, i32) {
    %c0_i32 = arith.constant 0 : i32
    %c0_i32_0 = arith.constant 0 : i32
    %c0_i32_1 = arith.constant 0 : i32
    return %c0_i32, %c0_i32_0 : i32, i32
  }
  func.func @transform_12(%arg0: i32) -> (i32, i32) {
    %c0_i32 = arith.constant 0 : i32
    %c0_i32_0 = arith.constant 0 : i32
    %c0_i32_1 = arith.constant 0 : i32
    return %c0_i32, %c0_i32_0 : i32, i32
  }
  func.func @transform_13(%arg0: i32) -> (i32, i32) {
    %c0_i32 = arith.constant 0 : i32
    %c0_i32_0 = arith.constant 0 : i32
    %c0_i32_1 = arith.constant 0 : i32
    return %c0_i32, %c0_i32_0 : i32, i32
  }
  func.func @transform_14(%arg0: i32) -> (i32, i32, i32) {
    %c0_i32 = arith.constant 0 : i32
    %c0_i32_0 = arith.constant 0 : i32
    %c0_i32_1 = arith.constant 0 : i32
    return %arg0, %c0_i32, %c0_i32_0 : i32, i32, i32
  }
}

</mosaic_0001>

<llo_original>
// kernel: _text_forward.2
$region0: #{_text_forward.2}
  #allocation0 [shape = 'u32[]', space=smem, size = 0x4, offset = 0x4, fixed_abs, tag = 'smem constant byte address 0x4 - core index']
  #allocation1 [shape = 'u32[144,128]{1,0:T(1,128)}', space=vmem, size = 0x12000, scoped, tag = 'internal scratch']
  %s0 = inlined_call_operand.vmem [shape: f32[2,8,128], index: 0, kind: input, shape index: {}]
  %s1 = inlined_call_operand.vmem [shape: f32[2,1,8], index: 1, kind: input, shape index: {}]
  %s2 = inlined_call_operand.hbm [shape: bf16[128,384], index: 2, kind: input, shape index: {}]
  %s3 = inlined_call_operand.vmem [shape: f32[1,384], index: 3, kind: input, shape index: {}]
  %s4 = inlined_call_operand.hbm [shape: bf16[128,128], index: 4, kind: input, shape index: {}]
  %s5 = inlined_call_operand.vmem [shape: f32[1,128], index: 5, kind: input, shape index: {}]
  %s6 = inlined_call_operand.vmem [shape: f32[1,128], index: 6, kind: input, shape index: {}]
  %s7 = inlined_call_operand.vmem [shape: f32[1,128], index: 7, kind: input, shape index: {}]
  %s8 = inlined_call_operand.hbm [shape: bf16[128,256], index: 8, kind: input, shape index: {}]
  %s9 = inlined_call_operand.vmem [shape: f32[1,256], index: 9, kind: input, shape index: {}]
  %s10 = inlined_call_operand.hbm [shape: bf16[256,128], index: 10, kind: input, shape index: {}]
  %s11 = inlined_call_operand.hbm [shape: f32[1,128], index: 11, kind: input, shape index: {}]
  %s12 = inlined_call_operand.vmem [shape: f32[1,128], index: 12, kind: input, shape index: {}]
  %s13 = inlined_call_operand.vmem [shape: f32[1,128], index: 13, kind: input, shape index: {}]
  %s14 = inlined_call_operand.vmem [shape: f32[2,8,128], index: 14, kind: output, shape index: {}]
  %s15 = sld [smem:[#allocation0]]
  $region109: #{_text_forward.2} parent=0
    _
  %s17 = ssub.s32 1, %s15
  %s18 = scalar_select 0, %s17, %s15
  $region1: #{_text_forward.2} parent=0
    #allocation2 [shape = 'u8[98304]{0}', space=vmem, size = 0x18000, scoped, tag = 'input window, operand 2, single buffered']
    #allocation3 [shape = 's32[2]{0}', space=sflag, size = 0x8, scoped, tag = 'scoped memory for _text_forward.2']
    #allocation4 [shape = 'u8[32768]{0}', space=vmem, size = 0x8000, scoped, tag = 'input window, operand 4, single buffered']
    #allocation5 [shape = 's32[1]{0}', space=sflag, size = 0x4, scoped, tag = 'scoped memory for _text_forward.2']
    #allocation6 [shape = 'u8[65536]{0}', space=vmem, size = 0x10000, scoped, tag = 'input window, operand 8, single buffered']
    #allocation7 [shape = 'u8[65536]{0}', space=vmem, size = 0x10000, scoped, tag = 'input window, operand 10, single buffered']
    #allocation8 [shape = 's32[1]{0}', space=sflag, size = 0x4, scoped, tag = 'scoped memory for _text_forward.2']
    #allocation9 [shape = 'u8[512]{0}', space=vmem, size = 0x400, scoped, tag = 'input window, operand 11, single buffered']
    %19 = vsyncpa [#allocation3], 0
    %20 = vsyncpa [#allocation5], 0
    %21 = vsyncpa [#allocation8], 0
    loop: start=0, step=1, limit=4
    $region2: #{_text_forward.2} parent=1 // loop_pre_header
      _
    $region3: #{_text_forward.2} parent=1 // loop_header
      %s23 = sphi 0, %s27
      %p24 = scmp.ge.s32.totalorder %s23, 4
      %s33 = sphi 0, %s35
      %s36 = sphi 0, %s33
      %s37 = sphi 0, %s36
      %s53 = sphi 0, %s37
      %s59 = sphi 0, %s61
      %s62 = sphi 0, %s59
      %s63 = sphi 0, %s62
      %s79 = sphi 0, %s63
      %s83 = sphi 0, %s83
      %s85 = sphi 0, %s83
      %s86 = sphi 0, %s85
      %s100 = sphi 0, %s86
      %s104 = sphi 0, %s104
      %s106 = sphi 0, %s104
      %s107 = sphi 0, %s106
      %s121 = sphi 0, %s107
      %s125 = sphi 0, %s125
      %s127 = sphi 0, %s125
      %s128 = sphi 0, %s127
      %s142 = sphi 0, %s128
      %s146 = sphi 0, %s146
      %s148 = sphi 0, %s146
      %s149 = sphi 0, %s148
      %s163 = sphi 0, %s149
      %s167 = sphi 0, %s167
      %s169 = sphi 0, %s167
      %s170 = sphi 0, %s169
      %s184 = sphi 0, %s170
      %s188 = sphi 0, %s188
      %s190 = sphi 0, %s188
      %s191 = sphi 0, %s190
      %s205 = sphi 0, %s191
      %s209 = sphi 0, %s209
      %s211 = sphi 0, %s209
      %s212 = sphi 0, %s211
      %s226 = sphi 0, %s212
      %s230 = sphi 0, %s230
      %s232 = sphi 0, %s230
      %s233 = sphi 0, %s232
      %s247 = sphi 0, %s233
      %s251 = sphi 0, %s251
      %s253 = sphi 0, %s251
      %s254 = sphi 0, %s253
      %s268 = sphi 0, %s254
      %s272 = sphi 0, %s272
      %s274 = sphi 0, %s272
      %s275 = sphi 0, %s274
      %s289 = sphi 0, %s275
      %s293 = sphi 0, %s293
      %s295 = sphi 0, %s293
      %s296 = sphi 0, %s295
      %s310 = sphi 0, %s296
      %s314 = sphi 0, %s314
      %s316 = sphi 0, %s314
      %s317 = sphi 0, %s316
      %s331 = sphi 0, %s317
      %s337 = sphi 0, %s339
      %s340 = sphi 0, %s337
      %s341 = sphi 0, %s340
      %s357 = sphi 0, %s341
    $region4: #{_text_forward.2} parent=1 // loop_header_branch
      %26 = sbr.rel (%p24) target = $region8
    $region5: #{_text_forward.2} parent=1 // loop_body
      %s28 = ssub.s32 %s23, 1
      %s29 = ssub.s32 %s23, 2
      %s30 = sadd.s32 %s23, 1
      %s31 = ssub.s32 %s23, %s30
      %p32 = scmp.eq.s32.totalorder %s31, 0
      %s34 = sadd.s32 %s33, 1
      %s35 = scalar_select %p32, %s33, %s34
      %p38 = pneg %p32
      %p39 = scmp.eq.s32.totalorder %s23, 1
      %p40 = por %p38, %p39
      %p41 = scmp.ne.s32.totalorder %s33, %s36
      %p42 = scmp.eq.s32.totalorder %s23, 0
      %p43 = por %p41, %p42
      %p44 = scmp.ne.s32.totalorder %s33, %s36
      %p45 = scmp.eq.s32.totalorder %s28, 1
      %p46 = por %p44, %p45
      %p47 = scmp.ne.s32.totalorder %s36, %s37
      %p48 = scmp.eq.s32.totalorder %s28, 0
      %p49 = por %p47, %p48
      %p50 = scmp.ne.s32.totalorder %s36, %s37
      %p51 = scmp.eq.s32.totalorder %s29, 1
      %p52 = por %p50, %p51
      %p54 = scmp.ne.s32.totalorder %s37, %s53
      %p55 = scmp.eq.s32.totalorder %s29, 0
      %p56 = por %p54, %p55
      %s57 = ssub.s32 %s23, %s30
      %p58 = scmp.eq.s32.totalorder %s57, 0
      %s60 = sadd.s32 %s59, 1
      %s61 = scalar_select %p58, %s59, %s60
      %p64 = pneg %p58
      %p65 = scmp.eq.s32.totalorder %s23, 1
      %p66 = por %p64, %p65
      %p67 = scmp.ne.s32.totalorder %s59, %s62
      %p68 = scmp.eq.s32.totalorder %s23, 0
      %p69 = por %p67, %p68
      %p70 = scmp.ne.s32.totalorder %s59, %s62
      %p71 = scmp.eq.s32.totalorder %s28, 1
      %p72 = por %p70, %p71
      %p73 = scmp.ne.s32.totalorder %s62, %s63
      %p74 = scmp.eq.s32.totalorder %s28, 0
      %p75 = por %p73, %p74
      %p76 = scmp.ne.s32.totalorder %s62, %s63
      %p77 = scmp.eq.s32.totalorder %s29, 1
      %p78 = por %p76, %p77
      %p80 = scmp.ne.s32.totalorder %s63, %s79
      %p81 = scmp.eq.s32.totalorder %s29, 0
      %p82 = por %p80, %p81
      %s84 = sadd.s32 %s83, 1
      %p87 = scmp.eq.s32.totalorder %s23, 1
      %p88 = scmp.ne.s32.totalorder %s83, %s85
      %p89 = scmp.eq.s32.totalorder %s23, 0
      %p90 = por %p88, %p89
      %p91 = scmp.ne.s32.totalorder %s83, %s85
      %p92 = scmp.eq.s32.totalorder %s28, 1
      %p93 = por %p91, %p92
      %p94 = scmp.ne.s32.totalorder %s85, %s86
      %p95 = scmp.eq.s32.totalorder %s28, 0
      %p96 = por %p94, %p95
      %p97 = scmp.ne.s32.totalorder %s85, %s86
      %p98 = scmp.eq.s32.totalorder %s29, 1
      %p99 = por %p97, %p98
      %p101 = scmp.ne.s32.totalorder %s86, %s100
      %p102 = scmp.eq.s32.totalorder %s29, 0
      %p103 = por %p101, %p102
      %s105 = sadd.s32 %s104, 1
      %p108 = scmp.eq.s32.totalorder %s23, 1
      %p109 = scmp.ne.s32.totalorder %s104, %s106
      %p110 = scmp.eq.s32.totalorder %s23, 0
      %p111 = por %p109, %p110
      %p112 = scmp.ne.s32.totalorder %s104, %s106
      %p113 = scmp.eq.s32.totalorder %s28, 1
      %p114 = por %p112, %p113
      %p115 = scmp.ne.s32.totalorder %s106, %s107
      %p116 = scmp.eq.s32.totalorder %s28, 0
      %p117 = por %p115, %p116
      %p118 = scmp.ne.s32.totalorder %s106, %s107
      %p119 = scmp.eq.s32.totalorder %s29, 1
      %p120 = por %p118, %p119
      %p122 = scmp.ne.s32.totalorder %s107, %s121
      %p123 = scmp.eq.s32.totalorder %s29, 0
      %p124 = por %p122, %p123
      %s126 = sadd.s32 %s125, 1
      %p129 = scmp.eq.s32.totalorder %s23, 1
      %p130 = scmp.ne.s32.totalorder %s125, %s127
      %p131 = scmp.eq.s32.totalorder %s23, 0
      %p132 = por %p130, %p131
      %p133 = scmp.ne.s32.totalorder %s125, %s127
      %p134 = scmp.eq.s32.totalorder %s28, 1
      %p135 = por %p133, %p134
      %p136 = scmp.ne.s32.totalorder %s127, %s128
      %p137 = scmp.eq.s32.totalorder %s28, 0
      %p138 = por %p136, %p137
      %p139 = scmp.ne.s32.totalorder %s127, %s128
      %p140 = scmp.eq.s32.totalorder %s29, 1
      %p141 = por %p139, %p140
      %p143 = scmp.ne.s32.totalorder %s128, %s142
      %p144 = scmp.eq.s32.totalorder %s29, 0
      %p145 = por %p143, %p144
      %s147 = sadd.s32 %s146, 1
      %p150 = scmp.eq.s32.totalorder %s23, 1
      %p151 = scmp.ne.s32.totalorder %s146, %s148
      %p152 = scmp.eq.s32.totalorder %s23, 0
      %p153 = por %p151, %p152
      %p154 = scmp.ne.s32.totalorder %s146, %s148
      %p155 = scmp.eq.s32.totalorder %s28, 1
      %p156 = por %p154, %p155
      %p157 = scmp.ne.s32.totalorder %s148, %s149
      %p158 = scmp.eq.s32.totalorder %s28, 0
      %p159 = por %p157, %p158
      %p160 = scmp.ne.s32.totalorder %s148, %s149
      %p161 = scmp.eq.s32.totalorder %s29, 1
      %p162 = por %p160, %p161
      %p164 = scmp.ne.s32.totalorder %s149, %s163
      %p165 = scmp.eq.s32.totalorder %s29, 0
      %p166 = por %p164, %p165
      %s168 = sadd.s32 %s167, 1
      %p171 = scmp.eq.s32.totalorder %s23, 1
      %p172 = scmp.ne.s32.totalorder %s167, %s169
      %p173 = scmp.eq.s32.totalorder %s23, 0
      %p174 = por %p172, %p173
      %p175 = scmp.ne.s32.totalorder %s167, %s169
      %p176 = scmp.eq.s32.totalorder %s28, 1
      %p177 = por %p175, %p176
      %p178 = scmp.ne.s32.totalorder %s169, %s170
      %p179 = scmp.eq.s32.totalorder %s28, 0
      %p180 = por %p178, %p179
      %p181 = scmp.ne.s32.totalorder %s169, %s170
      %p182 = scmp.eq.s32.totalorder %s29, 1
      %p183 = por %p181, %p182
      %p185 = scmp.ne.s32.totalorder %s170, %s184
      %p186 = scmp.eq.s32.totalorder %s29, 0
      %p187 = por %p185, %p186
      %s189 = sadd.s32 %s188, 1
      %p192 = scmp.eq.s32.totalorder %s23, 1
      %p193 = scmp.ne.s32.totalorder %s188, %s190
      %p194 = scmp.eq.s32.totalorder %s23, 0
      %p195 = por %p193, %p194
      %p196 = scmp.ne.s32.totalorder %s188, %s190
      %p197 = scmp.eq.s32.totalorder %s28, 1
      %p198 = por %p196, %p197
      %p199 = scmp.ne.s32.totalorder %s190, %s191
      %p200 = scmp.eq.s32.totalorder %s28, 0
      %p201 = por %p199, %p200
      %p202 = scmp.ne.s32.totalorder %s190, %s191
      %p203 = scmp.eq.s32.totalorder %s29, 1
      %p204 = por %p202, %p203
      %p206 = scmp.ne.s32.totalorder %s191, %s205
      %p207 = scmp.eq.s32.totalorder %s29, 0
      %p208 = por %p206, %p207
      %s210 = sadd.s32 %s209, 1
      %p213 = scmp.eq.s32.totalorder %s23, 1
      %p214 = scmp.ne.s32.totalorder %s209, %s211
      %p215 = scmp.eq.s32.totalorder %s23, 0
      %p216 = por %p214, %p215
      %p217 = scmp.ne.s32.totalorder %s209, %s211
      %p218 = scmp.eq.s32.totalorder %s28, 1
      %p219 = por %p217, %p218
      %p220 = scmp.ne.s32.totalorder %s211, %s212
      %p221 = scmp.eq.s32.totalorder %s28, 0
      %p222 = por %p220, %p221
      %p223 = scmp.ne.s32.totalorder %s211, %s212
      %p224 = scmp.eq.s32.totalorder %s29, 1
      %p225 = por %p223, %p224
      %p227 = scmp.ne.s32.totalorder %s212, %s226
      %p228 = scmp.eq.s32.totalorder %s29, 0
      %p229 = por %p227, %p228
      %s231 = sadd.s32 %s230, 1
      %p234 = scmp.eq.s32.totalorder %s23, 1
      %p235 = scmp.ne.s32.totalorder %s230, %s232
      %p236 = scmp.eq.s32.totalorder %s23, 0
      %p237 = por %p235, %p236
      %p238 = scmp.ne.s32.totalorder %s230, %s232
      %p239 = scmp.eq.s32.totalorder %s28, 1
      %p240 = por %p238, %p239
      %p241 = scmp.ne.s32.totalorder %s232, %s233
      %p242 = scmp.eq.s32.totalorder %s28, 0
      %p243 = por %p241, %p242
      %p244 = scmp.ne.s32.totalorder %s232, %s233
      %p245 = scmp.eq.s32.totalorder %s29, 1
      %p246 = por %p244, %p245
      %p248 = scmp.ne.s32.totalorder %s233, %s247
      %p249 = scmp.eq.s32.totalorder %s29, 0
      %p250 = por %p248, %p249
      %s252 = sadd.s32 %s251, 1
      %p255 = scmp.eq.s32.totalorder %s23, 1
      %p256 = scmp.ne.s32.totalorder %s251, %s253
      %p257 = scmp.eq.s32.totalorder %s23, 0
      %p258 = por %p256, %p257
      %p259 = scmp.ne.s32.totalorder %s251, %s253
      %p260 = scmp.eq.s32.totalorder %s28, 1
      %p261 = por %p259, %p260
      %p262 = scmp.ne.s32.totalorder %s253, %s254
      %p263 = scmp.eq.s32.totalorder %s28, 0
      %p264 = por %p262, %p263
      %p265 = scmp.ne.s32.totalorder %s253, %s254
      %p266 = scmp.eq.s32.totalorder %s29, 1
      %p267 = por %p265, %p266
      %p269 = scmp.ne.s32.totalorder %s254, %s268
      %p270 = scmp.eq.s32.totalorder %s29, 0
      %p271 = por %p269, %p270
      %s273 = sadd.s32 %s272, 1
      %p276 = scmp.eq.s32.totalorder %s23, 1
      %p277 = scmp.ne.s32.totalorder %s272, %s274
      %p278 = scmp.eq.s32.totalorder %s23, 0
      %p279 = por %p277, %p278
      %p280 = scmp.ne.s32.totalorder %s272, %s274
      %p281 = scmp.eq.s32.totalorder %s28, 1
      %p282 = por %p280, %p281
      %p283 = scmp.ne.s32.totalorder %s274, %s275
      %p284 = scmp.eq.s32.totalorder %s28, 0
      %p285 = por %p283, %p284
      %p286 = scmp.ne.s32.totalorder %s274, %s275
      %p287 = scmp.eq.s32.totalorder %s29, 1
      %p288 = por %p286, %p287
      %p290 = scmp.ne.s32.totalorder %s275, %s289
      %p291 = scmp.eq.s32.totalorder %s29, 0
      %p292 = por %p290, %p291
      %s294 = sadd.s32 %s293, 1
      %p297 = scmp.eq.s32.totalorder %s23, 1
      %p298 = scmp.ne.s32.totalorder %s293, %s295
      %p299 = scmp.eq.s32.totalorder %s23, 0
      %p300 = por %p298, %p299
      %p301 = scmp.ne.s32.totalorder %s293, %s295
      %p302 = scmp.eq.s32.totalorder %s28, 1
      %p303 = por %p301, %p302
      %p304 = scmp.ne.s32.totalorder %s295, %s296
      %p305 = scmp.eq.s32.totalorder %s28, 0
      %p306 = por %p304, %p305
      %p307 = scmp.ne.s32.totalorder %s295, %s296
      %p308 = scmp.eq.s32.totalorder %s29, 1
      %p309 = por %p307, %p308
      %p311 = scmp.ne.s32.totalorder %s296, %s310
      %p312 = scmp.eq.s32.totalorder %s29, 0
      %p313 = por %p311, %p312
      %s315 = sadd.s32 %s314, 1
      %p318 = scmp.eq.s32.totalorder %s23, 1
      %p319 = scmp.ne.s32.totalorder %s314, %s316
      %p320 = scmp.eq.s32.totalorder %s23, 0
      %p321 = por %p319, %p320
      %p322 = scmp.ne.s32.totalorder %s314, %s316
      %p323 = scmp.eq.s32.totalorder %s28, 1
      %p324 = por %p322, %p323
      %p325 = scmp.ne.s32.totalorder %s316, %s317
      %p326 = scmp.eq.s32.totalorder %s28, 0
      %p327 = por %p325, %p326
      %p328 = scmp.ne.s32.totalorder %s316, %s317
      %p329 = scmp.eq.s32.totalorder %s29, 1
      %p330 = por %p328, %p329
      %p332 = scmp.ne.s32.totalorder %s317, %s331
      %p333 = scmp.eq.s32.totalorder %s29, 0
      %p334 = por %p332, %p333
      %s335 = ssub.s32 %s23, %s30
      %p336 = scmp.eq.s32.totalorder %s335, 0
      %s338 = sadd.s32 %s337, 1
      %s339 = scalar_select %p336, %s337, %s338
      %p342 = pneg %p336
      %p343 = scmp.eq.s32.totalorder %s23, 1
      %p344 = por %p342, %p343
      %p345 = scmp.ne.s32.totalorder %s337, %s340
      %p346 = scmp.eq.s32.totalorder %s23, 0
      %p347 = por %p345, %p346
      %p348 = scmp.ne.s32.totalorder %s337, %s340
      %p349 = scmp.eq.s32.totalorder %s28, 1
      %p350 = por %p348, %p349
      %p351 = scmp.ne.s32.totalorder %s340, %s341
      %p352 = scmp.eq.s32.totalorder %s28, 0
      %p353 = por %p351, %p352
      %p354 = scmp.ne.s32.totalorder %s340, %s341
      %p355 = scmp.eq.s32.totalorder %s29, 1
      %p356 = por %p354, %p355
      %p358 = scmp.ne.s32.totalorder %s341, %s357
      %p359 = scmp.eq.s32.totalorder %s29, 0
      %p360 = por %p358, %p359
      %p361 = scmp.le.s32.totalorder 1, %s23
      %p362 = scmp.lt.s32.totalorder %s23, 3
      %p363 = pnand %p361, %p362
      %p364 = pneg %p363
      // Predicated region
      $region9: #{_text_forward.2} parent=5 // pred_check
        _
      $region10: #{_text_forward.2} parent=5 // pred_check_branch
        %366 = sbr.rel (%p363) target = $region12
      $region11: #{_text_forward.2} parent=5 // pred_region
        %s367 = ssub.s32 %s23, 1
        // Predicated region
        $region13: #{_text_forward.2} parent=11 // pred_check
          %p368 = pneg %p96
        $region14: #{_text_forward.2} parent=11 // pred_check_branch
          %370 = sbr.rel (%p368) target = $region16
        $region15: #{_text_forward.2} parent=11 // pred_region
          %s372 = ssub.s32 3072, 3072
          %373 = vsyncadd [#allocation3], %s372
          %s374 = sshll.u32 [#allocation2], 4
          %s375 = int_to_ptr.vmem [resolvable:$true] %s374
          %380 = dma.hbm_to_vmem [thread:$0]  %s2, 3072, %s375, [#allocation3], 192, 192, 12
        $region16: #{_text_forward.2} parent=11 // pred_fallthru
          _
        // Predicated region
        $region17: #{_text_forward.2} parent=11 // pred_check
          %p381 = pneg %p117
        $region18: #{_text_forward.2} parent=11 // pred_check_branch
          %383 = sbr.rel (%p381) target = $region20
        $region19: #{_text_forward.2} parent=11 // pred_region
          _
        $region20: #{_text_forward.2} parent=11 // pred_fallthru
          _
        // Predicated region
        $region21: #{_text_forward.2} parent=11 // pred_check
          %p384 = pneg %p138
        $region22: #{_text_forward.2} parent=11 // pred_check_branch
          %386 = sbr.rel (%p384) target = $region24
        $region23: #{_text_forward.2} parent=11 // pred_region
          %s388 = ssub.s32 1024, 1024
          %389 = vsyncadd [#allocation5], %s388
          %s390 = sshll.u32 [#allocation4], 4
          %s391 = int_to_ptr.vmem [resolvable:$true] %s390
          %396 = dma.hbm_to_vmem [thread:$0]  %s4, 1024, %s391, [#allocation5], 64, 64, 4
        $region24: #{_text_forward.2} parent=11 // pred_fallthru
          _
        // Predicated region
        $region25: #{_text_forward.2} parent=11 // pred_check
          %p397 = pneg %p159
        $region26: #{_text_forward.2} parent=11 // pred_check_branch
          %399 = sbr.rel (%p397) target = $region28
        $region27: #{_text_forward.2} parent=11 // pred_region
          _
        $region28: #{_text_forward.2} parent=11 // pred_fallthru
          _
        // Predicated region
        $region29: #{_text_forward.2} parent=11 // pred_check
          %p400 = pneg %p180
        $region30: #{_text_forward.2} parent=11 // pred_check_branch
          %402 = sbr.rel (%p400) target = $region32
        $region31: #{_text_forward.2} parent=11 // pred_region
          _
        $region32: #{_text_forward.2} parent=11 // pred_fallthru
          _
        // Predicated region
        $region33: #{_text_forward.2} parent=11 // pred_check
          %p403 = pneg %p201
        $region34: #{_text_forward.2} parent=11 // pred_check_branch
          %405 = sbr.rel (%p403) target = $region36
        $region35: #{_text_forward.2} parent=11 // pred_region
          _
        $region36: #{_text_forward.2} parent=11 // pred_fallthru
          _
        // Predicated region
        $region37: #{_text_forward.2} parent=11 // pred_check
          %p406 = pneg %p222
        $region38: #{_text_forward.2} parent=11 // pred_check_branch
          %408 = sbr.rel (%p406) target = $region40
        $region39: #{_text_forward.2} parent=11 // pred_region
          %s410 = ssub.s32 2048, 2048
          %411 = vsyncadd [#allocation5], %s410
          %s412 = sshll.u32 [#allocation6], 4
          %s413 = int_to_ptr.vmem [resolvable:$true] %s412
          %418 = dma.hbm_to_vmem [thread:$0]  %s8, 2048, %s413, [#allocation5], 128, 128, 8
        $region40: #{_text_forward.2} parent=11 // pred_fallthru
          _
        // Predicated region
        $region41: #{_text_forward.2} parent=11 // pred_check
          %p419 = pneg %p243
        $region42: #{_text_forward.2} parent=11 // pred_check_branch
          %421 = sbr.rel (%p419) target = $region44
        $region43: #{_text_forward.2} parent=11 // pred_region
          _
        $region44: #{_text_forward.2} parent=11 // pred_fallthru
          _
        // Predicated region
        $region45: #{_text_forward.2} parent=11 // pred_check
          %p422 = pneg %p264
        $region46: #{_text_forward.2} parent=11 // pred_check_branch
          %424 = sbr.rel (%p422) target = $region48
        $region47: #{_text_forward.2} parent=11 // pred_region
          %s426 = ssub.s32 2048, 2048
          %427 = vsyncadd [#allocation8], %s426
          %s428 = sshll.u32 [#allocation7], 4
          %s429 = int_to_ptr.vmem [resolvable:$true] %s428
          %434 = dma.hbm_to_vmem [thread:$0]  %s10, 2048, %s429, [#allocation8], 64, 64, 4
        $region48: #{_text_forward.2} parent=11 // pred_fallthru
          _
        // Predicated region
        $region49: #{_text_forward.2} parent=11 // pred_check
          %p435 = pneg %p285
        $region50: #{_text_forward.2} parent=11 // pred_check_branch
          %437 = sbr.rel (%p435) target = $region52
        $region51: #{_text_forward.2} parent=11 // pred_region
          %s439 = ssub.s32 16, 16
          %440 = vsyncadd [#allocation8], %s439
          %s442 = sshll.u32 [#allocation9], 4
          %s443 = int_to_ptr.vmem [resolvable:$true] %s442
          %445 = dma.hbm_to_vmem [thread:$0]  %s11, 16, %s443, [#allocation8]
        $region52: #{_text_forward.2} parent=11 // pred_fallthru
          _
        // Predicated region
        $region53: #{_text_forward.2} parent=11 // pred_check
          %p446 = pneg %p306
        $region54: #{_text_forward.2} parent=11 // pred_check_branch
          %448 = sbr.rel (%p446) target = $region56
        $region55: #{_text_forward.2} parent=11 // pred_region
          _
        $region56: #{_text_forward.2} parent=11 // pred_fallthru
          _
        // Predicated region
        $region57: #{_text_forward.2} parent=11 // pred_check
          %p449 = pneg %p327
        $region58: #{_text_forward.2} parent=11 // pred_check_branch
          %451 = sbr.rel (%p449) target = $region60
        $region59: #{_text_forward.2} parent=11 // pred_region
          _
        $region60: #{_text_forward.2} parent=11 // pred_fallthru
          _
      $region12: #{_text_forward.2} parent=5 // pred_fallthru
        _
      %p452 = scmp.lt.s32.totalorder %s23, 2
      // Predicated region
      $region61: #{_text_forward.2} parent=5 // pred_check
        %p453 = pneg %p452
      $region62: #{_text_forward.2} parent=5 // pred_check_branch
        %455 = sbr.rel (%p453) target = $region64
      $region63: #{_text_forward.2} parent=5 // pred_region
        // Predicated region
        $region65: #{_text_forward.2} parent=63 // pred_check
          %p456 = pneg %p43
        $region66: #{_text_forward.2} parent=63 // pred_check_branch
          %458 = sbr.rel (%p456) target = $region68
        $region67: #{_text_forward.2} parent=63 // pred_region
          %p459 = scmp.lt.s32.totalorder %s23, 1
          %s460 = scalar_select %p459, %s23, 1
          %s461 = smul.addr %s460, 8
          %s462 = scalar_lea.vmem %s0, %s461
        $region68: #{_text_forward.2} parent=63 // pred_fallthru
          _
        // Predicated region
        $region69: #{_text_forward.2} parent=63 // pred_check
          %p463 = pneg %p69
        $region70: #{_text_forward.2} parent=63 // pred_check_branch
          %465 = sbr.rel (%p463) target = $region72
        $region71: #{_text_forward.2} parent=63 // pred_region
          %p466 = scmp.lt.s32.totalorder %s23, 1
          %s467 = scalar_select %p466, %s23, 1
          %s468 = scalar_lea.vmem %s1, %s467
        $region72: #{_text_forward.2} parent=63 // pred_fallthru
          _
      $region64: #{_text_forward.2} parent=5 // pred_fallthru
        _
      %p469 = scmp.le.s32.totalorder 1, %s23
      %p470 = scmp.lt.s32.totalorder %s23, 3
      %p471 = pnand %p469, %p470
      %p472 = pneg %p471
      // Predicated region
      $region73: #{_text_forward.2} parent=5 // pred_check
        _
      $region74: #{_text_forward.2} parent=5 // pred_check_branch
        %474 = sbr.rel (%p471) target = $region76
      $region75: #{_text_forward.2} parent=5 // pred_region
        %s475 = ssub.s32 %s23, 1
        // Predicated region
        $region77: #{_text_forward.2} parent=75 // pred_check
          %p476 = pneg %p96
        $region78: #{_text_forward.2} parent=75 // pred_check_branch
          %478 = sbr.rel (%p476) target = $region80
        $region79: #{_text_forward.2} parent=75 // pred_region
          %479 = dma.done [#allocation3], 3072
        $region80: #{_text_forward.2} parent=75 // pred_fallthru
          _
        // Predicated region
        $region81: #{_text_forward.2} parent=75 // pred_check
          %p480 = pneg %p138
        $region82: #{_text_forward.2} parent=75 // pred_check_branch
          %482 = sbr.rel (%p480) target = $region84
        $region83: #{_text_forward.2} parent=75 // pred_region
          %483 = dma.done [#allocation5], 1024
        $region84: #{_text_forward.2} parent=75 // pred_fallthru
          _
        // Predicated region
        $region85: #{_text_forward.2} parent=75 // pred_check
          %p484 = pneg %p222
        $region86: #{_text_forward.2} parent=75 // pred_check_branch
          %486 = sbr.rel (%p484) target = $region88
        $region87: #{_text_forward.2} parent=75 // pred_region
          %487 = dma.done [#allocation5], 2048
        $region88: #{_text_forward.2} parent=75 // pred_fallthru
          _
        // Predicated region
        $region89: #{_text_forward.2} parent=75 // pred_check
          %p488 = pneg %p264
        $region90: #{_text_forward.2} parent=75 // pred_check_branch
          %490 = sbr.rel (%p488) target = $region92
        $region91: #{_text_forward.2} parent=75 // pred_region
          %491 = dma.done [#allocation8], 2048
        $region92: #{_text_forward.2} parent=75 // pred_fallthru
          _
        // Predicated region
        $region93: #{_text_forward.2} parent=75 // pred_check
          %p492 = pneg %p285
        $region94: #{_text_forward.2} parent=75 // pred_check_branch
          %494 = sbr.rel (%p492) target = $region96
        $region95: #{_text_forward.2} parent=75 // pred_region
          %495 = dma.done [#allocation8], 16
        $region96: #{_text_forward.2} parent=75 // pred_fallthru
          _
        %p496 = scmp.lt.s32.totalorder %s28, 1
        %s497 = scalar_select %p496, %s28, 1
        %s498 = smul.addr %s497, 8
        %s499 = scalar_lea.vmem %s0, %s498
        %p500 = pneg %p49
        %p501 = pneg %p46
        %p502 = scmp.lt.s32.totalorder %s28, 1
        %s503 = scalar_select %p502, %s28, 1
        %s504 = scalar_lea.vmem %s1, %s503
        %p505 = pneg %p75
        %p506 = pneg %p72
        %p507 = pneg %p96
        %p508 = pneg %p93
        %p509 = pneg %p117
        %p510 = pneg %p114
        %p511 = pneg %p138
        %p512 = pneg %p135
        %p513 = pneg %p159
        %p514 = pneg %p156
        %p515 = pneg %p180
        %p516 = pneg %p177
        %p517 = pneg %p201
        %p518 = pneg %p198
        %p519 = pneg %p222
        %p520 = pneg %p219
        %p521 = pneg %p243
        %p522 = pneg %p240
        %p523 = pneg %p264
        %p524 = pneg %p261
        %p525 = pneg %p285
        %p526 = pneg %p282
        %p527 = pneg %p306
        %p528 = pneg %p303
        %p529 = pneg %p327
        %p530 = pneg %p324
        %p531 = pneg %p353
        %p532 = pneg %p350
        %p533 = scmp.lt.s32.totalorder %s28, 1
        %s534 = scalar_select %p533, %s28, 1
        %s535 = smul.addr %s534, 8
        %s536 = scalar_lea.vmem %s14, %s535
        %p537 = scmp.lt.s32.totalorder %s28, 1
        %s538 = scalar_select %p537, %s28, 1
        %s539 = smul.addr %s538, 8
        %s540 = scalar_lea.vmem %s0, %s539
        %p541 = scmp.lt.s32.totalorder %s28, 1
        %s542 = scalar_select %p541, %s28, 1
        %s543 = scalar_lea.vmem %s1, %s542
        %p544 = scmp.lt.s32.totalorder %s28, 1
        %s545 = scalar_select %p544, %s28, 1
        %s546 = smul.addr %s545, 8
        %s547 = scalar_lea.vmem %s14, %s546
        %v549 = vld [vmem:[%s540] sm:$0xff]
        %v550 = vld [vmem:[%s543] sm:$0x1]
        %v551 = vpack.c.bf16 %v549, %v549
        %v552 = vld [vmem:[#allocation2] sm:$0xff]
        %v553 = vld [vmem:[#allocation2 + $0x8] sm:$0xf]
        %v554 = vld [vmem:[#allocation2 + $0xc] sm:$0xff]
        %v555 = vld [vmem:[#allocation2 + $0x14] sm:$0xf]
        %v556 = vld [vmem:[#allocation2 + $0x18] sm:$0xff]
        %v557 = vld [vmem:[#allocation2 + $0x20] sm:$0xf]
        %v558 = vld [vmem:[#allocation2 + $0x24] sm:$0xff]
        %v559 = vld [vmem:[#allocation2 + $0x2c] sm:$0xf]
        %v560 = vld [vmem:[#allocation2 + $0x30] sm:$0xff]
        %v561 = vld [vmem:[#allocation2 + $0x38] sm:$0xf]
        %v562 = vld [vmem:[#allocation2 + $0x3c] sm:$0xff]
        %v563 = vld [vmem:[#allocation2 + $0x44] sm:$0xf]
        %v564 = vld [vmem:[#allocation2 + $0x48] sm:$0xff]
        %v565 = vld [vmem:[#allocation2 + $0x50] sm:$0xf]
        %v566 = vld [vmem:[#allocation2 + $0x54] sm:$0xff]
        %v567 = vld [vmem:[#allocation2 + $0x5c] sm:$0xf]
        %v568 = vld [vmem:[#allocation2 + $0x60] sm:$0xff]
        %v569 = vld [vmem:[#allocation2 + $0x68] sm:$0xf]
        %v570 = vld [vmem:[#allocation2 + $0x6c] sm:$0xff]
        %v571 = vld [vmem:[#allocation2 + $0x74] sm:$0xf]
        %v572 = vld [vmem:[#allocation2 + $0x78] sm:$0xff]
        %v573 = vld [vmem:[#allocation2 + $0x80] sm:$0xf]
        %v574 = vld [vmem:[#allocation2 + $0x84] sm:$0xff]
        %v575 = vld [vmem:[#allocation2 + $0x8c] sm:$0xf]
        %v576 = vld [vmem:[#allocation2 + $0x90] sm:$0xff]
        %v577 = vld [vmem:[#allocation2 + $0x98] sm:$0xf]
        %v578 = vld [vmem:[#allocation2 + $0x9c] sm:$0xff]
        %v579 = vld [vmem:[#allocation2 + $0xa4] sm:$0xf]
        %v580 = vld [vmem:[#allocation2 + $0xa8] sm:$0xff]
        %v581 = vld [vmem:[#allocation2 + $0xb0] sm:$0xf]
        %v582 = vld [vmem:[#allocation2 + $0xb4] sm:$0xff]
        %v583 = vld [vmem:[#allocation2 + $0xbc] sm:$0xf]
        %v584 = vld [vmem:[%s3] sm:$0x7]
        %v586 = vlaneseq
        %v587 = vshrl.u32 %v586, 7
        %v588 = vsub.s32 0, %v587
        %v589 = vrot.slane %v584, %v588
        %v590 = vlaneseq
        %v591 = vshrl.u32 %v590, 7
        %v592 = vsub.s32 1, %v591
        %v593 = vrot.slane %v584, %v592
        %v594 = vlaneseq
        %v595 = vshrl.u32 %v594, 7
        %v596 = vsub.s32 2, %v595
        %v597 = vrot.slane %v584, %v596
        %v633 = vunpack.c.l.b16 %v552
        %v634 = vunpack.c.h.b16 %v552
        %v635 = vunpack.c.l.b16 %v553
        %v636 = vunpack.c.l.b16 %v554
        %v637 = vunpack.c.h.b16 %v554
        %v638 = vunpack.c.l.b16 %v555
        %v639 = vunpack.c.l.b16 %v556
        %v640 = vunpack.c.h.b16 %v556
        %v641 = vunpack.c.l.b16 %v557
        %v642 = vunpack.c.l.b16 %v558
        %v643 = vunpack.c.h.b16 %v558
        %v644 = vunpack.c.l.b16 %v559
        %v645 = vunpack.c.l.b16 %v560
        %v646 = vunpack.c.h.b16 %v560
        %v647 = vunpack.c.l.b16 %v561
        %v648 = vunpack.c.l.b16 %v562
        %v649 = vunpack.c.h.b16 %v562
        %v650 = vunpack.c.l.b16 %v563
        %v651 = vunpack.c.l.b16 %v564
        %v652 = vunpack.c.h.b16 %v564
        %v653 = vunpack.c.l.b16 %v565
        %v654 = vunpack.c.l.b16 %v566
        %v655 = vunpack.c.h.b16 %v566
        %v656 = vunpack.c.l.b16 %v567
        %v657 = vunpack.c.l.b16 %v568
        %v658 = vunpack.c.h.b16 %v568
        %v659 = vunpack.c.l.b16 %v569
        %v660 = vunpack.c.l.b16 %v570
        %v661 = vunpack.c.h.b16 %v570
        %v662 = vunpack.c.l.b16 %v571
        %v663 = vunpack.c.l.b16 %v572
        %v664 = vunpack.c.h.b16 %v572
        %v665 = vunpack.c.l.b16 %v573
        %v666 = vunpack.c.l.b16 %v574
        %v667 = vunpack.c.h.b16 %v574
        %v668 = vunpack.c.l.b16 %v575
        %v669 = vunpack.c.l.b16 %v576
        %v670 = vunpack.c.h.b16 %v576
        %v671 = vunpack.c.l.b16 %v577
        %v672 = vunpack.c.l.b16 %v578
        %v673 = vunpack.c.h.b16 %v578
        %v674 = vunpack.c.l.b16 %v579
        %v675 = vunpack.c.l.b16 %v580
        %v676 = vunpack.c.h.b16 %v580
        %v677 = vunpack.c.l.b16 %v581
        %v678 = vunpack.c.l.b16 %v582
        %v679 = vunpack.c.h.b16 %v582
        %v680 = vunpack.c.l.b16 %v583
        %v681 = vpack.c.b16 %v636, %v633
        %v682 = vpack.c.b16 %v637, %v634
        %v683 = vpack.c.b16 %v638, %v635
        %v684 = vpack.c.b16 %v642, %v639
        %v685 = vpack.c.b16 %v643, %v640
        %v686 = vpack.c.b16 %v644, %v641
        %v687 = vpack.c.b16 %v648, %v645
        %v688 = vpack.c.b16 %v649, %v646
        %v689 = vpack.c.b16 %v650, %v647
        %v690 = vpack.c.b16 %v654, %v651
        %v691 = vpack.c.b16 %v655, %v652
        %v692 = vpack.c.b16 %v656, %v653
        %v693 = vpack.c.b16 %v660, %v657
        %v694 = vpack.c.b16 %v661, %v658
        %v695 = vpack.c.b16 %v662, %v659
        %v696 = vpack.c.b16 %v666, %v663
        %v697 = vpack.c.b16 %v667, %v664
        %v698 = vpack.c.b16 %v668, %v665
        %v699 = vpack.c.b16 %v672, %v669
        %v700 = vpack.c.b16 %v673, %v670
        %v701 = vpack.c.b16 %v674, %v671
        %v702 = vpack.c.b16 %v678, %v675
        %v703 = vpack.c.b16 %v679, %v676
        %v704 = vpack.c.b16 %v680, %v677
        %729 = vmatprep.subr.bf16.mxu0 %v703
        %730 = vmatpush1.bf16.msra.mxu0 %v702
        %731 = vmatprep.subr.bf16.mxu0 %v700
        %732 = vmatpush1.bf16.msra.mxu0 %v699
        %733 = vmatprep.subr.bf16.mxu0 %v697
        %734 = vmatpush1.bf16.msra.mxu0 %v696
        %735 = vmatprep.subr.bf16.mxu0 %v694
        %736 = vmatpush1.bf16.msra.mxu0 %v693
        %737 = vmatprep.subr.bf16.mxu0 %v691
        %738 = vmatpush1.bf16.msra.mxu0 %v690
        %739 = vmatprep.subr.bf16.mxu0 %v688
        %740 = vmatpush1.bf16.msra.mxu0 %v687
        %741 = vmatprep.subr.bf16.mxu0 %v685
        %742 = vmatpush1.bf16.msra.mxu0 %v684
        %743 = vmatprep.subr.bf16.mxu0 %v682
        %744 = vmatpush1.bf16.msra.mxu0 %v681
        %745 = vmatprep.subr.bf16.mxu0 0
        %746 = vmatpush2.bf16.msra.mxu0 0
        %747 = vmatprep.subr.bf16.mxu0 0
        %748 = vmatpush2.bf16.msra.mxu0 0
        %749 = vmatprep.subr.bf16.mxu0 0
        %750 = vmatpush2.bf16.msra.mxu0 0
        %751 = vmatprep.subr.bf16.mxu0 0
        %752 = vmatpush2.bf16.msra.mxu0 0
        %753 = vmatprep.subr.bf16.mxu0 0
        %754 = vmatpush2.bf16.msra.mxu0 0
        %755 = vmatprep.subr.bf16.mxu0 0
        %756 = vmatpush2.bf16.msra.mxu0 0
        %757 = vmatprep.subr.bf16.mxu0 0
        %758 = vmatpush2.bf16.msra.mxu0 0
        %759 = vmatprep.subr.bf16.mxu0 0
        %760 = vmatpush2.bf16.msra.mxu0 0
        %761 = vmatprep.mubr.bf16.mxu0 0
        %762 = vmatmul.mubr.bf16.gmra.mxu0 %v551
        %v763 = vpop.f32.mrf.mxu0
        %v764 = vadd.f32 %v589, %v763
        %v765 = vpop.f32.mrf.mxu0
        %v766 = vadd.f32 %v593, %v765
        %v767 = vpop.f32.mrf.mxu0
        %v768 = vpop.f32.mrf.mxu0
        %769 = vdwg.mxu0
        %770 = vmatprep.subr.bf16.mxu0 0
        %771 = vmatpush1.bf16.msra.mxu0 %v704
        %772 = vmatprep.subr.bf16.mxu0 0
        %773 = vmatpush1.bf16.msra.mxu0 %v701
        %774 = vmatprep.subr.bf16.mxu0 0
        %775 = vmatpush1.bf16.msra.mxu0 %v698
        %776 = vmatprep.subr.bf16.mxu0 0
        %777 = vmatpush1.bf16.msra.mxu0 %v695
        %778 = vmatprep.subr.bf16.mxu0 0
        %779 = vmatpush1.bf16.msra.mxu0 %v692
        %780 = vmatprep.subr.bf16.mxu0 0
        %781 = vmatpush1.bf16.msra.mxu0 %v689
        %782 = vmatprep.subr.bf16.mxu0 0
        %783 = vmatpush1.bf16.msra.mxu0 %v686
        %784 = vmatprep.subr.bf16.mxu0 0
        %785 = vmatpush1.bf16.msra.mxu0 %v683
        %786 = vmatprep.subr.bf16.mxu0 0
        %787 = vmatpush2.bf16.msra.mxu0 0
        %788 = vmatprep.subr.bf16.mxu0 0
        %789 = vmatpush2.bf16.msra.mxu0 0
        %790 = vmatprep.subr.bf16.mxu0 0
        %791 = vmatpush2.bf16.msra.mxu0 0
        %792 = vmatprep.subr.bf16.mxu0 0
        %793 = vmatpush2.bf16.msra.mxu0 0
        %794 = vmatprep.subr.bf16.mxu0 0
        %795 = vmatpush2.bf16.msra.mxu0 0
        %796 = vmatprep.subr.bf16.mxu0 0
        %797 = vmatpush2.bf16.msra.mxu0 0
        %798 = vmatprep.subr.bf16.mxu0 0
        %799 = vmatpush2.bf16.msra.mxu0 0
        %800 = vmatprep.subr.bf16.mxu0 0
        %801 = vmatpush2.bf16.msra.mxu0 0
        %802 = vmatprep.mubr.bf16.mxu0 0
        %803 = vmatmul.mubr.bf16.gmra.mxu0 %v551
        %v804 = vpop.f32.mrf.mxu0
        %v805 = vadd.f32 %v597, %v804
        %v806 = vpop.f32.mrf.mxu0
        %v807 = vpop.f32.mrf.mxu0
        %v808 = vpop.f32.mrf.mxu0
        %809 = vdwg.mxu0
        %vm810 = vcmask 130048
        %v812 = vsel %vm810, %v764, 0
        %v815 = vsel %vm810, %v766, 0
        %817 = vmatprep.subr.mxu0 0.0
        %818 = vmatpush1.xpose.msra.mxu0 0.0
        %819 = vmatprep.subr.mxu0 0.0
        %820 = vmatpush1.xpose.msra.mxu0 0.0
        %821 = vmatprep.subr.mxu0 0.0
        %822 = vmatpush1.xpose.msra.mxu0 0.0
        %823 = vmatprep.subr.mxu0 0.0
        %824 = vmatpush1.xpose.msra.mxu0 0.0
        %825 = vmatprep.subr.mxu0 0.0
        %826 = vmatpush1.xpose.msra.mxu0 0.0
        %827 = vmatprep.subr.mxu0 0.0
        %828 = vmatpush1.xpose.msra.mxu0 0.0
        %829 = vmatprep.subr.mxu0 0.0
        %830 = vmatpush1.xpose.msra.mxu0 0.0
        %831 = vmatprep.subr.mxu0 0.0
        %832 = vmatpush1.xpose.msra.mxu0 0.0
        %833 = vmatprep.subr.mxu0 0.0
        %834 = vmatpush1.xpose.msra.mxu0 0.0
        %835 = vmatprep.subr.mxu0 0.0
        %836 = vmatpush1.xpose.msra.mxu0 0.0
        %837 = vmatprep.subr.mxu0 0.0
        %838 = vmatpush1.xpose.msra.mxu0 0.0
        %839 = vmatprep.subr.mxu0 0.0
        %840 = vmatpush1.xpose.msra.mxu0 0.0
        %841 = vmatprep.subr.mxu0 0.0
        %842 = vmatpush1.xpose.msra.mxu0 0.0
        %843 = vmatprep.subr.mxu0 0.0
        %844 = vmatpush1.xpose.msra.mxu0 0.0
        %845 = vmatprep.subr.mxu0 0.0
        %846 = vmatpush1.xpose.msra.mxu0 0.0
        %847 = vmatprep.subr.mxu0 0.0
        %848 = vmatpush1.xpose.msra.mxu0 %v815
        %849 = vmatprep.subr.mxu0 0.0
        %850 = vmatpush2.xpose.msra.mxu0 0.0
        %851 = vmatprep.subr.mxu0 0.0
        %852 = vmatpush2.xpose.msra.mxu0 0.0
        %853 = vmatprep.subr.mxu0 0.0
        %854 = vmatpush2.xpose.msra.mxu0 0.0
        %855 = vmatprep.subr.mxu0 0.0
        %856 = vmatpush2.xpose.msra.mxu0 0.0
        %857 = vmatprep.subr.mxu0 0.0
        %858 = vmatpush2.xpose.msra.mxu0 0.0
        %859 = vmatprep.subr.mxu0 0.0
        %860 = vmatpush2.xpose.msra.mxu0 0.0
        %861 = vmatprep.subr.mxu0 0.0
        %862 = vmatpush2.xpose.msra.mxu0 0.0
        %863 = vmatprep.subr.mxu0 0.0
        %864 = vmatpush2.xpose.msra.mxu0 0.0
        %865 = vmatprep.subr.mxu0 0.0
        %866 = vmatpush2.xpose.msra.mxu0 0.0
        %867 = vmatprep.subr.mxu0 0.0
        %868 = vmatpush2.xpose.msra.mxu0 0.0
        %869 = vmatprep.subr.mxu0 0.0
        %870 = vmatpush2.xpose.msra.mxu0 0.0
        %871 = vmatprep.subr.mxu0 0.0
        %872 = vmatpush2.xpose.msra.mxu0 0.0
        %873 = vmatprep.subr.mxu0 0.0
        %874 = vmatpush2.xpose.msra.mxu0 0.0
        %875 = vmatprep.subr.mxu0 0.0
        %876 = vmatpush2.xpose.msra.mxu0 0.0
        %877 = vmatprep.subr.mxu0 0.0
        %878 = vmatpush2.xpose.msra.mxu0 0.0
        %879 = vmatprep.subr.mxu0 0.0
        %880 = vmatpush2.xpose.msra.mxu0 0.0
        %881 = vmatprep.mubr.f32.mxu0 0.0
        %882 = vmatmul.mubr.f32.gmra.mxu0 %v812
        %v883 = vpop.f32.mrf.mxu0
        %v884 = vadd.f32 0.0, %v883
        %v885 = vpop.f32.mrf.mxu0
        %886 = vdwg.mxu0
        %v887 = vmul.f32 %v884, 0.25
        %v889 = vlaneseq
        %v890 = vshrl.u32 %v889, 7
        %v891 = vsub.s32 0, %v890
        %v892 = vrot.slane %v550, %v891
        %v894 = vadd.f32 %v887, %v892
        %vm895 = vcmask 64512
        %v896 = vsel %vm895, %v894, -inf
        %897 = vmax.xlane.f32.xlu0 %v896
        %v898 = vpop.xlane.xlu0 %897
        %v899 = vsub.f32 %v894, %v898
        %v900 = vmul.f32 %v899, 1.442695
        %v901 = vpow.pop %v900
        %v902 = vsel %vm895, %v901, 0.0
        %903 = vadd.xlane.f32.xlu0 %v902
        %v904 = vpop.xlane.xlu0 %903
        %v905 = vrcp.pop %v904
        %v906 = vmul.f32 %v901, %v905
        %v908 = vsel %vm895, %v906, 0
        %910 = vmatprep.subr.mxu0 0.0
        %911 = vmatpush1.msra.mxu0 0.0
        %912 = vmatprep.subr.mxu0 0.0
        %913 = vmatpush1.msra.mxu0 0.0
        %914 = vmatprep.subr.mxu0 0.0
        %915 = vmatpush1.msra.mxu0 0.0
        %916 = vmatprep.subr.mxu0 0.0
        %917 = vmatpush1.msra.mxu0 0.0
        %918 = vmatprep.subr.mxu0 0.0
        %919 = vmatpush1.msra.mxu0 0.0
        %920 = vmatprep.subr.mxu0 0.0
        %921 = vmatpush1.msra.mxu0 0.0
        %922 = vmatprep.subr.mxu0 0.0
        %923 = vmatpush1.msra.mxu0 0.0
        %924 = vmatprep.subr.mxu0 0.0
        %925 = vmatpush1.msra.mxu0 0.0
        %926 = vmatprep.subr.mxu0 0.0
        %927 = vmatpush1.msra.mxu0 0.0
        %928 = vmatprep.subr.mxu0 0.0
        %929 = vmatpush1.msra.mxu0 0.0
        %930 = vmatprep.subr.mxu0 0.0
        %931 = vmatpush1.msra.mxu0 0.0
        %932 = vmatprep.subr.mxu0 0.0
        %933 = vmatpush1.msra.mxu0 0.0
        %934 = vmatprep.subr.mxu0 0.0
        %935 = vmatpush1.msra.mxu0 0.0
        %936 = vmatprep.subr.mxu0 0.0
        %937 = vmatpush1.msra.mxu0 0.0
        %938 = vmatprep.subr.mxu0 0.0
        %939 = vmatpush1.msra.mxu0 0.0
        %940 = vmatprep.subr.mxu0 0.0
        %941 = vmatpush1.msra.mxu0 %v805
        %942 = vmatprep.subr.mxu0 0.0
        %943 = vmatpush2.msra.mxu0 0.0
        %944 = vmatprep.subr.mxu0 0.0
        %945 = vmatpush2.msra.mxu0 0.0
        %946 = vmatprep.subr.mxu0 0.0
        %947 = vmatpush2.msra.mxu0 0.0
        %948 = vmatprep.subr.mxu0 0.0
        %949 = vmatpush2.msra.mxu0 0.0
        %950 = vmatprep.subr.mxu0 0.0
        %951 = vmatpush2.msra.mxu0 0.0
        %952 = vmatprep.subr.mxu0 0.0
        %953 = vmatpush2.msra.mxu0 0.0
        %954 = vmatprep.subr.mxu0 0.0
        %955 = vmatpush2.msra.mxu0 0.0
        %956 = vmatprep.subr.mxu0 0.0
        %957 = vmatpush2.msra.mxu0 0.0
        %958 = vmatprep.subr.mxu0 0.0
        %959 = vmatpush2.msra.mxu0 0.0
        %960 = vmatprep.subr.mxu0 0.0
        %961 = vmatpush2.msra.mxu0 0.0
        %962 = vmatprep.subr.mxu0 0.0
        %963 = vmatpush2.msra.mxu0 0.0
        %964 = vmatprep.subr.mxu0 0.0
        %965 = vmatpush2.msra.mxu0 0.0
        %966 = vmatprep.subr.mxu0 0.0
        %967 = vmatpush2.msra.mxu0 0.0
        %968 = vmatprep.subr.mxu0 0.0
        %969 = vmatpush2.msra.mxu0 0.0
        %970 = vmatprep.subr.mxu0 0.0
        %971 = vmatpush2.msra.mxu0 0.0
        %972 = vmatprep.subr.mxu0 0.0
        %973 = vmatpush2.msra.mxu0 0.0
        %974 = vmatprep.mubr.f32.mxu0 0.0
        %975 = vmatmul.mubr.f32.gmra.mxu0 %v908
        %v976 = vpop.f32.mrf.mxu0
        %v977 = vadd.f32 0.0, %v976
        %v978 = vpop.f32.mrf.mxu0
        %979 = vdwg.mxu0
        %980 = vrot.lane.b32.xlu0 %v764, 112
        %v981 = vpop.permute.xlu0 %980
        %982 = vrot.lane.b32.xlu0 %v766, 112
        %v983 = vpop.permute.xlu0 %982
        %v984 = vsel %vm810, %v981, 0
        %v986 = vsel %vm810, %v983, 0
        %988 = vmatprep.subr.mxu0 0.0
        %989 = vmatpush1.xpose.msra.mxu0 0.0
        %990 = vmatprep.subr.mxu0 0.0
        %991 = vmatpush1.xpose.msra.mxu0 0.0
        %992 = vmatprep.subr.mxu0 0.0
        %993 = vmatpush1.xpose.msra.mxu0 0.0
        %994 = vmatprep.subr.mxu0 0.0
        %995 = vmatpush1.xpose.msra.mxu0 0.0
        %996 = vmatprep.subr.mxu0 0.0
        %997 = vmatpush1.xpose.msra.mxu0 0.0
        %998 = vmatprep.subr.mxu0 0.0
        %999 = vmatpush1.xpose.msra.mxu0 0.0
        %1000 = vmatprep.subr.mxu0 0.0
        %1001 = vmatpush1.xpose.msra.mxu0 0.0
        %1002 = vmatprep.subr.mxu0 0.0
        %1003 = vmatpush1.xpose.msra.mxu0 0.0
        %1004 = vmatprep.subr.mxu0 0.0
        %1005 = vmatpush1.xpose.msra.mxu0 0.0
        %1006 = vmatprep.subr.mxu0 0.0
        %1007 = vmatpush1.xpose.msra.mxu0 0.0
        %1008 = vmatprep.subr.mxu0 0.0
        %1009 = vmatpush1.xpose.msra.mxu0 0.0
        %1010 = vmatprep.subr.mxu0 0.0
        %1011 = vmatpush1.xpose.msra.mxu0 0.0
        %1012 = vmatprep.subr.mxu0 0.0
        %1013 = vmatpush1.xpose.msra.mxu0 0.0
        %1014 = vmatprep.subr.mxu0 0.0
        %1015 = vmatpush1.xpose.msra.mxu0 0.0
        %1016 = vmatprep.subr.mxu0 0.0
        %1017 = vmatpush1.xpose.msra.mxu0 0.0
        %1018 = vmatprep.subr.mxu0 0.0
        %1019 = vmatpush1.xpose.msra.mxu0 %v986
        %1020 = vmatprep.subr.mxu0 0.0
        %1021 = vmatpush2.xpose.msra.mxu0 0.0
        %1022 = vmatprep.subr.mxu0 0.0
        %1023 = vmatpush2.xpose.msra.mxu0 0.0
        %1024 = vmatprep.subr.mxu0 0.0
        %1025 = vmatpush2.xpose.msra.mxu0 0.0
        %1026 = vmatprep.subr.mxu0 0.0
        %1027 = vmatpush2.xpose.msra.mxu0 0.0
        %1028 = vmatprep.subr.mxu0 0.0
        %1029 = vmatpush2.xpose.msra.mxu0 0.0
        %1030 = vmatprep.subr.mxu0 0.0
        %1031 = vmatpush2.xpose.msra.mxu0 0.0
        %1032 = vmatprep.subr.mxu0 0.0
        %1033 = vmatpush2.xpose.msra.mxu0 0.0
        %1034 = vmatprep.subr.mxu0 0.0
        %1035 = vmatpush2.xpose.msra.mxu0 0.0
        %1036 = vmatprep.subr.mxu0 0.0
        %1037 = vmatpush2.xpose.msra.mxu0 0.0
        %1038 = vmatprep.subr.mxu0 0.0
        %1039 = vmatpush2.xpose.msra.mxu0 0.0
        %1040 = vmatprep.subr.mxu0 0.0
        %1041 = vmatpush2.xpose.msra.mxu0 0.0
        %1042 = vmatprep.subr.mxu0 0.0
        %1043 = vmatpush2.xpose.msra.mxu0 0.0
        %1044 = vmatprep.subr.mxu0 0.0
        %1045 = vmatpush2.xpose.msra.mxu0 0.0
        %1046 = vmatprep.subr.mxu0 0.0
        %1047 = vmatpush2.xpose.msra.mxu0 0.0
        %1048 = vmatprep.subr.mxu0 0.0
        %1049 = vmatpush2.xpose.msra.mxu0 0.0
        %1050 = vmatprep.subr.mxu0 0.0
        %1051 = vmatpush2.xpose.msra.mxu0 0.0
        %1052 = vmatprep.mubr.f32.mxu0 0.0
        %1053 = vmatmul.mubr.f32.gmra.mxu0 %v984
        %v1054 = vpop.f32.mrf.mxu0
        %v1055 = vadd.f32 0.0, %v1054
        %v1056 = vpop.f32.mrf.mxu0
        %1057 = vdwg.mxu0
        %v1058 = vmul.f32 %v1055, 0.25
        %v1059 = vadd.f32 %v1058, %v892
        %v1060 = vsel %vm895, %v1059, -inf
        %1061 = vmax.xlane.f32.xlu0 %v1060
        %v1062 = vpop.xlane.xlu0 %1061
        %v1063 = vsub.f32 %v1059, %v1062
        %v1064 = vmul.f32 %v1063, 1.442695
        %v1065 = vpow.pop %v1064
        %v1066 = vsel %vm895, %v1065, 0.0
        %1067 = vadd.xlane.f32.xlu0 %v1066
        %v1068 = vpop.xlane.xlu0 %1067
        %v1069 = vrcp.pop %v1068
        %v1070 = vmul.f32 %v1065, %v1069
        %1072 = vrot.lane.b32.xlu0 %v805, 112
        %v1073 = vpop.permute.xlu0 %1072
        %v1076 = vsel %vm895, %v1070, 0
        %1078 = vmatprep.subr.mxu0 0.0
        %1079 = vmatpush1.msra.mxu0 0.0
        %1080 = vmatprep.subr.mxu0 0.0
        %1081 = vmatpush1.msra.mxu0 0.0
        %1082 = vmatprep.subr.mxu0 0.0
        %1083 = vmatpush1.msra.mxu0 0.0
        %1084 = vmatprep.subr.mxu0 0.0
        %1085 = vmatpush1.msra.mxu0 0.0
        %1086 = vmatprep.subr.mxu0 0.0
        %1087 = vmatpush1.msra.mxu0 0.0
        %1088 = vmatprep.subr.mxu0 0.0
        %1089 = vmatpush1.msra.mxu0 0.0
        %1090 = vmatprep.subr.mxu0 0.0
        %1091 = vmatpush1.msra.mxu0 0.0
        %1092 = vmatprep.subr.mxu0 0.0
        %1093 = vmatpush1.msra.mxu0 0.0
        %1094 = vmatprep.subr.mxu0 0.0
        %1095 = vmatpush1.msra.mxu0 0.0
        %1096 = vmatprep.subr.mxu0 0.0
        %1097 = vmatpush1.msra.mxu0 0.0
        %1098 = vmatprep.subr.mxu0 0.0
        %1099 = vmatpush1.msra.mxu0 0.0
        %1100 = vmatprep.subr.mxu0 0.0
        %1101 = vmatpush1.msra.mxu0 0.0
        %1102 = vmatprep.subr.mxu0 0.0
        %1103 = vmatpush1.msra.mxu0 0.0
        %1104 = vmatprep.subr.mxu0 0.0
        %1105 = vmatpush1.msra.mxu0 0.0
        %1106 = vmatprep.subr.mxu0 0.0
        %1107 = vmatpush1.msra.mxu0 0.0
        %1108 = vmatprep.subr.mxu0 0.0
        %1109 = vmatpush1.msra.mxu0 %v1073
        %1110 = vmatprep.subr.mxu0 0.0
        %1111 = vmatpush2.msra.mxu0 0.0
        %1112 = vmatprep.subr.mxu0 0.0
        %1113 = vmatpush2.msra.mxu0 0.0
        %1114 = vmatprep.subr.mxu0 0.0
        %1115 = vmatpush2.msra.mxu0 0.0
        %1116 = vmatprep.subr.mxu0 0.0
        %1117 = vmatpush2.msra.mxu0 0.0
        %1118 = vmatprep.subr.mxu0 0.0
        %1119 = vmatpush2.msra.mxu0 0.0
        %1120 = vmatprep.subr.mxu0 0.0
        %1121 = vmatpush2.msra.mxu0 0.0
        %1122 = vmatprep.subr.mxu0 0.0
        %1123 = vmatpush2.msra.mxu0 0.0
        %1124 = vmatprep.subr.mxu0 0.0
        %1125 = vmatpush2.msra.mxu0 0.0
        %1126 = vmatprep.subr.mxu0 0.0
        %1127 = vmatpush2.msra.mxu0 0.0
        %1128 = vmatprep.subr.mxu0 0.0
        %1129 = vmatpush2.msra.mxu0 0.0
        %1130 = vmatprep.subr.mxu0 0.0
        %1131 = vmatpush2.msra.mxu0 0.0
        %1132 = vmatprep.subr.mxu0 0.0
        %1133 = vmatpush2.msra.mxu0 0.0
        %1134 = vmatprep.subr.mxu0 0.0
        %1135 = vmatpush2.msra.mxu0 0.0
        %1136 = vmatprep.subr.mxu0 0.0
        %1137 = vmatpush2.msra.mxu0 0.0
        %1138 = vmatprep.subr.mxu0 0.0
        %1139 = vmatpush2.msra.mxu0 0.0
        %1140 = vmatprep.subr.mxu0 0.0
        %1141 = vmatpush2.msra.mxu0 0.0
        %1142 = vmatprep.mubr.f32.mxu0 0.0
        %1143 = vmatmul.mubr.f32.gmra.mxu0 %v1076
        %v1144 = vpop.f32.mrf.mxu0
        %v1145 = vadd.f32 0.0, %v1144
        %v1146 = vpop.f32.mrf.mxu0
        %1147 = vdwg.mxu0
        %1148 = vrot.lane.b32.xlu0 %v764, 96
        %v1149 = vpop.permute.xlu0 %1148
        %1150 = vrot.lane.b32.xlu0 %v766, 96
        %v1151 = vpop.permute.xlu0 %1150
        %v1152 = vsel %vm810, %v1149, 0
        %v1154 = vsel %vm810, %v1151, 0
        %1156 = vmatprep.subr.mxu0 0.0
        %1157 = vmatpush1.xpose.msra.mxu0 0.0
        %1158 = vmatprep.subr.mxu0 0.0
        %1159 = vmatpush1.xpose.msra.mxu0 0.0
        %1160 = vmatprep.subr.mxu0 0.0
        %1161 = vmatpush1.xpose.msra.mxu0 0.0
        %1162 = vmatprep.subr.mxu0 0.0
        %1163 = vmatpush1.xpose.msra.mxu0 0.0
        %1164 = vmatprep.subr.mxu0 0.0
        %1165 = vmatpush1.xpose.msra.mxu0 0.0
        %1166 = vmatprep.subr.mxu0 0.0
        %1167 = vmatpush1.xpose.msra.mxu0 0.0
        %1168 = vmatprep.subr.mxu0 0.0
        %1169 = vmatpush1.xpose.msra.mxu0 0.0
        %1170 = vmatprep.subr.mxu0 0.0
        %1171 = vmatpush1.xpose.msra.mxu0 0.0
        %1172 = vmatprep.subr.mxu0 0.0
        %1173 = vmatpush1.xpose.msra.mxu0 0.0
        %1174 = vmatprep.subr.mxu0 0.0
        %1175 = vmatpush1.xpose.msra.mxu0 0.0
        %1176 = vmatprep.subr.mxu0 0.0
        %1177 = vmatpush1.xpose.msra.mxu0 0.0
        %1178 = vmatprep.subr.mxu0 0.0
        %1179 = vmatpush1.xpose.msra.mxu0 0.0
        %1180 = vmatprep.subr.mxu0 0.0
        %1181 = vmatpush1.xpose.msra.mxu0 0.0
        %1182 = vmatprep.subr.mxu0 0.0
        %1183 = vmatpush1.xpose.msra.mxu0 0.0
        %1184 = vmatprep.subr.mxu0 0.0
        %1185 = vmatpush1.xpose.msra.mxu0 0.0
        %1186 = vmatprep.subr.mxu0 0.0
        %1187 = vmatpush1.xpose.msra.mxu0 %v1154
        %1188 = vmatprep.subr.mxu0 0.0
        %1189 = vmatpush2.xpose.msra.mxu0 0.0
        %1190 = vmatprep.subr.mxu0 0.0
        %1191 = vmatpush2.xpose.msra.mxu0 0.0
        %1192 = vmatprep.subr.mxu0 0.0
        %1193 = vmatpush2.xpose.msra.mxu0 0.0
        %1194 = vmatprep.subr.mxu0 0.0
        %1195 = vmatpush2.xpose.msra.mxu0 0.0
        %1196 = vmatprep.subr.mxu0 0.0
        %1197 = vmatpush2.xpose.msra.mxu0 0.0
        %1198 = vmatprep.subr.mxu0 0.0
        %1199 = vmatpush2.xpose.msra.mxu0 0.0
        %1200 = vmatprep.subr.mxu0 0.0
        %1201 = vmatpush2.xpose.msra.mxu0 0.0
        %1202 = vmatprep.subr.mxu0 0.0
        %1203 = vmatpush2.xpose.msra.mxu0 0.0
        %1204 = vmatprep.subr.mxu0 0.0
        %1205 = vmatpush2.xpose.msra.mxu0 0.0
        %1206 = vmatprep.subr.mxu0 0.0
        %1207 = vmatpush2.xpose.msra.mxu0 0.0
        %1208 = vmatprep.subr.mxu0 0.0
        %1209 = vmatpush2.xpose.msra.mxu0 0.0
        %1210 = vmatprep.subr.mxu0 0.0
        %1211 = vmatpush2.xpose.msra.mxu0 0.0
        %1212 = vmatprep.subr.mxu0 0.0
        %1213 = vmatpush2.xpose.msra.mxu0 0.0
        %1214 = vmatprep.subr.mxu0 0.0
        %1215 = vmatpush2.xpose.msra.mxu0 0.0
        %1216 = vmatprep.subr.mxu0 0.0
        %1217 = vmatpush2.xpose.msra.mxu0 0.0
        %1218 = vmatprep.subr.mxu0 0.0
        %1219 = vmatpush2.xpose.msra.mxu0 0.0
        %1220 = vmatprep.mubr.f32.mxu0 0.0
        %1221 = vmatmul.mubr.f32.gmra.mxu0 %v1152
        %v1222 = vpop.f32.mrf.mxu0
        %v1223 = vadd.f32 0.0, %v1222
        %v1224 = vpop.f32.mrf.mxu0
        %1225 = vdwg.mxu0
        %v1226 = vmul.f32 %v1223, 0.25
        %v1227 = vadd.f32 %v1226, %v892
        %v1228 = vsel %vm895, %v1227, -inf
        %1229 = vmax.xlane.f32.xlu0 %v1228
        %v1230 = vpop.xlane.xlu0 %1229
        %v1231 = vsub.f32 %v1227, %v1230
        %v1232 = vmul.f32 %v1231, 1.442695
        %v1233 = vpow.pop %v1232
        %v1234 = vsel %vm895, %v1233, 0.0
        %1235 = vadd.xlane.f32.xlu0 %v1234
        %v1236 = vpop.xlane.xlu0 %1235
        %v1237 = vrcp.pop %v1236
        %v1238 = vmul.f32 %v1233, %v1237
        %1239 = vrot.lane.b32.xlu0 %v805, 96
        %v1240 = vpop.permute.xlu0 %1239
        %v1243 = vsel %vm895, %v1238, 0
        %1245 = vmatprep.subr.mxu0 0.0
        %1246 = vmatpush1.msra.mxu0 0.0
        %1247 = vmatprep.subr.mxu0 0.0
        %1248 = vmatpush1.msra.mxu0 0.0
        %1249 = vmatprep.subr.mxu0 0.0
        %1250 = vmatpush1.msra.mxu0 0.0
        %1251 = vmatprep.subr.mxu0 0.0
        %1252 = vmatpush1.msra.mxu0 0.0
        %1253 = vmatprep.subr.mxu0 0.0
        %1254 = vmatpush1.msra.mxu0 0.0
        %1255 = vmatprep.subr.mxu0 0.0
        %1256 = vmatpush1.msra.mxu0 0.0
        %1257 = vmatprep.subr.mxu0 0.0
        %1258 = vmatpush1.msra.mxu0 0.0
        %1259 = vmatprep.subr.mxu0 0.0
        %1260 = vmatpush1.msra.mxu0 0.0
        %1261 = vmatprep.subr.mxu0 0.0
        %1262 = vmatpush1.msra.mxu0 0.0
        %1263 = vmatprep.subr.mxu0 0.0
        %1264 = vmatpush1.msra.mxu0 0.0
        %1265 = vmatprep.subr.mxu0 0.0
        %1266 = vmatpush1.msra.mxu0 0.0
        %1267 = vmatprep.subr.mxu0 0.0
        %1268 = vmatpush1.msra.mxu0 0.0
        %1269 = vmatprep.subr.mxu0 0.0
        %1270 = vmatpush1.msra.mxu0 0.0
        %1271 = vmatprep.subr.mxu0 0.0
        %1272 = vmatpush1.msra.mxu0 0.0
        %1273 = vmatprep.subr.mxu0 0.0
        %1274 = vmatpush1.msra.mxu0 0.0
        %1275 = vmatprep.subr.mxu0 0.0
        %1276 = vmatpush1.msra.mxu0 %v1240
        %1277 = vmatprep.subr.mxu0 0.0
        %1278 = vmatpush2.msra.mxu0 0.0
        %1279 = vmatprep.subr.mxu0 0.0
        %1280 = vmatpush2.msra.mxu0 0.0
        %1281 = vmatprep.subr.mxu0 0.0
        %1282 = vmatpush2.msra.mxu0 0.0
        %1283 = vmatprep.subr.mxu0 0.0
        %1284 = vmatpush2.msra.mxu0 0.0
        %1285 = vmatprep.subr.mxu0 0.0
        %1286 = vmatpush2.msra.mxu0 0.0
        %1287 = vmatprep.subr.mxu0 0.0
        %1288 = vmatpush2.msra.mxu0 0.0
        %1289 = vmatprep.subr.mxu0 0.0
        %1290 = vmatpush2.msra.mxu0 0.0
        %1291 = vmatprep.subr.mxu0 0.0
        %1292 = vmatpush2.msra.mxu0 0.0
        %1293 = vmatprep.subr.mxu0 0.0
        %1294 = vmatpush2.msra.mxu0 0.0
        %1295 = vmatprep.subr.mxu0 0.0
        %1296 = vmatpush2.msra.mxu0 0.0
        %1297 = vmatprep.subr.mxu0 0.0
        %1298 = vmatpush2.msra.mxu0 0.0
        %1299 = vmatprep.subr.mxu0 0.0
        %1300 = vmatpush2.msra.mxu0 0.0
        %1301 = vmatprep.subr.mxu0 0.0
        %1302 = vmatpush2.msra.mxu0 0.0
        %1303 = vmatprep.subr.mxu0 0.0
        %1304 = vmatpush2.msra.mxu0 0.0
        %1305 = vmatprep.subr.mxu0 0.0
        %1306 = vmatpush2.msra.mxu0 0.0
        %1307 = vmatprep.subr.mxu0 0.0
        %1308 = vmatpush2.msra.mxu0 0.0
        %1309 = vmatprep.mubr.f32.mxu0 0.0
        %1310 = vmatmul.mubr.f32.gmra.mxu0 %v1243
        %v1311 = vpop.f32.mrf.mxu0
        %v1312 = vadd.f32 0.0, %v1311
        %v1313 = vpop.f32.mrf.mxu0
        %1314 = vdwg.mxu0
        %1315 = vrot.lane.b32.xlu0 %v764, 80
        %v1316 = vpop.permute.xlu0 %1315
        %1317 = vrot.lane.b32.xlu0 %v766, 80
        %v1318 = vpop.permute.xlu0 %1317
        %v1319 = vsel %vm810, %v1316, 0
        %v1321 = vsel %vm810, %v1318, 0
        %1323 = vmatprep.subr.mxu0 0.0
        %1324 = vmatpush1.xpose.msra.mxu0 0.0
        %1325 = vmatprep.subr.mxu0 0.0
        %1326 = vmatpush1.xpose.msra.mxu0 0.0
        %1327 = vmatprep.subr.mxu0 0.0
        %1328 = vmatpush1.xpose.msra.mxu0 0.0
        %1329 = vmatprep.subr.mxu0 0.0
        %1330 = vmatpush1.xpose.msra.mxu0 0.0
        %1331 = vmatprep.subr.mxu0 0.0
        %1332 = vmatpush1.xpose.msra.mxu0 0.0
        %1333 = vmatprep.subr.mxu0 0.0
        %1334 = vmatpush1.xpose.msra.mxu0 0.0
        %1335 = vmatprep.subr.mxu0 0.0
        %1336 = vmatpush1.xpose.msra.mxu0 0.0
        %1337 = vmatprep.subr.mxu0 0.0
        %1338 = vmatpush1.xpose.msra.mxu0 0.0
        %1339 = vmatprep.subr.mxu0 0.0
        %1340 = vmatpush1.xpose.msra.mxu0 0.0
        %1341 = vmatprep.subr.mxu0 0.0
        %1342 = vmatpush1.xpose.msra.mxu0 0.0
        %1343 = vmatprep.subr.mxu0 0.0
        %1344 = vmatpush1.xpose.msra.mxu0 0.0
        %1345 = vmatprep.subr.mxu0 0.0
        %1346 = vmatpush1.xpose.msra.mxu0 0.0
        %1347 = vmatprep.subr.mxu0 0.0
        %1348 = vmatpush1.xpose.msra.mxu0 0.0
        %1349 = vmatprep.subr.mxu0 0.0
        %1350 = vmatpush1.xpose.msra.mxu0 0.0
        %1351 = vmatprep.subr.mxu0 0.0
        %1352 = vmatpush1.xpose.msra.mxu0 0.0
        %1353 = vmatprep.subr.mxu0 0.0
        %1354 = vmatpush1.xpose.msra.mxu0 %v1321
        %1355 = vmatprep.subr.mxu0 0.0
        %1356 = vmatpush2.xpose.msra.mxu0 0.0
        %1357 = vmatprep.subr.mxu0 0.0
        %1358 = vmatpush2.xpose.msra.mxu0 0.0
        %1359 = vmatprep.subr.mxu0 0.0
        %1360 = vmatpush2.xpose.msra.mxu0 0.0
        %1361 = vmatprep.subr.mxu0 0.0
        %1362 = vmatpush2.xpose.msra.mxu0 0.0
        %1363 = vmatprep.subr.mxu0 0.0
        %1364 = vmatpush2.xpose.msra.mxu0 0.0
        %1365 = vmatprep.subr.mxu0 0.0
        %1366 = vmatpush2.xpose.msra.mxu0 0.0
        %1367 = vmatprep.subr.mxu0 0.0
        %1368 = vmatpush2.xpose.msra.mxu0 0.0
        %1369 = vmatprep.subr.mxu0 0.0
        %1370 = vmatpush2.xpose.msra.mxu0 0.0
        %1371 = vmatprep.subr.mxu0 0.0
        %1372 = vmatpush2.xpose.msra.mxu0 0.0
        %1373 = vmatprep.subr.mxu0 0.0
        %1374 = vmatpush2.xpose.msra.mxu0 0.0
        %1375 = vmatprep.subr.mxu0 0.0
        %1376 = vmatpush2.xpose.msra.mxu0 0.0
        %1377 = vmatprep.subr.mxu0 0.0
        %1378 = vmatpush2.xpose.msra.mxu0 0.0
        %1379 = vmatprep.subr.mxu0 0.0
        %1380 = vmatpush2.xpose.msra.mxu0 0.0
        %1381 = vmatprep.subr.mxu0 0.0
        %1382 = vmatpush2.xpose.msra.mxu0 0.0
        %1383 = vmatprep.subr.mxu0 0.0
        %1384 = vmatpush2.xpose.msra.mxu0 0.0
        %1385 = vmatprep.subr.mxu0 0.0
        %1386 = vmatpush2.xpose.msra.mxu0 0.0
        %1387 = vmatprep.mubr.f32.mxu0 0.0
        %1388 = vmatmul.mubr.f32.gmra.mxu0 %v1319
        %v1389 = vpop.f32.mrf.mxu0
        %v1390 = vadd.f32 0.0, %v1389
        %v1391 = vpop.f32.mrf.mxu0
        %1392 = vdwg.mxu0
        %v1393 = vmul.f32 %v1390, 0.25
        %v1394 = vadd.f32 %v1393, %v892
        %v1395 = vsel %vm895, %v1394, -inf
        %1396 = vmax.xlane.f32.xlu0 %v1395
        %v1397 = vpop.xlane.xlu0 %1396
        %v1398 = vsub.f32 %v1394, %v1397
        %v1399 = vmul.f32 %v1398, 1.442695
        %v1400 = vpow.pop %v1399
        %v1401 = vsel %vm895, %v1400, 0.0
        %1402 = vadd.xlane.f32.xlu0 %v1401
        %v1403 = vpop.xlane.xlu0 %1402
        %v1404 = vrcp.pop %v1403
        %v1405 = vmul.f32 %v1400, %v1404
        %1406 = vrot.lane.b32.xlu0 %v805, 80
        %v1407 = vpop.permute.xlu0 %1406
        %v1410 = vsel %vm895, %v1405, 0
        %1412 = vmatprep.subr.mxu0 0.0
        %1413 = vmatpush1.msra.mxu0 0.0
        %1414 = vmatprep.subr.mxu0 0.0
        %1415 = vmatpush1.msra.mxu0 0.0
        %1416 = vmatprep.subr.mxu0 0.0
        %1417 = vmatpush1.msra.mxu0 0.0
        %1418 = vmatprep.subr.mxu0 0.0
        %1419 = vmatpush1.msra.mxu0 0.0
        %1420 = vmatprep.subr.mxu0 0.0
        %1421 = vmatpush1.msra.mxu0 0.0
        %1422 = vmatprep.subr.mxu0 0.0
        %1423 = vmatpush1.msra.mxu0 0.0
        %1424 = vmatprep.subr.mxu0 0.0
        %1425 = vmatpush1.msra.mxu0 0.0
        %1426 = vmatprep.subr.mxu0 0.0
        %1427 = vmatpush1.msra.mxu0 0.0
        %1428 = vmatprep.subr.mxu0 0.0
        %1429 = vmatpush1.msra.mxu0 0.0
        %1430 = vmatprep.subr.mxu0 0.0
        %1431 = vmatpush1.msra.mxu0 0.0
        %1432 = vmatprep.subr.mxu0 0.0
        %1433 = vmatpush1.msra.mxu0 0.0
        %1434 = vmatprep.subr.mxu0 0.0
        %1435 = vmatpush1.msra.mxu0 0.0
        %1436 = vmatprep.subr.mxu0 0.0
        %1437 = vmatpush1.msra.mxu0 0.0
        %1438 = vmatprep.subr.mxu0 0.0
        %1439 = vmatpush1.msra.mxu0 0.0
        %1440 = vmatprep.subr.mxu0 0.0
        %1441 = vmatpush1.msra.mxu0 0.0
        %1442 = vmatprep.subr.mxu0 0.0
        %1443 = vmatpush1.msra.mxu0 %v1407
        %1444 = vmatprep.subr.mxu0 0.0
        %1445 = vmatpush2.msra.mxu0 0.0
        %1446 = vmatprep.subr.mxu0 0.0
        %1447 = vmatpush2.msra.mxu0 0.0
        %1448 = vmatprep.subr.mxu0 0.0
        %1449 = vmatpush2.msra.mxu0 0.0
        %1450 = vmatprep.subr.mxu0 0.0
        %1451 = vmatpush2.msra.mxu0 0.0
        %1452 = vmatprep.subr.mxu0 0.0
        %1453 = vmatpush2.msra.mxu0 0.0
        %1454 = vmatprep.subr.mxu0 0.0
        %1455 = vmatpush2.msra.mxu0 0.0
        %1456 = vmatprep.subr.mxu0 0.0
        %1457 = vmatpush2.msra.mxu0 0.0
        %1458 = vmatprep.subr.mxu0 0.0
        %1459 = vmatpush2.msra.mxu0 0.0
        %1460 = vmatprep.subr.mxu0 0.0
        %1461 = vmatpush2.msra.mxu0 0.0
        %1462 = vmatprep.subr.mxu0 0.0
        %1463 = vmatpush2.msra.mxu0 0.0
        %1464 = vmatprep.subr.mxu0 0.0
        %1465 = vmatpush2.msra.mxu0 0.0
        %1466 = vmatprep.subr.mxu0 0.0
        %1467 = vmatpush2.msra.mxu0 0.0
        %1468 = vmatprep.subr.mxu0 0.0
        %1469 = vmatpush2.msra.mxu0 0.0
        %1470 = vmatprep.subr.mxu0 0.0
        %1471 = vmatpush2.msra.mxu0 0.0
        %1472 = vmatprep.subr.mxu0 0.0
        %1473 = vmatpush2.msra.mxu0 0.0
        %1474 = vmatprep.subr.mxu0 0.0
        %1475 = vmatpush2.msra.mxu0 0.0
        %1476 = vmatprep.mubr.f32.mxu0 0.0
        %1477 = vmatmul.mubr.f32.gmra.mxu0 %v1410
        %v1478 = vpop.f32.mrf.mxu0
        %v1479 = vadd.f32 0.0, %v1478
        %v1480 = vpop.f32.mrf.mxu0
        %1481 = vdwg.mxu0
        %1482 = vrot.lane.b32.xlu0 %v764, 64
        %v1483 = vpop.permute.xlu0 %1482
        %1484 = vrot.lane.b32.xlu0 %v766, 64
        %v1485 = vpop.permute.xlu0 %1484
        %v1486 = vsel %vm810, %v1483, 0
        %v1488 = vsel %vm810, %v1485, 0
        %1490 = vmatprep.subr.mxu0 0.0
        %1491 = vmatpush1.xpose.msra.mxu0 0.0
        %1492 = vmatprep.subr.mxu0 0.0
        %1493 = vmatpush1.xpose.msra.mxu0 0.0
        %1494 = vmatprep.subr.mxu0 0.0
        %1495 = vmatpush1.xpose.msra.mxu0 0.0
        %1496 = vmatprep.subr.mxu0 0.0
        %1497 = vmatpush1.xpose.msra.mxu0 0.0
        %1498 = vmatprep.subr.mxu0 0.0
        %1499 = vmatpush1.xpose.msra.mxu0 0.0
        %1500 = vmatprep.subr.mxu0 0.0
        %1501 = vmatpush1.xpose.msra.mxu0 0.0
        %1502 = vmatprep.subr.mxu0 0.0
        %1503 = vmatpush1.xpose.msra.mxu0 0.0
        %1504 = vmatprep.subr.mxu0 0.0
        %1505 = vmatpush1.xpose.msra.mxu0 0.0
        %1506 = vmatprep.subr.mxu0 0.0
        %1507 = vmatpush1.xpose.msra.mxu0 0.0
        %1508 = vmatprep.subr.mxu0 0.0
        %1509 = vmatpush1.xpose.msra.mxu0 0.0
        %1510 = vmatprep.subr.mxu0 0.0
        %1511 = vmatpush1.xpose.msra.mxu0 0.0
        %1512 = vmatprep.subr.mxu0 0.0
        %1513 = vmatpush1.xpose.msra.mxu0 0.0
        %1514 = vmatprep.subr.mxu0 0.0
        %1515 = vmatpush1.xpose.msra.mxu0 0.0
        %1516 = vmatprep.subr.mxu0 0.0
        %1517 = vmatpush1.xpose.msra.mxu0 0.0
        %1518 = vmatprep.subr.mxu0 0.0
        %1519 = vmatpush1.xpose.msra.mxu0 0.0
        %1520 = vmatprep.subr.mxu0 0.0
        %1521 = vmatpush1.xpose.msra.mxu0 %v1488
        %1522 = vmatprep.subr.mxu0 0.0
        %1523 = vmatpush2.xpose.msra.mxu0 0.0
        %1524 = vmatprep.subr.mxu0 0.0
        %1525 = vmatpush2.xpose.msra.mxu0 0.0
        %1526 = vmatprep.subr.mxu0 0.0
        %1527 = vmatpush2.xpose.msra.mxu0 0.0
        %1528 = vmatprep.subr.mxu0 0.0
        %1529 = vmatpush2.xpose.msra.mxu0 0.0
        %1530 = vmatprep.subr.mxu0 0.0
        %1531 = vmatpush2.xpose.msra.mxu0 0.0
        %1532 = vmatprep.subr.mxu0 0.0
        %1533 = vmatpush2.xpose.msra.mxu0 0.0
        %1534 = vmatprep.subr.mxu0 0.0
        %1535 = vmatpush2.xpose.msra.mxu0 0.0
        %1536 = vmatprep.subr.mxu0 0.0
        %1537 = vmatpush2.xpose.msra.mxu0 0.0
        %1538 = vmatprep.subr.mxu0 0.0
        %1539 = vmatpush2.xpose.msra.mxu0 0.0
        %1540 = vmatprep.subr.mxu0 0.0
        %1541 = vmatpush2.xpose.msra.mxu0 0.0
        %1542 = vmatprep.subr.mxu0 0.0
        %1543 = vmatpush2.xpose.msra.mxu0 0.0
        %1544 = vmatprep.subr.mxu0 0.0
        %1545 = vmatpush2.xpose.msra.mxu0 0.0
        %1546 = vmatprep.subr.mxu0 0.0
        %1547 = vmatpush2.xpose.msra.mxu0 0.0
        %1548 = vmatprep.subr.mxu0 0.0
        %1549 = vmatpush2.xpose.msra.mxu0 0.0
        %1550 = vmatprep.subr.mxu0 0.0
        %1551 = vmatpush2.xpose.msra.mxu0 0.0
        %1552 = vmatprep.subr.mxu0 0.0
        %1553 = vmatpush2.xpose.msra.mxu0 0.0
        %1554 = vmatprep.mubr.f32.mxu0 0.0
        %1555 = vmatmul.mubr.f32.gmra.mxu0 %v1486
        %v1556 = vpop.f32.mrf.mxu0
        %v1557 = vadd.f32 0.0, %v1556
        %v1558 = vpop.f32.mrf.mxu0
        %1559 = vdwg.mxu0
        %v1560 = vmul.f32 %v1557, 0.25
        %v1561 = vadd.f32 %v1560, %v892
        %v1562 = vsel %vm895, %v1561, -inf
        %1563 = vmax.xlane.f32.xlu0 %v1562
        %v1564 = vpop.xlane.xlu0 %1563
        %v1565 = vsub.f32 %v1561, %v1564
        %v1566 = vmul.f32 %v1565, 1.442695
        %v1567 = vpow.pop %v1566
        %v1568 = vsel %vm895, %v1567, 0.0
        %1569 = vadd.xlane.f32.xlu0 %v1568
        %v1570 = vpop.xlane.xlu0 %1569
        %v1571 = vrcp.pop %v1570
        %v1572 = vmul.f32 %v1567, %v1571
        %1573 = vrot.lane.b32.xlu0 %v805, 64
        %v1574 = vpop.permute.xlu0 %1573
        %v1577 = vsel %vm895, %v1572, 0
        %1579 = vmatprep.subr.mxu0 0.0
        %1580 = vmatpush1.msra.mxu0 0.0
        %1581 = vmatprep.subr.mxu0 0.0
        %1582 = vmatpush1.msra.mxu0 0.0
        %1583 = vmatprep.subr.mxu0 0.0
        %1584 = vmatpush1.msra.mxu0 0.0
        %1585 = vmatprep.subr.mxu0 0.0
        %1586 = vmatpush1.msra.mxu0 0.0
        %1587 = vmatprep.subr.mxu0 0.0
        %1588 = vmatpush1.msra.mxu0 0.0
        %1589 = vmatprep.subr.mxu0 0.0
        %1590 = vmatpush1.msra.mxu0 0.0
        %1591 = vmatprep.subr.mxu0 0.0
        %1592 = vmatpush1.msra.mxu0 0.0
        %1593 = vmatprep.subr.mxu0 0.0
        %1594 = vmatpush1.msra.mxu0 0.0
        %1595 = vmatprep.subr.mxu0 0.0
        %1596 = vmatpush1.msra.mxu0 0.0
        %1597 = vmatprep.subr.mxu0 0.0
        %1598 = vmatpush1.msra.mxu0 0.0
        %1599 = vmatprep.subr.mxu0 0.0
        %1600 = vmatpush1.msra.mxu0 0.0
        %1601 = vmatprep.subr.mxu0 0.0
        %1602 = vmatpush1.msra.mxu0 0.0
        %1603 = vmatprep.subr.mxu0 0.0
        %1604 = vmatpush1.msra.mxu0 0.0
        %1605 = vmatprep.subr.mxu0 0.0
        %1606 = vmatpush1.msra.mxu0 0.0
        %1607 = vmatprep.subr.mxu0 0.0
        %1608 = vmatpush1.msra.mxu0 0.0
        %1609 = vmatprep.subr.mxu0 0.0
        %1610 = vmatpush1.msra.mxu0 %v1574
        %1611 = vmatprep.subr.mxu0 0.0
        %1612 = vmatpush2.msra.mxu0 0.0
        %1613 = vmatprep.subr.mxu0 0.0
        %1614 = vmatpush2.msra.mxu0 0.0
        %1615 = vmatprep.subr.mxu0 0.0
        %1616 = vmatpush2.msra.mxu0 0.0
        %1617 = vmatprep.subr.mxu0 0.0
        %1618 = vmatpush2.msra.mxu0 0.0
        %1619 = vmatprep.subr.mxu0 0.0
        %1620 = vmatpush2.msra.mxu0 0.0
        %1621 = vmatprep.subr.mxu0 0.0
        %1622 = vmatpush2.msra.mxu0 0.0
        %1623 = vmatprep.subr.mxu0 0.0
        %1624 = vmatpush2.msra.mxu0 0.0
        %1625 = vmatprep.subr.mxu0 0.0
        %1626 = vmatpush2.msra.mxu0 0.0
        %1627 = vmatprep.subr.mxu0 0.0
        %1628 = vmatpush2.msra.mxu0 0.0
        %1629 = vmatprep.subr.mxu0 0.0
        %1630 = vmatpush2.msra.mxu0 0.0
        %1631 = vmatprep.subr.mxu0 0.0
        %1632 = vmatpush2.msra.mxu0 0.0
        %1633 = vmatprep.subr.mxu0 0.0
        %1634 = vmatpush2.msra.mxu0 0.0
        %1635 = vmatprep.subr.mxu0 0.0
        %1636 = vmatpush2.msra.mxu0 0.0
        %1637 = vmatprep.subr.mxu0 0.0
        %1638 = vmatpush2.msra.mxu0 0.0
        %1639 = vmatprep.subr.mxu0 0.0
        %1640 = vmatpush2.msra.mxu0 0.0
        %1641 = vmatprep.subr.mxu0 0.0
        %1642 = vmatpush2.msra.mxu0 0.0
        %1643 = vmatprep.mubr.f32.mxu0 0.0
        %1644 = vmatmul.mubr.f32.gmra.mxu0 %v1577
        %v1645 = vpop.f32.mrf.mxu0
        %v1646 = vadd.f32 0.0, %v1645
        %v1647 = vpop.f32.mrf.mxu0
        %1648 = vdwg.mxu0
        %1649 = vrot.lane.b32.xlu0 %v764, 48
        %v1650 = vpop.permute.xlu0 %1649
        %1651 = vrot.lane.b32.xlu0 %v766, 48
        %v1652 = vpop.permute.xlu0 %1651
        %v1653 = vsel %vm810, %v1650, 0
        %v1655 = vsel %vm810, %v1652, 0
        %1657 = vmatprep.subr.mxu0 0.0
        %1658 = vmatpush1.xpose.msra.mxu0 0.0
        %1659 = vmatprep.subr.mxu0 0.0
        %1660 = vmatpush1.xpose.msra.mxu0 0.0
        %1661 = vmatprep.subr.mxu0 0.0
        %1662 = vmatpush1.xpose.msra.mxu0 0.0
        %1663 = vmatprep.subr.mxu0 0.0
        %1664 = vmatpush1.xpose.msra.mxu0 0.0
        %1665 = vmatprep.subr.mxu0 0.0
        %1666 = vmatpush1.xpose.msra.mxu0 0.0
        %1667 = vmatprep.subr.mxu0 0.0
        %1668 = vmatpush1.xpose.msra.mxu0 0.0
        %1669 = vmatprep.subr.mxu0 0.0
        %1670 = vmatpush1.xpose.msra.mxu0 0.0
        %1671 = vmatprep.subr.mxu0 0.0
        %1672 = vmatpush1.xpose.msra.mxu0 0.0
        %1673 = vmatprep.subr.mxu0 0.0
        %1674 = vmatpush1.xpose.msra.mxu0 0.0
        %1675 = vmatprep.subr.mxu0 0.0
        %1676 = vmatpush1.xpose.msra.mxu0 0.0
        %1677 = vmatprep.subr.mxu0 0.0
        %1678 = vmatpush1.xpose.msra.mxu0 0.0
        %1679 = vmatprep.subr.mxu0 0.0
        %1680 = vmatpush1.xpose.msra.mxu0 0.0
        %1681 = vmatprep.subr.mxu0 0.0
        %1682 = vmatpush1.xpose.msra.mxu0 0.0
        %1683 = vmatprep.subr.mxu0 0.0
        %1684 = vmatpush1.xpose.msra.mxu0 0.0
        %1685 = vmatprep.subr.mxu0 0.0
        %1686 = vmatpush1.xpose.msra.mxu0 0.0
        %1687 = vmatprep.subr.mxu0 0.0
        %1688 = vmatpush1.xpose.msra.mxu0 %v1655
        %1689 = vmatprep.subr.mxu0 0.0
        %1690 = vmatpush2.xpose.msra.mxu0 0.0
        %1691 = vmatprep.subr.mxu0 0.0
        %1692 = vmatpush2.xpose.msra.mxu0 0.0
        %1693 = vmatprep.subr.mxu0 0.0
        %1694 = vmatpush2.xpose.msra.mxu0 0.0
        %1695 = vmatprep.subr.mxu0 0.0
        %1696 = vmatpush2.xpose.msra.mxu0 0.0
        %1697 = vmatprep.subr.mxu0 0.0
        %1698 = vmatpush2.xpose.msra.mxu0 0.0
        %1699 = vmatprep.subr.mxu0 0.0
        %1700 = vmatpush2.xpose.msra.mxu0 0.0
        %1701 = vmatprep.subr.mxu0 0.0
        %1702 = vmatpush2.xpose.msra.mxu0 0.0
        %1703 = vmatprep.subr.mxu0 0.0
        %1704 = vmatpush2.xpose.msra.mxu0 0.0
        %1705 = vmatprep.subr.mxu0 0.0
        %1706 = vmatpush2.xpose.msra.mxu0 0.0
        %1707 = vmatprep.subr.mxu0 0.0
        %1708 = vmatpush2.xpose.msra.mxu0 0.0
        %1709 = vmatprep.subr.mxu0 0.0
        %1710 = vmatpush2.xpose.msra.mxu0 0.0
        %1711 = vmatprep.subr.mxu0 0.0
        %1712 = vmatpush2.xpose.msra.mxu0 0.0
        %1713 = vmatprep.subr.mxu0 0.0
        %1714 = vmatpush2.xpose.msra.mxu0 0.0
        %1715 = vmatprep.subr.mxu0 0.0
        %1716 = vmatpush2.xpose.msra.mxu0 0.0
        %1717 = vmatprep.subr.mxu0 0.0
        %1718 = vmatpush2.xpose.msra.mxu0 0.0
        %1719 = vmatprep.subr.mxu0 0.0
        %1720 = vmatpush2.xpose.msra.mxu0 0.0
        %1721 = vmatprep.mubr.f32.mxu0 0.0
        %1722 = vmatmul.mubr.f32.gmra.mxu0 %v1653
        %v1723 = vpop.f32.mrf.mxu0
        %v1724 = vadd.f32 0.0, %v1723
        %v1725 = vpop.f32.mrf.mxu0
        %1726 = vdwg.mxu0
        %v1727 = vmul.f32 %v1724, 0.25
        %v1728 = vadd.f32 %v1727, %v892
        %v1729 = vsel %vm895, %v1728, -inf
        %1730 = vmax.xlane.f32.xlu0 %v1729
        %v1731 = vpop.xlane.xlu0 %1730
        %v1732 = vsub.f32 %v1728, %v1731
        %v1733 = vmul.f32 %v1732, 1.442695
        %v1734 = vpow.pop %v1733
        %v1735 = vsel %vm895, %v1734, 0.0
        %1736 = vadd.xlane.f32.xlu0 %v1735
        %v1737 = vpop.xlane.xlu0 %1736
        %v1738 = vrcp.pop %v1737
        %v1739 = vmul.f32 %v1734, %v1738
        %1740 = vrot.lane.b32.xlu0 %v805, 48
        %v1741 = vpop.permute.xlu0 %1740
        %v1744 = vsel %vm895, %v1739, 0
        %1746 = vmatprep.subr.mxu0 0.0
        %1747 = vmatpush1.msra.mxu0 0.0
        %1748 = vmatprep.subr.mxu0 0.0
        %1749 = vmatpush1.msra.mxu0 0.0
        %1750 = vmatprep.subr.mxu0 0.0
        %1751 = vmatpush1.msra.mxu0 0.0
        %1752 = vmatprep.subr.mxu0 0.0
        %1753 = vmatpush1.msra.mxu0 0.0
        %1754 = vmatprep.subr.mxu0 0.0
        %1755 = vmatpush1.msra.mxu0 0.0
        %1756 = vmatprep.subr.mxu0 0.0
        %1757 = vmatpush1.msra.mxu0 0.0
        %1758 = vmatprep.subr.mxu0 0.0
        %1759 = vmatpush1.msra.mxu0 0.0
        %1760 = vmatprep.subr.mxu0 0.0
        %1761 = vmatpush1.msra.mxu0 0.0
        %1762 = vmatprep.subr.mxu0 0.0
        %1763 = vmatpush1.msra.mxu0 0.0
        %1764 = vmatprep.subr.mxu0 0.0
        %1765 = vmatpush1.msra.mxu0 0.0
        %1766 = vmatprep.subr.mxu0 0.0
        %1767 = vmatpush1.msra.mxu0 0.0
        %1768 = vmatprep.subr.mxu0 0.0
        %1769 = vmatpush1.msra.mxu0 0.0
        %1770 = vmatprep.subr.mxu0 0.0
        %1771 = vmatpush1.msra.mxu0 0.0
        %1772 = vmatprep.subr.mxu0 0.0
        %1773 = vmatpush1.msra.mxu0 0.0
        %1774 = vmatprep.subr.mxu0 0.0
        %1775 = vmatpush1.msra.mxu0 0.0
        %1776 = vmatprep.subr.mxu0 0.0
        %1777 = vmatpush1.msra.mxu0 %v1741
        %1778 = vmatprep.subr.mxu0 0.0
        %1779 = vmatpush2.msra.mxu0 0.0
        %1780 = vmatprep.subr.mxu0 0.0
        %1781 = vmatpush2.msra.mxu0 0.0
        %1782 = vmatprep.subr.mxu0 0.0
        %1783 = vmatpush2.msra.mxu0 0.0
        %1784 = vmatprep.subr.mxu0 0.0
        %1785 = vmatpush2.msra.mxu0 0.0
        %1786 = vmatprep.subr.mxu0 0.0
        %1787 = vmatpush2.msra.mxu0 0.0
        %1788 = vmatprep.subr.mxu0 0.0
        %1789 = vmatpush2.msra.mxu0 0.0
        %1790 = vmatprep.subr.mxu0 0.0
        %1791 = vmatpush2.msra.mxu0 0.0
        %1792 = vmatprep.subr.mxu0 0.0
        %1793 = vmatpush2.msra.mxu0 0.0
        %1794 = vmatprep.subr.mxu0 0.0
        %1795 = vmatpush2.msra.mxu0 0.0
        %1796 = vmatprep.subr.mxu0 0.0
        %1797 = vmatpush2.msra.mxu0 0.0
        %1798 = vmatprep.subr.mxu0 0.0
        %1799 = vmatpush2.msra.mxu0 0.0
        %1800 = vmatprep.subr.mxu0 0.0
        %1801 = vmatpush2.msra.mxu0 0.0
        %1802 = vmatprep.subr.mxu0 0.0
        %1803 = vmatpush2.msra.mxu0 0.0
        %1804 = vmatprep.subr.mxu0 0.0
        %1805 = vmatpush2.msra.mxu0 0.0
        %1806 = vmatprep.subr.mxu0 0.0
        %1807 = vmatpush2.msra.mxu0 0.0
        %1808 = vmatprep.subr.mxu0 0.0
        %1809 = vmatpush2.msra.mxu0 0.0
        %1810 = vmatprep.mubr.f32.mxu0 0.0
        %1811 = vmatmul.mubr.f32.gmra.mxu0 %v1744
        %v1812 = vpop.f32.mrf.mxu0
        %v1813 = vadd.f32 0.0, %v1812
        %v1814 = vpop.f32.mrf.mxu0
        %1815 = vdwg.mxu0
        %1816 = vrot.lane.b32.xlu0 %v764, 32
        %v1817 = vpop.permute.xlu0 %1816
        %1818 = vrot.lane.b32.xlu0 %v766, 32
        %v1819 = vpop.permute.xlu0 %1818
        %v1820 = vsel %vm810, %v1817, 0
        %v1822 = vsel %vm810, %v1819, 0
        %1824 = vmatprep.subr.mxu0 0.0
        %1825 = vmatpush1.xpose.msra.mxu0 0.0
        %1826 = vmatprep.subr.mxu0 0.0
        %1827 = vmatpush1.xpose.msra.mxu0 0.0
        %1828 = vmatprep.subr.mxu0 0.0
        %1829 = vmatpush1.xpose.msra.mxu0 0.0
        %1830 = vmatprep.subr.mxu0 0.0
        %1831 = vmatpush1.xpose.msra.mxu0 0.0
        %1832 = vmatprep.subr.mxu0 0.0
        %1833 = vmatpush1.xpose.msra.mxu0 0.0
        %1834 = vmatprep.subr.mxu0 0.0
        %1835 = vmatpush1.xpose.msra.mxu0 0.0
        %1836 = vmatprep.subr.mxu0 0.0
        %1837 = vmatpush1.xpose.msra.mxu0 0.0
        %1838 = vmatprep.subr.mxu0 0.0
        %1839 = vmatpush1.xpose.msra.mxu0 0.0
        %1840 = vmatprep.subr.mxu0 0.0
        %1841 = vmatpush1.xpose.msra.mxu0 0.0
        %1842 = vmatprep.subr.mxu0 0.0
        %1843 = vmatpush1.xpose.msra.mxu0 0.0
        %1844 = vmatprep.subr.mxu0 0.0
        %1845 = vmatpush1.xpose.msra.mxu0 0.0
        %1846 = vmatprep.subr.mxu0 0.0
        %1847 = vmatpush1.xpose.msra.mxu0 0.0
        %1848 = vmatprep.subr.mxu0 0.0
        %1849 = vmatpush1.xpose.msra.mxu0 0.0
        %1850 = vmatprep.subr.mxu0 0.0
        %1851 = vmatpush1.xpose.msra.mxu0 0.0
        %1852 = vmatprep.subr.mxu0 0.0
        %1853 = vmatpush1.xpose.msra.mxu0 0.0
        %1854 = vmatprep.subr.mxu0 0.0
        %1855 = vmatpush1.xpose.msra.mxu0 %v1822
        %1856 = vmatprep.subr.mxu0 0.0
        %1857 = vmatpush2.xpose.msra.mxu0 0.0
        %1858 = vmatprep.subr.mxu0 0.0
        %1859 = vmatpush2.xpose.msra.mxu0 0.0
        %1860 = vmatprep.subr.mxu0 0.0
        %1861 = vmatpush2.xpose.msra.mxu0 0.0
        %1862 = vmatprep.subr.mxu0 0.0
        %1863 = vmatpush2.xpose.msra.mxu0 0.0
        %1864 = vmatprep.subr.mxu0 0.0
        %1865 = vmatpush2.xpose.msra.mxu0 0.0
        %1866 = vmatprep.subr.mxu0 0.0
        %1867 = vmatpush2.xpose.msra.mxu0 0.0
        %1868 = vmatprep.subr.mxu0 0.0
        %1869 = vmatpush2.xpose.msra.mxu0 0.0
        %1870 = vmatprep.subr.mxu0 0.0
        %1871 = vmatpush2.xpose.msra.mxu0 0.0
        %1872 = vmatprep.subr.mxu0 0.0
        %1873 = vmatpush2.xpose.msra.mxu0 0.0
        %1874 = vmatprep.subr.mxu0 0.0
        %1875 = vmatpush2.xpose.msra.mxu0 0.0
        %1876 = vmatprep.subr.mxu0 0.0
        %1877 = vmatpush2.xpose.msra.mxu0 0.0
        %1878 = vmatprep.subr.mxu0 0.0
        %1879 = vmatpush2.xpose.msra.mxu0 0.0
        %1880 = vmatprep.subr.mxu0 0.0
        %1881 = vmatpush2.xpose.msra.mxu0 0.0
        %1882 = vmatprep.subr.mxu0 0.0
        %1883 = vmatpush2.xpose.msra.mxu0 0.0
        %1884 = vmatprep.subr.mxu0 0.0
        %1885 = vmatpush2.xpose.msra.mxu0 0.0
        %1886 = vmatprep.subr.mxu0 0.0
        %1887 = vmatpush2.xpose.msra.mxu0 0.0
        %1888 = vmatprep.mubr.f32.mxu0 0.0
        %1889 = vmatmul.mubr.f32.gmra.mxu0 %v1820
        %v1890 = vpop.f32.mrf.mxu0
        %v1891 = vadd.f32 0.0, %v1890
        %v1892 = vpop.f32.mrf.mxu0
        %1893 = vdwg.mxu0
        %v1894 = vmul.f32 %v1891, 0.25
        %v1895 = vadd.f32 %v1894, %v892
        %v1896 = vsel %vm895, %v1895, -inf
        %1897 = vmax.xlane.f32.xlu0 %v1896
        %v1898 = vpop.xlane.xlu0 %1897
        %v1899 = vsub.f32 %v1895, %v1898
        %v1900 = vmul.f32 %v1899, 1.442695
        %v1901 = vpow.pop %v1900
        %v1902 = vsel %vm895, %v1901, 0.0
        %1903 = vadd.xlane.f32.xlu0 %v1902
        %v1904 = vpop.xlane.xlu0 %1903
        %v1905 = vrcp.pop %v1904
        %v1906 = vmul.f32 %v1901, %v1905
        %1907 = vrot.lane.b32.xlu0 %v805, 32
        %v1908 = vpop.permute.xlu0 %1907
        %v1911 = vsel %vm895, %v1906, 0
        %1913 = vmatprep.subr.mxu0 0.0
        %1914 = vmatpush1.msra.mxu0 0.0
        %1915 = vmatprep.subr.mxu0 0.0
        %1916 = vmatpush1.msra.mxu0 0.0
        %1917 = vmatprep.subr.mxu0 0.0
        %1918 = vmatpush1.msra.mxu0 0.0
        %1919 = vmatprep.subr.mxu0 0.0
        %1920 = vmatpush1.msra.mxu0 0.0
        %1921 = vmatprep.subr.mxu0 0.0
        %1922 = vmatpush1.msra.mxu0 0.0
        %1923 = vmatprep.subr.mxu0 0.0
        %1924 = vmatpush1.msra.mxu0 0.0
        %1925 = vmatprep.subr.mxu0 0.0
        %1926 = vmatpush1.msra.mxu0 0.0
        %1927 = vmatprep.subr.mxu0 0.0
        %1928 = vmatpush1.msra.mxu0 0.0
        %1929 = vmatprep.subr.mxu0 0.0
        %1930 = vmatpush1.msra.mxu0 0.0
        %1931 = vmatprep.subr.mxu0 0.0
        %1932 = vmatpush1.msra.mxu0 0.0
        %1933 = vmatprep.subr.mxu0 0.0
        %1934 = vmatpush1.msra.mxu0 0.0
        %1935 = vmatprep.subr.mxu0 0.0
        %1936 = vmatpush1.msra.mxu0 0.0
        %1937 = vmatprep.subr.mxu0 0.0
        %1938 = vmatpush1.msra.mxu0 0.0
        %1939 = vmatprep.subr.mxu0 0.0
        %1940 = vmatpush1.msra.mxu0 0.0
        %1941 = vmatprep.subr.mxu0 0.0
        %1942 = vmatpush1.msra.mxu0 0.0
        %1943 = vmatprep.subr.mxu0 0.0
        %1944 = vmatpush1.msra.mxu0 %v1908
        %1945 = vmatprep.subr.mxu0 0.0
        %1946 = vmatpush2.msra.mxu0 0.0
        %1947 = vmatprep.subr.mxu0 0.0
        %1948 = vmatpush2.msra.mxu0 0.0
        %1949 = vmatprep.subr.mxu0 0.0
        %1950 = vmatpush2.msra.mxu0 0.0
        %1951 = vmatprep.subr.mxu0 0.0
        %1952 = vmatpush2.msra.mxu0 0.0
        %1953 = vmatprep.subr.mxu0 0.0
        %1954 = vmatpush2.msra.mxu0 0.0
        %1955 = vmatprep.subr.mxu0 0.0
        %1956 = vmatpush2.msra.mxu0 0.0
        %1957 = vmatprep.subr.mxu0 0.0
        %1958 = vmatpush2.msra.mxu0 0.0
        %1959 = vmatprep.subr.mxu0 0.0
        %1960 = vmatpush2.msra.mxu0 0.0
        %1961 = vmatprep.subr.mxu0 0.0
        %1962 = vmatpush2.msra.mxu0 0.0
        %1963 = vmatprep.subr.mxu0 0.0
        %1964 = vmatpush2.msra.mxu0 0.0
        %1965 = vmatprep.subr.mxu0 0.0
        %1966 = vmatpush2.msra.mxu0 0.0
        %1967 = vmatprep.subr.mxu0 0.0
        %1968 = vmatpush2.msra.mxu0 0.0
        %1969 = vmatprep.subr.mxu0 0.0
        %1970 = vmatpush2.msra.mxu0 0.0
        %1971 = vmatprep.subr.mxu0 0.0
        %1972 = vmatpush2.msra.mxu0 0.0
        %1973 = vmatprep.subr.mxu0 0.0
        %1974 = vmatpush2.msra.mxu0 0.0
        %1975 = vmatprep.subr.mxu0 0.0
        %1976 = vmatpush2.msra.mxu0 0.0
        %1977 = vmatprep.mubr.f32.mxu0 0.0
        %1978 = vmatmul.mubr.f32.gmra.mxu0 %v1911
        %v1979 = vpop.f32.mrf.mxu0
        %v1980 = vadd.f32 0.0, %v1979
        %v1981 = vpop.f32.mrf.mxu0
        %1982 = vdwg.mxu0
        %1983 = vrot.lane.b32.xlu0 %v764, 16
        %v1984 = vpop.permute.xlu0 %1983
        %1985 = vrot.lane.b32.xlu0 %v766, 16
        %v1986 = vpop.permute.xlu0 %1985
        %v1987 = vsel %vm810, %v1984, 0
        %v1989 = vsel %vm810, %v1986, 0
        %1991 = vmatprep.subr.mxu0 0.0
        %1992 = vmatpush1.xpose.msra.mxu0 0.0
        %1993 = vmatprep.subr.mxu0 0.0
        %1994 = vmatpush1.xpose.msra.mxu0 0.0
        %1995 = vmatprep.subr.mxu0 0.0
        %1996 = vmatpush1.xpose.msra.mxu0 0.0
        %1997 = vmatprep.subr.mxu0 0.0
        %1998 = vmatpush1.xpose.msra.mxu0 0.0
        %1999 = vmatprep.subr.mxu0 0.0
        %2000 = vmatpush1.xpose.msra.mxu0 0.0
        %2001 = vmatprep.subr.mxu0 0.0
        %2002 = vmatpush1.xpose.msra.mxu0 0.0
        %2003 = vmatprep.subr.mxu0 0.0
        %2004 = vmatpush1.xpose.msra.mxu0 0.0
        %2005 = vmatprep.subr.mxu0 0.0
        %2006 = vmatpush1.xpose.msra.mxu0 0.0
        %2007 = vmatprep.subr.mxu0 0.0
        %2008 = vmatpush1.xpose.msra.mxu0 0.0
        %2009 = vmatprep.subr.mxu0 0.0
        %2010 = vmatpush1.xpose.msra.mxu0 0.0
        %2011 = vmatprep.subr.mxu0 0.0
        %2012 = vmatpush1.xpose.msra.mxu0 0.0
        %2013 = vmatprep.subr.mxu0 0.0
        %2014 = vmatpush1.xpose.msra.mxu0 0.0
        %2015 = vmatprep.subr.mxu0 0.0
        %2016 = vmatpush1.xpose.msra.mxu0 0.0
        %2017 = vmatprep.subr.mxu0 0.0
        %2018 = vmatpush1.xpose.msra.mxu0 0.0
        %2019 = vmatprep.subr.mxu0 0.0
        %2020 = vmatpush1.xpose.msra.mxu0 0.0
        %2021 = vmatprep.subr.mxu0 0.0
        %2022 = vmatpush1.xpose.msra.mxu0 %v1989
        %2023 = vmatprep.subr.mxu0 0.0
        %2024 = vmatpush2.xpose.msra.mxu0 0.0
        %2025 = vmatprep.subr.mxu0 0.0
        %2026 = vmatpush2.xpose.msra.mxu0 0.0
        %2027 = vmatprep.subr.mxu0 0.0
        %2028 = vmatpush2.xpose.msra.mxu0 0.0
        %2029 = vmatprep.subr.mxu0 0.0
        %2030 = vmatpush2.xpose.msra.mxu0 0.0
        %2031 = vmatprep.subr.mxu0 0.0
        %2032 = vmatpush2.xpose.msra.mxu0 0.0
        %2033 = vmatprep.subr.mxu0 0.0
        %2034 = vmatpush2.xpose.msra.mxu0 0.0
        %2035 = vmatprep.subr.mxu0 0.0
        %2036 = vmatpush2.xpose.msra.mxu0 0.0
        %2037 = vmatprep.subr.mxu0 0.0
        %2038 = vmatpush2.xpose.msra.mxu0 0.0
        %2039 = vmatprep.subr.mxu0 0.0
        %2040 = vmatpush2.xpose.msra.mxu0 0.0
        %2041 = vmatprep.subr.mxu0 0.0
        %2042 = vmatpush2.xpose.msra.mxu0 0.0
        %2043 = vmatprep.subr.mxu0 0.0
        %2044 = vmatpush2.xpose.msra.mxu0 0.0
        %2045 = vmatprep.subr.mxu0 0.0
        %2046 = vmatpush2.xpose.msra.mxu0 0.0
        %2047 = vmatprep.subr.mxu0 0.0
        %2048 = vmatpush2.xpose.msra.mxu0 0.0
        %2049 = vmatprep.subr.mxu0 0.0
        %2050 = vmatpush2.xpose.msra.mxu0 0.0
        %2051 = vmatprep.subr.mxu0 0.0
        %2052 = vmatpush2.xpose.msra.mxu0 0.0
        %2053 = vmatprep.subr.mxu0 0.0
        %2054 = vmatpush2.xpose.msra.mxu0 0.0
        %2055 = vmatprep.mubr.f32.mxu0 0.0
        %2056 = vmatmul.mubr.f32.gmra.mxu0 %v1987
        %v2057 = vpop.f32.mrf.mxu0
        %v2058 = vadd.f32 0.0, %v2057
        %v2059 = vpop.f32.mrf.mxu0
        %2060 = vdwg.mxu0
        %v2061 = vmul.f32 %v2058, 0.25
        %v2062 = vadd.f32 %v2061, %v892
        %v2063 = vsel %vm895, %v2062, -inf
        %2064 = vmax.xlane.f32.xlu0 %v2063
        %v2065 = vpop.xlane.xlu0 %2064
        %v2066 = vsub.f32 %v2062, %v2065
        %v2067 = vmul.f32 %v2066, 1.442695
        %v2068 = vpow.pop %v2067
        %v2069 = vsel %vm895, %v2068, 0.0
        %2070 = vadd.xlane.f32.xlu0 %v2069
        %v2071 = vpop.xlane.xlu0 %2070
        %v2072 = vrcp.pop %v2071
        %v2073 = vmul.f32 %v2068, %v2072
        %2074 = vrot.lane.b32.xlu0 %v805, 16
        %v2075 = vpop.permute.xlu0 %2074
        %v2078 = vsel %vm895, %v2073, 0
        %2080 = vmatprep.subr.mxu0 0.0
        %2081 = vmatpush1.msra.mxu0 0.0
        %2082 = vmatprep.subr.mxu0 0.0
        %2083 = vmatpush1.msra.mxu0 0.0
        %2084 = vmatprep.subr.mxu0 0.0
        %2085 = vmatpush1.msra.mxu0 0.0
        %2086 = vmatprep.subr.mxu0 0.0
        %2087 = vmatpush1.msra.mxu0 0.0
        %2088 = vmatprep.subr.mxu0 0.0
        %2089 = vmatpush1.msra.mxu0 0.0
        %2090 = vmatprep.subr.mxu0 0.0
        %2091 = vmatpush1.msra.mxu0 0.0
        %2092 = vmatprep.subr.mxu0 0.0
        %2093 = vmatpush1.msra.mxu0 0.0
        %2094 = vmatprep.subr.mxu0 0.0
        %2095 = vmatpush1.msra.mxu0 0.0
        %2096 = vmatprep.subr.mxu0 0.0
        %2097 = vmatpush1.msra.mxu0 0.0
        %2098 = vmatprep.subr.mxu0 0.0
        %2099 = vmatpush1.msra.mxu0 0.0
        %2100 = vmatprep.subr.mxu0 0.0
        %2101 = vmatpush1.msra.mxu0 0.0
        %2102 = vmatprep.subr.mxu0 0.0
        %2103 = vmatpush1.msra.mxu0 0.0
        %2104 = vmatprep.subr.mxu0 0.0
        %2105 = vmatpush1.msra.mxu0 0.0
        %2106 = vmatprep.subr.mxu0 0.0
        %2107 = vmatpush1.msra.mxu0 0.0
        %2108 = vmatprep.subr.mxu0 0.0
        %2109 = vmatpush1.msra.mxu0 0.0
        %2110 = vmatprep.subr.mxu0 0.0
        %2111 = vmatpush1.msra.mxu0 %v2075
        %2112 = vmatprep.subr.mxu0 0.0
        %2113 = vmatpush2.msra.mxu0 0.0
        %2114 = vmatprep.subr.mxu0 0.0
        %2115 = vmatpush2.msra.mxu0 0.0
        %2116 = vmatprep.subr.mxu0 0.0
        %2117 = vmatpush2.msra.mxu0 0.0
        %2118 = vmatprep.subr.mxu0 0.0
        %2119 = vmatpush2.msra.mxu0 0.0
        %2120 = vmatprep.subr.mxu0 0.0
        %2121 = vmatpush2.msra.mxu0 0.0
        %2122 = vmatprep.subr.mxu0 0.0
        %2123 = vmatpush2.msra.mxu0 0.0
        %2124 = vmatprep.subr.mxu0 0.0
        %2125 = vmatpush2.msra.mxu0 0.0
        %2126 = vmatprep.subr.mxu0 0.0
        %2127 = vmatpush2.msra.mxu0 0.0
        %2128 = vmatprep.subr.mxu0 0.0
        %2129 = vmatpush2.msra.mxu0 0.0
        %2130 = vmatprep.subr.mxu0 0.0
        %2131 = vmatpush2.msra.mxu0 0.0
        %2132 = vmatprep.subr.mxu0 0.0
        %2133 = vmatpush2.msra.mxu0 0.0
        %2134 = vmatprep.subr.mxu0 0.0
        %2135 = vmatpush2.msra.mxu0 0.0
        %2136 = vmatprep.subr.mxu0 0.0
        %2137 = vmatpush2.msra.mxu0 0.0
        %2138 = vmatprep.subr.mxu0 0.0
        %2139 = vmatpush2.msra.mxu0 0.0
        %2140 = vmatprep.subr.mxu0 0.0
        %2141 = vmatpush2.msra.mxu0 0.0
        %2142 = vmatprep.subr.mxu0 0.0
        %2143 = vmatpush2.msra.mxu0 0.0
        %2144 = vmatprep.mubr.f32.mxu0 0.0
        %2145 = vmatmul.mubr.f32.gmra.mxu0 %v2078
        %v2146 = vpop.f32.mrf.mxu0
        %v2147 = vadd.f32 0.0, %v2146
        %v2148 = vpop.f32.mrf.mxu0
        %2149 = vdwg.mxu0
        %2151 = vrot.lane.b32.xlu0 %v1145, 16
        %v2152 = vpop.permute.xlu0 %2151
        %2155 = vrot.lane.b32.xlu0 %v1312, 32
        %v2156 = vpop.permute.xlu0 %2155
        %2159 = vrot.lane.b32.xlu0 %v1479, 48
        %v2160 = vpop.permute.xlu0 %2159
        %2163 = vrot.lane.b32.xlu0 %v1646, 64
        %v2164 = vpop.permute.xlu0 %2163
        %2167 = vrot.lane.b32.xlu0 %v1813, 80
        %v2168 = vpop.permute.xlu0 %2167
        %2171 = vrot.lane.b32.xlu0 %v1980, 96
        %v2172 = vpop.permute.xlu0 %2171
        %2175 = vrot.lane.b32.xlu0 %v2147, 112
        %v2176 = vpop.permute.xlu0 %2175
        %v2178 = vsel %vm810, %v977, %v2152
        %vm2179 = vcmask 261120
        %v2180 = vsel %vm2179, %v2178, %v2156
        %vm2181 = vcmask 392192
        %v2182 = vsel %vm2181, %v2180, %v2160
        %vm2183 = vcmask 523264
        %v2184 = vsel %vm2183, %v2182, %v2164
        %vm2185 = vcmask 654336
        %v2186 = vsel %vm2185, %v2184, %v2168
        %vm2187 = vcmask 785408
        %v2188 = vsel %vm2187, %v2186, %v2172
        %vm2189 = vcmask 916480
        %v2190 = vsel %vm2189, %v2188, %v2176
        %v2191 = vpack.c.bf16 %v2190, %v2190
        %v2192 = vld [vmem:[#allocation4] sm:$0xf]
        %v2193 = vld [vmem:[#allocation4 + $0x4] sm:$0xf]
        %v2194 = vld [vmem:[#allocation4 + $0x8] sm:$0xf]
        %v2195 = vld [vmem:[#allocation4 + $0xc] sm:$0xf]
        %v2196 = vld [vmem:[#allocation4 + $0x10] sm:$0xf]
        %v2197 = vld [vmem:[#allocation4 + $0x14] sm:$0xf]
        %v2198 = vld [vmem:[#allocation4 + $0x18] sm:$0xf]
        %v2199 = vld [vmem:[#allocation4 + $0x1c] sm:$0xf]
        %v2200 = vld [vmem:[#allocation4 + $0x20] sm:$0xf]
        %v2201 = vld [vmem:[#allocation4 + $0x24] sm:$0xf]
        %v2202 = vld [vmem:[#allocation4 + $0x28] sm:$0xf]
        %v2203 = vld [vmem:[#allocation4 + $0x2c] sm:$0xf]
        %v2204 = vld [vmem:[#allocation4 + $0x30] sm:$0xf]
        %v2205 = vld [vmem:[#allocation4 + $0x34] sm:$0xf]
        %v2206 = vld [vmem:[#allocation4 + $0x38] sm:$0xf]
        %v2207 = vld [vmem:[#allocation4 + $0x3c] sm:$0xf]
        %v2208 = vld [vmem:[%s5] sm:$0x1]
        %v2210 = vlaneseq
        %v2211 = vshrl.u32 %v2210, 7
        %v2212 = vsub.s32 0, %v2211
        %v2213 = vrot.slane %v2208, %v2212
        %v2231 = vunpack.c.l.b16 %v2192
        %v2232 = vunpack.c.l.b16 %v2193
        %v2233 = vunpack.c.l.b16 %v2194
        %v2234 = vunpack.c.l.b16 %v2195
        %v2235 = vunpack.c.l.b16 %v2196
        %v2236 = vunpack.c.l.b16 %v2197
        %v2237 = vunpack.c.l.b16 %v2198
        %v2238 = vunpack.c.l.b16 %v2199
        %v2239 = vunpack.c.l.b16 %v2200
        %v2240 = vunpack.c.l.b16 %v2201
        %v2241 = vunpack.c.l.b16 %v2202
        %v2242 = vunpack.c.l.b16 %v2203
        %v2243 = vunpack.c.l.b16 %v2204
        %v2244 = vunpack.c.l.b16 %v2205
        %v2245 = vunpack.c.l.b16 %v2206
        %v2246 = vunpack.c.l.b16 %v2207
        %v2247 = vpack.c.b16 %v2232, %v2231
        %v2248 = vpack.c.b16 %v2234, %v2233
        %v2249 = vpack.c.b16 %v2236, %v2235
        %v2250 = vpack.c.b16 %v2238, %v2237
        %v2251 = vpack.c.b16 %v2240, %v2239
        %v2252 = vpack.c.b16 %v2242, %v2241
        %v2253 = vpack.c.b16 %v2244, %v2243
        %v2254 = vpack.c.b16 %v2246, %v2245
        %2263 = vmatprep.subr.bf16.mxu0 0
        %2264 = vmatpush1.bf16.msra.mxu0 %v2254
        %2265 = vmatprep.subr.bf16.mxu0 0
        %2266 = vmatpush1.bf16.msra.mxu0 %v2253
        %2267 = vmatprep.subr.bf16.mxu0 0
        %2268 = vmatpush1.bf16.msra.mxu0 %v2252
        %2269 = vmatprep.subr.bf16.mxu0 0
        %2270 = vmatpush1.bf16.msra.mxu0 %v2251
        %2271 = vmatprep.subr.bf16.mxu0 0
        %2272 = vmatpush1.bf16.msra.mxu0 %v2250
        %2273 = vmatprep.subr.bf16.mxu0 0
        %2274 = vmatpush1.bf16.msra.mxu0 %v2249
        %2275 = vmatprep.subr.bf16.mxu0 0
        %2276 = vmatpush1.bf16.msra.mxu0 %v2248
        %2277 = vmatprep.subr.bf16.mxu0 0
        %2278 = vmatpush1.bf16.msra.mxu0 %v2247
        %2279 = vmatprep.subr.bf16.mxu0 0
        %2280 = vmatpush2.bf16.msra.mxu0 0
        %2281 = vmatprep.subr.bf16.mxu0 0
        %2282 = vmatpush2.bf16.msra.mxu0 0
        %2283 = vmatprep.subr.bf16.mxu0 0
        %2284 = vmatpush2.bf16.msra.mxu0 0
        %2285 = vmatprep.subr.bf16.mxu0 0
        %2286 = vmatpush2.bf16.msra.mxu0 0
        %2287 = vmatprep.subr.bf16.mxu0 0
        %2288 = vmatpush2.bf16.msra.mxu0 0
        %2289 = vmatprep.subr.bf16.mxu0 0
        %2290 = vmatpush2.bf16.msra.mxu0 0
        %2291 = vmatprep.subr.bf16.mxu0 0
        %2292 = vmatpush2.bf16.msra.mxu0 0
        %2293 = vmatprep.subr.bf16.mxu0 0
        %2294 = vmatpush2.bf16.msra.mxu0 0
        %2295 = vmatprep.mubr.bf16.mxu0 0
        %2296 = vmatmul.mubr.bf16.gmra.mxu0 %v2191
        %v2297 = vpop.f32.mrf.mxu0
        %v2298 = vadd.f32 %v2213, %v2297
        %v2299 = vpop.f32.mrf.mxu0
        %v2300 = vpop.f32.mrf.mxu0
        %v2301 = vpop.f32.mrf.mxu0
        %2302 = vdwg.mxu0
        %v2303 = vadd.f32 %v2298, %v549
        %2304 = vadd.xlane.f32.xlu0 %v2303
        %v2305 = vpop.xlane.xlu0 %2304
        %v2306 = vrcp.pop 128.0
        %v2307 = vmul.f32 %v2305, %v2306
        %v2308 = vsub.f32 %v2303, %v2307
        %v2309 = vmul.f32 %v2308, %v2308
        %2310 = vadd.xlane.f32.xlu0 %v2309
        %v2311 = vpop.xlane.xlu0 %2310
        %v2312 = vmul.f32 %v2311, %v2306
        %v2313 = vadd.f32 %v2312, 1e-12
        %v2314 = vrsqrt.pop %v2313
        %v2315 = vmul.f32 %v2308, %v2314
        %v2316 = vld [vmem:[%s6] sm:$0x1]
        %v2318 = vlaneseq
        %v2319 = vshrl.u32 %v2318, 7
        %v2320 = vsub.s32 0, %v2319
        %v2321 = vrot.slane %v2316, %v2320
        %v2323 = vmul.f32 %v2315, %v2321
        %v2324 = vld [vmem:[%s7] sm:$0x1]
        %v2326 = vlaneseq
        %v2327 = vshrl.u32 %v2326, 7
        %v2328 = vsub.s32 0, %v2327
        %v2329 = vrot.slane %v2324, %v2328
        %v2331 = vadd.f32 %v2323, %v2329
        %v2332 = vpack.c.bf16 %v2331, %v2331
        %v2333 = vld [vmem:[#allocation6] sm:$0xff]
        %v2334 = vld [vmem:[#allocation6 + $0x8] sm:$0xff]
        %v2335 = vld [vmem:[#allocation6 + $0x10] sm:$0xff]
        %v2336 = vld [vmem:[#allocation6 + $0x18] sm:$0xff]
        %v2337 = vld [vmem:[#allocation6 + $0x20] sm:$0xff]
        %v2338 = vld [vmem:[#allocation6 + $0x28] sm:$0xff]
        %v2339 = vld [vmem:[#allocation6 + $0x30] sm:$0xff]
        %v2340 = vld [vmem:[#allocation6 + $0x38] sm:$0xff]
        %v2341 = vld [vmem:[#allocation6 + $0x40] sm:$0xff]
        %v2342 = vld [vmem:[#allocation6 + $0x48] sm:$0xff]
        %v2343 = vld [vmem:[#allocation6 + $0x50] sm:$0xff]
        %v2344 = vld [vmem:[#allocation6 + $0x58] sm:$0xff]
        %v2345 = vld [vmem:[#allocation6 + $0x60] sm:$0xff]
        %v2346 = vld [vmem:[#allocation6 + $0x68] sm:$0xff]
        %v2347 = vld [vmem:[#allocation6 + $0x70] sm:$0xff]
        %v2348 = vld [vmem:[#allocation6 + $0x78] sm:$0xff]
        %v2349 = vld [vmem:[%s9] sm:$0x3]
        %v2351 = vlaneseq
        %v2352 = vshrl.u32 %v2351, 7
        %v2353 = vsub.s32 0, %v2352
        %v2354 = vrot.slane %v2349, %v2353
        %v2355 = vlaneseq
        %v2356 = vshrl.u32 %v2355, 7
        %v2357 = vsub.s32 1, %v2356
        %v2358 = vrot.slane %v2349, %v2357
        %v2377 = vunpack.c.l.b16 %v2333
        %v2378 = vunpack.c.h.b16 %v2333
        %v2379 = vunpack.c.l.b16 %v2334
        %v2380 = vunpack.c.h.b16 %v2334
        %v2381 = vunpack.c.l.b16 %v2335
        %v2382 = vunpack.c.h.b16 %v2335
        %v2383 = vunpack.c.l.b16 %v2336
        %v2384 = vunpack.c.h.b16 %v2336
        %v2385 = vunpack.c.l.b16 %v2337
        %v2386 = vunpack.c.h.b16 %v2337
        %v2387 = vunpack.c.l.b16 %v2338
        %v2388 = vunpack.c.h.b16 %v2338
        %v2389 = vunpack.c.l.b16 %v2339
        %v2390 = vunpack.c.h.b16 %v2339
        %v2391 = vunpack.c.l.b16 %v2340
        %v2392 = vunpack.c.h.b16 %v2340
        %v2393 = vunpack.c.l.b16 %v2341
        %v2394 = vunpack.c.h.b16 %v2341
        %v2395 = vunpack.c.l.b16 %v2342
        %v2396 = vunpack.c.h.b16 %v2342
        %v2397 = vunpack.c.l.b16 %v2343
        %v2398 = vunpack.c.h.b16 %v2343
        %v2399 = vunpack.c.l.b16 %v2344
        %v2400 = vunpack.c.h.b16 %v2344
        %v2401 = vunpack.c.l.b16 %v2345
        %v2402 = vunpack.c.h.b16 %v2345
        %v2403 = vunpack.c.l.b16 %v2346
        %v2404 = vunpack.c.h.b16 %v2346
        %v2405 = vunpack.c.l.b16 %v2347
        %v2406 = vunpack.c.h.b16 %v2347
        %v2407 = vunpack.c.l.b16 %v2348
        %v2408 = vunpack.c.h.b16 %v2348
        %v2409 = vpack.c.b16 %v2379, %v2377
        %v2410 = vpack.c.b16 %v2380, %v2378
        %v2411 = vpack.c.b16 %v2383, %v2381
        %v2412 = vpack.c.b16 %v2384, %v2382
        %v2413 = vpack.c.b16 %v2387, %v2385
        %v2414 = vpack.c.b16 %v2388, %v2386
        %v2415 = vpack.c.b16 %v2391, %v2389
        %v2416 = vpack.c.b16 %v2392, %v2390
        %v2417 = vpack.c.b16 %v2395, %v2393
        %v2418 = vpack.c.b16 %v2396, %v2394
        %v2419 = vpack.c.b16 %v2399, %v2397
        %v2420 = vpack.c.b16 %v2400, %v2398
        %v2421 = vpack.c.b16 %v2403, %v2401
        %v2422 = vpack.c.b16 %v2404, %v2402
        %v2423 = vpack.c.b16 %v2407, %v2405
        %v2424 = vpack.c.b16 %v2408, %v2406
        %2441 = vmatprep.subr.bf16.mxu0 %v2424
        %2442 = vmatpush1.bf16.msra.mxu0 %v2423
        %2443 = vmatprep.subr.bf16.mxu0 %v2422
        %2444 = vmatpush1.bf16.msra.mxu0 %v2421
        %2445 = vmatprep.subr.bf16.mxu0 %v2420
        %2446 = vmatpush1.bf16.msra.mxu0 %v2419
        %2447 = vmatprep.subr.bf16.mxu0 %v2418
        %2448 = vmatpush1.bf16.msra.mxu0 %v2417
        %2449 = vmatprep.subr.bf16.mxu0 %v2416
        %2450 = vmatpush1.bf16.msra.mxu0 %v2415
        %2451 = vmatprep.subr.bf16.mxu0 %v2414
        %2452 = vmatpush1.bf16.msra.mxu0 %v2413
        %2453 = vmatprep.subr.bf16.mxu0 %v2412
        %2454 = vmatpush1.bf16.msra.mxu0 %v2411
        %2455 = vmatprep.subr.bf16.mxu0 %v2410
        %2456 = vmatpush1.bf16.msra.mxu0 %v2409
        %2457 = vmatprep.subr.bf16.mxu0 0
        %2458 = vmatpush2.bf16.msra.mxu0 0
        %2459 = vmatprep.subr.bf16.mxu0 0
        %2460 = vmatpush2.bf16.msra.mxu0 0
        %2461 = vmatprep.subr.bf16.mxu0 0
        %2462 = vmatpush2.bf16.msra.mxu0 0
        %2463 = vmatprep.subr.bf16.mxu0 0
        %2464 = vmatpush2.bf16.msra.mxu0 0
        %2465 = vmatprep.subr.bf16.mxu0 0
        %2466 = vmatpush2.bf16.msra.mxu0 0
        %2467 = vmatprep.subr.bf16.mxu0 0
        %2468 = vmatpush2.bf16.msra.mxu0 0
        %2469 = vmatprep.subr.bf16.mxu0 0
        %2470 = vmatpush2.bf16.msra.mxu0 0
        %2471 = vmatprep.subr.bf16.mxu0 0
        %2472 = vmatpush2.bf16.msra.mxu0 0
        %2473 = vmatprep.mubr.bf16.mxu0 0
        %2474 = vmatmul.mubr.bf16.gmra.mxu0 %v2332
        %v2475 = vpop.f32.mrf.mxu0
        %v2476 = vadd.f32 %v2354, %v2475
        %v2477 = vpop.f32.mrf.mxu0
        %v2478 = vadd.f32 %v2358, %v2477
        %v2479 = vpop.f32.mrf.mxu0
        %v2480 = vpop.f32.mrf.mxu0
        %2481 = vdwg.mxu0
        %v2482 = vmul.f32 %v2476, 0.5
        %v2483 = vmul.f32 %v2478, 0.5
        %v2484 = vmul.f32 %v2476, 0.70710677
        %v2485 = vmul.f32 %v2478, 0.70710677
        %v2486 = verf.f32.pop %v2484
        %v2487 = verf.f32.pop %v2485
        %v2488 = vadd.f32 %v2486, 1.0
        %v2489 = vadd.f32 %v2487, 1.0
        %v2490 = vmul.f32 %v2482, %v2488
        %v2491 = vmul.f32 %v2483, %v2489
        %v2492 = vpack.c.bf16 %v2490, %v2490
        %v2493 = vpack.c.bf16 %v2491, %v2491
        %v2494 = vld [vmem:[#allocation7] sm:$0xf]
        %v2495 = vld [vmem:[#allocation7 + $0x4] sm:$0xf]
        %v2496 = vld [vmem:[#allocation7 + $0x8] sm:$0xf]
        %v2497 = vld [vmem:[#allocation7 + $0xc] sm:$0xf]
        %v2498 = vld [vmem:[#allocation7 + $0x10] sm:$0xf]
        %v2499 = vld [vmem:[#allocation7 + $0x14] sm:$0xf]
        %v2500 = vld [vmem:[#allocation7 + $0x18] sm:$0xf]
        %v2501 = vld [vmem:[#allocation7 + $0x1c] sm:$0xf]
        %v2502 = vld [vmem:[#allocation7 + $0x20] sm:$0xf]
        %v2503 = vld [vmem:[#allocation7 + $0x24] sm:$0xf]
        %v2504 = vld [vmem:[#allocation7 + $0x28] sm:$0xf]
        %v2505 = vld [vmem:[#allocation7 + $0x2c] sm:$0xf]
        %v2506 = vld [vmem:[#allocation7 + $0x30] sm:$0xf]
        %v2507 = vld [vmem:[#allocation7 + $0x34] sm:$0xf]
        %v2508 = vld [vmem:[#allocation7 + $0x38] sm:$0xf]
        %v2509 = vld [vmem:[#allocation7 + $0x3c] sm:$0xf]
        %v2510 = vld [vmem:[#allocation7 + $0x40] sm:$0xf]
        %v2511 = vld [vmem:[#allocation7 + $0x44] sm:$0xf]
        %v2512 = vld [vmem:[#allocation7 + $0x48] sm:$0xf]
        %v2513 = vld [vmem:[#allocation7 + $0x4c] sm:$0xf]
        %v2514 = vld [vmem:[#allocation7 + $0x50] sm:$0xf]
        %v2515 = vld [vmem:[#allocation7 + $0x54] sm:$0xf]
        %v2516 = vld [vmem:[#allocation7 + $0x58] sm:$0xf]
        %v2517 = vld [vmem:[#allocation7 + $0x5c] sm:$0xf]
        %v2518 = vld [vmem:[#allocation7 + $0x60] sm:$0xf]
        %v2519 = vld [vmem:[#allocation7 + $0x64] sm:$0xf]
        %v2520 = vld [vmem:[#allocation7 + $0x68] sm:$0xf]
        %v2521 = vld [vmem:[#allocation7 + $0x6c] sm:$0xf]
        %v2522 = vld [vmem:[#allocation7 + $0x70] sm:$0xf]
        %v2523 = vld [vmem:[#allocation7 + $0x74] sm:$0xf]
        %v2524 = vld [vmem:[#allocation7 + $0x78] sm:$0xf]
        %v2525 = vld [vmem:[#allocation7 + $0x7c] sm:$0xf]
        %v2526 = vld [vmem:[#allocation9] sm:$0x1]
        %v2528 = vlaneseq
        %v2529 = vshrl.u32 %v2528, 7
        %v2530 = vsub.s32 0, %v2529
        %v2531 = vrot.slane %v2526, %v2530
        %v2565 = vunpack.c.l.b16 %v2494
        %v2566 = vunpack.c.l.b16 %v2495
        %v2567 = vunpack.c.l.b16 %v2496
        %v2568 = vunpack.c.l.b16 %v2497
        %v2569 = vunpack.c.l.b16 %v2498
        %v2570 = vunpack.c.l.b16 %v2499
        %v2571 = vunpack.c.l.b16 %v2500
        %v2572 = vunpack.c.l.b16 %v2501
        %v2573 = vunpack.c.l.b16 %v2502
        %v2574 = vunpack.c.l.b16 %v2503
        %v2575 = vunpack.c.l.b16 %v2504
        %v2576 = vunpack.c.l.b16 %v2505
        %v2577 = vunpack.c.l.b16 %v2506
        %v2578 = vunpack.c.l.b16 %v2507
        %v2579 = vunpack.c.l.b16 %v2508
        %v2580 = vunpack.c.l.b16 %v2509
        %v2581 = vunpack.c.l.b16 %v2510
        %v2582 = vunpack.c.l.b16 %v2511
        %v2583 = vunpack.c.l.b16 %v2512
        %v2584 = vunpack.c.l.b16 %v2513
        %v2585 = vunpack.c.l.b16 %v2514
        %v2586 = vunpack.c.l.b16 %v2515
        %v2587 = vunpack.c.l.b16 %v2516
        %v2588 = vunpack.c.l.b16 %v2517
        %v2589 = vunpack.c.l.b16 %v2518
        %v2590 = vunpack.c.l.b16 %v2519
        %v2591 = vunpack.c.l.b16 %v2520
        %v2592 = vunpack.c.l.b16 %v2521
        %v2593 = vunpack.c.l.b16 %v2522
        %v2594 = vunpack.c.l.b16 %v2523
        %v2595 = vunpack.c.l.b16 %v2524
        %v2596 = vunpack.c.l.b16 %v2525
        %v2597 = vpack.c.b16 %v2566, %v2565
        %v2598 = vpack.c.b16 %v2568, %v2567
        %v2599 = vpack.c.b16 %v2570, %v2569
        %v2600 = vpack.c.b16 %v2572, %v2571
        %v2601 = vpack.c.b16 %v2574, %v2573
        %v2602 = vpack.c.b16 %v2576, %v2575
        %v2603 = vpack.c.b16 %v2578, %v2577
        %v2604 = vpack.c.b16 %v2580, %v2579
        %v2605 = vpack.c.b16 %v2582, %v2581
        %v2606 = vpack.c.b16 %v2584, %v2583
        %v2607 = vpack.c.b16 %v2586, %v2585
        %v2608 = vpack.c.b16 %v2588, %v2587
        %v2609 = vpack.c.b16 %v2590, %v2589
        %v2610 = vpack.c.b16 %v2592, %v2591
        %v2611 = vpack.c.b16 %v2594, %v2593
        %v2612 = vpack.c.b16 %v2596, %v2595
        %2629 = vmatprep.subr.bf16.mxu0 0
        %2630 = vmatpush1.bf16.msra.mxu0 %v2604
        %2631 = vmatprep.subr.bf16.mxu0 0
        %2632 = vmatpush1.bf16.msra.mxu0 %v2603
        %2633 = vmatprep.subr.bf16.mxu0 0
        %2634 = vmatpush1.bf16.msra.mxu0 %v2602
        %2635 = vmatprep.subr.bf16.mxu0 0
        %2636 = vmatpush1.bf16.msra.mxu0 %v2601
        %2637 = vmatprep.subr.bf16.mxu0 0
        %2638 = vmatpush1.bf16.msra.mxu0 %v2600
        %2639 = vmatprep.subr.bf16.mxu0 0
        %2640 = vmatpush1.bf16.msra.mxu0 %v2599
        %2641 = vmatprep.subr.bf16.mxu0 0
        %2642 = vmatpush1.bf16.msra.mxu0 %v2598
        %2643 = vmatprep.subr.bf16.mxu0 0
        %2644 = vmatpush1.bf16.msra.mxu0 %v2597
        %2645 = vmatprep.subr.bf16.mxu0 0
        %2646 = vmatpush2.bf16.msra.mxu0 %v2612
        %2647 = vmatprep.subr.bf16.mxu0 0
        %2648 = vmatpush2.bf16.msra.mxu0 %v2611
        %2649 = vmatprep.subr.bf16.mxu0 0
        %2650 = vmatpush2.bf16.msra.mxu0 %v2610
        %2651 = vmatprep.subr.bf16.mxu0 0
        %2652 = vmatpush2.bf16.msra.mxu0 %v2609
        %2653 = vmatprep.subr.bf16.mxu0 0
        %2654 = vmatpush2.bf16.msra.mxu0 %v2608
        %2655 = vmatprep.subr.bf16.mxu0 0
        %2656 = vmatpush2.bf16.msra.mxu0 %v2607
        %2657 = vmatprep.subr.bf16.mxu0 0
        %2658 = vmatpush2.bf16.msra.mxu0 %v2606
        %2659 = vmatprep.subr.bf16.mxu0 0
        %2660 = vmatpush2.bf16.msra.mxu0 %v2605
        %2661 = vmatprep.mubr.bf16.mxu0 %v2493
        %2662 = vmatmul.mubr.bf16.gmra.mxu0 %v2492
        %v2663 = vpop.f32.mrf.mxu0
        %v2664 = vadd.f32 %v2531, %v2663
        %v2665 = vpop.f32.mrf.mxu0
        %v2666 = vpop.f32.mrf.mxu0
        %v2667 = vpop.f32.mrf.mxu0
        %2668 = vdwg.mxu0
        %v2669 = vadd.f32 %v2664, %v2331
        %2670 = vadd.xlane.f32.xlu0 %v2669
        %v2671 = vpop.xlane.xlu0 %2670
        %v2672 = vmul.f32 %v2671, %v2306
        %v2673 = vsub.f32 %v2669, %v2672
        %v2674 = vmul.f32 %v2673, %v2673
        %2675 = vadd.xlane.f32.xlu0 %v2674
        %v2676 = vpop.xlane.xlu0 %2675
        %v2677 = vmul.f32 %v2676, %v2306
        %v2678 = vadd.f32 %v2677, 1e-12
        %v2679 = vrsqrt.pop %v2678
        %v2680 = vmul.f32 %v2673, %v2679
        %v2681 = vld [vmem:[%s12] sm:$0x1]
        %v2683 = vlaneseq
        %v2684 = vshrl.u32 %v2683, 7
        %v2685 = vsub.s32 0, %v2684
        %v2686 = vrot.slane %v2681, %v2685
        %v2688 = vmul.f32 %v2680, %v2686
        %v2689 = vld [vmem:[%s13] sm:$0x1]
        %v2691 = vlaneseq
        %v2692 = vshrl.u32 %v2691, 7
        %v2693 = vsub.s32 0, %v2692
        %v2694 = vrot.slane %v2689, %v2693
        %v2696 = vadd.f32 %v2688, %v2694
        %2697 = vst [vmem:[%s547] sm:$0xff] %v2696
        %p2698 = scmp.lt.s32.totalorder %s28, 1
        %s2699 = scalar_select %p2698, %s28, 1
        %s2700 = smul.addr %s2699, 8
        %s2701 = scalar_lea.vmem %s14, %s2700
        // Predicated region
        $region97: #{_text_forward.2} parent=75 // pred_check
          %p2702 = pneg %p350
        $region98: #{_text_forward.2} parent=75 // pred_check_branch
          %2704 = sbr.rel (%p2702) target = $region100
        $region99: #{_text_forward.2} parent=75 // pred_region
          _
        $region100: #{_text_forward.2} parent=75 // pred_fallthru
          _
      $region76: #{_text_forward.2} parent=5 // pred_fallthru
        _
      %p2705 = scmp.le.s32.totalorder 2, %s23
      // Predicated region
      $region101: #{_text_forward.2} parent=5 // pred_check
        %p2706 = pneg %p2705
      $region102: #{_text_forward.2} parent=5 // pred_check_branch
        %2708 = sbr.rel (%p2706) target = $region104
      $region103: #{_text_forward.2} parent=5 // pred_region
        %s2709 = ssub.s32 %s23, 2
        // Predicated region
        $region105: #{_text_forward.2} parent=103 // pred_check
          %p2710 = pneg %p356
        $region106: #{_text_forward.2} parent=103 // pred_check_branch
          %2712 = sbr.rel (%p2710) target = $region108
        $region107: #{_text_forward.2} parent=103 // pred_region
          %p2713 = scmp.lt.s32.totalorder %s29, 1
          %s2714 = scalar_select %p2713, %s29, 1
          %s2715 = smul.addr %s2714, 8
          %s2716 = scalar_lea.vmem %s14, %s2715
        $region108: #{_text_forward.2} parent=103 // pred_fallthru
          _
      $region104: #{_text_forward.2} parent=5 // pred_fallthru
        _
    $region6: #{_text_forward.2} parent=1 // loop_footer
      %s27 = sadd.s32 1, %s23
    $region7: #{_text_forward.2} parent=1 // loop_footer_branch
      %22 = sbr.rel target = $region3
    $region8: #{_text_forward.2} parent=1 // loop_exit
      _
    %2717 = vsyncpa [#allocation3], 1
    %s2718 = scalar_lea.sflag [#allocation3], 1
    %2719 = vsyncpa %s2718, 1
    %2720 = vsyncpa [#allocation5], 1
    %2721 = vsyncpa [#allocation8], 1

// kernel: _text_forward.3
$region0: #{_text_forward.3}
  #allocation0 [shape = 'u32[]', space=smem, size = 0x4, offset = 0x4, fixed_abs, tag = 'smem constant byte address 0x4 - core index']
  #allocation1 [shape = 'u32[144,128]{1,0:T(1,128)}', space=vmem, size = 0x12000, scoped, tag = 'internal scratch']
  %s0 = inlined_call_operand.vmem [shape: f32[2,9,128], index: 0, kind: input, shape index: {}]
  %s1 = inlined_call_operand.vmem [shape: f32[2,1,9], index: 1, kind: input, shape index: {}]
  %s2 = inlined_call_operand.vmem [shape: bf16[128,384], index: 2, kind: input, shape index: {}]
  %s3 = inlined_call_operand.vmem [shape: f32[1,384], index: 3, kind: input, shape index: {}]
  %s4 = inlined_call_operand.vmem [shape: bf16[128,128], index: 4, kind: input, shape index: {}]
  %s5 = inlined_call_operand.vmem [shape: f32[1,128], index: 5, kind: input, shape index: {}]
  %s6 = inlined_call_operand.vmem [shape: f32[1,128], index: 6, kind: input, shape index: {}]
  %s7 = inlined_call_operand.vmem [shape: f32[1,128], index: 7, kind: input, shape index: {}]
  %s8 = inlined_call_operand.vmem [shape: bf16[128,256], index: 8, kind: input, shape index: {}]
  %s9 = inlined_call_operand.vmem [shape: f32[1,256], index: 9, kind: input, shape index: {}]
  %s10 = inlined_call_operand.vmem [shape: bf16[256,128], index: 10, kind: input, shape index: {}]
  %s11 = inlined_call_operand.vmem [shape: f32[1,128], index: 11, kind: input, shape index: {}]
  %s12 = inlined_call_operand.vmem [shape: f32[1,128], index: 12, kind: input, shape index: {}]
  %s13 = inlined_call_operand.vmem [shape: f32[1,128], index: 13, kind: input, shape index: {}]
  %s14 = inlined_call_operand.vmem [shape: f32[2,9,128], index: 14, kind: output, shape index: {}]
  %s15 = sld [smem:[#allocation0]]
  $region89: #{_text_forward.3} parent=0
    _
  %s17 = ssub.s32 1, %s15
  %s18 = scalar_select 0, %s17, %s15
  loop: start=0, step=1, limit=4
  $region2: #{_text_forward.3} parent=0 // loop_pre_header
    _
  $region3: #{_text_forward.3} parent=0 // loop_header
    %s20 = sphi 0, %s24
    %p21 = scmp.ge.s32.totalorder %s20, 4
    %s30 = sphi 0, %s32
    %s33 = sphi 0, %s30
    %s34 = sphi 0, %s33
    %s50 = sphi 0, %s34
    %s56 = sphi 0, %s58
    %s59 = sphi 0, %s56
    %s60 = sphi 0, %s59
    %s76 = sphi 0, %s60
    %s80 = sphi 0, %s80
    %s82 = sphi 0, %s80
    %s83 = sphi 0, %s82
    %s97 = sphi 0, %s83
    %s101 = sphi 0, %s101
    %s103 = sphi 0, %s101
    %s104 = sphi 0, %s103
    %s118 = sphi 0, %s104
    %s122 = sphi 0, %s122
    %s124 = sphi 0, %s122
    %s125 = sphi 0, %s124
    %s139 = sphi 0, %s125
    %s143 = sphi 0, %s143
    %s145 = sphi 0, %s143
    %s146 = sphi 0, %s145
    %s160 = sphi 0, %s146
    %s164 = sphi 0, %s164
    %s166 = sphi 0, %s164
    %s167 = sphi 0, %s166
    %s181 = sphi 0, %s167
    %s185 = sphi 0, %s185
    %s187 = sphi 0, %s185
    %s188 = sphi 0, %s187
    %s202 = sphi 0, %s188
    %s206 = sphi 0, %s206
    %s208 = sphi 0, %s206
    %s209 = sphi 0, %s208
    %s223 = sphi 0, %s209
    %s227 = sphi 0, %s227
    %s229 = sphi 0, %s227
    %s230 = sphi 0, %s229
    %s244 = sphi 0, %s230
    %s248 = sphi 0, %s248
    %s250 = sphi 0, %s248
    %s251 = sphi 0, %s250
    %s265 = sphi 0, %s251
    %s269 = sphi 0, %s269
    %s271 = sphi 0, %s269
    %s272 = sphi 0, %s271
    %s286 = sphi 0, %s272
    %s290 = sphi 0, %s290
    %s292 = sphi 0, %s290
    %s293 = sphi 0, %s292
    %s307 = sphi 0, %s293
    %s311 = sphi 0, %s311
    %s313 = sphi 0, %s311
    %s314 = sphi 0, %s313
    %s328 = sphi 0, %s314
    %s334 = sphi 0, %s336
    %s337 = sphi 0, %s334
    %s338 = sphi 0, %s337
    %s354 = sphi 0, %s338
  $region4: #{_text_forward.3} parent=0 // loop_header_branch
    %23 = sbr.rel (%p21) target = $region8
  $region5: #{_text_forward.3} parent=0 // loop_body
    %s25 = ssub.s32 %s20, 1
    %s26 = ssub.s32 %s20, 2
    %s27 = sadd.s32 %s20, 1
    %s28 = ssub.s32 %s20, %s27
    %p29 = scmp.eq.s32.totalorder %s28, 0
    %s31 = sadd.s32 %s30, 1
    %s32 = scalar_select %p29, %s30, %s31
    %p35 = pneg %p29
    %p36 = scmp.eq.s32.totalorder %s20, 1
    %p37 = por %p35, %p36
    %p38 = scmp.ne.s32.totalorder %s30, %s33
    %p39 = scmp.eq.s32.totalorder %s20, 0
    %p40 = por %p38, %p39
    %p41 = scmp.ne.s32.totalorder %s30, %s33
    %p42 = scmp.eq.s32.totalorder %s25, 1
    %p43 = por %p41, %p42
    %p44 = scmp.ne.s32.totalorder %s33, %s34
    %p45 = scmp.eq.s32.totalorder %s25, 0
    %p46 = por %p44, %p45
    %p47 = scmp.ne.s32.totalorder %s33, %s34
    %p48 = scmp.eq.s32.totalorder %s26, 1
    %p49 = por %p47, %p48
    %p51 = scmp.ne.s32.totalorder %s34, %s50
    %p52 = scmp.eq.s32.totalorder %s26, 0
    %p53 = por %p51, %p52
    %s54 = ssub.s32 %s20, %s27
    %p55 = scmp.eq.s32.totalorder %s54, 0
    %s57 = sadd.s32 %s56, 1
    %s58 = scalar_select %p55, %s56, %s57
    %p61 = pneg %p55
    %p62 = scmp.eq.s32.totalorder %s20, 1
    %p63 = por %p61, %p62
    %p64 = scmp.ne.s32.totalorder %s56, %s59
    %p65 = scmp.eq.s32.totalorder %s20, 0
    %p66 = por %p64, %p65
    %p67 = scmp.ne.s32.totalorder %s56, %s59
    %p68 = scmp.eq.s32.totalorder %s25, 1
    %p69 = por %p67, %p68
    %p70 = scmp.ne.s32.totalorder %s59, %s60
    %p71 = scmp.eq.s32.totalorder %s25, 0
    %p72 = por %p70, %p71
    %p73 = scmp.ne.s32.totalorder %s59, %s60
    %p74 = scmp.eq.s32.totalorder %s26, 1
    %p75 = por %p73, %p74
    %p77 = scmp.ne.s32.totalorder %s60, %s76
    %p78 = scmp.eq.s32.totalorder %s26, 0
    %p79 = por %p77, %p78
    %s81 = sadd.s32 %s80, 1
    %p84 = scmp.eq.s32.totalorder %s20, 1
    %p85 = scmp.ne.s32.totalorder %s80, %s82
    %p86 = scmp.eq.s32.totalorder %s20, 0
    %p87 = por %p85, %p86
    %p88 = scmp.ne.s32.totalorder %s80, %s82
    %p89 = scmp.eq.s32.totalorder %s25, 1
    %p90 = por %p88, %p89
    %p91 = scmp.ne.s32.totalorder %s82, %s83
    %p92 = scmp.eq.s32.totalorder %s25, 0
    %p93 = por %p91, %p92
    %p94 = scmp.ne.s32.totalorder %s82, %s83
    %p95 = scmp.eq.s32.totalorder %s26, 1
    %p96 = por %p94, %p95
    %p98 = scmp.ne.s32.totalorder %s83, %s97
    %p99 = scmp.eq.s32.totalorder %s26, 0
    %p100 = por %p98, %p99
    %s102 = sadd.s32 %s101, 1
    %p105 = scmp.eq.s32.totalorder %s20, 1
    %p106 = scmp.ne.s32.totalorder %s101, %s103
    %p107 = scmp.eq.s32.totalorder %s20, 0
    %p108 = por %p106, %p107
    %p109 = scmp.ne.s32.totalorder %s101, %s103
    %p110 = scmp.eq.s32.totalorder %s25, 1
    %p111 = por %p109, %p110
    %p112 = scmp.ne.s32.totalorder %s103, %s104
    %p113 = scmp.eq.s32.totalorder %s25, 0
    %p114 = por %p112, %p113
    %p115 = scmp.ne.s32.totalorder %s103, %s104
    %p116 = scmp.eq.s32.totalorder %s26, 1
    %p117 = por %p115, %p116
    %p119 = scmp.ne.s32.totalorder %s104, %s118
    %p120 = scmp.eq.s32.totalorder %s26, 0
    %p121 = por %p119, %p120
    %s123 = sadd.s32 %s122, 1
    %p126 = scmp.eq.s32.totalorder %s20, 1
    %p127 = scmp.ne.s32.totalorder %s122, %s124
    %p128 = scmp.eq.s32.totalorder %s20, 0
    %p129 = por %p127, %p128
    %p130 = scmp.ne.s32.totalorder %s122, %s124
    %p131 = scmp.eq.s32.totalorder %s25, 1
    %p132 = por %p130, %p131
    %p133 = scmp.ne.s32.totalorder %s124, %s125
    %p134 = scmp.eq.s32.totalorder %s25, 0
    %p135 = por %p133, %p134
    %p136 = scmp.ne.s32.totalorder %s124, %s125
    %p137 = scmp.eq.s32.totalorder %s26, 1
    %p138 = por %p136, %p137
    %p140 = scmp.ne.s32.totalorder %s125, %s139
    %p141 = scmp.eq.s32.totalorder %s26, 0
    %p142 = por %p140, %p141
    %s144 = sadd.s32 %s143, 1
    %p147 = scmp.eq.s32.totalorder %s20, 1
    %p148 = scmp.ne.s32.totalorder %s143, %s145
    %p149 = scmp.eq.s32.totalorder %s20, 0
    %p150 = por %p148, %p149
    %p151 = scmp.ne.s32.totalorder %s143, %s145
    %p152 = scmp.eq.s32.totalorder %s25, 1
    %p153 = por %p151, %p152
    %p154 = scmp.ne.s32.totalorder %s145, %s146
    %p155 = scmp.eq.s32.totalorder %s25, 0
    %p156 = por %p154, %p155
    %p157 = scmp.ne.s32.totalorder %s145, %s146
    %p158 = scmp.eq.s32.totalorder %s26, 1
    %p159 = por %p157, %p158
    %p161 = scmp.ne.s32.totalorder %s146, %s160
    %p162 = scmp.eq.s32.totalorder %s26, 0
    %p163 = por %p161, %p162
    %s165 = sadd.s32 %s164, 1
    %p168 = scmp.eq.s32.totalorder %s20, 1
    %p169 = scmp.ne.s32.totalorder %s164, %s166
    %p170 = scmp.eq.s32.totalorder %s20, 0
    %p171 = por %p169, %p170
    %p172 = scmp.ne.s32.totalorder %s164, %s166
    %p173 = scmp.eq.s32.totalorder %s25, 1
    %p174 = por %p172, %p173
    %p175 = scmp.ne.s32.totalorder %s166, %s167
    %p176 = scmp.eq.s32.totalorder %s25, 0
    %p177 = por %p175, %p176
    %p178 = scmp.ne.s32.totalorder %s166, %s167
    %p179 = scmp.eq.s32.totalorder %s26, 1
    %p180 = por %p178, %p179
    %p182 = scmp.ne.s32.totalorder %s167, %s181
    %p183 = scmp.eq.s32.totalorder %s26, 0
    %p184 = por %p182, %p183
    %s186 = sadd.s32 %s185, 1
    %p189 = scmp.eq.s32.totalorder %s20, 1
    %p190 = scmp.ne.s32.totalorder %s185, %s187
    %p191 = scmp.eq.s32.totalorder %s20, 0
    %p192 = por %p190, %p191
    %p193 = scmp.ne.s32.totalorder %s185, %s187
    %p194 = scmp.eq.s32.totalorder %s25, 1
    %p195 = por %p193, %p194
    %p196 = scmp.ne.s32.totalorder %s187, %s188
    %p197 = scmp.eq.s32.totalorder %s25, 0
    %p198 = por %p196, %p197
    %p199 = scmp.ne.s32.totalorder %s187, %s188
    %p200 = scmp.eq.s32.totalorder %s26, 1
    %p201 = por %p199, %p200
    %p203 = scmp.ne.s32.totalorder %s188, %s202
    %p204 = scmp.eq.s32.totalorder %s26, 0
    %p205 = por %p203, %p204
    %s207 = sadd.s32 %s206, 1
    %p210 = scmp.eq.s32.totalorder %s20, 1
    %p211 = scmp.ne.s32.totalorder %s206, %s208
    %p212 = scmp.eq.s32.totalorder %s20, 0
    %p213 = por %p211, %p212
    %p214 = scmp.ne.s32.totalorder %s206, %s208
    %p215 = scmp.eq.s32.totalorder %s25, 1
    %p216 = por %p214, %p215
    %p217 = scmp.ne.s32.totalorder %s208, %s209
    %p218 = scmp.eq.s32.totalorder %s25, 0
    %p219 = por %p217, %p218
    %p220 = scmp.ne.s32.totalorder %s208, %s209
    %p221 = scmp.eq.s32.totalorder %s26, 1
    %p222 = por %p220, %p221
    %p224 = scmp.ne.s32.totalorder %s209, %s223
    %p225 = scmp.eq.s32.totalorder %s26, 0
    %p226 = por %p224, %p225
    %s228 = sadd.s32 %s227, 1
    %p231 = scmp.eq.s32.totalorder %s20, 1
    %p232 = scmp.ne.s32.totalorder %s227, %s229
    %p233 = scmp.eq.s32.totalorder %s20, 0
    %p234 = por %p232, %p233
    %p235 = scmp.ne.s32.totalorder %s227, %s229
    %p236 = scmp.eq.s32.totalorder %s25, 1
    %p237 = por %p235, %p236
    %p238 = scmp.ne.s32.totalorder %s229, %s230
    %p239 = scmp.eq.s32.totalorder %s25, 0
    %p240 = por %p238, %p239
    %p241 = scmp.ne.s32.totalorder %s229, %s230
    %p242 = scmp.eq.s32.totalorder %s26, 1
    %p243 = por %p241, %p242
    %p245 = scmp.ne.s32.totalorder %s230, %s244
    %p246 = scmp.eq.s32.totalorder %s26, 0
    %p247 = por %p245, %p246
    %s249 = sadd.s32 %s248, 1
    %p252 = scmp.eq.s32.totalorder %s20, 1
    %p253 = scmp.ne.s32.totalorder %s248, %s250
    %p254 = scmp.eq.s32.totalorder %s20, 0
    %p255 = por %p253, %p254
    %p256 = scmp.ne.s32.totalorder %s248, %s250
    %p257 = scmp.eq.s32.totalorder %s25, 1
    %p258 = por %p256, %p257
    %p259 = scmp.ne.s32.totalorder %s250, %s251
    %p260 = scmp.eq.s32.totalorder %s25, 0
    %p261 = por %p259, %p260
    %p262 = scmp.ne.s32.totalorder %s250, %s251
    %p263 = scmp.eq.s32.totalorder %s26, 1
    %p264 = por %p262, %p263
    %p266 = scmp.ne.s32.totalorder %s251, %s265
    %p267 = scmp.eq.s32.totalorder %s26, 0
    %p268 = por %p266, %p267
    %s270 = sadd.s32 %s269, 1
    %p273 = scmp.eq.s32.totalorder %s20, 1
    %p274 = scmp.ne.s32.totalorder %s269, %s271
    %p275 = scmp.eq.s32.totalorder %s20, 0
    %p276 = por %p274, %p275
    %p277 = scmp.ne.s32.totalorder %s269, %s271
    %p278 = scmp.eq.s32.totalorder %s25, 1
    %p279 = por %p277, %p278
    %p280 = scmp.ne.s32.totalorder %s271, %s272
    %p281 = scmp.eq.s32.totalorder %s25, 0
    %p282 = por %p280, %p281
    %p283 = scmp.ne.s32.totalorder %s271, %s272
    %p284 = scmp.eq.s32.totalorder %s26, 1
    %p285 = por %p283, %p284
    %p287 = scmp.ne.s32.totalorder %s272, %s286
    %p288 = scmp.eq.s32.totalorder %s26, 0
    %p289 = por %p287, %p288
    %s291 = sadd.s32 %s290, 1
    %p294 = scmp.eq.s32.totalorder %s20, 1
    %p295 = scmp.ne.s32.totalorder %s290, %s292
    %p296 = scmp.eq.s32.totalorder %s20, 0
    %p297 = por %p295, %p296
    %p298 = scmp.ne.s32.totalorder %s290, %s292
    %p299 = scmp.eq.s32.totalorder %s25, 1
    %p300 = por %p298, %p299
    %p301 = scmp.ne.s32.totalorder %s292, %s293
    %p302 = scmp.eq.s32.totalorder %s25, 0
    %p303 = por %p301, %p302
    %p304 = scmp.ne.s32.totalorder %s292, %s293
    %p305 = scmp.eq.s32.totalorder %s26, 1
    %p306 = por %p304, %p305
    %p308 = scmp.ne.s32.totalorder %s293, %s307
    %p309 = scmp.eq.s32.totalorder %s26, 0
    %p310 = por %p308, %p309
    %s312 = sadd.s32 %s311, 1
    %p315 = scmp.eq.s32.totalorder %s20, 1
    %p316 = scmp.ne.s32.totalorder %s311, %s313
    %p317 = scmp.eq.s32.totalorder %s20, 0
    %p318 = por %p316, %p317
    %p319 = scmp.ne.s32.totalorder %s311, %s313
    %p320 = scmp.eq.s32.totalorder %s25, 1
    %p321 = por %p319, %p320
    %p322 = scmp.ne.s32.totalorder %s313, %s314
    %p323 = scmp.eq.s32.totalorder %s25, 0
    %p324 = por %p322, %p323
    %p325 = scmp.ne.s32.totalorder %s313, %s314
    %p326 = scmp.eq.s32.totalorder %s26, 1
    %p327 = por %p325, %p326
    %p329 = scmp.ne.s32.totalorder %s314, %s328
    %p330 = scmp.eq.s32.totalorder %s26, 0
    %p331 = por %p329, %p330
    %s332 = ssub.s32 %s20, %s27
    %p333 = scmp.eq.s32.totalorder %s332, 0
    %s335 = sadd.s32 %s334, 1
    %s336 = scalar_select %p333, %s334, %s335
    %p339 = pneg %p333
    %p340 = scmp.eq.s32.totalorder %s20, 1
    %p341 = por %p339, %p340
    %p342 = scmp.ne.s32.totalorder %s334, %s337
    %p343 = scmp.eq.s32.totalorder %s20, 0
    %p344 = por %p342, %p343
    %p345 = scmp.ne.s32.totalorder %s334, %s337
    %p346 = scmp.eq.s32.totalorder %s25, 1
    %p347 = por %p345, %p346
    %p348 = scmp.ne.s32.totalorder %s337, %s338
    %p349 = scmp.eq.s32.totalorder %s25, 0
    %p350 = por %p348, %p349
    %p351 = scmp.ne.s32.totalorder %s337, %s338
    %p352 = scmp.eq.s32.totalorder %s26, 1
    %p353 = por %p351, %p352
    %p355 = scmp.ne.s32.totalorder %s338, %s354
    %p356 = scmp.eq.s32.totalorder %s26, 0
    %p357 = por %p355, %p356
    %p358 = scmp.le.s32.totalorder 1, %s20
    %p359 = scmp.lt.s32.totalorder %s20, 3
    %p360 = pnand %p358, %p359
    %p361 = pneg %p360
    // Predicated region
    $region9: #{_text_forward.3} parent=5 // pred_check
      _
    $region10: #{_text_forward.3} parent=5 // pred_check_branch
      %363 = sbr.rel (%p360) target = $region12
    $region11: #{_text_forward.3} parent=5 // pred_region
      %s364 = ssub.s32 %s20, 1
      // Predicated region
      $region13: #{_text_forward.3} parent=11 // pred_check
        %p365 = pneg %p93
      $region14: #{_text_forward.3} parent=11 // pred_check_branch
        %367 = sbr.rel (%p365) target = $region16
      $region15: #{_text_forward.3} parent=11 // pred_region
        _
      $region16: #{_text_forward.3} parent=11 // pred_fallthru
        _
      // Predicated region
      $region17: #{_text_forward.3} parent=11 // pred_check
        %p368 = pneg %p114
      $region18: #{_text_forward.3} parent=11 // pred_check_branch
        %370 = sbr.rel (%p368) target = $region20
      $region19: #{_text_forward.3} parent=11 // pred_region
        _
      $region20: #{_text_forward.3} parent=11 // pred_fallthru
        _
      // Predicated region
      $region21: #{_text_forward.3} parent=11 // pred_check
        %p371 = pneg %p135
      $region22: #{_text_forward.3} parent=11 // pred_check_branch
        %373 = sbr.rel (%p371) target = $region24
      $region23: #{_text_forward.3} parent=11 // pred_region
        _
      $region24: #{_text_forward.3} parent=11 // pred_fallthru
        _
      // Predicated region
      $region25: #{_text_forward.3} parent=11 // pred_check
        %p374 = pneg %p156
      $region26: #{_text_forward.3} parent=11 // pred_check_branch
        %376 = sbr.rel (%p374) target = $region28
      $region27: #{_text_forward.3} parent=11 // pred_region
        _
      $region28: #{_text_forward.3} parent=11 // pred_fallthru
        _
      // Predicated region
      $region29: #{_text_forward.3} parent=11 // pred_check
        %p377 = pneg %p177
      $region30: #{_text_forward.3} parent=11 // pred_check_branch
        %379 = sbr.rel (%p377) target = $region32
      $region31: #{_text_forward.3} parent=11 // pred_region
        _
      $region32: #{_text_forward.3} parent=11 // pred_fallthru
        _
      // Predicated region
      $region33: #{_text_forward.3} parent=11 // pred_check
        %p380 = pneg %p198
      $region34: #{_text_forward.3} parent=11 // pred_check_branch
        %382 = sbr.rel (%p380) target = $region36
      $region35: #{_text_forward.3} parent=11 // pred_region
        _
      $region36: #{_text_forward.3} parent=11 // pred_fallthru
        _
      // Predicated region
      $region37: #{_text_forward.3} parent=11 // pred_check
        %p383 = pneg %p219
      $region38: #{_text_forward.3} parent=11 // pred_check_branch
        %385 = sbr.rel (%p383) target = $region40
      $region39: #{_text_forward.3} parent=11 // pred_region
        _
      $region40: #{_text_forward.3} parent=11 // pred_fallthru
        _
      // Predicated region
      $region41: #{_text_forward.3} parent=11 // pred_check
        %p386 = pneg %p240
      $region42: #{_text_forward.3} parent=11 // pred_check_branch
        %388 = sbr.rel (%p386) target = $region44
      $region43: #{_text_forward.3} parent=11 // pred_region
        _
      $region44: #{_text_forward.3} parent=11 // pred_fallthru
        _
      // Predicated region
      $region45: #{_text_forward.3} parent=11 // pred_check
        %p389 = pneg %p261
      $region46: #{_text_forward.3} parent=11 // pred_check_branch
        %391 = sbr.rel (%p389) target = $region48
      $region47: #{_text_forward.3} parent=11 // pred_region
        _
      $region48: #{_text_forward.3} parent=11 // pred_fallthru
        _
      // Predicated region
      $region49: #{_text_forward.3} parent=11 // pred_check
        %p392 = pneg %p282
      $region50: #{_text_forward.3} parent=11 // pred_check_branch
        %394 = sbr.rel (%p392) target = $region52
      $region51: #{_text_forward.3} parent=11 // pred_region
        _
      $region52: #{_text_forward.3} parent=11 // pred_fallthru
        _
      // Predicated region
      $region53: #{_text_forward.3} parent=11 // pred_check
        %p395 = pneg %p303
      $region54: #{_text_forward.3} parent=11 // pred_check_branch
        %397 = sbr.rel (%p395) target = $region56
      $region55: #{_text_forward.3} parent=11 // pred_region
        _
      $region56: #{_text_forward.3} parent=11 // pred_fallthru
        _
      // Predicated region
      $region57: #{_text_forward.3} parent=11 // pred_check
        %p398 = pneg %p324
      $region58: #{_text_forward.3} parent=11 // pred_check_branch
        %400 = sbr.rel (%p398) target = $region60
      $region59: #{_text_forward.3} parent=11 // pred_region
        _
      $region60: #{_text_forward.3} parent=11 // pred_fallthru
        _
    $region12: #{_text_forward.3} parent=5 // pred_fallthru
      _
    %p401 = scmp.lt.s32.totalorder %s20, 2
    // Predicated region
    $region61: #{_text_forward.3} parent=5 // pred_check
      %p402 = pneg %p401
    $region62: #{_text_forward.3} parent=5 // pred_check_branch
      %404 = sbr.rel (%p402) target = $region64
    $region63: #{_text_forward.3} parent=5 // pred_region
      // Predicated region
      $region65: #{_text_forward.3} parent=63 // pred_check
        %p405 = pneg %p40
      $region66: #{_text_forward.3} parent=63 // pred_check_branch
        %407 = sbr.rel (%p405) target = $region68
      $region67: #{_text_forward.3} parent=63 // pred_region
        %p408 = scmp.lt.s32.totalorder %s20, 1
        %s409 = scalar_select %p408, %s20, 1
        %s410 = smul.addr %s409, 2
        %s411 = smul.addr %s410, 8
        %s412 = scalar_lea.vmem %s0, %s411
      $region68: #{_text_forward.3} parent=63 // pred_fallthru
        _
      // Predicated region
      $region69: #{_text_forward.3} parent=63 // pred_check
        %p413 = pneg %p66
      $region70: #{_text_forward.3} parent=63 // pred_check_branch
        %415 = sbr.rel (%p413) target = $region72
      $region71: #{_text_forward.3} parent=63 // pred_region
        %p416 = scmp.lt.s32.totalorder %s20, 1
        %s417 = scalar_select %p416, %s20, 1
        %s418 = scalar_lea.vmem %s1, %s417
      $region72: #{_text_forward.3} parent=63 // pred_fallthru
        _
    $region64: #{_text_forward.3} parent=5 // pred_fallthru
      _
    %p419 = scmp.le.s32.totalorder 1, %s20
    %p420 = scmp.lt.s32.totalorder %s20, 3
    %p421 = pnand %p419, %p420
    %p422 = pneg %p421
    // Predicated region
    $region73: #{_text_forward.3} parent=5 // pred_check
      _
    $region74: #{_text_forward.3} parent=5 // pred_check_branch
      %424 = sbr.rel (%p421) target = $region76
    $region75: #{_text_forward.3} parent=5 // pred_region
      %s425 = ssub.s32 %s20, 1
      %p426 = scmp.lt.s32.totalorder %s25, 1
      %s427 = scalar_select %p426, %s25, 1
      %s428 = smul.addr %s427, 2
      %s429 = smul.addr %s428, 8
      %s430 = scalar_lea.vmem %s0, %s429
      %p431 = pneg %p46
      %p432 = pneg %p43
      %p433 = scmp.lt.s32.totalorder %s25, 1
      %s434 = scalar_select %p433, %s25, 1
      %s435 = scalar_lea.vmem %s1, %s434
      %p436 = pneg %p72
      %p437 = pneg %p69
      %p438 = pneg %p93
      %p439 = pneg %p90
      %p440 = pneg %p114
      %p441 = pneg %p111
      %p442 = pneg %p135
      %p443 = pneg %p132
      %p444 = pneg %p156
      %p445 = pneg %p153
      %p446 = pneg %p177
      %p447 = pneg %p174
      %p448 = pneg %p198
      %p449 = pneg %p195
      %p450 = pneg %p219
      %p451 = pneg %p216
      %p452 = pneg %p240
      %p453 = pneg %p237
      %p454 = pneg %p261
      %p455 = pneg %p258
      %p456 = pneg %p282
      %p457 = pneg %p279
      %p458 = pneg %p303
      %p459 = pneg %p300
      %p460 = pneg %p324
      %p461 = pneg %p321
      %p462 = pneg %p350
      %p463 = pneg %p347
      %p464 = scmp.lt.s32.totalorder %s25, 1
      %s465 = scalar_select %p464, %s25, 1
      %s466 = smul.addr %s465, 2
      %s467 = smul.addr %s466, 8
      %s468 = scalar_lea.vmem %s14, %s467
      %p469 = scmp.lt.s32.totalorder %s25, 1
      %s470 = scalar_select %p469, %s25, 1
      %s471 = smul.addr %s470, 2
      %s472 = smul.addr %s471, 8
      %s473 = scalar_lea.vmem %s0, %s472
      %p474 = scmp.lt.s32.totalorder %s25, 1
      %s475 = scalar_select %p474, %s25, 1
      %s476 = scalar_lea.vmem %s1, %s475
      %p477 = scmp.lt.s32.totalorder %s25, 1
      %s478 = scalar_select %p477, %s25, 1
      %s479 = smul.addr %s478, 2
      %s480 = smul.addr %s479, 8
      %s481 = scalar_lea.vmem %s14, %s480
      %v483 = vld [vmem:[%s473] sm:$0xff]
      %v484 = vld [vmem:[%s473 + $0x8] sm:$0x1]
      %v485 = vld [vmem:[%s476] sm:$0x1]
      %v486 = vpack.c.bf16 %v484, %v483
      %v487 = vld [vmem:[%s2] sm:$0xff]
      %v488 = vld [vmem:[%s2 + $0x8] sm:$0xf]
      %v489 = vld [vmem:[%s2 + $0xc] sm:$0xff]
      %v490 = vld [vmem:[%s2 + $0x14] sm:$0xf]
      %v491 = vld [vmem:[%s2 + $0x18] sm:$0xff]
      %v492 = vld [vmem:[%s2 + $0x20] sm:$0xf]
      %v493 = vld [vmem:[%s2 + $0x24] sm:$0xff]
      %v494 = vld [vmem:[%s2 + $0x2c] sm:$0xf]
      %v495 = vld [vmem:[%s2 + $0x30] sm:$0xff]
      %v496 = vld [vmem:[%s2 + $0x38] sm:$0xf]
      %v497 = vld [vmem:[%s2 + $0x3c] sm:$0xff]
      %v498 = vld [vmem:[%s2 + $0x44] sm:$0xf]
      %v499 = vld [vmem:[%s2 + $0x48] sm:$0xff]
      %v500 = vld [vmem:[%s2 + $0x50] sm:$0xf]
      %v501 = vld [vmem:[%s2 + $0x54] sm:$0xff]
      %v502 = vld [vmem:[%s2 + $0x5c] sm:$0xf]
      %v503 = vld [vmem:[%s2 + $0x60] sm:$0xff]
      %v504 = vld [vmem:[%s2 + $0x68] sm:$0xf]
      %v505 = vld [vmem:[%s2 + $0x6c] sm:$0xff]
      %v506 = vld [vmem:[%s2 + $0x74] sm:$0xf]
      %v507 = vld [vmem:[%s2 + $0x78] sm:$0xff]
      %v508 = vld [vmem:[%s2 + $0x80] sm:$0xf]
      %v509 = vld [vmem:[%s2 + $0x84] sm:$0xff]
      %v510 = vld [vmem:[%s2 + $0x8c] sm:$0xf]
      %v511 = vld [vmem:[%s2 + $0x90] sm:$0xff]
      %v512 = vld [vmem:[%s2 + $0x98] sm:$0xf]
      %v513 = vld [vmem:[%s2 + $0x9c] sm:$0xff]
      %v514 = vld [vmem:[%s2 + $0xa4] sm:$0xf]
      %v515 = vld [vmem:[%s2 + $0xa8] sm:$0xff]
      %v516 = vld [vmem:[%s2 + $0xb0] sm:$0xf]
      %v517 = vld [vmem:[%s2 + $0xb4] sm:$0xff]
      %v518 = vld [vmem:[%s2 + $0xbc] sm:$0xf]
      %v519 = vld [vmem:[%s3] sm:$0x7]
      %v521 = vlaneseq
      %v522 = vshrl.u32 %v521, 7
      %v523 = vsub.s32 0, %v522
      %v524 = vrot.slane %v519, %v523
      %v525 = vlaneseq
      %v526 = vshrl.u32 %v525, 7
      %v527 = vsub.s32 1, %v526
      %v528 = vrot.slane %v519, %v527
      %v529 = vlaneseq
      %v530 = vshrl.u32 %v529, 7
      %v531 = vsub.s32 2, %v530
      %v532 = vrot.slane %v519, %v531
      %v568 = vunpack.c.l.b16 %v487
      %v569 = vunpack.c.h.b16 %v487
      %v570 = vunpack.c.l.b16 %v488
      %v571 = vunpack.c.l.b16 %v489
      %v572 = vunpack.c.h.b16 %v489
      %v573 = vunpack.c.l.b16 %v490
      %v574 = vunpack.c.l.b16 %v491
      %v575 = vunpack.c.h.b16 %v491
      %v576 = vunpack.c.l.b16 %v492
      %v577 = vunpack.c.l.b16 %v493
      %v578 = vunpack.c.h.b16 %v493
      %v579 = vunpack.c.l.b16 %v494
      %v580 = vunpack.c.l.b16 %v495
      %v581 = vunpack.c.h.b16 %v495
      %v582 = vunpack.c.l.b16 %v496
      %v583 = vunpack.c.l.b16 %v497
      %v584 = vunpack.c.h.b16 %v497
      %v585 = vunpack.c.l.b16 %v498
      %v586 = vunpack.c.l.b16 %v499
      %v587 = vunpack.c.h.b16 %v499
      %v588 = vunpack.c.l.b16 %v500
      %v589 = vunpack.c.l.b16 %v501
      %v590 = vunpack.c.h.b16 %v501
      %v591 = vunpack.c.l.b16 %v502
      %v592 = vunpack.c.l.b16 %v503
      %v593 = vunpack.c.h.b16 %v503
      %v594 = vunpack.c.l.b16 %v504
      %v595 = vunpack.c.l.b16 %v505
      %v596 = vunpack.c.h.b16 %v505
      %v597 = vunpack.c.l.b16 %v506
      %v598 = vunpack.c.l.b16 %v507
      %v599 = vunpack.c.h.b16 %v507
      %v600 = vunpack.c.l.b16 %v508
      %v601 = vunpack.c.l.b16 %v509
      %v602 = vunpack.c.h.b16 %v509
      %v603 = vunpack.c.l.b16 %v510
      %v604 = vunpack.c.l.b16 %v511
      %v605 = vunpack.c.h.b16 %v511
      %v606 = vunpack.c.l.b16 %v512
      %v607 = vunpack.c.l.b16 %v513
      %v608 = vunpack.c.h.b16 %v513
      %v609 = vunpack.c.l.b16 %v514
      %v610 = vunpack.c.l.b16 %v515
      %v611 = vunpack.c.h.b16 %v515
      %v612 = vunpack.c.l.b16 %v516
      %v613 = vunpack.c.l.b16 %v517
      %v614 = vunpack.c.h.b16 %v517
      %v615 = vunpack.c.l.b16 %v518
      %v616 = vpack.c.b16 %v571, %v568
      %v617 = vpack.c.b16 %v572, %v569
      %v618 = vpack.c.b16 %v573, %v570
      %v619 = vpack.c.b16 %v577, %v574
      %v620 = vpack.c.b16 %v578, %v575
      %v621 = vpack.c.b16 %v579, %v576
      %v622 = vpack.c.b16 %v583, %v580
      %v623 = vpack.c.b16 %v584, %v581
      %v624 = vpack.c.b16 %v585, %v582
      %v625 = vpack.c.b16 %v589, %v586
      %v626 = vpack.c.b16 %v590, %v587
      %v627 = vpack.c.b16 %v591, %v588
      %v628 = vpack.c.b16 %v595, %v592
      %v629 = vpack.c.b16 %v596, %v593
      %v630 = vpack.c.b16 %v597, %v594
      %v631 = vpack.c.b16 %v601, %v598
      %v632 = vpack.c.b16 %v602, %v599
      %v633 = vpack.c.b16 %v603, %v600
      %v634 = vpack.c.b16 %v607, %v604
      %v635 = vpack.c.b16 %v608, %v605
      %v636 = vpack.c.b16 %v609, %v606
      %v637 = vpack.c.b16 %v613, %v610
      %v638 = vpack.c.b16 %v614, %v611
      %v639 = vpack.c.b16 %v615, %v612
      %664 = vmatprep.subr.bf16.mxu0 %v638
      %665 = vmatpush1.bf16.msra.mxu0 %v637
      %666 = vmatprep.subr.bf16.mxu0 %v635
      %667 = vmatpush1.bf16.msra.mxu0 %v634
      %668 = vmatprep.subr.bf16.mxu0 %v632
      %669 = vmatpush1.bf16.msra.mxu0 %v631
      %670 = vmatprep.subr.bf16.mxu0 %v629
      %671 = vmatpush1.bf16.msra.mxu0 %v628
      %672 = vmatprep.subr.bf16.mxu0 %v626
      %673 = vmatpush1.bf16.msra.mxu0 %v625
      %674 = vmatprep.subr.bf16.mxu0 %v623
      %675 = vmatpush1.bf16.msra.mxu0 %v622
      %676 = vmatprep.subr.bf16.mxu0 %v620
      %677 = vmatpush1.bf16.msra.mxu0 %v619
      %678 = vmatprep.subr.bf16.mxu0 %v617
      %679 = vmatpush1.bf16.msra.mxu0 %v616
      %680 = vmatprep.subr.bf16.mxu0 0
      %681 = vmatpush2.bf16.msra.mxu0 0
      %682 = vmatprep.subr.bf16.mxu0 0
      %683 = vmatpush2.bf16.msra.mxu0 0
      %684 = vmatprep.subr.bf16.mxu0 0
      %685 = vmatpush2.bf16.msra.mxu0 0
      %686 = vmatprep.subr.bf16.mxu0 0
      %687 = vmatpush2.bf16.msra.mxu0 0
      %688 = vmatprep.subr.bf16.mxu0 0
      %689 = vmatpush2.bf16.msra.mxu0 0
      %690 = vmatprep.subr.bf16.mxu0 0
      %691 = vmatpush2.bf16.msra.mxu0 0
      %692 = vmatprep.subr.bf16.mxu0 0
      %693 = vmatpush2.bf16.msra.mxu0 0
      %694 = vmatprep.subr.bf16.mxu0 0
      %695 = vmatpush2.bf16.msra.mxu0 0
      %696 = vmatprep.mubr.bf16.mxu0 0
      %697 = vmatmul.mubr.bf16.gmra.mxu0 %v486
      %v698 = vpop.f32.mrf.mxu0
      %v699 = vadd.f32 %v524, %v698
      %v700 = vpop.f32.mrf.mxu0
      %v701 = vadd.f32 %v528, %v700
      %v702 = vpop.f32.mrf.mxu0
      %v703 = vadd.f32 %v524, %v702
      %v704 = vpop.f32.mrf.mxu0
      %v705 = vadd.f32 %v528, %v704
      %706 = vdwg.mxu0
      %707 = vmatprep.subr.bf16.mxu0 0
      %708 = vmatpush1.bf16.msra.mxu0 %v639
      %709 = vmatprep.subr.bf16.mxu0 0
      %710 = vmatpush1.bf16.msra.mxu0 %v636
      %711 = vmatprep.subr.bf16.mxu0 0
      %712 = vmatpush1.bf16.msra.mxu0 %v633
      %713 = vmatprep.subr.bf16.mxu0 0
      %714 = vmatpush1.bf16.msra.mxu0 %v630
      %715 = vmatprep.subr.bf16.mxu0 0
      %716 = vmatpush1.bf16.msra.mxu0 %v627
      %717 = vmatprep.subr.bf16.mxu0 0
      %718 = vmatpush1.bf16.msra.mxu0 %v624
      %719 = vmatprep.subr.bf16.mxu0 0
      %720 = vmatpush1.bf16.msra.mxu0 %v621
      %721 = vmatprep.subr.bf16.mxu0 0
      %722 = vmatpush1.bf16.msra.mxu0 %v618
      %723 = vmatprep.subr.bf16.mxu0 0
      %724 = vmatpush2.bf16.msra.mxu0 0
      %725 = vmatprep.subr.bf16.mxu0 0
      %726 = vmatpush2.bf16.msra.mxu0 0
      %727 = vmatprep.subr.bf16.mxu0 0
      %728 = vmatpush2.bf16.msra.mxu0 0
      %729 = vmatprep.subr.bf16.mxu0 0
      %730 = vmatpush2.bf16.msra.mxu0 0
      %731 = vmatprep.subr.bf16.mxu0 0
      %732 = vmatpush2.bf16.msra.mxu0 0
      %733 = vmatprep.subr.bf16.mxu0 0
      %734 = vmatpush2.bf16.msra.mxu0 0
      %735 = vmatprep.subr.bf16.mxu0 0
      %736 = vmatpush2.bf16.msra.mxu0 0
      %737 = vmatprep.subr.bf16.mxu0 0
      %738 = vmatpush2.bf16.msra.mxu0 0
      %739 = vmatprep.mubr.bf16.mxu0 0
      %740 = vmatmul.mubr.bf16.gmra.mxu0 %v486
      %v741 = vpop.f32.mrf.mxu0
      %v742 = vadd.f32 %v532, %v741
      %v743 = vpop.f32.mrf.mxu0
      %v744 = vpop.f32.mrf.mxu0
      %v745 = vadd.f32 %v532, %v744
      %v746 = vpop.f32.mrf.mxu0
      %747 = vdwg.mxu0
      %vm748 = vcmask 130048
      %v750 = vsel %vm748, %v699, 0
      %v753 = vsel %vm748, %v703, 0
      %v756 = vsel %vm748, %v701, 0
      %v759 = vsel %vm748, %v705, 0
      %761 = vmatprep.subr.mxu0 0.0
      %762 = vmatpush1.xpose.msra.mxu0 0.0
      %763 = vmatprep.subr.mxu0 0.0
      %764 = vmatpush1.xpose.msra.mxu0 0.0
      %765 = vmatprep.subr.mxu0 0.0
      %766 = vmatpush1.xpose.msra.mxu0 0.0
      %767 = vmatprep.subr.mxu0 0.0
      %768 = vmatpush1.xpose.msra.mxu0 0.0
      %769 = vmatprep.subr.mxu0 0.0
      %770 = vmatpush1.xpose.msra.mxu0 0.0
      %771 = vmatprep.subr.mxu0 0.0
      %772 = vmatpush1.xpose.msra.mxu0 0.0
      %773 = vmatprep.subr.mxu0 0.0
      %774 = vmatpush1.xpose.msra.mxu0 0.0
      %775 = vmatprep.subr.mxu0 0.0
      %776 = vmatpush1.xpose.msra.mxu0 0.0
      %777 = vmatprep.subr.mxu0 0.0
      %778 = vmatpush1.xpose.msra.mxu0 0.0
      %779 = vmatprep.subr.mxu0 0.0
      %780 = vmatpush1.xpose.msra.mxu0 0.0
      %781 = vmatprep.subr.mxu0 0.0
      %782 = vmatpush1.xpose.msra.mxu0 0.0
      %783 = vmatprep.subr.mxu0 0.0
      %784 = vmatpush1.xpose.msra.mxu0 0.0
      %785 = vmatprep.subr.mxu0 0.0
      %786 = vmatpush1.xpose.msra.mxu0 0.0
      %787 = vmatprep.subr.mxu0 0.0
      %788 = vmatpush1.xpose.msra.mxu0 0.0
      %789 = vmatprep.subr.mxu0 0.0
      %790 = vmatpush1.xpose.msra.mxu0 %v759
      %791 = vmatprep.subr.mxu0 0.0
      %792 = vmatpush1.xpose.msra.mxu0 %v756
      %793 = vmatprep.subr.mxu0 0.0
      %794 = vmatpush2.xpose.msra.mxu0 0.0
      %795 = vmatprep.subr.mxu0 0.0
      %796 = vmatpush2.xpose.msra.mxu0 0.0
      %797 = vmatprep.subr.mxu0 0.0
      %798 = vmatpush2.xpose.msra.mxu0 0.0
      %799 = vmatprep.subr.mxu0 0.0
      %800 = vmatpush2.xpose.msra.mxu0 0.0
      %801 = vmatprep.subr.mxu0 0.0
      %802 = vmatpush2.xpose.msra.mxu0 0.0
      %803 = vmatprep.subr.mxu0 0.0
      %804 = vmatpush2.xpose.msra.mxu0 0.0
      %805 = vmatprep.subr.mxu0 0.0
      %806 = vmatpush2.xpose.msra.mxu0 0.0
      %807 = vmatprep.subr.mxu0 0.0
      %808 = vmatpush2.xpose.msra.mxu0 0.0
      %809 = vmatprep.subr.mxu0 0.0
      %810 = vmatpush2.xpose.msra.mxu0 0.0
      %811 = vmatprep.subr.mxu0 0.0
      %812 = vmatpush2.xpose.msra.mxu0 0.0
      %813 = vmatprep.subr.mxu0 0.0
      %814 = vmatpush2.xpose.msra.mxu0 0.0
      %815 = vmatprep.subr.mxu0 0.0
      %816 = vmatpush2.xpose.msra.mxu0 0.0
      %817 = vmatprep.subr.mxu0 0.0
      %818 = vmatpush2.xpose.msra.mxu0 0.0
      %819 = vmatprep.subr.mxu0 0.0
      %820 = vmatpush2.xpose.msra.mxu0 0.0
      %821 = vmatprep.subr.mxu0 0.0
      %822 = vmatpush2.xpose.msra.mxu0 0.0
      %823 = vmatprep.subr.mxu0 0.0
      %824 = vmatpush2.xpose.msra.mxu0 0.0
      %825 = vmatprep.mubr.f32.mxu0 0.0
      %826 = vmatmul.mubr.f32.gmra.mxu0 %v750
      %v827 = vpop.f32.mrf.mxu0
      %v828 = vadd.f32 0.0, %v827
      %v829 = vpop.f32.mrf.mxu0
      %830 = vmatprep.mubr.f32.mxu0 0.0
      %831 = vmatmul.mubr.f32.gmra.mxu0 %v753
      %v832 = vpop.f32.mrf.mxu0
      %v833 = vadd.f32 0.0, %v832
      %v834 = vpop.f32.mrf.mxu0
      %835 = vdwg.mxu0
      %v836 = vmul.f32 %v828, 0.25
      %v837 = vmul.f32 %v833, 0.25
      %v839 = vlaneseq
      %v840 = vshrl.u32 %v839, 7
      %v841 = vsub.s32 0, %v840
      %v842 = vrot.slane %v485, %v841
      %v844 = vadd.f32 %v836, %v842
      %v845 = vadd.f32 %v837, %v842
      %vm846 = vcmask 72704
      %v847 = vsel %vm846, %v844, -inf
      %848 = vmax.xlane.f32.xlu0 %v847
      %v849 = vpop.xlane.xlu0 %848
      %vm850 = vcmask 65536
      %v851 = vsel %vm850, %v845, -inf
      %852 = vmax.xlane.f32.xlu0 %v851
      %v853 = vpop.xlane.xlu0 %852
      %v854 = vsub.f32 %v844, %v849
      %v855 = vsub.f32 %v845, %v853
      %v856 = vmul.f32 %v854, 1.442695
      %v857 = vpow.pop %v856
      %v858 = vmul.f32 %v855, 1.442695
      %v859 = vpow.pop %v858
      %v860 = vsel %vm846, %v857, 0.0
      %861 = vadd.xlane.f32.xlu0 %v860
      %v862 = vpop.xlane.xlu0 %861
      %v863 = vsel %vm850, %v859, 0.0
      %864 = vadd.xlane.f32.xlu0 %v863
      %v865 = vpop.xlane.xlu0 %864
      %v866 = vrcp.pop %v862
      %v867 = vrcp.pop %v865
      %v868 = vmul.f32 %v857, %v866
      %v869 = vmul.f32 %v859, %v867
      %v871 = vsel %vm846, %v868, 0
      %v874 = vsel %vm846, %v869, 0
      %vm876 = vcmask 1040384
      %v878 = vsel %vm876, %v745, 0
      %880 = vmatprep.subr.mxu0 0.0
      %881 = vmatpush1.msra.mxu0 0.0
      %882 = vmatprep.subr.mxu0 0.0
      %883 = vmatpush1.msra.mxu0 0.0
      %884 = vmatprep.subr.mxu0 0.0
      %885 = vmatpush1.msra.mxu0 0.0
      %886 = vmatprep.subr.mxu0 0.0
      %887 = vmatpush1.msra.mxu0 0.0
      %888 = vmatprep.subr.mxu0 0.0
      %889 = vmatpush1.msra.mxu0 0.0
      %890 = vmatprep.subr.mxu0 0.0
      %891 = vmatpush1.msra.mxu0 0.0
      %892 = vmatprep.subr.mxu0 0.0
      %893 = vmatpush1.msra.mxu0 0.0
      %894 = vmatprep.subr.mxu0 0.0
      %895 = vmatpush1.msra.mxu0 0.0
      %896 = vmatprep.subr.mxu0 0.0
      %897 = vmatpush1.msra.mxu0 0.0
      %898 = vmatprep.subr.mxu0 0.0
      %899 = vmatpush1.msra.mxu0 0.0
      %900 = vmatprep.subr.mxu0 0.0
      %901 = vmatpush1.msra.mxu0 0.0
      %902 = vmatprep.subr.mxu0 0.0
      %903 = vmatpush1.msra.mxu0 0.0
      %904 = vmatprep.subr.mxu0 0.0
      %905 = vmatpush1.msra.mxu0 0.0
      %906 = vmatprep.subr.mxu0 0.0
      %907 = vmatpush1.msra.mxu0 0.0
      %908 = vmatprep.subr.mxu0 0.0
      %909 = vmatpush1.msra.mxu0 %v878
      %910 = vmatprep.subr.mxu0 0.0
      %911 = vmatpush1.msra.mxu0 %v742
      %912 = vmatprep.subr.mxu0 0.0
      %913 = vmatpush2.msra.mxu0 0.0
      %914 = vmatprep.subr.mxu0 0.0
      %915 = vmatpush2.msra.mxu0 0.0
      %916 = vmatprep.subr.mxu0 0.0
      %917 = vmatpush2.msra.mxu0 0.0
      %918 = vmatprep.subr.mxu0 0.0
      %919 = vmatpush2.msra.mxu0 0.0
      %920 = vmatprep.subr.mxu0 0.0
      %921 = vmatpush2.msra.mxu0 0.0
      %922 = vmatprep.subr.mxu0 0.0
      %923 = vmatpush2.msra.mxu0 0.0
      %924 = vmatprep.subr.mxu0 0.0
      %925 = vmatpush2.msra.mxu0 0.0
      %926 = vmatprep.subr.mxu0 0.0
      %927 = vmatpush2.msra.mxu0 0.0
      %928 = vmatprep.subr.mxu0 0.0
      %929 = vmatpush2.msra.mxu0 0.0
      %930 = vmatprep.subr.mxu0 0.0
      %931 = vmatpush2.msra.mxu0 0.0
      %932 = vmatprep.subr.mxu0 0.0
      %933 = vmatpush2.msra.mxu0 0.0
      %934 = vmatprep.subr.mxu0 0.0
      %935 = vmatpush2.msra.mxu0 0.0
      %936 = vmatprep.subr.mxu0 0.0
      %937 = vmatpush2.msra.mxu0 0.0
      %938 = vmatprep.subr.mxu0 0.0
      %939 = vmatpush2.msra.mxu0 0.0
      %940 = vmatprep.subr.mxu0 0.0
      %941 = vmatpush2.msra.mxu0 0.0
      %942 = vmatprep.subr.mxu0 0.0
      %943 = vmatpush2.msra.mxu0 0.0
      %944 = vmatprep.mubr.f32.mxu0 0.0
      %945 = vmatmul.mubr.f32.gmra.mxu0 %v871
      %v946 = vpop.f32.mrf.mxu0
      %v947 = vadd.f32 0.0, %v946
      %v948 = vpop.f32.mrf.mxu0
      %949 = vmatprep.mubr.f32.mxu0 0.0
      %950 = vmatmul.mubr.f32.gmra.mxu0 %v874
      %v951 = vpop.f32.mrf.mxu0
      %v952 = vadd.f32 0.0, %v951
      %v953 = vpop.f32.mrf.mxu0
      %954 = vdwg.mxu0
      %955 = vrot.lane.b32.xlu0 %v699, 112
      %v956 = vpop.permute.xlu0 %955
      %957 = vrot.lane.b32.xlu0 %v703, 112
      %v958 = vpop.permute.xlu0 %957
      %959 = vrot.lane.b32.xlu0 %v701, 112
      %v960 = vpop.permute.xlu0 %959
      %961 = vrot.lane.b32.xlu0 %v705, 112
      %v962 = vpop.permute.xlu0 %961
      %v963 = vsel %vm748, %v956, 0
      %v965 = vsel %vm748, %v958, 0
      %v967 = vsel %vm748, %v960, 0
      %v969 = vsel %vm748, %v962, 0
      %971 = vmatprep.subr.mxu0 0.0
      %972 = vmatpush1.xpose.msra.mxu0 0.0
      %973 = vmatprep.subr.mxu0 0.0
      %974 = vmatpush1.xpose.msra.mxu0 0.0
      %975 = vmatprep.subr.mxu0 0.0
      %976 = vmatpush1.xpose.msra.mxu0 0.0
      %977 = vmatprep.subr.mxu0 0.0
      %978 = vmatpush1.xpose.msra.mxu0 0.0
      %979 = vmatprep.subr.mxu0 0.0
      %980 = vmatpush1.xpose.msra.mxu0 0.0
      %981 = vmatprep.subr.mxu0 0.0
      %982 = vmatpush1.xpose.msra.mxu0 0.0
      %983 = vmatprep.subr.mxu0 0.0
      %984 = vmatpush1.xpose.msra.mxu0 0.0
      %985 = vmatprep.subr.mxu0 0.0
      %986 = vmatpush1.xpose.msra.mxu0 0.0
      %987 = vmatprep.subr.mxu0 0.0
      %988 = vmatpush1.xpose.msra.mxu0 0.0
      %989 = vmatprep.subr.mxu0 0.0
      %990 = vmatpush1.xpose.msra.mxu0 0.0
      %991 = vmatprep.subr.mxu0 0.0
      %992 = vmatpush1.xpose.msra.mxu0 0.0
      %993 = vmatprep.subr.mxu0 0.0
      %994 = vmatpush1.xpose.msra.mxu0 0.0
      %995 = vmatprep.subr.mxu0 0.0
      %996 = vmatpush1.xpose.msra.mxu0 0.0
      %997 = vmatprep.subr.mxu0 0.0
      %998 = vmatpush1.xpose.msra.mxu0 0.0
      %999 = vmatprep.subr.mxu0 0.0
      %1000 = vmatpush1.xpose.msra.mxu0 %v969
      %1001 = vmatprep.subr.mxu0 0.0
      %1002 = vmatpush1.xpose.msra.mxu0 %v967
      %1003 = vmatprep.subr.mxu0 0.0
      %1004 = vmatpush2.xpose.msra.mxu0 0.0
      %1005 = vmatprep.subr.mxu0 0.0
      %1006 = vmatpush2.xpose.msra.mxu0 0.0
      %1007 = vmatprep.subr.mxu0 0.0
      %1008 = vmatpush2.xpose.msra.mxu0 0.0
      %1009 = vmatprep.subr.mxu0 0.0
      %1010 = vmatpush2.xpose.msra.mxu0 0.0
      %1011 = vmatprep.subr.mxu0 0.0
      %1012 = vmatpush2.xpose.msra.mxu0 0.0
      %1013 = vmatprep.subr.mxu0 0.0
      %1014 = vmatpush2.xpose.msra.mxu0 0.0
      %1015 = vmatprep.subr.mxu0 0.0
      %1016 = vmatpush2.xpose.msra.mxu0 0.0
      %1017 = vmatprep.subr.mxu0 0.0
      %1018 = vmatpush2.xpose.msra.mxu0 0.0
      %1019 = vmatprep.subr.mxu0 0.0
      %1020 = vmatpush2.xpose.msra.mxu0 0.0
      %1021 = vmatprep.subr.mxu0 0.0
      %1022 = vmatpush2.xpose.msra.mxu0 0.0
      %1023 = vmatprep.subr.mxu0 0.0
      %1024 = vmatpush2.xpose.msra.mxu0 0.0
      %1025 = vmatprep.subr.mxu0 0.0
      %1026 = vmatpush2.xpose.msra.mxu0 0.0
      %1027 = vmatprep.subr.mxu0 0.0
      %1028 = vmatpush2.xpose.msra.mxu0 0.0
      %1029 = vmatprep.subr.mxu0 0.0
      %1030 = vmatpush2.xpose.msra.mxu0 0.0
      %1031 = vmatprep.subr.mxu0 0.0
      %1032 = vmatpush2.xpose.msra.mxu0 0.0
      %1033 = vmatprep.subr.mxu0 0.0
      %1034 = vmatpush2.xpose.msra.mxu0 0.0
      %1035 = vmatprep.mubr.f32.mxu0 0.0
      %1036 = vmatmul.mubr.f32.gmra.mxu0 %v963
      %v1037 = vpop.f32.mrf.mxu0
      %v1038 = vadd.f32 0.0, %v1037
      %v1039 = vpop.f32.mrf.mxu0
      %1040 = vmatprep.mubr.f32.mxu0 0.0
      %1041 = vmatmul.mubr.f32.gmra.mxu0 %v965
      %v1042 = vpop.f32.mrf.mxu0
      %v1043 = vadd.f32 0.0, %v1042
      %v1044 = vpop.f32.mrf.mxu0
      %1045 = vdwg.mxu0
      %v1046 = vmul.f32 %v1038, 0.25
      %v1047 = vmul.f32 %v1043, 0.25
      %v1048 = vadd.f32 %v1046, %v842
      %v1049 = vadd.f32 %v1047, %v842
      %v1050 = vsel %vm846, %v1048, -inf
      %1051 = vmax.xlane.f32.xlu0 %v1050
      %v1052 = vpop.xlane.xlu0 %1051
      %v1053 = vsel %vm850, %v1049, -inf
      %1054 = vmax.xlane.f32.xlu0 %v1053
      %v1055 = vpop.xlane.xlu0 %1054
      %v1056 = vsub.f32 %v1048, %v1052
      %v1057 = vsub.f32 %v1049, %v1055
      %v1058 = vmul.f32 %v1056, 1.442695
      %v1059 = vpow.pop %v1058
      %v1060 = vmul.f32 %v1057, 1.442695
      %v1061 = vpow.pop %v1060
      %v1062 = vsel %vm846, %v1059, 0.0
      %1063 = vadd.xlane.f32.xlu0 %v1062
      %v1064 = vpop.xlane.xlu0 %1063
      %v1065 = vsel %vm850, %v1061, 0.0
      %1066 = vadd.xlane.f32.xlu0 %v1065
      %v1067 = vpop.xlane.xlu0 %1066
      %v1068 = vrcp.pop %v1064
      %v1069 = vrcp.pop %v1067
      %v1070 = vmul.f32 %v1059, %v1068
      %v1071 = vmul.f32 %v1061, %v1069
      %1073 = vrot.lane.b32.xlu0 %v742, 112
      %v1074 = vpop.permute.xlu0 %1073
      %1075 = vrot.lane.b32.xlu0 %v745, 112
      %v1076 = vpop.permute.xlu0 %1075
      %v1079 = vsel %vm846, %v1070, 0
      %v1082 = vsel %vm846, %v1071, 0
      %v1084 = vsel %vm876, %v1076, 0
      %1086 = vmatprep.subr.mxu0 0.0
      %1087 = vmatpush1.msra.mxu0 0.0
      %1088 = vmatprep.subr.mxu0 0.0
      %1089 = vmatpush1.msra.mxu0 0.0
      %1090 = vmatprep.subr.mxu0 0.0
      %1091 = vmatpush1.msra.mxu0 0.0
      %1092 = vmatprep.subr.mxu0 0.0
      %1093 = vmatpush1.msra.mxu0 0.0
      %1094 = vmatprep.subr.mxu0 0.0
      %1095 = vmatpush1.msra.mxu0 0.0
      %1096 = vmatprep.subr.mxu0 0.0
      %1097 = vmatpush1.msra.mxu0 0.0
      %1098 = vmatprep.subr.mxu0 0.0
      %1099 = vmatpush1.msra.mxu0 0.0
      %1100 = vmatprep.subr.mxu0 0.0
      %1101 = vmatpush1.msra.mxu0 0.0
      %1102 = vmatprep.subr.mxu0 0.0
      %1103 = vmatpush1.msra.mxu0 0.0
      %1104 = vmatprep.subr.mxu0 0.0
      %1105 = vmatpush1.msra.mxu0 0.0
      %1106 = vmatprep.subr.mxu0 0.0
      %1107 = vmatpush1.msra.mxu0 0.0
      %1108 = vmatprep.subr.mxu0 0.0
      %1109 = vmatpush1.msra.mxu0 0.0
      %1110 = vmatprep.subr.mxu0 0.0
      %1111 = vmatpush1.msra.mxu0 0.0
      %1112 = vmatprep.subr.mxu0 0.0
      %1113 = vmatpush1.msra.mxu0 0.0
      %1114 = vmatprep.subr.mxu0 0.0
      %1115 = vmatpush1.msra.mxu0 %v1084
      %1116 = vmatprep.subr.mxu0 0.0
      %1117 = vmatpush1.msra.mxu0 %v1074
      %1118 = vmatprep.subr.mxu0 0.0
      %1119 = vmatpush2.msra.mxu0 0.0
      %1120 = vmatprep.subr.mxu0 0.0
      %1121 = vmatpush2.msra.mxu0 0.0
      %1122 = vmatprep.subr.mxu0 0.0
      %1123 = vmatpush2.msra.mxu0 0.0
      %1124 = vmatprep.subr.mxu0 0.0
      %1125 = vmatpush2.msra.mxu0 0.0
      %1126 = vmatprep.subr.mxu0 0.0
      %1127 = vmatpush2.msra.mxu0 0.0
      %1128 = vmatprep.subr.mxu0 0.0
      %1129 = vmatpush2.msra.mxu0 0.0
      %1130 = vmatprep.subr.mxu0 0.0
      %1131 = vmatpush2.msra.mxu0 0.0
      %1132 = vmatprep.subr.mxu0 0.0
      %1133 = vmatpush2.msra.mxu0 0.0
      %1134 = vmatprep.subr.mxu0 0.0
      %1135 = vmatpush2.msra.mxu0 0.0
      %1136 = vmatprep.subr.mxu0 0.0
      %1137 = vmatpush2.msra.mxu0 0.0
      %1138 = vmatprep.subr.mxu0 0.0
      %1139 = vmatpush2.msra.mxu0 0.0
      %1140 = vmatprep.subr.mxu0 0.0
      %1141 = vmatpush2.msra.mxu0 0.0
      %1142 = vmatprep.subr.mxu0 0.0
      %1143 = vmatpush2.msra.mxu0 0.0
      %1144 = vmatprep.subr.mxu0 0.0
      %1145 = vmatpush2.msra.mxu0 0.0
      %1146 = vmatprep.subr.mxu0 0.0
      %1147 = vmatpush2.msra.mxu0 0.0
      %1148 = vmatprep.subr.mxu0 0.0
      %1149 = vmatpush2.msra.mxu0 0.0
      %1150 = vmatprep.mubr.f32.mxu0 0.0
      %1151 = vmatmul.mubr.f32.gmra.mxu0 %v1079
      %v1152 = vpop.f32.mrf.mxu0
      %v1153 = vadd.f32 0.0, %v1152
      %v1154 = vpop.f32.mrf.mxu0
      %1155 = vmatprep.mubr.f32.mxu0 0.0
      %1156 = vmatmul.mubr.f32.gmra.mxu0 %v1082
      %v1157 = vpop.f32.mrf.mxu0
      %v1158 = vadd.f32 0.0, %v1157
      %v1159 = vpop.f32.mrf.mxu0
      %1160 = vdwg.mxu0
      %1161 = vrot.lane.b32.xlu0 %v699, 96
      %v1162 = vpop.permute.xlu0 %1161
      %1163 = vrot.lane.b32.xlu0 %v703, 96
      %v1164 = vpop.permute.xlu0 %1163
      %1165 = vrot.lane.b32.xlu0 %v701, 96
      %v1166 = vpop.permute.xlu0 %1165
      %1167 = vrot.lane.b32.xlu0 %v705, 96
      %v1168 = vpop.permute.xlu0 %1167
      %v1169 = vsel %vm748, %v1162, 0
      %v1171 = vsel %vm748, %v1164, 0
      %v1173 = vsel %vm748, %v1166, 0
      %v1175 = vsel %vm748, %v1168, 0
      %1177 = vmatprep.subr.mxu0 0.0
      %1178 = vmatpush1.xpose.msra.mxu0 0.0
      %1179 = vmatprep.subr.mxu0 0.0
      %1180 = vmatpush1.xpose.msra.mxu0 0.0
      %1181 = vmatprep.subr.mxu0 0.0
      %1182 = vmatpush1.xpose.msra.mxu0 0.0
      %1183 = vmatprep.subr.mxu0 0.0
      %1184 = vmatpush1.xpose.msra.mxu0 0.0
      %1185 = vmatprep.subr.mxu0 0.0
      %1186 = vmatpush1.xpose.msra.mxu0 0.0
      %1187 = vmatprep.subr.mxu0 0.0
      %1188 = vmatpush1.xpose.msra.mxu0 0.0
      %1189 = vmatprep.subr.mxu0 0.0
      %1190 = vmatpush1.xpose.msra.mxu0 0.0
      %1191 = vmatprep.subr.mxu0 0.0
      %1192 = vmatpush1.xpose.msra.mxu0 0.0
      %1193 = vmatprep.subr.mxu0 0.0
      %1194 = vmatpush1.xpose.msra.mxu0 0.0
      %1195 = vmatprep.subr.mxu0 0.0
      %1196 = vmatpush1.xpose.msra.mxu0 0.0
      %1197 = vmatprep.subr.mxu0 0.0
      %1198 = vmatpush1.xpose.msra.mxu0 0.0
      %1199 = vmatprep.subr.mxu0 0.0
      %1200 = vmatpush1.xpose.msra.mxu0 0.0
      %1201 = vmatprep.subr.mxu0 0.0
      %1202 = vmatpush1.xpose.msra.mxu0 0.0
      %1203 = vmatprep.subr.mxu0 0.0
      %1204 = vmatpush1.xpose.msra.mxu0 0.0
      %1205 = vmatprep.subr.mxu0 0.0
      %1206 = vmatpush1.xpose.msra.mxu0 %v1175
      %1207 = vmatprep.subr.mxu0 0.0
      %1208 = vmatpush1.xpose.msra.mxu0 %v1173
      %1209 = vmatprep.subr.mxu0 0.0
      %1210 = vmatpush2.xpose.msra.mxu0 0.0
      %1211 = vmatprep.subr.mxu0 0.0
      %1212 = vmatpush2.xpose.msra.mxu0 0.0
      %1213 = vmatprep.subr.mxu0 0.0
      %1214 = vmatpush2.xpose.msra.mxu0 0.0
      %1215 = vmatprep.subr.mxu0 0.0
      %1216 = vmatpush2.xpose.msra.mxu0 0.0
      %1217 = vmatprep.subr.mxu0 0.0
      %1218 = vmatpush2.xpose.msra.mxu0 0.0
      %1219 = vmatprep.subr.mxu0 0.0
      %1220 = vmatpush2.xpose.msra.mxu0 0.0
      %1221 = vmatprep.subr.mxu0 0.0
      %1222 = vmatpush2.xpose.msra.mxu0 0.0
      %1223 = vmatprep.subr.mxu0 0.0
      %1224 = vmatpush2.xpose.msra.mxu0 0.0
      %1225 = vmatprep.subr.mxu0 0.0
      %1226 = vmatpush2.xpose.msra.mxu0 0.0
      %1227 = vmatprep.subr.mxu0 0.0
      %1228 = vmatpush2.xpose.msra.mxu0 0.0
      %1229 = vmatprep.subr.mxu0 0.0
      %1230 = vmatpush2.xpose.msra.mxu0 0.0
      %1231 = vmatprep.subr.mxu0 0.0
      %1232 = vmatpush2.xpose.msra.mxu0 0.0
      %1233 = vmatprep.subr.mxu0 0.0
      %1234 = vmatpush2.xpose.msra.mxu0 0.0
      %1235 = vmatprep.subr.mxu0 0.0
      %1236 = vmatpush2.xpose.msra.mxu0 0.0
      %1237 = vmatprep.subr.mxu0 0.0
      %1238 = vmatpush2.xpose.msra.mxu0 0.0
      %1239 = vmatprep.subr.mxu0 0.0
      %1240 = vmatpush2.xpose.msra.mxu0 0.0
      %1241 = vmatprep.mubr.f32.mxu0 0.0
      %1242 = vmatmul.mubr.f32.gmra.mxu0 %v1169
      %v1243 = vpop.f32.mrf.mxu0
      %v1244 = vadd.f32 0.0, %v1243
      %v1245 = vpop.f32.mrf.mxu0
      %1246 = vmatprep.mubr.f32.mxu0 0.0
      %1247 = vmatmul.mubr.f32.gmra.mxu0 %v1171
      %v1248 = vpop.f32.mrf.mxu0
      %v1249 = vadd.f32 0.0, %v1248
      %v1250 = vpop.f32.mrf.mxu0
      %1251 = vdwg.mxu0
      %v1252 = vmul.f32 %v1244, 0.25
      %v1253 = vmul.f32 %v1249, 0.25
      %v1254 = vadd.f32 %v1252, %v842
      %v1255 = vadd.f32 %v1253, %v842
      %v1256 = vsel %vm846, %v1254, -inf
      %1257 = vmax.xlane.f32.xlu0 %v1256
      %v1258 = vpop.xlane.xlu0 %1257
      %v1259 = vsel %vm850, %v1255, -inf
      %1260 = vmax.xlane.f32.xlu0 %v1259
      %v1261 = vpop.xlane.xlu0 %1260
      %v1262 = vsub.f32 %v1254, %v1258
      %v1263 = vsub.f32 %v1255, %v1261
      %v1264 = vmul.f32 %v1262, 1.442695
      %v1265 = vpow.pop %v1264
      %v1266 = vmul.f32 %v1263, 1.442695
      %v1267 = vpow.pop %v1266
      %v1268 = vsel %vm846, %v1265, 0.0
      %1269 = vadd.xlane.f32.xlu0 %v1268
      %v1270 = vpop.xlane.xlu0 %1269
      %v1271 = vsel %vm850, %v1267, 0.0
      %1272 = vadd.xlane.f32.xlu0 %v1271
      %v1273 = vpop.xlane.xlu0 %1272
      %v1274 = vrcp.pop %v1270
      %v1275 = vrcp.pop %v1273
      %v1276 = vmul.f32 %v1265, %v1274
      %v1277 = vmul.f32 %v1267, %v1275
      %1278 = vrot.lane.b32.xlu0 %v742, 96
      %v1279 = vpop.permute.xlu0 %1278
      %1280 = vrot.lane.b32.xlu0 %v745, 96
      %v1281 = vpop.permute.xlu0 %1280
      %v1284 = vsel %vm846, %v1276, 0
      %v1287 = vsel %vm846, %v1277, 0
      %v1289 = vsel %vm876, %v1281, 0
      %1291 = vmatprep.subr.mxu0 0.0
      %1292 = vmatpush1.msra.mxu0 0.0
      %1293 = vmatprep.subr.mxu0 0.0
      %1294 = vmatpush1.msra.mxu0 0.0
      %1295 = vmatprep.subr.mxu0 0.0
      %1296 = vmatpush1.msra.mxu0 0.0
      %1297 = vmatprep.subr.mxu0 0.0
      %1298 = vmatpush1.msra.mxu0 0.0
      %1299 = vmatprep.subr.mxu0 0.0
      %1300 = vmatpush1.msra.mxu0 0.0
      %1301 = vmatprep.subr.mxu0 0.0
      %1302 = vmatpush1.msra.mxu0 0.0
      %1303 = vmatprep.subr.mxu0 0.0
      %1304 = vmatpush1.msra.mxu0 0.0
      %1305 = vmatprep.subr.mxu0 0.0
      %1306 = vmatpush1.msra.mxu0 0.0
      %1307 = vmatprep.subr.mxu0 0.0
      %1308 = vmatpush1.msra.mxu0 0.0
      %1309 = vmatprep.subr.mxu0 0.0
      %1310 = vmatpush1.msra.mxu0 0.0
      %1311 = vmatprep.subr.mxu0 0.0
      %1312 = vmatpush1.msra.mxu0 0.0
      %1313 = vmatprep.subr.mxu0 0.0
      %1314 = vmatpush1.msra.mxu0 0.0
      %1315 = vmatprep.subr.mxu0 0.0
      %1316 = vmatpush1.msra.mxu0 0.0
      %1317 = vmatprep.subr.mxu0 0.0
      %1318 = vmatpush1.msra.mxu0 0.0
      %1319 = vmatprep.subr.mxu0 0.0
      %1320 = vmatpush1.msra.mxu0 %v1289
      %1321 = vmatprep.subr.mxu0 0.0
      %1322 = vmatpush1.msra.mxu0 %v1279
      %1323 = vmatprep.subr.mxu0 0.0
      %1324 = vmatpush2.msra.mxu0 0.0
      %1325 = vmatprep.subr.mxu0 0.0
      %1326 = vmatpush2.msra.mxu0 0.0
      %1327 = vmatprep.subr.mxu0 0.0
      %1328 = vmatpush2.msra.mxu0 0.0
      %1329 = vmatprep.subr.mxu0 0.0
      %1330 = vmatpush2.msra.mxu0 0.0
      %1331 = vmatprep.subr.mxu0 0.0
      %1332 = vmatpush2.msra.mxu0 0.0
      %1333 = vmatprep.subr.mxu0 0.0
      %1334 = vmatpush2.msra.mxu0 0.0
      %1335 = vmatprep.subr.mxu0 0.0
      %1336 = vmatpush2.msra.mxu0 0.0
      %1337 = vmatprep.subr.mxu0 0.0
      %1338 = vmatpush2.msra.mxu0 0.0
      %1339 = vmatprep.subr.mxu0 0.0
      %1340 = vmatpush2.msra.mxu0 0.0
      %1341 = vmatprep.subr.mxu0 0.0
      %1342 = vmatpush2.msra.mxu0 0.0
      %1343 = vmatprep.subr.mxu0 0.0
      %1344 = vmatpush2.msra.mxu0 0.0
      %1345 = vmatprep.subr.mxu0 0.0
      %1346 = vmatpush2.msra.mxu0 0.0
      %1347 = vmatprep.subr.mxu0 0.0
      %1348 = vmatpush2.msra.mxu0 0.0
      %1349 = vmatprep.subr.mxu0 0.0
      %1350 = vmatpush2.msra.mxu0 0.0
      %1351 = vmatprep.subr.mxu0 0.0
      %1352 = vmatpush2.msra.mxu0 0.0
      %1353 = vmatprep.subr.mxu0 0.0
      %1354 = vmatpush2.msra.mxu0 0.0
      %1355 = vmatprep.mubr.f32.mxu0 0.0
      %1356 = vmatmul.mubr.f32.gmra.mxu0 %v1284
      %v1357 = vpop.f32.mrf.mxu0
      %v1358 = vadd.f32 0.0, %v1357
      %v1359 = vpop.f32.mrf.mxu0
      %1360 = vmatprep.mubr.f32.mxu0 0.0
      %1361 = vmatmul.mubr.f32.gmra.mxu0 %v1287
      %v1362 = vpop.f32.mrf.mxu0
      %v1363 = vadd.f32 0.0, %v1362
      %v1364 = vpop.f32.mrf.mxu0
      %1365 = vdwg.mxu0
      %1366 = vrot.lane.b32.xlu0 %v699, 80
      %v1367 = vpop.permute.xlu0 %1366
      %1368 = vrot.lane.b32.xlu0 %v703, 80
      %v1369 = vpop.permute.xlu0 %1368
      %1370 = vrot.lane.b32.xlu0 %v701, 80
      %v1371 = vpop.permute.xlu0 %1370
      %1372 = vrot.lane.b32.xlu0 %v705, 80
      %v1373 = vpop.permute.xlu0 %1372
      %v1374 = vsel %vm748, %v1367, 0
      %v1376 = vsel %vm748, %v1369, 0
      %v1378 = vsel %vm748, %v1371, 0
      %v1380 = vsel %vm748, %v1373, 0
      %1382 = vmatprep.subr.mxu0 0.0
      %1383 = vmatpush1.xpose.msra.mxu0 0.0
      %1384 = vmatprep.subr.mxu0 0.0
      %1385 = vmatpush1.xpose.msra.mxu0 0.0
      %1386 = vmatprep.subr.mxu0 0.0
      %1387 = vmatpush1.xpose.msra.mxu0 0.0
      %1388 = vmatprep.subr.mxu0 0.0
      %1389 = vmatpush1.xpose.msra.mxu0 0.0
      %1390 = vmatprep.subr.mxu0 0.0
      %1391 = vmatpush1.xpose.msra.mxu0 0.0
      %1392 = vmatprep.subr.mxu0 0.0
      %1393 = vmatpush1.xpose.msra.mxu0 0.0
      %1394 = vmatprep.subr.mxu0 0.0
      %1395 = vmatpush1.xpose.msra.mxu0 0.0
      %1396 = vmatprep.subr.mxu0 0.0
      %1397 = vmatpush1.xpose.msra.mxu0 0.0
      %1398 = vmatprep.subr.mxu0 0.0
      %1399 = vmatpush1.xpose.msra.mxu0 0.0
      %1400 = vmatprep.subr.mxu0 0.0
      %1401 = vmatpush1.xpose.msra.mxu0 0.0
      %1402 = vmatprep.subr.mxu0 0.0
      %1403 = vmatpush1.xpose.msra.mxu0 0.0
      %1404 = vmatprep.subr.mxu0 0.0
      %1405 = vmatpush1.xpose.msra.mxu0 0.0
      %1406 = vmatprep.subr.mxu0 0.0
      %1407 = vmatpush1.xpose.msra.mxu0 0.0
      %1408 = vmatprep.subr.mxu0 0.0
      %1409 = vmatpush1.xpose.msra.mxu0 0.0
      %1410 = vmatprep.subr.mxu0 0.0
      %1411 = vmatpush1.xpose.msra.mxu0 %v1380
      %1412 = vmatprep.subr.mxu0 0.0
      %1413 = vmatpush1.xpose.msra.mxu0 %v1378
      %1414 = vmatprep.subr.mxu0 0.0
      %1415 = vmatpush2.xpose.msra.mxu0 0.0
      %1416 = vmatprep.subr.mxu0 0.0
      %1417 = vmatpush2.xpose.msra.mxu0 0.0
      %1418 = vmatprep.subr.mxu0 0.0
      %1419 = vmatpush2.xpose.msra.mxu0 0.0
      %1420 = vmatprep.subr.mxu0 0.0
      %1421 = vmatpush2.xpose.msra.mxu0 0.0
      %1422 = vmatprep.subr.mxu0 0.0
      %1423 = vmatpush2.xpose.msra.mxu0 0.0
      %1424 = vmatprep.subr.mxu0 0.0
      %1425 = vmatpush2.xpose.msra.mxu0 0.0
      %1426 = vmatprep.subr.mxu0 0.0
      %1427 = vmatpush2.xpose.msra.mxu0 0.0
      %1428 = vmatprep.subr.mxu0 0.0
      %1429 = vmatpush2.xpose.msra.mxu0 0.0
      %1430 = vmatprep.subr.mxu0 0.0
      %1431 = vmatpush2.xpose.msra.mxu0 0.0
      %1432 = vmatprep.subr.mxu0 0.0
      %1433 = vmatpush2.xpose.msra.mxu0 0.0
      %1434 = vmatprep.subr.mxu0 0.0
      %1435 = vmatpush2.xpose.msra.mxu0 0.0
      %1436 = vmatprep.subr.mxu0 0.0
      %1437 = vmatpush2.xpose.msra.mxu0 0.0
      %1438 = vmatprep.subr.mxu0 0.0
      %1439 = vmatpush2.xpose.msra.mxu0 0.0
      %1440 = vmatprep.subr.mxu0 0.0
      %1441 = vmatpush2.xpose.msra.mxu0 0.0
      %1442 = vmatprep.subr.mxu0 0.0
      %1443 = vmatpush2.xpose.msra.mxu0 0.0
      %1444 = vmatprep.subr.mxu0 0.0
      %1445 = vmatpush2.xpose.msra.mxu0 0.0
      %1446 = vmatprep.mubr.f32.mxu0 0.0
      %1447 = vmatmul.mubr.f32.gmra.mxu0 %v1374
      %v1448 = vpop.f32.mrf.mxu0
      %v1449 = vadd.f32 0.0, %v1448
      %v1450 = vpop.f32.mrf.mxu0
      %1451 = vmatprep.mubr.f32.mxu0 0.0
      %1452 = vmatmul.mubr.f32.gmra.mxu0 %v1376
      %v1453 = vpop.f32.mrf.mxu0
      %v1454 = vadd.f32 0.0, %v1453
      %v1455 = vpop.f32.mrf.mxu0
      %1456 = vdwg.mxu0
      %v1457 = vmul.f32 %v1449, 0.25
      %v1458 = vmul.f32 %v1454, 0.25
      %v1459 = vadd.f32 %v1457, %v842
      %v1460 = vadd.f32 %v1458, %v842
      %v1461 = vsel %vm846, %v1459, -inf
      %1462 = vmax.xlane.f32.xlu0 %v1461
      %v1463 = vpop.xlane.xlu0 %1462
      %v1464 = vsel %vm850, %v1460, -inf
      %1465 = vmax.xlane.f32.xlu0 %v1464
      %v1466 = vpop.xlane.xlu0 %1465
      %v1467 = vsub.f32 %v1459, %v1463
      %v1468 = vsub.f32 %v1460, %v1466
      %v1469 = vmul.f32 %v1467, 1.442695
      %v1470 = vpow.pop %v1469
      %v1471 = vmul.f32 %v1468, 1.442695
      %v1472 = vpow.pop %v1471
      %v1473 = vsel %vm846, %v1470, 0.0
      %1474 = vadd.xlane.f32.xlu0 %v1473
      %v1475 = vpop.xlane.xlu0 %1474
      %v1476 = vsel %vm850, %v1472, 0.0
      %1477 = vadd.xlane.f32.xlu0 %v1476
      %v1478 = vpop.xlane.xlu0 %1477
      %v1479 = vrcp.pop %v1475
      %v1480 = vrcp.pop %v1478
      %v1481 = vmul.f32 %v1470, %v1479
      %v1482 = vmul.f32 %v1472, %v1480
      %1483 = vrot.lane.b32.xlu0 %v742, 80
      %v1484 = vpop.permute.xlu0 %1483
      %1485 = vrot.lane.b32.xlu0 %v745, 80
      %v1486 = vpop.permute.xlu0 %1485
      %v1489 = vsel %vm846, %v1481, 0
      %v1492 = vsel %vm846, %v1482, 0
      %v1494 = vsel %vm876, %v1486, 0
      %1496 = vmatprep.subr.mxu0 0.0
      %1497 = vmatpush1.msra.mxu0 0.0
      %1498 = vmatprep.subr.mxu0 0.0
      %1499 = vmatpush1.msra.mxu0 0.0
      %1500 = vmatprep.subr.mxu0 0.0
      %1501 = vmatpush1.msra.mxu0 0.0
      %1502 = vmatprep.subr.mxu0 0.0
      %1503 = vmatpush1.msra.mxu0 0.0
      %1504 = vmatprep.subr.mxu0 0.0
      %1505 = vmatpush1.msra.mxu0 0.0
      %1506 = vmatprep.subr.mxu0 0.0
      %1507 = vmatpush1.msra.mxu0 0.0
      %1508 = vmatprep.subr.mxu0 0.0
      %1509 = vmatpush1.msra.mxu0 0.0
      %1510 = vmatprep.subr.mxu0 0.0
      %1511 = vmatpush1.msra.mxu0 0.0
      %1512 = vmatprep.subr.mxu0 0.0
      %1513 = vmatpush1.msra.mxu0 0.0
      %1514 = vmatprep.subr.mxu0 0.0
      %1515 = vmatpush1.msra.mxu0 0.0
      %1516 = vmatprep.subr.mxu0 0.0
      %1517 = vmatpush1.msra.mxu0 0.0
      %1518 = vmatprep.subr.mxu0 0.0
      %1519 = vmatpush1.msra.mxu0 0.0
      %1520 = vmatprep.subr.mxu0 0.0
      %1521 = vmatpush1.msra.mxu0 0.0
      %1522 = vmatprep.subr.mxu0 0.0
      %1523 = vmatpush1.msra.mxu0 0.0
      %1524 = vmatprep.subr.mxu0 0.0
      %1525 = vmatpush1.msra.mxu0 %v1494
      %1526 = vmatprep.subr.mxu0 0.0
      %1527 = vmatpush1.msra.mxu0 %v1484
      %1528 = vmatprep.subr.mxu0 0.0
      %1529 = vmatpush2.msra.mxu0 0.0
      %1530 = vmatprep.subr.mxu0 0.0
      %1531 = vmatpush2.msra.mxu0 0.0
      %1532 = vmatprep.subr.mxu0 0.0
      %1533 = vmatpush2.msra.mxu0 0.0
      %1534 = vmatprep.subr.mxu0 0.0
      %1535 = vmatpush2.msra.mxu0 0.0
      %1536 = vmatprep.subr.mxu0 0.0
      %1537 = vmatpush2.msra.mxu0 0.0
      %1538 = vmatprep.subr.mxu0 0.0
      %1539 = vmatpush2.msra.mxu0 0.0
      %1540 = vmatprep.subr.mxu0 0.0
      %1541 = vmatpush2.msra.mxu0 0.0
      %1542 = vmatprep.subr.mxu0 0.0
      %1543 = vmatpush2.msra.mxu0 0.0
      %1544 = vmatprep.subr.mxu0 0.0
      %1545 = vmatpush2.msra.mxu0 0.0
      %1546 = vmatprep.subr.mxu0 0.0
      %1547 = vmatpush2.msra.mxu0 0.0
      %1548 = vmatprep.subr.mxu0 0.0
      %1549 = vmatpush2.msra.mxu0 0.0
      %1550 = vmatprep.subr.mxu0 0.0
      %1551 = vmatpush2.msra.mxu0 0.0
      %1552 = vmatprep.subr.mxu0 0.0
      %1553 = vmatpush2.msra.mxu0 0.0
      %1554 = vmatprep.subr.mxu0 0.0
      %1555 = vmatpush2.msra.mxu0 0.0
      %1556 = vmatprep.subr.mxu0 0.0
      %1557 = vmatpush2.msra.mxu0 0.0
      %1558 = vmatprep.subr.mxu0 0.0
      %1559 = vmatpush2.msra.mxu0 0.0
      %1560 = vmatprep.mubr.f32.mxu0 0.0
      %1561 = vmatmul.mubr.f32.gmra.mxu0 %v1489
      %v1562 = vpop.f32.mrf.mxu0
      %v1563 = vadd.f32 0.0, %v1562
      %v1564 = vpop.f32.mrf.mxu0
      %1565 = vmatprep.mubr.f32.mxu0 0.0
      %1566 = vmatmul.mubr.f32.gmra.mxu0 %v1492
      %v1567 = vpop.f32.mrf.mxu0
      %v1568 = vadd.f32 0.0, %v1567
      %v1569 = vpop.f32.mrf.mxu0
      %1570 = vdwg.mxu0
      %1571 = vrot.lane.b32.xlu0 %v699, 64
      %v1572 = vpop.permute.xlu0 %1571
      %1573 = vrot.lane.b32.xlu0 %v703, 64
      %v1574 = vpop.permute.xlu0 %1573
      %1575 = vrot.lane.b32.xlu0 %v701, 64
      %v1576 = vpop.permute.xlu0 %1575
      %1577 = vrot.lane.b32.xlu0 %v705, 64
      %v1578 = vpop.permute.xlu0 %1577
      %v1579 = vsel %vm748, %v1572, 0
      %v1581 = vsel %vm748, %v1574, 0
      %v1583 = vsel %vm748, %v1576, 0
      %v1585 = vsel %vm748, %v1578, 0
      %1587 = vmatprep.subr.mxu0 0.0
      %1588 = vmatpush1.xpose.msra.mxu0 0.0
      %1589 = vmatprep.subr.mxu0 0.0
      %1590 = vmatpush1.xpose.msra.mxu0 0.0
      %1591 = vmatprep.subr.mxu0 0.0
      %1592 = vmatpush1.xpose.msra.mxu0 0.0
      %1593 = vmatprep.subr.mxu0 0.0
      %1594 = vmatpush1.xpose.msra.mxu0 0.0
      %1595 = vmatprep.subr.mxu0 0.0
      %1596 = vmatpush1.xpose.msra.mxu0 0.0
      %1597 = vmatprep.subr.mxu0 0.0
      %1598 = vmatpush1.xpose.msra.mxu0 0.0
      %1599 = vmatprep.subr.mxu0 0.0
      %1600 = vmatpush1.xpose.msra.mxu0 0.0
      %1601 = vmatprep.subr.mxu0 0.0
      %1602 = vmatpush1.xpose.msra.mxu0 0.0
      %1603 = vmatprep.subr.mxu0 0.0
      %1604 = vmatpush1.xpose.msra.mxu0 0.0
      %1605 = vmatprep.subr.mxu0 0.0
      %1606 = vmatpush1.xpose.msra.mxu0 0.0
      %1607 = vmatprep.subr.mxu0 0.0
      %1608 = vmatpush1.xpose.msra.mxu0 0.0
      %1609 = vmatprep.subr.mxu0 0.0
      %1610 = vmatpush1.xpose.msra.mxu0 0.0
      %1611 = vmatprep.subr.mxu0 0.0
      %1612 = vmatpush1.xpose.msra.mxu0 0.0
      %1613 = vmatprep.subr.mxu0 0.0
      %1614 = vmatpush1.xpose.msra.mxu0 0.0
      %1615 = vmatprep.subr.mxu0 0.0
      %1616 = vmatpush1.xpose.msra.mxu0 %v1585
      %1617 = vmatprep.subr.mxu0 0.0
      %1618 = vmatpush1.xpose.msra.mxu0 %v1583
      %1619 = vmatprep.subr.mxu0 0.0
      %1620 = vmatpush2.xpose.msra.mxu0 0.0
      %1621 = vmatprep.subr.mxu0 0.0
      %1622 = vmatpush2.xpose.msra.mxu0 0.0
      %1623 = vmatprep.subr.mxu0 0.0
      %1624 = vmatpush2.xpose.msra.mxu0 0.0
      %1625 = vmatprep.subr.mxu0 0.0
      %1626 = vmatpush2.xpose.msra.mxu0 0.0
      %1627 = vmatprep.subr.mxu0 0.0
      %1628 = vmatpush2.xpose.msra.mxu0 0.0
      %1629 = vmatprep.subr.mxu0 0.0
      %1630 = vmatpush2.xpose.msra.mxu0 0.0
      %1631 = vmatprep.subr.mxu0 0.0
      %1632 = vmatpush2.xpose.msra.mxu0 0.0
      %1633 = vmatprep.subr.mxu0 0.0
      %1634 = vmatpush2.xpose.msra.mxu0 0.0
      %1635 = vmatprep.subr.mxu0 0.0
      %1636 = vmatpush2.xpose.msra.mxu0 0.0
      %1637 = vmatprep.subr.mxu0 0.0
      %1638 = vmatpush2.xpose.msra.mxu0 0.0
      %1639 = vmatprep.subr.mxu0 0.0
      %1640 = vmatpush2.xpose.msra.mxu0 0.0
      %1641 = vmatprep.subr.mxu0 0.0
      %1642 = vmatpush2.xpose.msra.mxu0 0.0
      %1643 = vmatprep.subr.mxu0 0.0
      %1644 = vmatpush2.xpose.msra.mxu0 0.0
      %1645 = vmatprep.subr.mxu0 0.0
      %1646 = vmatpush2.xpose.msra.mxu0 0.0
      %1647 = vmatprep.subr.mxu0 0.0
      %1648 = vmatpush2.xpose.msra.mxu0 0.0
      %1649 = vmatprep.subr.mxu0 0.0
      %1650 = vmatpush2.xpose.msra.mxu0 0.0
      %1651 = vmatprep.mubr.f32.mxu0 0.0
      %1652 = vmatmul.mubr.f32.gmra.mxu0 %v1579
      %v1653 = vpop.f32.mrf.mxu0
      %v1654 = vadd.f32 0.0, %v1653
      %v1655 = vpop.f32.mrf.mxu0
      %1656 = vmatprep.mubr.f32.mxu0 0.0
      %1657 = vmatmul.mubr.f32.gmra.mxu0 %v1581
      %v1658 = vpop.f32.mrf.mxu0
      %v1659 = vadd.f32 0.0, %v1658
      %v1660 = vpop.f32.mrf.mxu0
      %1661 = vdwg.mxu0
      %v1662 = vmul.f32 %v1654, 0.25
      %v1663 = vmul.f32 %v1659, 0.25
      %v1664 = vadd.f32 %v1662, %v842
      %v1665 = vadd.f32 %v1663, %v842
      %v1666 = vsel %vm846, %v1664, -inf
      %1667 = vmax.xlane.f32.xlu0 %v1666
      %v1668 = vpop.xlane.xlu0 %1667
      %v1669 = vsel %vm850, %v1665, -inf
      %1670 = vmax.xlane.f32.xlu0 %v1669
      %v1671 = vpop.xlane.xlu0 %1670
      %v1672 = vsub.f32 %v1664, %v1668
      %v1673 = vsub.f32 %v1665, %v1671
      %v1674 = vmul.f32 %v1672, 1.442695
      %v1675 = vpow.pop %v1674
      %v1676 = vmul.f32 %v1673, 1.442695
      %v1677 = vpow.pop %v1676
      %v1678 = vsel %vm846, %v1675, 0.0
      %1679 = vadd.xlane.f32.xlu0 %v1678
      %v1680 = vpop.xlane.xlu0 %1679
      %v1681 = vsel %vm850, %v1677, 0.0
      %1682 = vadd.xlane.f32.xlu0 %v1681
      %v1683 = vpop.xlane.xlu0 %1682
      %v1684 = vrcp.pop %v1680
      %v1685 = vrcp.pop %v1683
      %v1686 = vmul.f32 %v1675, %v1684
      %v1687 = vmul.f32 %v1677, %v1685
      %1688 = vrot.lane.b32.xlu0 %v742, 64
      %v1689 = vpop.permute.xlu0 %1688
      %1690 = vrot.lane.b32.xlu0 %v745, 64
      %v1691 = vpop.permute.xlu0 %1690
      %v1694 = vsel %vm846, %v1686, 0
      %v1697 = vsel %vm846, %v1687, 0
      %v1699 = vsel %vm876, %v1691, 0
      %1701 = vmatprep.subr.mxu0 0.0
      %1702 = vmatpush1.msra.mxu0 0.0
      %1703 = vmatprep.subr.mxu0 0.0
      %1704 = vmatpush1.msra.mxu0 0.0
      %1705 = vmatprep.subr.mxu0 0.0
      %1706 = vmatpush1.msra.mxu0 0.0
      %1707 = vmatprep.subr.mxu0 0.0
      %1708 = vmatpush1.msra.mxu0 0.0
      %1709 = vmatprep.subr.mxu0 0.0
      %1710 = vmatpush1.msra.mxu0 0.0
      %1711 = vmatprep.subr.mxu0 0.0
      %1712 = vmatpush1.msra.mxu0 0.0
      %1713 = vmatprep.subr.mxu0 0.0
      %1714 = vmatpush1.msra.mxu0 0.0
      %1715 = vmatprep.subr.mxu0 0.0
      %1716 = vmatpush1.msra.mxu0 0.0
      %1717 = vmatprep.subr.mxu0 0.0
      %1718 = vmatpush1.msra.mxu0 0.0
      %1719 = vmatprep.subr.mxu0 0.0
      %1720 = vmatpush1.msra.mxu0 0.0
      %1721 = vmatprep.subr.mxu0 0.0
      %1722 = vmatpush1.msra.mxu0 0.0
      %1723 = vmatprep.subr.mxu0 0.0
      %1724 = vmatpush1.msra.mxu0 0.0
      %1725 = vmatprep.subr.mxu0 0.0
      %1726 = vmatpush1.msra.mxu0 0.0
      %1727 = vmatprep.subr.mxu0 0.0
      %1728 = vmatpush1.msra.mxu0 0.0
      %1729 = vmatprep.subr.mxu0 0.0
      %1730 = vmatpush1.msra.mxu0 %v1699
      %1731 = vmatprep.subr.mxu0 0.0
      %1732 = vmatpush1.msra.mxu0 %v1689
      %1733 = vmatprep.subr.mxu0 0.0
      %1734 = vmatpush2.msra.mxu0 0.0
      %1735 = vmatprep.subr.mxu0 0.0
      %1736 = vmatpush2.msra.mxu0 0.0
      %1737 = vmatprep.subr.mxu0 0.0
      %1738 = vmatpush2.msra.mxu0 0.0
      %1739 = vmatprep.subr.mxu0 0.0
      %1740 = vmatpush2.msra.mxu0 0.0
      %1741 = vmatprep.subr.mxu0 0.0
      %1742 = vmatpush2.msra.mxu0 0.0
      %1743 = vmatprep.subr.mxu0 0.0
      %1744 = vmatpush2.msra.mxu0 0.0
      %1745 = vmatprep.subr.mxu0 0.0
      %1746 = vmatpush2.msra.mxu0 0.0
      %1747 = vmatprep.subr.mxu0 0.0
      %1748 = vmatpush2.msra.mxu0 0.0
      %1749 = vmatprep.subr.mxu0 0.0
      %1750 = vmatpush2.msra.mxu0 0.0
      %1751 = vmatprep.subr.mxu0 0.0
      %1752 = vmatpush2.msra.mxu0 0.0
      %1753 = vmatprep.subr.mxu0 0.0
      %1754 = vmatpush2.msra.mxu0 0.0
      %1755 = vmatprep.subr.mxu0 0.0
      %1756 = vmatpush2.msra.mxu0 0.0
      %1757 = vmatprep.subr.mxu0 0.0
      %1758 = vmatpush2.msra.mxu0 0.0
      %1759 = vmatprep.subr.mxu0 0.0
      %1760 = vmatpush2.msra.mxu0 0.0
      %1761 = vmatprep.subr.mxu0 0.0
      %1762 = vmatpush2.msra.mxu0 0.0
      %1763 = vmatprep.subr.mxu0 0.0
      %1764 = vmatpush2.msra.mxu0 0.0
      %1765 = vmatprep.mubr.f32.mxu0 0.0
      %1766 = vmatmul.mubr.f32.gmra.mxu0 %v1694
      %v1767 = vpop.f32.mrf.mxu0
      %v1768 = vadd.f32 0.0, %v1767
      %v1769 = vpop.f32.mrf.mxu0
      %1770 = vmatprep.mubr.f32.mxu0 0.0
      %1771 = vmatmul.mubr.f32.gmra.mxu0 %v1697
      %v1772 = vpop.f32.mrf.mxu0
      %v1773 = vadd.f32 0.0, %v1772
      %v1774 = vpop.f32.mrf.mxu0
      %1775 = vdwg.mxu0
      %1776 = vrot.lane.b32.xlu0 %v699, 48
      %v1777 = vpop.permute.xlu0 %1776
      %1778 = vrot.lane.b32.xlu0 %v703, 48
      %v1779 = vpop.permute.xlu0 %1778
      %1780 = vrot.lane.b32.xlu0 %v701, 48
      %v1781 = vpop.permute.xlu0 %1780
      %1782 = vrot.lane.b32.xlu0 %v705, 48
      %v1783 = vpop.permute.xlu0 %1782
      %v1784 = vsel %vm748, %v1777, 0
      %v1786 = vsel %vm748, %v1779, 0
      %v1788 = vsel %vm748, %v1781, 0
      %v1790 = vsel %vm748, %v1783, 0
      %1792 = vmatprep.subr.mxu0 0.0
      %1793 = vmatpush1.xpose.msra.mxu0 0.0
      %1794 = vmatprep.subr.mxu0 0.0
      %1795 = vmatpush1.xpose.msra.mxu0 0.0
      %1796 = vmatprep.subr.mxu0 0.0
      %1797 = vmatpush1.xpose.msra.mxu0 0.0
      %1798 = vmatprep.subr.mxu0 0.0
      %1799 = vmatpush1.xpose.msra.mxu0 0.0
      %1800 = vmatprep.subr.mxu0 0.0
      %1801 = vmatpush1.xpose.msra.mxu0 0.0
      %1802 = vmatprep.subr.mxu0 0.0
      %1803 = vmatpush1.xpose.msra.mxu0 0.0
      %1804 = vmatprep.subr.mxu0 0.0
      %1805 = vmatpush1.xpose.msra.mxu0 0.0
      %1806 = vmatprep.subr.mxu0 0.0
      %1807 = vmatpush1.xpose.msra.mxu0 0.0
      %1808 = vmatprep.subr.mxu0 0.0
      %1809 = vmatpush1.xpose.msra.mxu0 0.0
      %1810 = vmatprep.subr.mxu0 0.0
      %1811 = vmatpush1.xpose.msra.mxu0 0.0
      %1812 = vmatprep.subr.mxu0 0.0
      %1813 = vmatpush1.xpose.msra.mxu0 0.0
      %1814 = vmatprep.subr.mxu0 0.0
      %1815 = vmatpush1.xpose.msra.mxu0 0.0
      %1816 = vmatprep.subr.mxu0 0.0
      %1817 = vmatpush1.xpose.msra.mxu0 0.0
      %1818 = vmatprep.subr.mxu0 0.0
      %1819 = vmatpush1.xpose.msra.mxu0 0.0
      %1820 = vmatprep.subr.mxu0 0.0
      %1821 = vmatpush1.xpose.msra.mxu0 %v1790
      %1822 = vmatprep.subr.mxu0 0.0
      %1823 = vmatpush1.xpose.msra.mxu0 %v1788
      %1824 = vmatprep.subr.mxu0 0.0
      %1825 = vmatpush2.xpose.msra.mxu0 0.0
      %1826 = vmatprep.subr.mxu0 0.0
      %1827 = vmatpush2.xpose.msra.mxu0 0.0
      %1828 = vmatprep.subr.mxu0 0.0
      %1829 = vmatpush2.xpose.msra.mxu0 0.0
      %1830 = vmatprep.subr.mxu0 0.0
      %1831 = vmatpush2.xpose.msra.mxu0 0.0
      %1832 = vmatprep.subr.mxu0 0.0
      %1833 = vmatpush2.xpose.msra.mxu0 0.0
      %1834 = vmatprep.subr.mxu0 0.0
      %1835 = vmatpush2.xpose.msra.mxu0 0.0
      %1836 = vmatprep.subr.mxu0 0.0
      %1837 = vmatpush2.xpose.msra.mxu0 0.0
      %1838 = vmatprep.subr.mxu0 0.0
      %1839 = vmatpush2.xpose.msra.mxu0 0.0
      %1840 = vmatprep.subr.mxu0 0.0
      %1841 = vmatpush2.xpose.msra.mxu0 0.0
      %1842 = vmatprep.subr.mxu0 0.0
      %1843 = vmatpush2.xpose.msra.mxu0 0.0
      %1844 = vmatprep.subr.mxu0 0.0
      %1845 = vmatpush2.xpose.msra.mxu0 0.0
      %1846 = vmatprep.subr.mxu0 0.0
      %1847 = vmatpush2.xpose.msra.mxu0 0.0
      %1848 = vmatprep.subr.mxu0 0.0
      %1849 = vmatpush2.xpose.msra.mxu0 0.0
      %1850 = vmatprep.subr.mxu0 0.0
      %1851 = vmatpush2.xpose.msra.mxu0 0.0
      %1852 = vmatprep.subr.mxu0 0.0
      %1853 = vmatpush2.xpose.msra.mxu0 0.0
      %1854 = vmatprep.subr.mxu0 0.0
      %1855 = vmatpush2.xpose.msra.mxu0 0.0
      %1856 = vmatprep.mubr.f32.mxu0 0.0
      %1857 = vmatmul.mubr.f32.gmra.mxu0 %v1784
      %v1858 = vpop.f32.mrf.mxu0
      %v1859 = vadd.f32 0.0, %v1858
      %v1860 = vpop.f32.mrf.mxu0
      %1861 = vmatprep.mubr.f32.mxu0 0.0
      %1862 = vmatmul.mubr.f32.gmra.mxu0 %v1786
      %v1863 = vpop.f32.mrf.mxu0
      %v1864 = vadd.f32 0.0, %v1863
      %v1865 = vpop.f32.mrf.mxu0
      %1866 = vdwg.mxu0
      %v1867 = vmul.f32 %v1859, 0.25
      %v1868 = vmul.f32 %v1864, 0.25
      %v1869 = vadd.f32 %v1867, %v842
      %v1870 = vadd.f32 %v1868, %v842
      %v1871 = vsel %vm846, %v1869, -inf
      %1872 = vmax.xlane.f32.xlu0 %v1871
      %v1873 = vpop.xlane.xlu0 %1872
      %v1874 = vsel %vm850, %v1870, -inf
      %1875 = vmax.xlane.f32.xlu0 %v1874
      %v1876 = vpop.xlane.xlu0 %1875
      %v1877 = vsub.f32 %v1869, %v1873
      %v1878 = vsub.f32 %v1870, %v1876
      %v1879 = vmul.f32 %v1877, 1.442695
      %v1880 = vpow.pop %v1879
      %v1881 = vmul.f32 %v1878, 1.442695
      %v1882 = vpow.pop %v1881
      %v1883 = vsel %vm846, %v1880, 0.0
      %1884 = vadd.xlane.f32.xlu0 %v1883
      %v1885 = vpop.xlane.xlu0 %1884
      %v1886 = vsel %vm850, %v1882, 0.0
      %1887 = vadd.xlane.f32.xlu0 %v1886
      %v1888 = vpop.xlane.xlu0 %1887
      %v1889 = vrcp.pop %v1885
      %v1890 = vrcp.pop %v1888
      %v1891 = vmul.f32 %v1880, %v1889
      %v1892 = vmul.f32 %v1882, %v1890
      %1893 = vrot.lane.b32.xlu0 %v742, 48
      %v1894 = vpop.permute.xlu0 %1893
      %1895 = vrot.lane.b32.xlu0 %v745, 48
      %v1896 = vpop.permute.xlu0 %1895
      %v1899 = vsel %vm846, %v1891, 0
      %v1902 = vsel %vm846, %v1892, 0
      %v1904 = vsel %vm876, %v1896, 0
      %1906 = vmatprep.subr.mxu0 0.0
      %1907 = vmatpush1.msra.mxu0 0.0
      %1908 = vmatprep.subr.mxu0 0.0
      %1909 = vmatpush1.msra.mxu0 0.0
      %1910 = vmatprep.subr.mxu0 0.0
      %1911 = vmatpush1.msra.mxu0 0.0
      %1912 = vmatprep.subr.mxu0 0.0
      %1913 = vmatpush1.msra.mxu0 0.0
      %1914 = vmatprep.subr.mxu0 0.0
      %1915 = vmatpush1.msra.mxu0 0.0
      %1916 = vmatprep.subr.mxu0 0.0
      %1917 = vmatpush1.msra.mxu0 0.0
      %1918 = vmatprep.subr.mxu0 0.0
      %1919 = vmatpush1.msra.mxu0 0.0
      %1920 = vmatprep.subr.mxu0 0.0
      %1921 = vmatpush1.msra.mxu0 0.0
      %1922 = vmatprep.subr.mxu0 0.0
      %1923 = vmatpush1.msra.mxu0 0.0
      %1924 = vmatprep.subr.mxu0 0.0
      %1925 = vmatpush1.msra.mxu0 0.0
      %1926 = vmatprep.subr.mxu0 0.0
      %1927 = vmatpush1.msra.mxu0 0.0
      %1928 = vmatprep.subr.mxu0 0.0
      %1929 = vmatpush1.msra.mxu0 0.0
      %1930 = vmatprep.subr.mxu0 0.0
      %1931 = vmatpush1.msra.mxu0 0.0
      %1932 = vmatprep.subr.mxu0 0.0
      %1933 = vmatpush1.msra.mxu0 0.0
      %1934 = vmatprep.subr.mxu0 0.0
      %1935 = vmatpush1.msra.mxu0 %v1904
      %1936 = vmatprep.subr.mxu0 0.0
      %1937 = vmatpush1.msra.mxu0 %v1894
      %1938 = vmatprep.subr.mxu0 0.0
      %1939 = vmatpush2.msra.mxu0 0.0
      %1940 = vmatprep.subr.mxu0 0.0
      %1941 = vmatpush2.msra.mxu0 0.0
      %1942 = vmatprep.subr.mxu0 0.0
      %1943 = vmatpush2.msra.mxu0 0.0
      %1944 = vmatprep.subr.mxu0 0.0
      %1945 = vmatpush2.msra.mxu0 0.0
      %1946 = vmatprep.subr.mxu0 0.0
      %1947 = vmatpush2.msra.mxu0 0.0
      %1948 = vmatprep.subr.mxu0 0.0
      %1949 = vmatpush2.msra.mxu0 0.0
      %1950 = vmatprep.subr.mxu0 0.0
      %1951 = vmatpush2.msra.mxu0 0.0
      %1952 = vmatprep.subr.mxu0 0.0
      %1953 = vmatpush2.msra.mxu0 0.0
      %1954 = vmatprep.subr.mxu0 0.0
      %1955 = vmatpush2.msra.mxu0 0.0
      %1956 = vmatprep.subr.mxu0 0.0
      %1957 = vmatpush2.msra.mxu0 0.0
      %1958 = vmatprep.subr.mxu0 0.0
      %1959 = vmatpush2.msra.mxu0 0.0
      %1960 = vmatprep.subr.mxu0 0.0
      %1961 = vmatpush2.msra.mxu0 0.0
      %1962 = vmatprep.subr.mxu0 0.0
      %1963 = vmatpush2.msra.mxu0 0.0
      %1964 = vmatprep.subr.mxu0 0.0
      %1965 = vmatpush2.msra.mxu0 0.0
      %1966 = vmatprep.subr.mxu0 0.0
      %1967 = vmatpush2.msra.mxu0 0.0
      %1968 = vmatprep.subr.mxu0 0.0
      %1969 = vmatpush2.msra.mxu0 0.0
      %1970 = vmatprep.mubr.f32.mxu0 0.0
      %1971 = vmatmul.mubr.f32.gmra.mxu0 %v1899
      %v1972 = vpop.f32.mrf.mxu0
      %v1973 = vadd.f32 0.0, %v1972
      %v1974 = vpop.f32.mrf.mxu0
      %1975 = vmatprep.mubr.f32.mxu0 0.0
      %1976 = vmatmul.mubr.f32.gmra.mxu0 %v1902
      %v1977 = vpop.f32.mrf.mxu0
      %v1978 = vadd.f32 0.0, %v1977
      %v1979 = vpop.f32.mrf.mxu0
      %1980 = vdwg.mxu0
      %1981 = vrot.lane.b32.xlu0 %v699, 32
      %v1982 = vpop.permute.xlu0 %1981
      %1983 = vrot.lane.b32.xlu0 %v703, 32
      %v1984 = vpop.permute.xlu0 %1983
      %1985 = vrot.lane.b32.xlu0 %v701, 32
      %v1986 = vpop.permute.xlu0 %1985
      %1987 = vrot.lane.b32.xlu0 %v705, 32
      %v1988 = vpop.permute.xlu0 %1987
      %v1989 = vsel %vm748, %v1982, 0
      %v1991 = vsel %vm748, %v1984, 0
      %v1993 = vsel %vm748, %v1986, 0
      %v1995 = vsel %vm748, %v1988, 0
      %1997 = vmatprep.subr.mxu0 0.0
      %1998 = vmatpush1.xpose.msra.mxu0 0.0
      %1999 = vmatprep.subr.mxu0 0.0
      %2000 = vmatpush1.xpose.msra.mxu0 0.0
      %2001 = vmatprep.subr.mxu0 0.0
      %2002 = vmatpush1.xpose.msra.mxu0 0.0
      %2003 = vmatprep.subr.mxu0 0.0
      %2004 = vmatpush1.xpose.msra.mxu0 0.0
      %2005 = vmatprep.subr.mxu0 0.0
      %2006 = vmatpush1.xpose.msra.mxu0 0.0
      %2007 = vmatprep.subr.mxu0 0.0
      %2008 = vmatpush1.xpose.msra.mxu0 0.0
      %2009 = vmatprep.subr.mxu0 0.0
      %2010 = vmatpush1.xpose.msra.mxu0 0.0
      %2011 = vmatprep.subr.mxu0 0.0
      %2012 = vmatpush1.xpose.msra.mxu0 0.0
      %2013 = vmatprep.subr.mxu0 0.0
      %2014 = vmatpush1.xpose.msra.mxu0 0.0
      %2015 = vmatprep.subr.mxu0 0.0
      %2016 = vmatpush1.xpose.msra.mxu0 0.0
      %2017 = vmatprep.subr.mxu0 0.0
      %2018 = vmatpush1.xpose.msra.mxu0 0.0
      %2019 = vmatprep.subr.mxu0 0.0
      %2020 = vmatpush1.xpose.msra.mxu0 0.0
      %2021 = vmatprep.subr.mxu0 0.0
      %2022 = vmatpush1.xpose.msra.mxu0 0.0
      %2023 = vmatprep.subr.mxu0 0.0
      %2024 = vmatpush1.xpose.msra.mxu0 0.0
      %2025 = vmatprep.subr.mxu0 0.0
      %2026 = vmatpush1.xpose.msra.mxu0 %v1995
      %2027 = vmatprep.subr.mxu0 0.0
      %2028 = vmatpush1.xpose.msra.mxu0 %v1993
      %2029 = vmatprep.subr.mxu0 0.0
      %2030 = vmatpush2.xpose.msra.mxu0 0.0
      %2031 = vmatprep.subr.mxu0 0.0
      %2032 = vmatpush2.xpose.msra.mxu0 0.0
      %2033 = vmatprep.subr.mxu0 0.0
      %2034 = vmatpush2.xpose.msra.mxu0 0.0
      %2035 = vmatprep.subr.mxu0 0.0
      %2036 = vmatpush2.xpose.msra.mxu0 0.0
      %2037 = vmatprep.subr.mxu0 0.0
      %2038 = vmatpush2.xpose.msra.mxu0 0.0
      %2039 = vmatprep.subr.mxu0 0.0
      %2040 = vmatpush2.xpose.msra.mxu0 0.0
      %2041 = vmatprep.subr.mxu0 0.0
      %2042 = vmatpush2.xpose.msra.mxu0 0.0
      %2043 = vmatprep.subr.mxu0 0.0
      %2044 = vmatpush2.xpose.msra.mxu0 0.0
      %2045 = vmatprep.subr.mxu0 0.0
      %2046 = vmatpush2.xpose.msra.mxu0 0.0
      %2047 = vmatprep.subr.mxu0 0.0
      %2048 = vmatpush2.xpose.msra.mxu0 0.0
      %2049 = vmatprep.subr.mxu0 0.0
      %2050 = vmatpush2.xpose.msra.mxu0 0.0
      %2051 = vmatprep.subr.mxu0 0.0
      %2052 = vmatpush2.xpose.msra.mxu0 0.0
      %2053 = vmatprep.subr.mxu0 0.0
      %2054 = vmatpush2.xpose.msra.mxu0 0.0
      %2055 = vmatprep.subr.mxu0 0.0
      %2056 = vmatpush2.xpose.msra.mxu0 0.0
      %2057 = vmatprep.subr.mxu0 0.0
      %2058 = vmatpush2.xpose.msra.mxu0 0.0
      %2059 = vmatprep.subr.mxu0 0.0
      %2060 = vmatpush2.xpose.msra.mxu0 0.0
      %2061 = vmatprep.mubr.f32.mxu0 0.0
      %2062 = vmatmul.mubr.f32.gmra.mxu0 %v1989
      %v2063 = vpop.f32.mrf.mxu0
      %v2064 = vadd.f32 0.0, %v2063
      %v2065 = vpop.f32.mrf.mxu0
      %2066 = vmatprep.mubr.f32.mxu0 0.0
      %2067 = vmatmul.mubr.f32.gmra.mxu0 %v1991
      %v2068 = vpop.f32.mrf.mxu0
      %v2069 = vadd.f32 0.0, %v2068
      %v2070 = vpop.f32.mrf.mxu0
      %2071 = vdwg.mxu0
      %v2072 = vmul.f32 %v2064, 0.25
      %v2073 = vmul.f32 %v2069, 0.25
      %v2074 = vadd.f32 %v2072, %v842
      %v2075 = vadd.f32 %v2073, %v842
      %v2076 = vsel %vm846, %v2074, -inf
      %2077 = vmax.xlane.f32.xlu0 %v2076
      %v2078 = vpop.xlane.xlu0 %2077
      %v2079 = vsel %vm850, %v2075, -inf
      %2080 = vmax.xlane.f32.xlu0 %v2079
      %v2081 = vpop.xlane.xlu0 %2080
      %v2082 = vsub.f32 %v2074, %v2078
      %v2083 = vsub.f32 %v2075, %v2081
      %v2084 = vmul.f32 %v2082, 1.442695
      %v2085 = vpow.pop %v2084
      %v2086 = vmul.f32 %v2083, 1.442695
      %v2087 = vpow.pop %v2086
      %v2088 = vsel %vm846, %v2085, 0.0
      %2089 = vadd.xlane.f32.xlu0 %v2088
      %v2090 = vpop.xlane.xlu0 %2089
      %v2091 = vsel %vm850, %v2087, 0.0
      %2092 = vadd.xlane.f32.xlu0 %v2091
      %v2093 = vpop.xlane.xlu0 %2092
      %v2094 = vrcp.pop %v2090
      %v2095 = vrcp.pop %v2093
      %v2096 = vmul.f32 %v2085, %v2094
      %v2097 = vmul.f32 %v2087, %v2095
      %2098 = vrot.lane.b32.xlu0 %v742, 32
      %v2099 = vpop.permute.xlu0 %2098
      %2100 = vrot.lane.b32.xlu0 %v745, 32
      %v2101 = vpop.permute.xlu0 %2100
      %v2104 = vsel %vm846, %v2096, 0
      %v2107 = vsel %vm846, %v2097, 0
      %v2109 = vsel %vm876, %v2101, 0
      %2111 = vmatprep.subr.mxu0 0.0
      %2112 = vmatpush1.msra.mxu0 0.0
      %2113 = vmatprep.subr.mxu0 0.0
      %2114 = vmatpush1.msra.mxu0 0.0
      %2115 = vmatprep.subr.mxu0 0.0
      %2116 = vmatpush1.msra.mxu0 0.0
      %2117 = vmatprep.subr.mxu0 0.0
      %2118 = vmatpush1.msra.mxu0 0.0
      %2119 = vmatprep.subr.mxu0 0.0
      %2120 = vmatpush1.msra.mxu0 0.0
      %2121 = vmatprep.subr.mxu0 0.0
      %2122 = vmatpush1.msra.mxu0 0.0
      %2123 = vmatprep.subr.mxu0 0.0
      %2124 = vmatpush1.msra.mxu0 0.0
      %2125 = vmatprep.subr.mxu0 0.0
      %2126 = vmatpush1.msra.mxu0 0.0
      %2127 = vmatprep.subr.mxu0 0.0
      %2128 = vmatpush1.msra.mxu0 0.0
      %2129 = vmatprep.subr.mxu0 0.0
      %2130 = vmatpush1.msra.mxu0 0.0
      %2131 = vmatprep.subr.mxu0 0.0
      %2132 = vmatpush1.msra.mxu0 0.0
      %2133 = vmatprep.subr.mxu0 0.0
      %2134 = vmatpush1.msra.mxu0 0.0
      %2135 = vmatprep.subr.mxu0 0.0
      %2136 = vmatpush1.msra.mxu0 0.0
      %2137 = vmatprep.subr.mxu0 0.0
      %2138 = vmatpush1.msra.mxu0 0.0
      %2139 = vmatprep.subr.mxu0 0.0
      %2140 = vmatpush1.msra.mxu0 %v2109
      %2141 = vmatprep.subr.mxu0 0.0
      %2142 = vmatpush1.msra.mxu0 %v2099
      %2143 = vmatprep.subr.mxu0 0.0
      %2144 = vmatpush2.msra.mxu0 0.0
      %2145 = vmatprep.subr.mxu0 0.0
      %2146 = vmatpush2.msra.mxu0 0.0
      %2147 = vmatprep.subr.mxu0 0.0
      %2148 = vmatpush2.msra.mxu0 0.0
      %2149 = vmatprep.subr.mxu0 0.0
      %2150 = vmatpush2.msra.mxu0 0.0
      %2151 = vmatprep.subr.mxu0 0.0
      %2152 = vmatpush2.msra.mxu0 0.0
      %2153 = vmatprep.subr.mxu0 0.0
      %2154 = vmatpush2.msra.mxu0 0.0
      %2155 = vmatprep.subr.mxu0 0.0
      %2156 = vmatpush2.msra.mxu0 0.0
      %2157 = vmatprep.subr.mxu0 0.0
      %2158 = vmatpush2.msra.mxu0 0.0
      %2159 = vmatprep.subr.mxu0 0.0
      %2160 = vmatpush2.msra.mxu0 0.0
      %2161 = vmatprep.subr.mxu0 0.0
      %2162 = vmatpush2.msra.mxu0 0.0
      %2163 = vmatprep.subr.mxu0 0.0
      %2164 = vmatpush2.msra.mxu0 0.0
      %2165 = vmatprep.subr.mxu0 0.0
      %2166 = vmatpush2.msra.mxu0 0.0
      %2167 = vmatprep.subr.mxu0 0.0
      %2168 = vmatpush2.msra.mxu0 0.0
      %2169 = vmatprep.subr.mxu0 0.0
      %2170 = vmatpush2.msra.mxu0 0.0
      %2171 = vmatprep.subr.mxu0 0.0
      %2172 = vmatpush2.msra.mxu0 0.0
      %2173 = vmatprep.subr.mxu0 0.0
      %2174 = vmatpush2.msra.mxu0 0.0
      %2175 = vmatprep.mubr.f32.mxu0 0.0
      %2176 = vmatmul.mubr.f32.gmra.mxu0 %v2104
      %v2177 = vpop.f32.mrf.mxu0
      %v2178 = vadd.f32 0.0, %v2177
      %v2179 = vpop.f32.mrf.mxu0
      %2180 = vmatprep.mubr.f32.mxu0 0.0
      %2181 = vmatmul.mubr.f32.gmra.mxu0 %v2107
      %v2182 = vpop.f32.mrf.mxu0
      %v2183 = vadd.f32 0.0, %v2182
      %v2184 = vpop.f32.mrf.mxu0
      %2185 = vdwg.mxu0
      %2186 = vrot.lane.b32.xlu0 %v699, 16
      %v2187 = vpop.permute.xlu0 %2186
      %2188 = vrot.lane.b32.xlu0 %v703, 16
      %v2189 = vpop.permute.xlu0 %2188
      %2190 = vrot.lane.b32.xlu0 %v701, 16
      %v2191 = vpop.permute.xlu0 %2190
      %2192 = vrot.lane.b32.xlu0 %v705, 16
      %v2193 = vpop.permute.xlu0 %2192
      %v2194 = vsel %vm748, %v2187, 0
      %v2196 = vsel %vm748, %v2189, 0
      %v2198 = vsel %vm748, %v2191, 0
      %v2200 = vsel %vm748, %v2193, 0
      %2202 = vmatprep.subr.mxu0 0.0
      %2203 = vmatpush1.xpose.msra.mxu0 0.0
      %2204 = vmatprep.subr.mxu0 0.0
      %2205 = vmatpush1.xpose.msra.mxu0 0.0
      %2206 = vmatprep.subr.mxu0 0.0
      %2207 = vmatpush1.xpose.msra.mxu0 0.0
      %2208 = vmatprep.subr.mxu0 0.0
      %2209 = vmatpush1.xpose.msra.mxu0 0.0
      %2210 = vmatprep.subr.mxu0 0.0
      %2211 = vmatpush1.xpose.msra.mxu0 0.0
      %2212 = vmatprep.subr.mxu0 0.0
      %2213 = vmatpush1.xpose.msra.mxu0 0.0
      %2214 = vmatprep.subr.mxu0 0.0
      %2215 = vmatpush1.xpose.msra.mxu0 0.0
      %2216 = vmatprep.subr.mxu0 0.0
      %2217 = vmatpush1.xpose.msra.mxu0 0.0
      %2218 = vmatprep.subr.mxu0 0.0
      %2219 = vmatpush1.xpose.msra.mxu0 0.0
      %2220 = vmatprep.subr.mxu0 0.0
      %2221 = vmatpush1.xpose.msra.mxu0 0.0
      %2222 = vmatprep.subr.mxu0 0.0
      %2223 = vmatpush1.xpose.msra.mxu0 0.0
      %2224 = vmatprep.subr.mxu0 0.0
      %2225 = vmatpush1.xpose.msra.mxu0 0.0
      %2226 = vmatprep.subr.mxu0 0.0
      %2227 = vmatpush1.xpose.msra.mxu0 0.0
      %2228 = vmatprep.subr.mxu0 0.0
      %2229 = vmatpush1.xpose.msra.mxu0 0.0
      %2230 = vmatprep.subr.mxu0 0.0
      %2231 = vmatpush1.xpose.msra.mxu0 %v2200
      %2232 = vmatprep.subr.mxu0 0.0
      %2233 = vmatpush1.xpose.msra.mxu0 %v2198
      %2234 = vmatprep.subr.mxu0 0.0
      %2235 = vmatpush2.xpose.msra.mxu0 0.0
      %2236 = vmatprep.subr.mxu0 0.0
      %2237 = vmatpush2.xpose.msra.mxu0 0.0
      %2238 = vmatprep.subr.mxu0 0.0
      %2239 = vmatpush2.xpose.msra.mxu0 0.0
      %2240 = vmatprep.subr.mxu0 0.0
      %2241 = vmatpush2.xpose.msra.mxu0 0.0
      %2242 = vmatprep.subr.mxu0 0.0
      %2243 = vmatpush2.xpose.msra.mxu0 0.0
      %2244 = vmatprep.subr.mxu0 0.0
      %2245 = vmatpush2.xpose.msra.mxu0 0.0
      %2246 = vmatprep.subr.mxu0 0.0
      %2247 = vmatpush2.xpose.msra.mxu0 0.0
      %2248 = vmatprep.subr.mxu0 0.0
      %2249 = vmatpush2.xpose.msra.mxu0 0.0
      %2250 = vmatprep.subr.mxu0 0.0
      %2251 = vmatpush2.xpose.msra.mxu0 0.0
      %2252 = vmatprep.subr.mxu0 0.0
      %2253 = vmatpush2.xpose.msra.mxu0 0.0
      %2254 = vmatprep.subr.mxu0 0.0
      %2255 = vmatpush2.xpose.msra.mxu0 0.0
      %2256 = vmatprep.subr.mxu0 0.0
      %2257 = vmatpush2.xpose.msra.mxu0 0.0
      %2258 = vmatprep.subr.mxu0 0.0
      %2259 = vmatpush2.xpose.msra.mxu0 0.0
      %2260 = vmatprep.subr.mxu0 0.0
      %2261 = vmatpush2.xpose.msra.mxu0 0.0
      %2262 = vmatprep.subr.mxu0 0.0
      %2263 = vmatpush2.xpose.msra.mxu0 0.0
      %2264 = vmatprep.subr.mxu0 0.0
      %2265 = vmatpush2.xpose.msra.mxu0 0.0
      %2266 = vmatprep.mubr.f32.mxu0 0.0
      %2267 = vmatmul.mubr.f32.gmra.mxu0 %v2194
      %v2268 = vpop.f32.mrf.mxu0
      %v2269 = vadd.f32 0.0, %v2268
      %v2270 = vpop.f32.mrf.mxu0
      %2271 = vmatprep.mubr.f32.mxu0 0.0
      %2272 = vmatmul.mubr.f32.gmra.mxu0 %v2196
      %v2273 = vpop.f32.mrf.mxu0
      %v2274 = vadd.f32 0.0, %v2273
      %v2275 = vpop.f32.mrf.mxu0
      %2276 = vdwg.mxu0
      %v2277 = vmul.f32 %v2269, 0.25
      %v2278 = vmul.f32 %v2274, 0.25
      %v2279 = vadd.f32 %v2277, %v842
      %v2280 = vadd.f32 %v2278, %v842
      %v2281 = vsel %vm846, %v2279, -inf
      %2282 = vmax.xlane.f32.xlu0 %v2281
      %v2283 = vpop.xlane.xlu0 %2282
      %v2284 = vsel %vm850, %v2280, -inf
      %2285 = vmax.xlane.f32.xlu0 %v2284
      %v2286 = vpop.xlane.xlu0 %2285
      %v2287 = vsub.f32 %v2279, %v2283
      %v2288 = vsub.f32 %v2280, %v2286
      %v2289 = vmul.f32 %v2287, 1.442695
      %v2290 = vpow.pop %v2289
      %v2291 = vmul.f32 %v2288, 1.442695
      %v2292 = vpow.pop %v2291
      %v2293 = vsel %vm846, %v2290, 0.0
      %2294 = vadd.xlane.f32.xlu0 %v2293
      %v2295 = vpop.xlane.xlu0 %2294
      %v2296 = vsel %vm850, %v2292, 0.0
      %2297 = vadd.xlane.f32.xlu0 %v2296
      %v2298 = vpop.xlane.xlu0 %2297
      %v2299 = vrcp.pop %v2295
      %v2300 = vrcp.pop %v2298
      %v2301 = vmul.f32 %v2290, %v2299
      %v2302 = vmul.f32 %v2292, %v2300
      %2303 = vrot.lane.b32.xlu0 %v742, 16
      %v2304 = vpop.permute.xlu0 %2303
      %2305 = vrot.lane.b32.xlu0 %v745, 16
      %v2306 = vpop.permute.xlu0 %2305
      %v2309 = vsel %vm846, %v2301, 0
      %v2312 = vsel %vm846, %v2302, 0
      %v2314 = vsel %vm876, %v2306, 0
      %2316 = vmatprep.subr.mxu0 0.0
      %2317 = vmatpush1.msra.mxu0 0.0
      %2318 = vmatprep.subr.mxu0 0.0
      %2319 = vmatpush1.msra.mxu0 0.0
      %2320 = vmatprep.subr.mxu0 0.0
      %2321 = vmatpush1.msra.mxu0 0.0
      %2322 = vmatprep.subr.mxu0 0.0
      %2323 = vmatpush1.msra.mxu0 0.0
      %2324 = vmatprep.subr.mxu0 0.0
      %2325 = vmatpush1.msra.mxu0 0.0
      %2326 = vmatprep.subr.mxu0 0.0
      %2327 = vmatpush1.msra.mxu0 0.0
      %2328 = vmatprep.subr.mxu0 0.0
      %2329 = vmatpush1.msra.mxu0 0.0
      %2330 = vmatprep.subr.mxu0 0.0
      %2331 = vmatpush1.msra.mxu0 0.0
      %2332 = vmatprep.subr.mxu0 0.0
      %2333 = vmatpush1.msra.mxu0 0.0
      %2334 = vmatprep.subr.mxu0 0.0
      %2335 = vmatpush1.msra.mxu0 0.0
      %2336 = vmatprep.subr.mxu0 0.0
      %2337 = vmatpush1.msra.mxu0 0.0
      %2338 = vmatprep.subr.mxu0 0.0
      %2339 = vmatpush1.msra.mxu0 0.0
      %2340 = vmatprep.subr.mxu0 0.0
      %2341 = vmatpush1.msra.mxu0 0.0
      %2342 = vmatprep.subr.mxu0 0.0
      %2343 = vmatpush1.msra.mxu0 0.0
      %2344 = vmatprep.subr.mxu0 0.0
      %2345 = vmatpush1.msra.mxu0 %v2314
      %2346 = vmatprep.subr.mxu0 0.0
      %2347 = vmatpush1.msra.mxu0 %v2304
      %2348 = vmatprep.subr.mxu0 0.0
      %2349 = vmatpush2.msra.mxu0 0.0
      %2350 = vmatprep.subr.mxu0 0.0
      %2351 = vmatpush2.msra.mxu0 0.0
      %2352 = vmatprep.subr.mxu0 0.0
      %2353 = vmatpush2.msra.mxu0 0.0
      %2354 = vmatprep.subr.mxu0 0.0
      %2355 = vmatpush2.msra.mxu0 0.0
      %2356 = vmatprep.subr.mxu0 0.0
      %2357 = vmatpush2.msra.mxu0 0.0
      %2358 = vmatprep.subr.mxu0 0.0
      %2359 = vmatpush2.msra.mxu0 0.0
      %2360 = vmatprep.subr.mxu0 0.0
      %2361 = vmatpush2.msra.mxu0 0.0
      %2362 = vmatprep.subr.mxu0 0.0
      %2363 = vmatpush2.msra.mxu0 0.0
      %2364 = vmatprep.subr.mxu0 0.0
      %2365 = vmatpush2.msra.mxu0 0.0
      %2366 = vmatprep.subr.mxu0 0.0
      %2367 = vmatpush2.msra.mxu0 0.0
      %2368 = vmatprep.subr.mxu0 0.0
      %2369 = vmatpush2.msra.mxu0 0.0
      %2370 = vmatprep.subr.mxu0 0.0
      %2371 = vmatpush2.msra.mxu0 0.0
      %2372 = vmatprep.subr.mxu0 0.0
      %2373 = vmatpush2.msra.mxu0 0.0
      %2374 = vmatprep.subr.mxu0 0.0
      %2375 = vmatpush2.msra.mxu0 0.0
      %2376 = vmatprep.subr.mxu0 0.0
      %2377 = vmatpush2.msra.mxu0 0.0
      %2378 = vmatprep.subr.mxu0 0.0
      %2379 = vmatpush2.msra.mxu0 0.0
      %2380 = vmatprep.mubr.f32.mxu0 0.0
      %2381 = vmatmul.mubr.f32.gmra.mxu0 %v2309
      %v2382 = vpop.f32.mrf.mxu0
      %v2383 = vadd.f32 0.0, %v2382
      %v2384 = vpop.f32.mrf.mxu0
      %2385 = vmatprep.mubr.f32.mxu0 0.0
      %2386 = vmatmul.mubr.f32.gmra.mxu0 %v2312
      %v2387 = vpop.f32.mrf.mxu0
      %v2388 = vadd.f32 0.0, %v2387
      %v2389 = vpop.f32.mrf.mxu0
      %2390 = vdwg.mxu0
      %2393 = vrot.lane.b32.xlu0 %v1153, 16
      %v2394 = vpop.permute.xlu0 %2393
      %2395 = vrot.lane.b32.xlu0 %v1158, 16
      %v2396 = vpop.permute.xlu0 %2395
      %2401 = vrot.lane.b32.xlu0 %v1358, 32
      %v2402 = vpop.permute.xlu0 %2401
      %2403 = vrot.lane.b32.xlu0 %v1363, 32
      %v2404 = vpop.permute.xlu0 %2403
      %2409 = vrot.lane.b32.xlu0 %v1563, 48
      %v2410 = vpop.permute.xlu0 %2409
      %2411 = vrot.lane.b32.xlu0 %v1568, 48
      %v2412 = vpop.permute.xlu0 %2411
      %2417 = vrot.lane.b32.xlu0 %v1768, 64
      %v2418 = vpop.permute.xlu0 %2417
      %2419 = vrot.lane.b32.xlu0 %v1773, 64
      %v2420 = vpop.permute.xlu0 %2419
      %2425 = vrot.lane.b32.xlu0 %v1973, 80
      %v2426 = vpop.permute.xlu0 %2425
      %2427 = vrot.lane.b32.xlu0 %v1978, 80
      %v2428 = vpop.permute.xlu0 %2427
      %2433 = vrot.lane.b32.xlu0 %v2178, 96
      %v2434 = vpop.permute.xlu0 %2433
      %2435 = vrot.lane.b32.xlu0 %v2183, 96
      %v2436 = vpop.permute.xlu0 %2435
      %2441 = vrot.lane.b32.xlu0 %v2383, 112
      %v2442 = vpop.permute.xlu0 %2441
      %2443 = vrot.lane.b32.xlu0 %v2388, 112
      %v2444 = vpop.permute.xlu0 %2443
      %v2447 = vsel %vm748, %v947, %v2394
      %v2448 = vsel %vm748, %v952, %v2396
      %vm2449 = vcmask 261120
      %v2450 = vsel %vm2449, %v2447, %v2402
      %v2451 = vsel %vm2449, %v2448, %v2404
      %vm2452 = vcmask 392192
      %v2453 = vsel %vm2452, %v2450, %v2410
      %v2454 = vsel %vm2452, %v2451, %v2412
      %vm2455 = vcmask 523264
      %v2456 = vsel %vm2455, %v2453, %v2418
      %v2457 = vsel %vm2455, %v2454, %v2420
      %vm2458 = vcmask 654336
      %v2459 = vsel %vm2458, %v2456, %v2426
      %v2460 = vsel %vm2458, %v2457, %v2428
      %vm2461 = vcmask 785408
      %v2462 = vsel %vm2461, %v2459, %v2434
      %v2463 = vsel %vm2461, %v2460, %v2436
      %vm2464 = vcmask 916480
      %v2465 = vsel %vm2464, %v2462, %v2442
      %v2466 = vsel %vm2464, %v2463, %v2444
      %v2467 = vpack.c.bf16 %v2466, %v2465
      %v2468 = vld [vmem:[%s4] sm:$0xf]
      %v2469 = vld [vmem:[%s4 + $0x4] sm:$0xf]
      %v2470 = vld [vmem:[%s4 + $0x8] sm:$0xf]
      %v2471 = vld [vmem:[%s4 + $0xc] sm:$0xf]
      %v2472 = vld [vmem:[%s4 + $0x10] sm:$0xf]
      %v2473 = vld [vmem:[%s4 + $0x14] sm:$0xf]
      %v2474 = vld [vmem:[%s4 + $0x18] sm:$0xf]
      %v2475 = vld [vmem:[%s4 + $0x1c] sm:$0xf]
      %v2476 = vld [vmem:[%s4 + $0x20] sm:$0xf]
      %v2477 = vld [vmem:[%s4 + $0x24] sm:$0xf]
      %v2478 = vld [vmem:[%s4 + $0x28] sm:$0xf]
      %v2479 = vld [vmem:[%s4 + $0x2c] sm:$0xf]
      %v2480 = vld [vmem:[%s4 + $0x30] sm:$0xf]
      %v2481 = vld [vmem:[%s4 + $0x34] sm:$0xf]
      %v2482 = vld [vmem:[%s4 + $0x38] sm:$0xf]
      %v2483 = vld [vmem:[%s4 + $0x3c] sm:$0xf]
      %v2484 = vld [vmem:[%s5] sm:$0x1]
      %v2486 = vlaneseq
      %v2487 = vshrl.u32 %v2486, 7
      %v2488 = vsub.s32 0, %v2487
      %v2489 = vrot.slane %v2484, %v2488
      %v2507 = vunpack.c.l.b16 %v2468
      %v2508 = vunpack.c.l.b16 %v2469
      %v2509 = vunpack.c.l.b16 %v2470
      %v2510 = vunpack.c.l.b16 %v2471
      %v2511 = vunpack.c.l.b16 %v2472
      %v2512 = vunpack.c.l.b16 %v2473
      %v2513 = vunpack.c.l.b16 %v2474
      %v2514 = vunpack.c.l.b16 %v2475
      %v2515 = vunpack.c.l.b16 %v2476
      %v2516 = vunpack.c.l.b16 %v2477
      %v2517 = vunpack.c.l.b16 %v2478
      %v2518 = vunpack.c.l.b16 %v2479
      %v2519 = vunpack.c.l.b16 %v2480
      %v2520 = vunpack.c.l.b16 %v2481
      %v2521 = vunpack.c.l.b16 %v2482
      %v2522 = vunpack.c.l.b16 %v2483
      %v2523 = vpack.c.b16 %v2508, %v2507
      %v2524 = vpack.c.b16 %v2510, %v2509
      %v2525 = vpack.c.b16 %v2512, %v2511
      %v2526 = vpack.c.b16 %v2514, %v2513
      %v2527 = vpack.c.b16 %v2516, %v2515
      %v2528 = vpack.c.b16 %v2518, %v2517
      %v2529 = vpack.c.b16 %v2520, %v2519
      %v2530 = vpack.c.b16 %v2522, %v2521
      %2539 = vmatprep.subr.bf16.mxu0 0
      %2540 = vmatpush1.bf16.msra.mxu0 %v2530
      %2541 = vmatprep.subr.bf16.mxu0 0
      %2542 = vmatpush1.bf16.msra.mxu0 %v2529
      %2543 = vmatprep.subr.bf16.mxu0 0
      %2544 = vmatpush1.bf16.msra.mxu0 %v2528
      %2545 = vmatprep.subr.bf16.mxu0 0
      %2546 = vmatpush1.bf16.msra.mxu0 %v2527
      %2547 = vmatprep.subr.bf16.mxu0 0
      %2548 = vmatpush1.bf16.msra.mxu0 %v2526
      %2549 = vmatprep.subr.bf16.mxu0 0
      %2550 = vmatpush1.bf16.msra.mxu0 %v2525
      %2551 = vmatprep.subr.bf16.mxu0 0
      %2552 = vmatpush1.bf16.msra.mxu0 %v2524
      %2553 = vmatprep.subr.bf16.mxu0 0
      %2554 = vmatpush1.bf16.msra.mxu0 %v2523
      %2555 = vmatprep.subr.bf16.mxu0 0
      %2556 = vmatpush2.bf16.msra.mxu0 0
      %2557 = vmatprep.subr.bf16.mxu0 0
      %2558 = vmatpush2.bf16.msra.mxu0 0
      %2559 = vmatprep.subr.bf16.mxu0 0
      %2560 = vmatpush2.bf16.msra.mxu0 0
      %2561 = vmatprep.subr.bf16.mxu0 0
      %2562 = vmatpush2.bf16.msra.mxu0 0
      %2563 = vmatprep.subr.bf16.mxu0 0
      %2564 = vmatpush2.bf16.msra.mxu0 0
      %2565 = vmatprep.subr.bf16.mxu0 0
      %2566 = vmatpush2.bf16.msra.mxu0 0
      %2567 = vmatprep.subr.bf16.mxu0 0
      %2568 = vmatpush2.bf16.msra.mxu0 0
      %2569 = vmatprep.subr.bf16.mxu0 0
      %2570 = vmatpush2.bf16.msra.mxu0 0
      %2571 = vmatprep.mubr.bf16.mxu0 0
      %2572 = vmatmul.mubr.bf16.gmra.mxu0 %v2467
      %v2573 = vpop.f32.mrf.mxu0
      %v2574 = vadd.f32 %v2489, %v2573
      %v2575 = vpop.f32.mrf.mxu0
      %v2576 = vpop.f32.mrf.mxu0
      %v2577 = vadd.f32 %v2489, %v2576
      %v2578 = vpop.f32.mrf.mxu0
      %2579 = vdwg.mxu0
      %v2580 = vadd.f32 %v2574, %v483
      %v2581 = vadd.f32 %v2577, %v484
      %2582 = vadd.xlane.f32.xlu0 %v2580
      %v2583 = vpop.xlane.xlu0 %2582
      %v2584 = vsel %vm876, %v2581, 0.0
      %2585 = vadd.xlane.f32.xlu0 %v2584
      %v2586 = vpop.xlane.xlu0 %2585
      %v2587 = vrcp.pop 128.0
      %v2588 = vmul.f32 %v2583, %v2587
      %v2589 = vmul.f32 %v2586, %v2587
      %v2590 = vsub.f32 %v2580, %v2588
      %v2591 = vsub.f32 %v2581, %v2589
      %v2592 = vmul.f32 %v2590, %v2590
      %v2593 = vmul.f32 %v2591, %v2591
      %2594 = vadd.xlane.f32.xlu0 %v2592
      %v2595 = vpop.xlane.xlu0 %2594
      %v2596 = vsel %vm876, %v2593, 0.0
      %2597 = vadd.xlane.f32.xlu0 %v2596
      %v2598 = vpop.xlane.xlu0 %2597
      %v2599 = vmul.f32 %v2595, %v2587
      %v2600 = vmul.f32 %v2598, %v2587
      %v2601 = vadd.f32 %v2599, 1e-05
      %v2602 = vadd.f32 %v2600, 1e-05
      %v2603 = vrsqrt.pop %v2601
      %v2604 = vrsqrt.pop %v2602
      %v2605 = vmul.f32 %v2590, %v2603
      %v2606 = vmul.f32 %v2591, %v2604
      %v2607 = vld [vmem:[%s6] sm:$0x1]
      %v2609 = vlaneseq
      %v2610 = vshrl.u32 %v2609, 7
      %v2611 = vsub.s32 0, %v2610
      %v2612 = vrot.slane %v2607, %v2611
      %v2614 = vmul.f32 %v2605, %v2612
      %v2615 = vmul.f32 %v2606, %v2612
      %v2616 = vld [vmem:[%s7] sm:$0x1]
      %v2618 = vlaneseq
      %v2619 = vshrl.u32 %v2618, 7
      %v2620 = vsub.s32 0, %v2619
      %v2621 = vrot.slane %v2616, %v2620
      %v2623 = vadd.f32 %v2614, %v2621
      %v2624 = vadd.f32 %v2615, %v2621
      %v2625 = vpack.c.bf16 %v2624, %v2623
      %v2626 = vld [vmem:[%s8] sm:$0xff]
      %v2627 = vld [vmem:[%s8 + $0x8] sm:$0xff]
      %v2628 = vld [vmem:[%s8 + $0x10] sm:$0xff]
      %v2629 = vld [vmem:[%s8 + $0x18] sm:$0xff]
      %v2630 = vld [vmem:[%s8 + $0x20] sm:$0xff]
      %v2631 = vld [vmem:[%s8 + $0x28] sm:$0xff]
      %v2632 = vld [vmem:[%s8 + $0x30] sm:$0xff]
      %v2633 = vld [vmem:[%s8 + $0x38] sm:$0xff]
      %v2634 = vld [vmem:[%s8 + $0x40] sm:$0xff]
      %v2635 = vld [vmem:[%s8 + $0x48] sm:$0xff]
      %v2636 = vld [vmem:[%s8 + $0x50] sm:$0xff]
      %v2637 = vld [vmem:[%s8 + $0x58] sm:$0xff]
      %v2638 = vld [vmem:[%s8 + $0x60] sm:$0xff]
      %v2639 = vld [vmem:[%s8 + $0x68] sm:$0xff]
      %v2640 = vld [vmem:[%s8 + $0x70] sm:$0xff]
      %v2641 = vld [vmem:[%s8 + $0x78] sm:$0xff]
      %v2642 = vld [vmem:[%s9] sm:$0x3]
      %v2644 = vlaneseq
      %v2645 = vshrl.u32 %v2644, 7
      %v2646 = vsub.s32 0, %v2645
      %v2647 = vrot.slane %v2642, %v2646
      %v2648 = vlaneseq
      %v2649 = vshrl.u32 %v2648, 7
      %v2650 = vsub.s32 1, %v2649
      %v2651 = vrot.slane %v2642, %v2650
      %v2670 = vunpack.c.l.b16 %v2626
      %v2671 = vunpack.c.h.b16 %v2626
      %v2672 = vunpack.c.l.b16 %v2627
      %v2673 = vunpack.c.h.b16 %v2627
      %v2674 = vunpack.c.l.b16 %v2628
      %v2675 = vunpack.c.h.b16 %v2628
      %v2676 = vunpack.c.l.b16 %v2629
      %v2677 = vunpack.c.h.b16 %v2629
      %v2678 = vunpack.c.l.b16 %v2630
      %v2679 = vunpack.c.h.b16 %v2630
      %v2680 = vunpack.c.l.b16 %v2631
      %v2681 = vunpack.c.h.b16 %v2631
      %v2682 = vunpack.c.l.b16 %v2632
      %v2683 = vunpack.c.h.b16 %v2632
      %v2684 = vunpack.c.l.b16 %v2633
      %v2685 = vunpack.c.h.b16 %v2633
      %v2686 = vunpack.c.l.b16 %v2634
      %v2687 = vunpack.c.h.b16 %v2634
      %v2688 = vunpack.c.l.b16 %v2635
      %v2689 = vunpack.c.h.b16 %v2635
      %v2690 = vunpack.c.l.b16 %v2636
      %v2691 = vunpack.c.h.b16 %v2636
      %v2692 = vunpack.c.l.b16 %v2637
      %v2693 = vunpack.c.h.b16 %v2637
      %v2694 = vunpack.c.l.b16 %v2638
      %v2695 = vunpack.c.h.b16 %v2638
      %v2696 = vunpack.c.l.b16 %v2639
      %v2697 = vunpack.c.h.b16 %v2639
      %v2698 = vunpack.c.l.b16 %v2640
      %v2699 = vunpack.c.h.b16 %v2640
      %v2700 = vunpack.c.l.b16 %v2641
      %v2701 = vunpack.c.h.b16 %v2641
      %v2702 = vpack.c.b16 %v2672, %v2670
      %v2703 = vpack.c.b16 %v2673, %v2671
      %v2704 = vpack.c.b16 %v2676, %v2674
      %v2705 = vpack.c.b16 %v2677, %v2675
      %v2706 = vpack.c.b16 %v2680, %v2678
      %v2707 = vpack.c.b16 %v2681, %v2679
      %v2708 = vpack.c.b16 %v2684, %v2682
      %v2709 = vpack.c.b16 %v2685, %v2683
      %v2710 = vpack.c.b16 %v2688, %v2686
      %v2711 = vpack.c.b16 %v2689, %v2687
      %v2712 = vpack.c.b16 %v2692, %v2690
      %v2713 = vpack.c.b16 %v2693, %v2691
      %v2714 = vpack.c.b16 %v2696, %v2694
      %v2715 = vpack.c.b16 %v2697, %v2695
      %v2716 = vpack.c.b16 %v2700, %v2698
      %v2717 = vpack.c.b16 %v2701, %v2699
      %2734 = vmatprep.subr.bf16.mxu0 %v2717
      %2735 = vmatpush1.bf16.msra.mxu0 %v2716
      %2736 = vmatprep.subr.bf16.mxu0 %v2715
      %2737 = vmatpush1.bf16.msra.mxu0 %v2714
      %2738 = vmatprep.subr.bf16.mxu0 %v2713
      %2739 = vmatpush1.bf16.msra.mxu0 %v2712
      %2740 = vmatprep.subr.bf16.mxu0 %v2711
      %2741 = vmatpush1.bf16.msra.mxu0 %v2710
      %2742 = vmatprep.subr.bf16.mxu0 %v2709
      %2743 = vmatpush1.bf16.msra.mxu0 %v2708
      %2744 = vmatprep.subr.bf16.mxu0 %v2707
      %2745 = vmatpush1.bf16.msra.mxu0 %v2706
      %2746 = vmatprep.subr.bf16.mxu0 %v2705
      %2747 = vmatpush1.bf16.msra.mxu0 %v2704
      %2748 = vmatprep.subr.bf16.mxu0 %v2703
      %2749 = vmatpush1.bf16.msra.mxu0 %v2702
      %2750 = vmatprep.subr.bf16.mxu0 0
      %2751 = vmatpush2.bf16.msra.mxu0 0
      %2752 = vmatprep.subr.bf16.mxu0 0
      %2753 = vmatpush2.bf16.msra.mxu0 0
      %2754 = vmatprep.subr.bf16.mxu0 0
      %2755 = vmatpush2.bf16.msra.mxu0 0
      %2756 = vmatprep.subr.bf16.mxu0 0
      %2757 = vmatpush2.bf16.msra.mxu0 0
      %2758 = vmatprep.subr.bf16.mxu0 0
      %2759 = vmatpush2.bf16.msra.mxu0 0
      %2760 = vmatprep.subr.bf16.mxu0 0
      %2761 = vmatpush2.bf16.msra.mxu0 0
      %2762 = vmatprep.subr.bf16.mxu0 0
      %2763 = vmatpush2.bf16.msra.mxu0 0
      %2764 = vmatprep.subr.bf16.mxu0 0
      %2765 = vmatpush2.bf16.msra.mxu0 0
      %2766 = vmatprep.mubr.bf16.mxu0 0
      %2767 = vmatmul.mubr.bf16.gmra.mxu0 %v2625
      %v2768 = vpop.f32.mrf.mxu0
      %v2769 = vadd.f32 %v2647, %v2768
      %v2770 = vpop.f32.mrf.mxu0
      %v2771 = vadd.f32 %v2651, %v2770
      %v2772 = vpop.f32.mrf.mxu0
      %v2773 = vadd.f32 %v2647, %v2772
      %v2774 = vpop.f32.mrf.mxu0
      %v2775 = vadd.f32 %v2651, %v2774
      %2776 = vdwg.mxu0
      %v2777 = vmax.f32 %v2769, 0.0
      %v2778 = vmax.f32 %v2771, 0.0
      %v2779 = vmax.f32 %v2773, 0.0
      %v2780 = vmax.f32 %v2775, 0.0
      %v2781 = vpack.c.bf16 %v2779, %v2777
      %v2782 = vpack.c.bf16 %v2780, %v2778
      %v2783 = vld [vmem:[%s10] sm:$0xf]
      %v2784 = vld [vmem:[%s10 + $0x4] sm:$0xf]
      %v2785 = vld [vmem:[%s10 + $0x8] sm:$0xf]
      %v2786 = vld [vmem:[%s10 + $0xc] sm:$0xf]
      %v2787 = vld [vmem:[%s10 + $0x10] sm:$0xf]
      %v2788 = vld [vmem:[%s10 + $0x14] sm:$0xf]
      %v2789 = vld [vmem:[%s10 + $0x18] sm:$0xf]
      %v2790 = vld [vmem:[%s10 + $0x1c] sm:$0xf]
      %v2791 = vld [vmem:[%s10 + $0x20] sm:$0xf]
      %v2792 = vld [vmem:[%s10 + $0x24] sm:$0xf]
      %v2793 = vld [vmem:[%s10 + $0x28] sm:$0xf]
      %v2794 = vld [vmem:[%s10 + $0x2c] sm:$0xf]
      %v2795 = vld [vmem:[%s10 + $0x30] sm:$0xf]
      %v2796 = vld [vmem:[%s10 + $0x34] sm:$0xf]
      %v2797 = vld [vmem:[%s10 + $0x38] sm:$0xf]
      %v2798 = vld [vmem:[%s10 + $0x3c] sm:$0xf]
      %v2799 = vld [vmem:[%s10 + $0x40] sm:$0xf]
      %v2800 = vld [vmem:[%s10 + $0x44] sm:$0xf]
      %v2801 = vld [vmem:[%s10 + $0x48] sm:$0xf]
      %v2802 = vld [vmem:[%s10 + $0x4c] sm:$0xf]
      %v2803 = vld [vmem:[%s10 + $0x50] sm:$0xf]
      %v2804 = vld [vmem:[%s10 + $0x54] sm:$0xf]
      %v2805 = vld [vmem:[%s10 + $0x58] sm:$0xf]
      %v2806 = vld [vmem:[%s10 + $0x5c] sm:$0xf]
      %v2807 = vld [vmem:[%s10 + $0x60] sm:$0xf]
      %v2808 = vld [vmem:[%s10 + $0x64] sm:$0xf]
      %v2809 = vld [vmem:[%s10 + $0x68] sm:$0xf]
      %v2810 = vld [vmem:[%s10 + $0x6c] sm:$0xf]
      %v2811 = vld [vmem:[%s10 + $0x70] sm:$0xf]
      %v2812 = vld [vmem:[%s10 + $0x74] sm:$0xf]
      %v2813 = vld [vmem:[%s10 + $0x78] sm:$0xf]
      %v2814 = vld [vmem:[%s10 + $0x7c] sm:$0xf]
      %v2815 = vld [vmem:[%s11] sm:$0x1]
      %v2817 = vlaneseq
      %v2818 = vshrl.u32 %v2817, 7
      %v2819 = vsub.s32 0, %v2818
      %v2820 = vrot.slane %v2815, %v2819
      %v2854 = vunpack.c.l.b16 %v2783
      %v2855 = vunpack.c.l.b16 %v2784
      %v2856 = vunpack.c.l.b16 %v2785
      %v2857 = vunpack.c.l.b16 %v2786
      %v2858 = vunpack.c.l.b16 %v2787
      %v2859 = vunpack.c.l.b16 %v2788
      %v2860 = vunpack.c.l.b16 %v2789
      %v2861 = vunpack.c.l.b16 %v2790
      %v2862 = vunpack.c.l.b16 %v2791
      %v2863 = vunpack.c.l.b16 %v2792
      %v2864 = vunpack.c.l.b16 %v2793
      %v2865 = vunpack.c.l.b16 %v2794
      %v2866 = vunpack.c.l.b16 %v2795
      %v2867 = vunpack.c.l.b16 %v2796
      %v2868 = vunpack.c.l.b16 %v2797
      %v2869 = vunpack.c.l.b16 %v2798
      %v2870 = vunpack.c.l.b16 %v2799
      %v2871 = vunpack.c.l.b16 %v2800
      %v2872 = vunpack.c.l.b16 %v2801
      %v2873 = vunpack.c.l.b16 %v2802
      %v2874 = vunpack.c.l.b16 %v2803
      %v2875 = vunpack.c.l.b16 %v2804
      %v2876 = vunpack.c.l.b16 %v2805
      %v2877 = vunpack.c.l.b16 %v2806
      %v2878 = vunpack.c.l.b16 %v2807
      %v2879 = vunpack.c.l.b16 %v2808
      %v2880 = vunpack.c.l.b16 %v2809
      %v2881 = vunpack.c.l.b16 %v2810
      %v2882 = vunpack.c.l.b16 %v2811
      %v2883 = vunpack.c.l.b16 %v2812
      %v2884 = vunpack.c.l.b16 %v2813
      %v2885 = vunpack.c.l.b16 %v2814
      %v2886 = vpack.c.b16 %v2855, %v2854
      %v2887 = vpack.c.b16 %v2857, %v2856
      %v2888 = vpack.c.b16 %v2859, %v2858
      %v2889 = vpack.c.b16 %v2861, %v2860
      %v2890 = vpack.c.b16 %v2863, %v2862
      %v2891 = vpack.c.b16 %v2865, %v2864
      %v2892 = vpack.c.b16 %v2867, %v2866
      %v2893 = vpack.c.b16 %v2869, %v2868
      %v2894 = vpack.c.b16 %v2871, %v2870
      %v2895 = vpack.c.b16 %v2873, %v2872
      %v2896 = vpack.c.b16 %v2875, %v2874
      %v2897 = vpack.c.b16 %v2877, %v2876
      %v2898 = vpack.c.b16 %v2879, %v2878
      %v2899 = vpack.c.b16 %v2881, %v2880
      %v2900 = vpack.c.b16 %v2883, %v2882
      %v2901 = vpack.c.b16 %v2885, %v2884
      %2918 = vmatprep.subr.bf16.mxu0 0
      %2919 = vmatpush1.bf16.msra.mxu0 %v2893
      %2920 = vmatprep.subr.bf16.mxu0 0
      %2921 = vmatpush1.bf16.msra.mxu0 %v2892
      %2922 = vmatprep.subr.bf16.mxu0 0
      %2923 = vmatpush1.bf16.msra.mxu0 %v2891
      %2924 = vmatprep.subr.bf16.mxu0 0
      %2925 = vmatpush1.bf16.msra.mxu0 %v2890
      %2926 = vmatprep.subr.bf16.mxu0 0
      %2927 = vmatpush1.bf16.msra.mxu0 %v2889
      %2928 = vmatprep.subr.bf16.mxu0 0
      %2929 = vmatpush1.bf16.msra.mxu0 %v2888
      %2930 = vmatprep.subr.bf16.mxu0 0
      %2931 = vmatpush1.bf16.msra.mxu0 %v2887
      %2932 = vmatprep.subr.bf16.mxu0 0
      %2933 = vmatpush1.bf16.msra.mxu0 %v2886
      %2934 = vmatprep.subr.bf16.mxu0 0
      %2935 = vmatpush2.bf16.msra.mxu0 %v2901
      %2936 = vmatprep.subr.bf16.mxu0 0
      %2937 = vmatpush2.bf16.msra.mxu0 %v2900
      %2938 = vmatprep.subr.bf16.mxu0 0
      %2939 = vmatpush2.bf16.msra.mxu0 %v2899
      %2940 = vmatprep.subr.bf16.mxu0 0
      %2941 = vmatpush2.bf16.msra.mxu0 %v2898
      %2942 = vmatprep.subr.bf16.mxu0 0
      %2943 = vmatpush2.bf16.msra.mxu0 %v2897
      %2944 = vmatprep.subr.bf16.mxu0 0
      %2945 = vmatpush2.bf16.msra.mxu0 %v2896
      %2946 = vmatprep.subr.bf16.mxu0 0
      %2947 = vmatpush2.bf16.msra.mxu0 %v2895
      %2948 = vmatprep.subr.bf16.mxu0 0
      %2949 = vmatpush2.bf16.msra.mxu0 %v2894
      %2950 = vmatprep.mubr.bf16.mxu0 %v2782
      %2951 = vmatmul.mubr.bf16.gmra.mxu0 %v2781
      %v2952 = vpop.f32.mrf.mxu0
      %v2953 = vadd.f32 %v2820, %v2952
      %v2954 = vpop.f32.mrf.mxu0
      %v2955 = vpop.f32.mrf.mxu0
      %v2956 = vadd.f32 %v2820, %v2955
      %v2957 = vpop.f32.mrf.mxu0
      %2958 = vdwg.mxu0
      %v2959 = vadd.f32 %v2953, %v2623
      %v2960 = vadd.f32 %v2956, %v2624
      %2961 = vadd.xlane.f32.xlu0 %v2959
      %v2962 = vpop.xlane.xlu0 %2961
      %v2963 = vsel %vm876, %v2960, 0.0
      %2964 = vadd.xlane.f32.xlu0 %v2963
      %v2965 = vpop.xlane.xlu0 %2964
      %v2966 = vmul.f32 %v2962, %v2587
      %v2967 = vmul.f32 %v2965, %v2587
      %v2968 = vsub.f32 %v2959, %v2966
      %v2969 = vsub.f32 %v2960, %v2967
      %v2970 = vmul.f32 %v2968, %v2968
      %v2971 = vmul.f32 %v2969, %v2969
      %2972 = vadd.xlane.f32.xlu0 %v2970
      %v2973 = vpop.xlane.xlu0 %2972
      %v2974 = vsel %vm876, %v2971, 0.0
      %2975 = vadd.xlane.f32.xlu0 %v2974
      %v2976 = vpop.xlane.xlu0 %2975
      %v2977 = vmul.f32 %v2973, %v2587
      %v2978 = vmul.f32 %v2976, %v2587
      %v2979 = vadd.f32 %v2977, 1e-05
      %v2980 = vadd.f32 %v2978, 1e-05
      %v2981 = vrsqrt.pop %v2979
      %v2982 = vrsqrt.pop %v2980
      %v2983 = vmul.f32 %v2968, %v2981
      %v2984 = vmul.f32 %v2969, %v2982
      %v2985 = vld [vmem:[%s12] sm:$0x1]
      %v2987 = vlaneseq
      %v2988 = vshrl.u32 %v2987, 7
      %v2989 = vsub.s32 0, %v2988
      %v2990 = vrot.slane %v2985, %v2989
      %v2992 = vmul.f32 %v2983, %v2990
      %v2993 = vmul.f32 %v2984, %v2990
      %v2994 = vld [vmem:[%s13] sm:$0x1]
      %v2996 = vlaneseq
      %v2997 = vshrl.u32 %v2996, 7
      %v2998 = vsub.s32 0, %v2997
      %v2999 = vrot.slane %v2994, %v2998
      %v3001 = vadd.f32 %v2992, %v2999
      %v3002 = vadd.f32 %v2993, %v2999
      %3003 = vst [vmem:[%s481] sm:$0xff] %v3001
      %3004 = vst [vmem:[%s481 + $0x8] sm:$0x1] %v3002
      %p3005 = scmp.lt.s32.totalorder %s25, 1
      %s3006 = scalar_select %p3005, %s25, 1
      %s3007 = smul.addr %s3006, 2
      %s3008 = smul.addr %s3007, 8
      %s3009 = scalar_lea.vmem %s14, %s3008
      // Predicated region
      $region77: #{_text_forward.3} parent=75 // pred_check
        %p3010 = pneg %p347
      $region78: #{_text_forward.3} parent=75 // pred_check_branch
        %3012 = sbr.rel (%p3010) target = $region80
      $region79: #{_text_forward.3} parent=75 // pred_region
        _
      $region80: #{_text_forward.3} parent=75 // pred_fallthru
        _
    $region76: #{_text_forward.3} parent=5 // pred_fallthru
      _
    %p3013 = scmp.le.s32.totalorder 2, %s20
    // Predicated region
    $region81: #{_text_forward.3} parent=5 // pred_check
      %p3014 = pneg %p3013
    $region82: #{_text_forward.3} parent=5 // pred_check_branch
      %3016 = sbr.rel (%p3014) target = $region84
    $region83: #{_text_forward.3} parent=5 // pred_region
      %s3017 = ssub.s32 %s20, 2
      // Predicated region
      $region85: #{_text_forward.3} parent=83 // pred_check
        %p3018 = pneg %p353
      $region86: #{_text_forward.3} parent=83 // pred_check_branch
        %3020 = sbr.rel (%p3018) target = $region88
      $region87: #{_text_forward.3} parent=83 // pred_region
        %p3021 = scmp.lt.s32.totalorder %s26, 1
        %s3022 = scalar_select %p3021, %s26, 1
        %s3023 = smul.addr %s3022, 2
        %s3024 = smul.addr %s3023, 8
        %s3025 = scalar_lea.vmem %s14, %s3024
      $region88: #{_text_forward.3} parent=83 // pred_fallthru
        _
    $region84: #{_text_forward.3} parent=5 // pred_fallthru
      _
  $region6: #{_text_forward.3} parent=0 // loop_footer
    %s24 = sadd.s32 1, %s20
  $region7: #{_text_forward.3} parent=0 // loop_footer_branch
    %19 = sbr.rel target = $region3
  $region8: #{_text_forward.3} parent=0 // loop_exit
    _

</llo_original>
